<compile_context>
chip_gen: v7x
topology: tpu7x:2x2x1
jax: 0.10.0
libtpu: 0.0.40
codegen_flags: <defaults>
</compile_context>

<pallas_src>
import jax
import jax.numpy as jnp
from jax.experimental import pallas as pl
from jax.experimental.pallas import tpu as pltpu

# ---------------------------------------------------------------------------
# Model dimensions (small, consistent with the module's interfaces)
# ---------------------------------------------------------------------------
BATCH = 2
IN_CH = 3                        # RGB input to SrmLayer
SRM_CH = 30                      # SrmLayer output channels == EfficientNet in_channels
KSIZE = 5                        # SRM filter size (padding = 2, stride = 1)
PAD = KSIZE // 2
HEIGHT = 16
WIDTH = 16
PIX = HEIGHT * WIDTH             # 256 output pixels per image
PATCH_K = KSIZE * KSIZE * IN_CH  # 75 im2col contraction size
PATCH_K_PAD = 128                # zero-padded to a full lane tile
FEAT = 1408                      # EfficientNet-b2 feature width
NUM_CLASSES = 4
NUM_CLASSES_PAD = 128            # lane-dense classifier / output
M_ROWS = BATCH * PIX             # 512 rows: all images stacked in one matmul


# ---------------------------------------------------------------------------
# Fused kernel: folded (SRM conv + feature projection) matmul + swish
#               + MXU global avg pool + padded FC + log_softmax
# ---------------------------------------------------------------------------
def fused_kernel(p_ref, wf_ref, b1_ref, pool_ref, w2_ref, b2_ref, o_ref):
    # p_ref   : (M_ROWS, PATCH_K_PAD)     bf16 im2col patches, all images stacked
    # wf_ref  : (PATCH_K_PAD, FEAT)       bf16 folded weights (w_srm @ w1, padded K)
    # b1_ref  : (1, FEAT)                 f32
    # pool_ref: (BATCH, M_ROWS)           f32 block-diagonal ones/PIX pooling matrix
    # w2_ref  : (FEAT, NUM_CLASSES_PAD)   f32 classifier, zero-padded 4 -> 128
    # b2_ref  : (1, NUM_CLASSES_PAD)      f32
    # o_ref   : (BATCH, NUM_CLASSES_PAD)  log-probabilities (padded lanes ~ -1e30)

    # Folded SRM conv + 1x1 projection: one K=128 bf16 MXU matmul, f32 accumulate.
    y = jnp.dot(p_ref[...], wf_ref[...],
                preferred_element_type=jnp.float32) + b1_ref[...]      # (512, 1408)

    # swish (EfficientNet activation) with a single EUP op per vreg:
    # sigmoid(y) = 0.5*tanh(0.5*y) + 0.5  (no exp overflow, no approx recip).
    y = y * (0.5 * jnp.tanh(0.5 * y) + 0.5)

    # Per-image global average pooling as an MXU reduction with the
    # block-diagonal ones/PIX matrix -> (BATCH, FEAT); keeps VALU/XLU free.
    pooled = jnp.dot(pool_ref[...], y, preferred_element_type=jnp.float32)

    # Final classifier Linear(1408, 4), lane-dense via class padding to 128.
    logits = jnp.dot(pooled, w2_ref[...],
                     preferred_element_type=jnp.float32) + b2_ref[...]  # (B, 128)

    # Mask the padded class lanes before the softmax reductions.
    lane = jax.lax.broadcasted_iota(jnp.int32, logits.shape, 1)
    logits = jnp.where(lane < NUM_CLASSES, logits, jnp.float32(-1e30))

    # Numerically stable log_softmax over the class dimension.
    m = jnp.max(logits, axis=-1, keepdims=True)
    z = logits - m
    lse = jnp.log(jnp.sum(jnp.exp(z), axis=-1, keepdims=True))
    o_ref[...] = (z - lse).astype(o_ref.dtype)


def fused_forward(patches, w_fused, b1, pool_mat, w2_pad, b2_pad):
    vmem_spec = pl.BlockSpec(memory_space=pltpu.MemorySpace.VMEM)
    out = pl.pallas_call(
        fused_kernel,
        out_shape=jax.ShapeDtypeStruct((BATCH, NUM_CLASSES_PAD), jnp.float32),
        in_specs=[vmem_spec] * 6,
        out_specs=vmem_spec,
    )(patches, w_fused, b1, pool_mat, w2_pad, b2_pad)
    return out[:, :NUM_CLASSES]                                  # (B, 4)


# ---------------------------------------------------------------------------
# Wrapper-side data prep (cheap, one-off XLA ops fused under jit)
# ---------------------------------------------------------------------------
def _im2col(x_nhwc):
    """(B,H,W,C) -> lane-dense bf16 im2col patches (B*H*W, PATCH_K_PAD)."""
    b, h, w, c = x_nhwc.shape
    xp = jnp.pad(x_nhwc, ((0, 0), (PAD, PAD), (PAD, PAD), (0, 0)))
    taps = [xp[:, dy:dy + h, dx:dx + w, :]
            for dy in range(KSIZE) for dx in range(KSIZE)]
    patches = jnp.stack(taps, axis=3).reshape(b, h * w, KSIZE * KSIZE * c)
    # Zero-pad the contraction dim 75 -> 128 (lane-dense, unmasked DMA) and
    # stack the batch into the M dimension; bf16 halves HBM traffic and feeds
    # the MXU at full rate.
    patches = jnp.pad(patches, ((0, 0), (0, 0),
                                (0, PATCH_K_PAD - patches.shape[-1])))
    return patches.reshape(b * h * w, PATCH_K_PAD).astype(jnp.bfloat16)


def end_to_end_net(img_input_nchw, params):
    # NCHW -> NHWC (kernel layout), then im2col the SRM receptive fields.
    x = jnp.transpose(img_input_nchw, (0, 2, 3, 1)).astype(jnp.float32)
    patches = _im2col(x)                                          # (512, 128) bf16

    # Fold SRM conv (75,30) with the 1x1 projection (30,1408) in f32 (exact:
    # no nonlinearity between them), then pad K 75 -> 128 and cast to bf16.
    w_srm_flat = params["w_srm"].reshape(PATCH_K, SRM_CH)
    w_fused = jnp.dot(w_srm_flat, params["w1"],
                      preferred_element_type=jnp.float32)         # (75, 1408)
    w_fused = jnp.pad(w_fused, ((0, PATCH_K_PAD - PATCH_K), (0, 0)))
    w_fused = w_fused.astype(jnp.bfloat16)

    # Block-diagonal per-image average-pool matrix (B, B*PIX), value 1/PIX.
    rows = jnp.arange(BATCH, dtype=jnp.int32)[:, None]
    cols = jnp.arange(M_ROWS, dtype=jnp.int32)[None, :]
    pool_mat = jnp.where(cols // PIX == rows,
                         jnp.float32(1.0 / PIX), jnp.float32(0.0))

    # Lane-dense classifier: pad classes 4 -> 128 (zeros; masked in-kernel).
    w2_pad = jnp.pad(params["w2"], ((0, 0), (0, NUM_CLASSES_PAD - NUM_CLASSES)))
    b2_pad = jnp.pad(params["b2"], ((0, 0), (0, NUM_CLASSES_PAD - NUM_CLASSES)))

    return fused_forward(patches, w_fused, params["b1"],
                         pool_mat, w2_pad, b2_pad)                # (B, 4)


def init_params(key):
    k_srm, k_w1, k_b1, k_w2, k_b2 = jax.random.split(key, 5)
    # SRM filters are fixed (non-learned) in the original layer; initialized
    # deterministically here since the exact filter bank values are defined
    # outside this module.
    w_srm = 0.1 * jax.random.normal(k_srm, (KSIZE, KSIZE, IN_CH, SRM_CH),
                                    dtype=jnp.float32)
    w1 = 0.05 * jax.random.normal(k_w1, (SRM_CH, FEAT), dtype=jnp.float32)
    b1 = 0.01 * jax.random.normal(k_b1, (1, FEAT), dtype=jnp.float32)
    w2 = 0.05 * jax.random.normal(k_w2, (FEAT, NUM_CLASSES), dtype=jnp.float32)
    b2 = 0.01 * jax.random.normal(k_b2, (1, NUM_CLASSES), dtype=jnp.float32)
    return {"w_srm": w_srm, "w1": w1, "b1": b1, "w2": w2, "b2": b2}


if __name__ == "__main__":
    key = jax.random.PRNGKey(0)
    k_in, k_params = jax.random.split(key)
    img_input = jax.random.normal(
        k_in, (BATCH, IN_CH, HEIGHT, WIDTH), dtype=jnp.float32)  # NCHW
    params = init_params(k_params)

    out = jax.jit(end_to_end_net)(img_input, params)
    out = jax.block_until_ready(out)

    assert out.shape == (BATCH, NUM_CLASSES)
    # log_softmax rows must (approximately) exponentiate-sum to 1
    row_sums = jnp.sum(jnp.exp(out), axis=-1)
    assert jnp.allclose(row_sums, jnp.ones_like(row_sums), atol=1e-4)
    print("KERNEL_OK")
</pallas_src>

<mosaic_0001>
module attributes {stable_mosaic.version = 11 : i64} {
  func.func @fused_kernel(%arg0: memref<512x128xbf16, #tpu.memory_space<vmem>>, %arg1: memref<128x1408xbf16, #tpu.memory_space<vmem>>, %arg2: memref<1x1408xf32, #tpu.memory_space<vmem>>, %arg3: memref<2x512xf32, #tpu.memory_space<vmem>>, %arg4: memref<1408x128xf32, #tpu.memory_space<vmem>>, %arg5: memref<1x128xf32, #tpu.memory_space<vmem>>, %arg6: memref<2x128xf32, #tpu.memory_space<vmem>>) attributes {dimension_semantics = [], scalar_prefetch = 0 : i64, scratch_operands = 0 : i64, tpu.core_type = #tpu.core_type<tc>} {
    %c0 = arith.constant 0 : index
    %c0_0 = arith.constant 0 : index
    %0 = vector.load %arg0[%c0, %c0_0] : memref<512x128xbf16, #tpu.memory_space<vmem>>, vector<512x128xbf16>
    %c0_1 = arith.constant 0 : index
    %c0_2 = arith.constant 0 : index
    %1 = vector.load %arg1[%c0_1, %c0_2] : memref<128x1408xbf16, #tpu.memory_space<vmem>>, vector<128x1408xbf16>
    %cst = arith.constant dense<0.000000e+00> : vector<512x1408xf32>
    %2 = tpu.matmul %0, %1, %cst {dimension_numbers = #tpu.dot_dimension_numbers<[1], [0], [0], [1], [0, 0, 1, 1], [], []>} : vector<512x128xbf16>, vector<128x1408xbf16>, vector<512x1408xf32> -> vector<512x1408xf32>
    %c0_3 = arith.constant 0 : index
    %c0_4 = arith.constant 0 : index
    %3 = vector.load %arg2[%c0_3, %c0_4] : memref<1x1408xf32, #tpu.memory_space<vmem>>, vector<1x1408xf32>
    %4 = vector.broadcast %3 : vector<1x1408xf32> to vector<512x1408xf32>
    %5 = arith.addf %2, %4 : vector<512x1408xf32>
    %cst_5 = arith.constant 5.000000e-01 : f32
    %6 = vector.broadcast %cst_5 : f32 to vector<512x1408xf32>
    %7 = arith.mulf %6, %5 : vector<512x1408xf32>
    %8 = math.tanh %7 : vector<512x1408xf32>
    %cst_6 = arith.constant 5.000000e-01 : f32
    %9 = vector.broadcast %cst_6 : f32 to vector<512x1408xf32>
    %10 = arith.mulf %9, %8 : vector<512x1408xf32>
    %cst_7 = arith.constant 5.000000e-01 : f32
    %11 = vector.broadcast %cst_7 : f32 to vector<512x1408xf32>
    %12 = arith.addf %10, %11 : vector<512x1408xf32>
    %13 = arith.mulf %5, %12 : vector<512x1408xf32>
    %c0_8 = arith.constant 0 : index
    %c0_9 = arith.constant 0 : index
    %14 = vector.load %arg3[%c0_8, %c0_9] : memref<2x512xf32, #tpu.memory_space<vmem>>, vector<2x512xf32>
    %cst_10 = arith.constant dense<0.000000e+00> : vector<2x1408xf32>
    %15 = tpu.matmul %14, %13, %cst_10 {dimension_numbers = #tpu.dot_dimension_numbers<[1], [0], [0], [1], [0, 0, 1, 1], [], []>} : vector<2x512xf32>, vector<512x1408xf32>, vector<2x1408xf32> -> vector<2x1408xf32>
    %c0_11 = arith.constant 0 : index
    %c0_12 = arith.constant 0 : index
    %16 = vector.load %arg4[%c0_11, %c0_12] : memref<1408x128xf32, #tpu.memory_space<vmem>>, vector<1408x128xf32>
    %cst_13 = arith.constant dense<0.000000e+00> : vector<2x128xf32>
    %17 = tpu.matmul %15, %16, %cst_13 {dimension_numbers = #tpu.dot_dimension_numbers<[1], [0], [0], [1], [0, 0, 1, 1], [], []>} : vector<2x1408xf32>, vector<1408x128xf32>, vector<2x128xf32> -> vector<2x128xf32>
    %c0_14 = arith.constant 0 : index
    %c0_15 = arith.constant 0 : index
    %18 = vector.load %arg5[%c0_14, %c0_15] : memref<1x128xf32, #tpu.memory_space<vmem>>, vector<1x128xf32>
    %19 = vector.broadcast %18 : vector<1x128xf32> to vector<2x128xf32>
    %20 = arith.addf %17, %19 : vector<2x128xf32>
    %21 = tpu.iota {dimensions = array<i32: 1>} : vector<2x128xi32>
    %c4_i32 = arith.constant 4 : i32
    %22 = vector.broadcast %c4_i32 : i32 to vector<2x128xi32>
    %23 = arith.cmpi slt, %21, %22 : vector<2x128xi32>
    %cst_16 = arith.constant -1.000000e+30 : f32
    %24 = vector.broadcast %cst_16 : f32 to vector<2x128xf32>
    %25 = arith.select %23, %20, %24 : vector<2x128xi1>, vector<2x128xf32>
    %cst_17 = arith.constant dense<0xFF800000> : vector<2xf32>
    %26 = vector.multi_reduction <maximumf>, %25, %cst_17 [1] : vector<2x128xf32> to vector<2xf32>
    %27 = vector.shape_cast %26 : vector<2xf32> to vector<2x1xf32>
    %28 = vector.broadcast %27 : vector<2x1xf32> to vector<2x128xf32>
    %29 = arith.subf %25, %28 : vector<2x128xf32>
    %30 = math.exp %29 : vector<2x128xf32>
    %cst_18 = arith.constant dense<0.000000e+00> : vector<2xf32>
    %31 = vector.multi_reduction <add>, %30, %cst_18 [1] : vector<2x128xf32> to vector<2xf32>
    %32 = vector.shape_cast %31 : vector<2xf32> to vector<2x1xf32>
    %33 = math.log %32 : vector<2x1xf32>
    %34 = vector.broadcast %33 : vector<2x1xf32> to vector<2x128xf32>
    %35 = arith.subf %29, %34 : vector<2x128xf32>
    %c0_19 = arith.constant 0 : index
    %c0_20 = arith.constant 0 : index
    %36 = vector.load %arg6[%c0_19, %c0_20] : memref<2x128xf32, #tpu.memory_space<vmem>>, vector<2x128xf32>
    tpu.vector_store %arg6[%c0_19, %c0_20], %35 {strides = array<i32>} : memref<2x128xf32, #tpu.memory_space<vmem>>, vector<2x128xf32>,
    return
  }
}

</mosaic_0001>

<llo_original>
// kernel: end_to_end_net.1
$region0: #{end_to_end_net.1}
  #allocation0 [shape = 'u32[]', space=smem, size = 0x4, offset = 0x4, fixed_abs, tag = 'smem constant byte address 0x4 - core index']
  #allocation1 [shape = 'u32[144,128]{1,0:T(1,128)}', space=vmem, size = 0x12000, scoped, tag = 'internal scratch']
  %s0 = inlined_call_operand.vmem [shape: bf16[512,128], index: 0, kind: input, shape index: {}]
  %s1 = inlined_call_operand.vmem [shape: bf16[128,1408], index: 1, kind: input, shape index: {}]
  %s2 = inlined_call_operand.vmem [shape: f32[1,1408], index: 2, kind: input, shape index: {}]
  %s3 = inlined_call_operand.vmem [shape: f32[2,512], index: 3, kind: input, shape index: {}]
  %s4 = inlined_call_operand.vmem [shape: f32[1408,128], index: 4, kind: input, shape index: {}]
  %s5 = inlined_call_operand.vmem [shape: f32[1,128], index: 5, kind: input, shape index: {}]
  %s6 = inlined_call_operand.hbm [shape: f32[2,128], index: 6, kind: output, shape index: {}]
  %s7 = sld [smem:[#allocation0]]
  $region34: #{end_to_end_net.1} parent=0
    _
  %s9 = ssub.s32 1, %s7
  %s10 = scalar_select 0, %s9, %s7
  $region1: #{end_to_end_net.1} parent=0
    #allocation2 [shape = 'u8[1024]{0}', space=vmem, size = 0x400, scoped, tag = 'output window, operand 0, single buffered']
    #allocation3 [shape = 's32[1]{0}', space=sflag, size = 0x4, scoped, tag = 'scoped memory for end_to_end_net.1']
    %11 = vsyncpa [#allocation3], 0
    // Predicated region
    $region2: #{end_to_end_net.1} parent=1 // pred_check
      _
    $region3: #{end_to_end_net.1} parent=1 // pred_check_branch
      %13 = sbr.rel (0) target = $region5
    $region4: #{end_to_end_net.1} parent=1 // pred_region
      _
    $region5: #{end_to_end_net.1} parent=1 // pred_fallthru
      _
    // Predicated region
    $region6: #{end_to_end_net.1} parent=1 // pred_check
      _
    $region7: #{end_to_end_net.1} parent=1 // pred_check_branch
      %15 = sbr.rel (0) target = $region9
    $region8: #{end_to_end_net.1} parent=1 // pred_region
      _
    $region9: #{end_to_end_net.1} parent=1 // pred_fallthru
      _
    // Predicated region
    $region10: #{end_to_end_net.1} parent=1 // pred_check
      _
    $region11: #{end_to_end_net.1} parent=1 // pred_check_branch
      %17 = sbr.rel (0) target = $region13
    $region12: #{end_to_end_net.1} parent=1 // pred_region
      _
    $region13: #{end_to_end_net.1} parent=1 // pred_fallthru
      _
    // Predicated region
    $region14: #{end_to_end_net.1} parent=1 // pred_check
      _
    $region15: #{end_to_end_net.1} parent=1 // pred_check_branch
      %19 = sbr.rel (0) target = $region17
    $region16: #{end_to_end_net.1} parent=1 // pred_region
      _
    $region17: #{end_to_end_net.1} parent=1 // pred_fallthru
      _
    // Predicated region
    $region18: #{end_to_end_net.1} parent=1 // pred_check
      _
    $region19: #{end_to_end_net.1} parent=1 // pred_check_branch
      %21 = sbr.rel (0) target = $region21
    $region20: #{end_to_end_net.1} parent=1 // pred_region
      _
    $region21: #{end_to_end_net.1} parent=1 // pred_fallthru
      _
    // Predicated region
    $region22: #{end_to_end_net.1} parent=1 // pred_check
      _
    $region23: #{end_to_end_net.1} parent=1 // pred_check_branch
      %23 = sbr.rel (0) target = $region25
    $region24: #{end_to_end_net.1} parent=1 // pred_region
      _
    $region25: #{end_to_end_net.1} parent=1 // pred_fallthru
      _
    %v25 = vld [vmem:[%s0] sm:$0xf]
    %v26 = vld [vmem:[%s0 + $0x4] sm:$0xf]
    %v27 = vld [vmem:[%s0 + $0x8] sm:$0xf]
    %v28 = vld [vmem:[%s0 + $0xc] sm:$0xf]
    %v29 = vld [vmem:[%s0 + $0x10] sm:$0xf]
    %v30 = vld [vmem:[%s0 + $0x14] sm:$0xf]
    %v31 = vld [vmem:[%s0 + $0x18] sm:$0xf]
    %v32 = vld [vmem:[%s0 + $0x1c] sm:$0xf]
    %v33 = vld [vmem:[%s0 + $0x20] sm:$0xf]
    %v34 = vld [vmem:[%s0 + $0x24] sm:$0xf]
    %v35 = vld [vmem:[%s0 + $0x28] sm:$0xf]
    %v36 = vld [vmem:[%s0 + $0x2c] sm:$0xf]
    %v37 = vld [vmem:[%s0 + $0x30] sm:$0xf]
    %v38 = vld [vmem:[%s0 + $0x34] sm:$0xf]
    %v39 = vld [vmem:[%s0 + $0x38] sm:$0xf]
    %v40 = vld [vmem:[%s0 + $0x3c] sm:$0xf]
    %v41 = vld [vmem:[%s0 + $0x40] sm:$0xf]
    %v42 = vld [vmem:[%s0 + $0x44] sm:$0xf]
    %v43 = vld [vmem:[%s0 + $0x48] sm:$0xf]
    %v44 = vld [vmem:[%s0 + $0x4c] sm:$0xf]
    %v45 = vld [vmem:[%s0 + $0x50] sm:$0xf]
    %v46 = vld [vmem:[%s0 + $0x54] sm:$0xf]
    %v47 = vld [vmem:[%s0 + $0x58] sm:$0xf]
    %v48 = vld [vmem:[%s0 + $0x5c] sm:$0xf]
    %v49 = vld [vmem:[%s0 + $0x60] sm:$0xf]
    %v50 = vld [vmem:[%s0 + $0x64] sm:$0xf]
    %v51 = vld [vmem:[%s0 + $0x68] sm:$0xf]
    %v52 = vld [vmem:[%s0 + $0x6c] sm:$0xf]
    %v53 = vld [vmem:[%s0 + $0x70] sm:$0xf]
    %v54 = vld [vmem:[%s0 + $0x74] sm:$0xf]
    %v55 = vld [vmem:[%s0 + $0x78] sm:$0xf]
    %v56 = vld [vmem:[%s0 + $0x7c] sm:$0xf]
    %v57 = vld [vmem:[%s0 + $0x80] sm:$0xf]
    %v58 = vld [vmem:[%s0 + $0x84] sm:$0xf]
    %v59 = vld [vmem:[%s0 + $0x88] sm:$0xf]
    %v60 = vld [vmem:[%s0 + $0x8c] sm:$0xf]
    %v61 = vld [vmem:[%s0 + $0x90] sm:$0xf]
    %v62 = vld [vmem:[%s0 + $0x94] sm:$0xf]
    %v63 = vld [vmem:[%s0 + $0x98] sm:$0xf]
    %v64 = vld [vmem:[%s0 + $0x9c] sm:$0xf]
    %v65 = vld [vmem:[%s0 + $0xa0] sm:$0xf]
    %v66 = vld [vmem:[%s0 + $0xa4] sm:$0xf]
    %v67 = vld [vmem:[%s0 + $0xa8] sm:$0xf]
    %v68 = vld [vmem:[%s0 + $0xac] sm:$0xf]
    %v69 = vld [vmem:[%s0 + $0xb0] sm:$0xf]
    %v70 = vld [vmem:[%s0 + $0xb4] sm:$0xf]
    %v71 = vld [vmem:[%s0 + $0xb8] sm:$0xf]
    %v72 = vld [vmem:[%s0 + $0xbc] sm:$0xf]
    %v73 = vld [vmem:[%s0 + $0xc0] sm:$0xf]
    %v74 = vld [vmem:[%s0 + $0xc4] sm:$0xf]
    %v75 = vld [vmem:[%s0 + $0xc8] sm:$0xf]
    %v76 = vld [vmem:[%s0 + $0xcc] sm:$0xf]
    %v77 = vld [vmem:[%s0 + $0xd0] sm:$0xf]
    %v78 = vld [vmem:[%s0 + $0xd4] sm:$0xf]
    %v79 = vld [vmem:[%s0 + $0xd8] sm:$0xf]
    %v80 = vld [vmem:[%s0 + $0xdc] sm:$0xf]
    %v81 = vld [vmem:[%s0 + $0xe0] sm:$0xf]
    %v82 = vld [vmem:[%s0 + $0xe4] sm:$0xf]
    %v83 = vld [vmem:[%s0 + $0xe8] sm:$0xf]
    %v84 = vld [vmem:[%s0 + $0xec] sm:$0xf]
    %v85 = vld [vmem:[%s0 + $0xf0] sm:$0xf]
    %v86 = vld [vmem:[%s0 + $0xf4] sm:$0xf]
    %v87 = vld [vmem:[%s0 + $0xf8] sm:$0xf]
    %v88 = vld [vmem:[%s0 + $0xfc] sm:$0xf]
    %v89 = vld [vmem:[%s1] sm:$0xff]
    %v90 = vld [vmem:[%s1 + $0x8] sm:$0xff]
    %v91 = vld [vmem:[%s1 + $0x10] sm:$0xff]
    %v92 = vld [vmem:[%s1 + $0x18] sm:$0xff]
    %v93 = vld [vmem:[%s1 + $0x20] sm:$0xff]
    %v94 = vld [vmem:[%s1 + $0x28] sm:$0xf]
    %v95 = vld [vmem:[%s1 + $0x2c] sm:$0xff]
    %v96 = vld [vmem:[%s1 + $0x34] sm:$0xff]
    %v97 = vld [vmem:[%s1 + $0x3c] sm:$0xff]
    %v98 = vld [vmem:[%s1 + $0x44] sm:$0xff]
    %v99 = vld [vmem:[%s1 + $0x4c] sm:$0xff]
    %v100 = vld [vmem:[%s1 + $0x54] sm:$0xf]
    %v101 = vld [vmem:[%s1 + $0x58] sm:$0xff]
    %v102 = vld [vmem:[%s1 + $0x60] sm:$0xff]
    %v103 = vld [vmem:[%s1 + $0x68] sm:$0xff]
    %v104 = vld [vmem:[%s1 + $0x70] sm:$0xff]
    %v105 = vld [vmem:[%s1 + $0x78] sm:$0xff]
    %v106 = vld [vmem:[%s1 + $0x80] sm:$0xf]
    %v107 = vld [vmem:[%s1 + $0x84] sm:$0xff]
    %v108 = vld [vmem:[%s1 + $0x8c] sm:$0xff]
    %v109 = vld [vmem:[%s1 + $0x94] sm:$0xff]
    %v110 = vld [vmem:[%s1 + $0x9c] sm:$0xff]
    %v111 = vld [vmem:[%s1 + $0xa4] sm:$0xff]
    %v112 = vld [vmem:[%s1 + $0xac] sm:$0xf]
    %v113 = vld [vmem:[%s1 + $0xb0] sm:$0xff]
    %v114 = vld [vmem:[%s1 + $0xb8] sm:$0xff]
    %v115 = vld [vmem:[%s1 + $0xc0] sm:$0xff]
    %v116 = vld [vmem:[%s1 + $0xc8] sm:$0xff]
    %v117 = vld [vmem:[%s1 + $0xd0] sm:$0xff]
    %v118 = vld [vmem:[%s1 + $0xd8] sm:$0xf]
    %v119 = vld [vmem:[%s1 + $0xdc] sm:$0xff]
    %v120 = vld [vmem:[%s1 + $0xe4] sm:$0xff]
    %v121 = vld [vmem:[%s1 + $0xec] sm:$0xff]
    %v122 = vld [vmem:[%s1 + $0xf4] sm:$0xff]
    %v123 = vld [vmem:[%s1 + $0xfc] sm:$0xff]
    %v124 = vld [vmem:[%s1 + $0x104] sm:$0xf]
    %v125 = vld [vmem:[%s1 + $0x108] sm:$0xff]
    %v126 = vld [vmem:[%s1 + $0x110] sm:$0xff]
    %v127 = vld [vmem:[%s1 + $0x118] sm:$0xff]
    %v128 = vld [vmem:[%s1 + $0x120] sm:$0xff]
    %v129 = vld [vmem:[%s1 + $0x128] sm:$0xff]
    %v130 = vld [vmem:[%s1 + $0x130] sm:$0xf]
    %v131 = vld [vmem:[%s1 + $0x134] sm:$0xff]
    %v132 = vld [vmem:[%s1 + $0x13c] sm:$0xff]
    %v133 = vld [vmem:[%s1 + $0x144] sm:$0xff]
    %v134 = vld [vmem:[%s1 + $0x14c] sm:$0xff]
    %v135 = vld [vmem:[%s1 + $0x154] sm:$0xff]
    %v136 = vld [vmem:[%s1 + $0x15c] sm:$0xf]
    %v137 = vld [vmem:[%s1 + $0x160] sm:$0xff]
    %v138 = vld [vmem:[%s1 + $0x168] sm:$0xff]
    %v139 = vld [vmem:[%s1 + $0x170] sm:$0xff]
    %v140 = vld [vmem:[%s1 + $0x178] sm:$0xff]
    %v141 = vld [vmem:[%s1 + $0x180] sm:$0xff]
    %v142 = vld [vmem:[%s1 + $0x188] sm:$0xf]
    %v143 = vld [vmem:[%s1 + $0x18c] sm:$0xff]
    %v144 = vld [vmem:[%s1 + $0x194] sm:$0xff]
    %v145 = vld [vmem:[%s1 + $0x19c] sm:$0xff]
    %v146 = vld [vmem:[%s1 + $0x1a4] sm:$0xff]
    %v147 = vld [vmem:[%s1 + $0x1ac] sm:$0xff]
    %v148 = vld [vmem:[%s1 + $0x1b4] sm:$0xf]
    %v149 = vld [vmem:[%s1 + $0x1b8] sm:$0xff]
    %v150 = vld [vmem:[%s1 + $0x1c0] sm:$0xff]
    %v151 = vld [vmem:[%s1 + $0x1c8] sm:$0xff]
    %v152 = vld [vmem:[%s1 + $0x1d0] sm:$0xff]
    %v153 = vld [vmem:[%s1 + $0x1d8] sm:$0xff]
    %v154 = vld [vmem:[%s1 + $0x1e0] sm:$0xf]
    %v155 = vld [vmem:[%s1 + $0x1e4] sm:$0xff]
    %v156 = vld [vmem:[%s1 + $0x1ec] sm:$0xff]
    %v157 = vld [vmem:[%s1 + $0x1f4] sm:$0xff]
    %v158 = vld [vmem:[%s1 + $0x1fc] sm:$0xff]
    %v159 = vld [vmem:[%s1 + $0x204] sm:$0xff]
    %v160 = vld [vmem:[%s1 + $0x20c] sm:$0xf]
    %v161 = vld [vmem:[%s1 + $0x210] sm:$0xff]
    %v162 = vld [vmem:[%s1 + $0x218] sm:$0xff]
    %v163 = vld [vmem:[%s1 + $0x220] sm:$0xff]
    %v164 = vld [vmem:[%s1 + $0x228] sm:$0xff]
    %v165 = vld [vmem:[%s1 + $0x230] sm:$0xff]
    %v166 = vld [vmem:[%s1 + $0x238] sm:$0xf]
    %v167 = vld [vmem:[%s1 + $0x23c] sm:$0xff]
    %v168 = vld [vmem:[%s1 + $0x244] sm:$0xff]
    %v169 = vld [vmem:[%s1 + $0x24c] sm:$0xff]
    %v170 = vld [vmem:[%s1 + $0x254] sm:$0xff]
    %v171 = vld [vmem:[%s1 + $0x25c] sm:$0xff]
    %v172 = vld [vmem:[%s1 + $0x264] sm:$0xf]
    %v173 = vld [vmem:[%s1 + $0x268] sm:$0xff]
    %v174 = vld [vmem:[%s1 + $0x270] sm:$0xff]
    %v175 = vld [vmem:[%s1 + $0x278] sm:$0xff]
    %v176 = vld [vmem:[%s1 + $0x280] sm:$0xff]
    %v177 = vld [vmem:[%s1 + $0x288] sm:$0xff]
    %v178 = vld [vmem:[%s1 + $0x290] sm:$0xf]
    %v179 = vld [vmem:[%s1 + $0x294] sm:$0xff]
    %v180 = vld [vmem:[%s1 + $0x29c] sm:$0xff]
    %v181 = vld [vmem:[%s1 + $0x2a4] sm:$0xff]
    %v182 = vld [vmem:[%s1 + $0x2ac] sm:$0xff]
    %v183 = vld [vmem:[%s1 + $0x2b4] sm:$0xff]
    %v184 = vld [vmem:[%s1 + $0x2bc] sm:$0xf]
    %v185 = vld [vmem:[%s2] sm:$0xff]
    %v186 = vld [vmem:[%s2 + $0x8] sm:$0x7]
    %v189 = vlaneseq
    %v190 = vshrl.u32 %v189, 7
    %v191 = vsub.s32 0, %v190
    %v192 = vrot.slane %v185, %v191
    %v193 = vlaneseq
    %v194 = vshrl.u32 %v193, 7
    %v195 = vsub.s32 1, %v194
    %v196 = vrot.slane %v185, %v195
    %v197 = vlaneseq
    %v198 = vshrl.u32 %v197, 7
    %v199 = vsub.s32 2, %v198
    %v200 = vrot.slane %v185, %v199
    %v201 = vlaneseq
    %v202 = vshrl.u32 %v201, 7
    %v203 = vsub.s32 3, %v202
    %v204 = vrot.slane %v185, %v203
    %v205 = vlaneseq
    %v206 = vshrl.u32 %v205, 7
    %v207 = vsub.s32 4, %v206
    %v208 = vrot.slane %v185, %v207
    %v209 = vlaneseq
    %v210 = vshrl.u32 %v209, 7
    %v211 = vsub.s32 5, %v210
    %v212 = vrot.slane %v185, %v211
    %v213 = vlaneseq
    %v214 = vshrl.u32 %v213, 7
    %v215 = vsub.s32 6, %v214
    %v216 = vrot.slane %v185, %v215
    %v217 = vlaneseq
    %v218 = vshrl.u32 %v217, 7
    %v219 = vsub.s32 7, %v218
    %v220 = vrot.slane %v185, %v219
    %v221 = vlaneseq
    %v222 = vshrl.u32 %v221, 7
    %v223 = vsub.s32 0, %v222
    %v224 = vrot.slane %v186, %v223
    %v225 = vlaneseq
    %v226 = vshrl.u32 %v225, 7
    %v227 = vsub.s32 1, %v226
    %v228 = vrot.slane %v186, %v227
    %v229 = vlaneseq
    %v230 = vshrl.u32 %v229, 7
    %v231 = vsub.s32 2, %v230
    %v232 = vrot.slane %v186, %v231
    %v308 = vunpack.c.l.b16 %v25
    %v309 = vunpack.c.l.b16 %v26
    %v310 = vunpack.c.l.b16 %v27
    %v311 = vunpack.c.l.b16 %v28
    %v312 = vunpack.c.l.b16 %v29
    %v313 = vunpack.c.l.b16 %v30
    %v314 = vunpack.c.l.b16 %v31
    %v315 = vunpack.c.l.b16 %v32
    %v316 = vunpack.c.l.b16 %v33
    %v317 = vunpack.c.l.b16 %v34
    %v318 = vunpack.c.l.b16 %v35
    %v319 = vunpack.c.l.b16 %v36
    %v320 = vunpack.c.l.b16 %v37
    %v321 = vunpack.c.l.b16 %v38
    %v322 = vunpack.c.l.b16 %v39
    %v323 = vunpack.c.l.b16 %v40
    %v324 = vunpack.c.l.b16 %v41
    %v325 = vunpack.c.l.b16 %v42
    %v326 = vunpack.c.l.b16 %v43
    %v327 = vunpack.c.l.b16 %v44
    %v328 = vunpack.c.l.b16 %v45
    %v329 = vunpack.c.l.b16 %v46
    %v330 = vunpack.c.l.b16 %v47
    %v331 = vunpack.c.l.b16 %v48
    %v332 = vunpack.c.l.b16 %v49
    %v333 = vunpack.c.l.b16 %v50
    %v334 = vunpack.c.l.b16 %v51
    %v335 = vunpack.c.l.b16 %v52
    %v336 = vunpack.c.l.b16 %v53
    %v337 = vunpack.c.l.b16 %v54
    %v338 = vunpack.c.l.b16 %v55
    %v339 = vunpack.c.l.b16 %v56
    %v340 = vunpack.c.l.b16 %v57
    %v341 = vunpack.c.l.b16 %v58
    %v342 = vunpack.c.l.b16 %v59
    %v343 = vunpack.c.l.b16 %v60
    %v344 = vunpack.c.l.b16 %v61
    %v345 = vunpack.c.l.b16 %v62
    %v346 = vunpack.c.l.b16 %v63
    %v347 = vunpack.c.l.b16 %v64
    %v348 = vunpack.c.l.b16 %v65
    %v349 = vunpack.c.l.b16 %v66
    %v350 = vunpack.c.l.b16 %v67
    %v351 = vunpack.c.l.b16 %v68
    %v352 = vunpack.c.l.b16 %v69
    %v353 = vunpack.c.l.b16 %v70
    %v354 = vunpack.c.l.b16 %v71
    %v355 = vunpack.c.l.b16 %v72
    %v356 = vunpack.c.l.b16 %v73
    %v357 = vunpack.c.l.b16 %v74
    %v358 = vunpack.c.l.b16 %v75
    %v359 = vunpack.c.l.b16 %v76
    %v360 = vunpack.c.l.b16 %v77
    %v361 = vunpack.c.l.b16 %v78
    %v362 = vunpack.c.l.b16 %v79
    %v363 = vunpack.c.l.b16 %v80
    %v364 = vunpack.c.l.b16 %v81
    %v365 = vunpack.c.l.b16 %v82
    %v366 = vunpack.c.l.b16 %v83
    %v367 = vunpack.c.l.b16 %v84
    %v368 = vunpack.c.l.b16 %v85
    %v369 = vunpack.c.l.b16 %v86
    %v370 = vunpack.c.l.b16 %v87
    %v371 = vunpack.c.l.b16 %v88
    %v372 = vpack.c.b16 %v309, %v308
    %v373 = vpack.c.b16 %v311, %v310
    %v374 = vpack.c.b16 %v313, %v312
    %v375 = vpack.c.b16 %v315, %v314
    %v376 = vpack.c.b16 %v317, %v316
    %v377 = vpack.c.b16 %v319, %v318
    %v378 = vpack.c.b16 %v321, %v320
    %v379 = vpack.c.b16 %v323, %v322
    %v380 = vpack.c.b16 %v325, %v324
    %v381 = vpack.c.b16 %v327, %v326
    %v382 = vpack.c.b16 %v329, %v328
    %v383 = vpack.c.b16 %v331, %v330
    %v384 = vpack.c.b16 %v333, %v332
    %v385 = vpack.c.b16 %v335, %v334
    %v386 = vpack.c.b16 %v337, %v336
    %v387 = vpack.c.b16 %v339, %v338
    %v388 = vpack.c.b16 %v341, %v340
    %v389 = vpack.c.b16 %v343, %v342
    %v390 = vpack.c.b16 %v345, %v344
    %v391 = vpack.c.b16 %v347, %v346
    %v392 = vpack.c.b16 %v349, %v348
    %v393 = vpack.c.b16 %v351, %v350
    %v394 = vpack.c.b16 %v353, %v352
    %v395 = vpack.c.b16 %v355, %v354
    %v396 = vpack.c.b16 %v357, %v356
    %v397 = vpack.c.b16 %v359, %v358
    %v398 = vpack.c.b16 %v361, %v360
    %v399 = vpack.c.b16 %v363, %v362
    %v400 = vpack.c.b16 %v365, %v364
    %v401 = vpack.c.b16 %v367, %v366
    %v402 = vpack.c.b16 %v369, %v368
    %v403 = vpack.c.b16 %v371, %v370
    %v532 = vunpack.c.l.b16 %v89
    %v533 = vunpack.c.h.b16 %v89
    %v534 = vunpack.c.l.b16 %v90
    %v535 = vunpack.c.h.b16 %v90
    %v536 = vunpack.c.l.b16 %v91
    %v537 = vunpack.c.h.b16 %v91
    %v538 = vunpack.c.l.b16 %v92
    %v539 = vunpack.c.h.b16 %v92
    %v540 = vunpack.c.l.b16 %v93
    %v541 = vunpack.c.h.b16 %v93
    %v542 = vunpack.c.l.b16 %v94
    %v543 = vunpack.c.l.b16 %v95
    %v544 = vunpack.c.h.b16 %v95
    %v545 = vunpack.c.l.b16 %v96
    %v546 = vunpack.c.h.b16 %v96
    %v547 = vunpack.c.l.b16 %v97
    %v548 = vunpack.c.h.b16 %v97
    %v549 = vunpack.c.l.b16 %v98
    %v550 = vunpack.c.h.b16 %v98
    %v551 = vunpack.c.l.b16 %v99
    %v552 = vunpack.c.h.b16 %v99
    %v553 = vunpack.c.l.b16 %v100
    %v554 = vunpack.c.l.b16 %v101
    %v555 = vunpack.c.h.b16 %v101
    %v556 = vunpack.c.l.b16 %v102
    %v557 = vunpack.c.h.b16 %v102
    %v558 = vunpack.c.l.b16 %v103
    %v559 = vunpack.c.h.b16 %v103
    %v560 = vunpack.c.l.b16 %v104
    %v561 = vunpack.c.h.b16 %v104
    %v562 = vunpack.c.l.b16 %v105
    %v563 = vunpack.c.h.b16 %v105
    %v564 = vunpack.c.l.b16 %v106
    %v565 = vunpack.c.l.b16 %v107
    %v566 = vunpack.c.h.b16 %v107
    %v567 = vunpack.c.l.b16 %v108
    %v568 = vunpack.c.h.b16 %v108
    %v569 = vunpack.c.l.b16 %v109
    %v570 = vunpack.c.h.b16 %v109
    %v571 = vunpack.c.l.b16 %v110
    %v572 = vunpack.c.h.b16 %v110
    %v573 = vunpack.c.l.b16 %v111
    %v574 = vunpack.c.h.b16 %v111
    %v575 = vunpack.c.l.b16 %v112
    %v576 = vunpack.c.l.b16 %v113
    %v577 = vunpack.c.h.b16 %v113
    %v578 = vunpack.c.l.b16 %v114
    %v579 = vunpack.c.h.b16 %v114
    %v580 = vunpack.c.l.b16 %v115
    %v581 = vunpack.c.h.b16 %v115
    %v582 = vunpack.c.l.b16 %v116
    %v583 = vunpack.c.h.b16 %v116
    %v584 = vunpack.c.l.b16 %v117
    %v585 = vunpack.c.h.b16 %v117
    %v586 = vunpack.c.l.b16 %v118
    %v587 = vunpack.c.l.b16 %v119
    %v588 = vunpack.c.h.b16 %v119
    %v589 = vunpack.c.l.b16 %v120
    %v590 = vunpack.c.h.b16 %v120
    %v591 = vunpack.c.l.b16 %v121
    %v592 = vunpack.c.h.b16 %v121
    %v593 = vunpack.c.l.b16 %v122
    %v594 = vunpack.c.h.b16 %v122
    %v595 = vunpack.c.l.b16 %v123
    %v596 = vunpack.c.h.b16 %v123
    %v597 = vunpack.c.l.b16 %v124
    %v598 = vunpack.c.l.b16 %v125
    %v599 = vunpack.c.h.b16 %v125
    %v600 = vunpack.c.l.b16 %v126
    %v601 = vunpack.c.h.b16 %v126
    %v602 = vunpack.c.l.b16 %v127
    %v603 = vunpack.c.h.b16 %v127
    %v604 = vunpack.c.l.b16 %v128
    %v605 = vunpack.c.h.b16 %v128
    %v606 = vunpack.c.l.b16 %v129
    %v607 = vunpack.c.h.b16 %v129
    %v608 = vunpack.c.l.b16 %v130
    %v609 = vunpack.c.l.b16 %v131
    %v610 = vunpack.c.h.b16 %v131
    %v611 = vunpack.c.l.b16 %v132
    %v612 = vunpack.c.h.b16 %v132
    %v613 = vunpack.c.l.b16 %v133
    %v614 = vunpack.c.h.b16 %v133
    %v615 = vunpack.c.l.b16 %v134
    %v616 = vunpack.c.h.b16 %v134
    %v617 = vunpack.c.l.b16 %v135
    %v618 = vunpack.c.h.b16 %v135
    %v619 = vunpack.c.l.b16 %v136
    %v620 = vunpack.c.l.b16 %v137
    %v621 = vunpack.c.h.b16 %v137
    %v622 = vunpack.c.l.b16 %v138
    %v623 = vunpack.c.h.b16 %v138
    %v624 = vunpack.c.l.b16 %v139
    %v625 = vunpack.c.h.b16 %v139
    %v626 = vunpack.c.l.b16 %v140
    %v627 = vunpack.c.h.b16 %v140
    %v628 = vunpack.c.l.b16 %v141
    %v629 = vunpack.c.h.b16 %v141
    %v630 = vunpack.c.l.b16 %v142
    %v631 = vunpack.c.l.b16 %v143
    %v632 = vunpack.c.h.b16 %v143
    %v633 = vunpack.c.l.b16 %v144
    %v634 = vunpack.c.h.b16 %v144
    %v635 = vunpack.c.l.b16 %v145
    %v636 = vunpack.c.h.b16 %v145
    %v637 = vunpack.c.l.b16 %v146
    %v638 = vunpack.c.h.b16 %v146
    %v639 = vunpack.c.l.b16 %v147
    %v640 = vunpack.c.h.b16 %v147
    %v641 = vunpack.c.l.b16 %v148
    %v642 = vunpack.c.l.b16 %v149
    %v643 = vunpack.c.h.b16 %v149
    %v644 = vunpack.c.l.b16 %v150
    %v645 = vunpack.c.h.b16 %v150
    %v646 = vunpack.c.l.b16 %v151
    %v647 = vunpack.c.h.b16 %v151
    %v648 = vunpack.c.l.b16 %v152
    %v649 = vunpack.c.h.b16 %v152
    %v650 = vunpack.c.l.b16 %v153
    %v651 = vunpack.c.h.b16 %v153
    %v652 = vunpack.c.l.b16 %v154
    %v653 = vunpack.c.l.b16 %v155
    %v654 = vunpack.c.h.b16 %v155
    %v655 = vunpack.c.l.b16 %v156
    %v656 = vunpack.c.h.b16 %v156
    %v657 = vunpack.c.l.b16 %v157
    %v658 = vunpack.c.h.b16 %v157
    %v659 = vunpack.c.l.b16 %v158
    %v660 = vunpack.c.h.b16 %v158
    %v661 = vunpack.c.l.b16 %v159
    %v662 = vunpack.c.h.b16 %v159
    %v663 = vunpack.c.l.b16 %v160
    %v664 = vunpack.c.l.b16 %v161
    %v665 = vunpack.c.h.b16 %v161
    %v666 = vunpack.c.l.b16 %v162
    %v667 = vunpack.c.h.b16 %v162
    %v668 = vunpack.c.l.b16 %v163
    %v669 = vunpack.c.h.b16 %v163
    %v670 = vunpack.c.l.b16 %v164
    %v671 = vunpack.c.h.b16 %v164
    %v672 = vunpack.c.l.b16 %v165
    %v673 = vunpack.c.h.b16 %v165
    %v674 = vunpack.c.l.b16 %v166
    %v675 = vunpack.c.l.b16 %v167
    %v676 = vunpack.c.h.b16 %v167
    %v677 = vunpack.c.l.b16 %v168
    %v678 = vunpack.c.h.b16 %v168
    %v679 = vunpack.c.l.b16 %v169
    %v680 = vunpack.c.h.b16 %v169
    %v681 = vunpack.c.l.b16 %v170
    %v682 = vunpack.c.h.b16 %v170
    %v683 = vunpack.c.l.b16 %v171
    %v684 = vunpack.c.h.b16 %v171
    %v685 = vunpack.c.l.b16 %v172
    %v686 = vunpack.c.l.b16 %v173
    %v687 = vunpack.c.h.b16 %v173
    %v688 = vunpack.c.l.b16 %v174
    %v689 = vunpack.c.h.b16 %v174
    %v690 = vunpack.c.l.b16 %v175
    %v691 = vunpack.c.h.b16 %v175
    %v692 = vunpack.c.l.b16 %v176
    %v693 = vunpack.c.h.b16 %v176
    %v694 = vunpack.c.l.b16 %v177
    %v695 = vunpack.c.h.b16 %v177
    %v696 = vunpack.c.l.b16 %v178
    %v697 = vunpack.c.l.b16 %v179
    %v698 = vunpack.c.h.b16 %v179
    %v699 = vunpack.c.l.b16 %v180
    %v700 = vunpack.c.h.b16 %v180
    %v701 = vunpack.c.l.b16 %v181
    %v702 = vunpack.c.h.b16 %v181
    %v703 = vunpack.c.l.b16 %v182
    %v704 = vunpack.c.h.b16 %v182
    %v705 = vunpack.c.l.b16 %v183
    %v706 = vunpack.c.h.b16 %v183
    %v707 = vunpack.c.l.b16 %v184
    %v708 = vpack.c.b16 %v543, %v532
    %v709 = vpack.c.b16 %v544, %v533
    %v710 = vpack.c.b16 %v545, %v534
    %v711 = vpack.c.b16 %v546, %v535
    %v712 = vpack.c.b16 %v547, %v536
    %v713 = vpack.c.b16 %v548, %v537
    %v714 = vpack.c.b16 %v549, %v538
    %v715 = vpack.c.b16 %v550, %v539
    %v716 = vpack.c.b16 %v551, %v540
    %v717 = vpack.c.b16 %v552, %v541
    %v718 = vpack.c.b16 %v553, %v542
    %v719 = vpack.c.b16 %v565, %v554
    %v720 = vpack.c.b16 %v566, %v555
    %v721 = vpack.c.b16 %v567, %v556
    %v722 = vpack.c.b16 %v568, %v557
    %v723 = vpack.c.b16 %v569, %v558
    %v724 = vpack.c.b16 %v570, %v559
    %v725 = vpack.c.b16 %v571, %v560
    %v726 = vpack.c.b16 %v572, %v561
    %v727 = vpack.c.b16 %v573, %v562
    %v728 = vpack.c.b16 %v574, %v563
    %v729 = vpack.c.b16 %v575, %v564
    %v730 = vpack.c.b16 %v587, %v576
    %v731 = vpack.c.b16 %v588, %v577
    %v732 = vpack.c.b16 %v589, %v578
    %v733 = vpack.c.b16 %v590, %v579
    %v734 = vpack.c.b16 %v591, %v580
    %v735 = vpack.c.b16 %v592, %v581
    %v736 = vpack.c.b16 %v593, %v582
    %v737 = vpack.c.b16 %v594, %v583
    %v738 = vpack.c.b16 %v595, %v584
    %v739 = vpack.c.b16 %v596, %v585
    %v740 = vpack.c.b16 %v597, %v586
    %v741 = vpack.c.b16 %v609, %v598
    %v742 = vpack.c.b16 %v610, %v599
    %v743 = vpack.c.b16 %v611, %v600
    %v744 = vpack.c.b16 %v612, %v601
    %v745 = vpack.c.b16 %v613, %v602
    %v746 = vpack.c.b16 %v614, %v603
    %v747 = vpack.c.b16 %v615, %v604
    %v748 = vpack.c.b16 %v616, %v605
    %v749 = vpack.c.b16 %v617, %v606
    %v750 = vpack.c.b16 %v618, %v607
    %v751 = vpack.c.b16 %v619, %v608
    %v752 = vpack.c.b16 %v631, %v620
    %v753 = vpack.c.b16 %v632, %v621
    %v754 = vpack.c.b16 %v633, %v622
    %v755 = vpack.c.b16 %v634, %v623
    %v756 = vpack.c.b16 %v635, %v624
    %v757 = vpack.c.b16 %v636, %v625
    %v758 = vpack.c.b16 %v637, %v626
    %v759 = vpack.c.b16 %v638, %v627
    %v760 = vpack.c.b16 %v639, %v628
    %v761 = vpack.c.b16 %v640, %v629
    %v762 = vpack.c.b16 %v641, %v630
    %v763 = vpack.c.b16 %v653, %v642
    %v764 = vpack.c.b16 %v654, %v643
    %v765 = vpack.c.b16 %v655, %v644
    %v766 = vpack.c.b16 %v656, %v645
    %v767 = vpack.c.b16 %v657, %v646
    %v768 = vpack.c.b16 %v658, %v647
    %v769 = vpack.c.b16 %v659, %v648
    %v770 = vpack.c.b16 %v660, %v649
    %v771 = vpack.c.b16 %v661, %v650
    %v772 = vpack.c.b16 %v662, %v651
    %v773 = vpack.c.b16 %v663, %v652
    %v774 = vpack.c.b16 %v675, %v664
    %v775 = vpack.c.b16 %v676, %v665
    %v776 = vpack.c.b16 %v677, %v666
    %v777 = vpack.c.b16 %v678, %v667
    %v778 = vpack.c.b16 %v679, %v668
    %v779 = vpack.c.b16 %v680, %v669
    %v780 = vpack.c.b16 %v681, %v670
    %v781 = vpack.c.b16 %v682, %v671
    %v782 = vpack.c.b16 %v683, %v672
    %v783 = vpack.c.b16 %v684, %v673
    %v784 = vpack.c.b16 %v685, %v674
    %v785 = vpack.c.b16 %v697, %v686
    %v786 = vpack.c.b16 %v698, %v687
    %v787 = vpack.c.b16 %v699, %v688
    %v788 = vpack.c.b16 %v700, %v689
    %v789 = vpack.c.b16 %v701, %v690
    %v790 = vpack.c.b16 %v702, %v691
    %v791 = vpack.c.b16 %v703, %v692
    %v792 = vpack.c.b16 %v704, %v693
    %v793 = vpack.c.b16 %v705, %v694
    %v794 = vpack.c.b16 %v706, %v695
    %v795 = vpack.c.b16 %v707, %v696
    %884 = vmatprep.subr.bf16.mxu0 %v709
    %885 = vmatpush1.bf16.msra.mxu0 %v708
    %886 = vmatprep.subr.bf16.mxu0 %v720
    %887 = vmatpush1.bf16.msra.mxu0 %v719
    %888 = vmatprep.subr.bf16.mxu0 %v731
    %889 = vmatpush1.bf16.msra.mxu0 %v730
    %890 = vmatprep.subr.bf16.mxu0 %v742
    %891 = vmatpush1.bf16.msra.mxu0 %v741
    %892 = vmatprep.subr.bf16.mxu0 %v753
    %893 = vmatpush1.bf16.msra.mxu0 %v752
    %894 = vmatprep.subr.bf16.mxu0 %v764
    %895 = vmatpush1.bf16.msra.mxu0 %v763
    %896 = vmatprep.subr.bf16.mxu0 %v775
    %897 = vmatpush1.bf16.msra.mxu0 %v774
    %898 = vmatprep.subr.bf16.mxu0 %v786
    %899 = vmatpush1.bf16.msra.mxu0 %v785
    %900 = vmatprep.subr.bf16.mxu0 0
    %901 = vmatpush1.bf16.msra.mxu0 0
    %902 = vmatprep.subr.bf16.mxu0 0
    %903 = vmatpush1.bf16.msra.mxu0 0
    %904 = vmatprep.subr.bf16.mxu0 0
    %905 = vmatpush1.bf16.msra.mxu0 0
    %906 = vmatprep.subr.bf16.mxu0 0
    %907 = vmatpush1.bf16.msra.mxu0 0
    %908 = vmatprep.subr.bf16.mxu0 0
    %909 = vmatpush1.bf16.msra.mxu0 0
    %910 = vmatprep.subr.bf16.mxu0 0
    %911 = vmatpush1.bf16.msra.mxu0 0
    %912 = vmatprep.subr.bf16.mxu0 0
    %913 = vmatpush1.bf16.msra.mxu0 0
    %914 = vmatprep.subr.bf16.mxu0 0
    %915 = vmatpush1.bf16.msra.mxu0 0
    %916 = vmatprep.mubr.bf16.mxu0 0
    %917 = vmatmul.mubr.bf16.gmra.mrb[0].mxu0 %v372
    %v918 = vpop.f32.mrb[0].mxu0
    %v919 = vadd.f32 %v192, %v918
    %v920 = vpop.f32.mrb[0].mxu0
    %v921 = vadd.f32 %v196, %v920
    %v922 = vpop.f32.mrb[0].mxu0
    %v923 = vadd.f32 %v192, %v922
    %v924 = vpop.f32.mrb[0].mxu0
    %v925 = vadd.f32 %v196, %v924
    %926 = vmatprep.mubr.bf16.mxu0 0
    %927 = vmatmul.mubr.bf16.gmra.mrb[0].mxu0 %v373
    %v928 = vpop.f32.mrb[0].mxu0
    %v929 = vadd.f32 %v192, %v928
    %v930 = vpop.f32.mrb[0].mxu0
    %v931 = vadd.f32 %v196, %v930
    %v932 = vpop.f32.mrb[0].mxu0
    %v933 = vadd.f32 %v192, %v932
    %v934 = vpop.f32.mrb[0].mxu0
    %v935 = vadd.f32 %v196, %v934
    %936 = vmatprep.mubr.bf16.mxu0 0
    %937 = vmatmul.mubr.bf16.gmra.mrb[0].mxu0 %v374
    %v938 = vpop.f32.mrb[0].mxu0
    %v939 = vadd.f32 %v192, %v938
    %v940 = vpop.f32.mrb[0].mxu0
    %v941 = vadd.f32 %v196, %v940
    %v942 = vpop.f32.mrb[0].mxu0
    %v943 = vadd.f32 %v192, %v942
    %v944 = vpop.f32.mrb[0].mxu0
    %v945 = vadd.f32 %v196, %v944
    %946 = vmatprep.mubr.bf16.mxu0 0
    %947 = vmatmul.mubr.bf16.gmra.mrb[0].mxu0 %v375
    %v948 = vpop.f32.mrb[0].mxu0
    %v949 = vadd.f32 %v192, %v948
    %v950 = vpop.f32.mrb[0].mxu0
    %v951 = vadd.f32 %v196, %v950
    %v952 = vpop.f32.mrb[0].mxu0
    %v953 = vadd.f32 %v192, %v952
    %v954 = vpop.f32.mrb[0].mxu0
    %v955 = vadd.f32 %v196, %v954
    %956 = vmatprep.mubr.bf16.mxu0 0
    %957 = vmatmul.mubr.bf16.gmra.mrb[0].mxu0 %v376
    %v958 = vpop.f32.mrb[0].mxu0
    %v959 = vadd.f32 %v192, %v958
    %v960 = vpop.f32.mrb[0].mxu0
    %v961 = vadd.f32 %v196, %v960
    %v962 = vpop.f32.mrb[0].mxu0
    %v963 = vadd.f32 %v192, %v962
    %v964 = vpop.f32.mrb[0].mxu0
    %v965 = vadd.f32 %v196, %v964
    %966 = vmatprep.mubr.bf16.mxu0 0
    %967 = vmatmul.mubr.bf16.gmra.mrb[0].mxu0 %v377
    %v968 = vpop.f32.mrb[0].mxu0
    %v969 = vadd.f32 %v192, %v968
    %v970 = vpop.f32.mrb[0].mxu0
    %v971 = vadd.f32 %v196, %v970
    %v972 = vpop.f32.mrb[0].mxu0
    %v973 = vadd.f32 %v192, %v972
    %v974 = vpop.f32.mrb[0].mxu0
    %v975 = vadd.f32 %v196, %v974
    %976 = vmatprep.mubr.bf16.mxu0 0
    %977 = vmatmul.mubr.bf16.gmra.mrb[0].mxu0 %v378
    %v978 = vpop.f32.mrb[0].mxu0
    %v979 = vadd.f32 %v192, %v978
    %v980 = vpop.f32.mrb[0].mxu0
    %v981 = vadd.f32 %v196, %v980
    %v982 = vpop.f32.mrb[0].mxu0
    %v983 = vadd.f32 %v192, %v982
    %v984 = vpop.f32.mrb[0].mxu0
    %v985 = vadd.f32 %v196, %v984
    %986 = vmatprep.mubr.bf16.mxu0 0
    %987 = vmatmul.mubr.bf16.gmra.mrb[0].mxu0 %v379
    %v988 = vpop.f32.mrb[0].mxu0
    %v989 = vadd.f32 %v192, %v988
    %v990 = vpop.f32.mrb[0].mxu0
    %v991 = vadd.f32 %v196, %v990
    %v992 = vpop.f32.mrb[0].mxu0
    %v993 = vadd.f32 %v192, %v992
    %v994 = vpop.f32.mrb[0].mxu0
    %v995 = vadd.f32 %v196, %v994
    %996 = vmatprep.mubr.bf16.mxu0 0
    %997 = vmatmul.mubr.bf16.gmra.mrb[0].mxu0 %v380
    %v998 = vpop.f32.mrb[0].mxu0
    %v999 = vadd.f32 %v192, %v998
    %v1000 = vpop.f32.mrb[0].mxu0
    %v1001 = vadd.f32 %v196, %v1000
    %v1002 = vpop.f32.mrb[0].mxu0
    %v1003 = vadd.f32 %v192, %v1002
    %v1004 = vpop.f32.mrb[0].mxu0
    %v1005 = vadd.f32 %v196, %v1004
    %1006 = vmatprep.mubr.bf16.mxu0 0
    %1007 = vmatmul.mubr.bf16.gmra.mrb[0].mxu0 %v381
    %v1008 = vpop.f32.mrb[0].mxu0
    %v1009 = vadd.f32 %v192, %v1008
    %v1010 = vpop.f32.mrb[0].mxu0
    %v1011 = vadd.f32 %v196, %v1010
    %v1012 = vpop.f32.mrb[0].mxu0
    %v1013 = vadd.f32 %v192, %v1012
    %v1014 = vpop.f32.mrb[0].mxu0
    %v1015 = vadd.f32 %v196, %v1014
    %1016 = vmatprep.mubr.bf16.mxu0 0
    %1017 = vmatmul.mubr.bf16.gmra.mrb[0].mxu0 %v382
    %v1018 = vpop.f32.mrb[0].mxu0
    %v1019 = vadd.f32 %v192, %v1018
    %v1020 = vpop.f32.mrb[0].mxu0
    %v1021 = vadd.f32 %v196, %v1020
    %v1022 = vpop.f32.mrb[0].mxu0
    %v1023 = vadd.f32 %v192, %v1022
    %v1024 = vpop.f32.mrb[0].mxu0
    %v1025 = vadd.f32 %v196, %v1024
    %1026 = vmatprep.mubr.bf16.mxu0 0
    %1027 = vmatmul.mubr.bf16.gmra.mrb[0].mxu0 %v383
    %v1028 = vpop.f32.mrb[0].mxu0
    %v1029 = vadd.f32 %v192, %v1028
    %v1030 = vpop.f32.mrb[0].mxu0
    %v1031 = vadd.f32 %v196, %v1030
    %v1032 = vpop.f32.mrb[0].mxu0
    %v1033 = vadd.f32 %v192, %v1032
    %v1034 = vpop.f32.mrb[0].mxu0
    %v1035 = vadd.f32 %v196, %v1034
    %1036 = vmatprep.mubr.bf16.mxu0 0
    %1037 = vmatmul.mubr.bf16.gmra.mrb[0].mxu0 %v384
    %v1038 = vpop.f32.mrb[0].mxu0
    %v1039 = vadd.f32 %v192, %v1038
    %v1040 = vpop.f32.mrb[0].mxu0
    %v1041 = vadd.f32 %v196, %v1040
    %v1042 = vpop.f32.mrb[0].mxu0
    %v1043 = vadd.f32 %v192, %v1042
    %v1044 = vpop.f32.mrb[0].mxu0
    %v1045 = vadd.f32 %v196, %v1044
    %1046 = vmatprep.mubr.bf16.mxu0 0
    %1047 = vmatmul.mubr.bf16.gmra.mrb[0].mxu0 %v385
    %v1048 = vpop.f32.mrb[0].mxu0
    %v1049 = vadd.f32 %v192, %v1048
    %v1050 = vpop.f32.mrb[0].mxu0
    %v1051 = vadd.f32 %v196, %v1050
    %v1052 = vpop.f32.mrb[0].mxu0
    %v1053 = vadd.f32 %v192, %v1052
    %v1054 = vpop.f32.mrb[0].mxu0
    %v1055 = vadd.f32 %v196, %v1054
    %1056 = vmatprep.mubr.bf16.mxu0 0
    %1057 = vmatmul.mubr.bf16.gmra.mrb[0].mxu0 %v386
    %v1058 = vpop.f32.mrb[0].mxu0
    %v1059 = vadd.f32 %v192, %v1058
    %v1060 = vpop.f32.mrb[0].mxu0
    %v1061 = vadd.f32 %v196, %v1060
    %v1062 = vpop.f32.mrb[0].mxu0
    %v1063 = vadd.f32 %v192, %v1062
    %v1064 = vpop.f32.mrb[0].mxu0
    %v1065 = vadd.f32 %v196, %v1064
    %1066 = vmatprep.mubr.bf16.mxu0 0
    %1067 = vmatmul.mubr.bf16.gmra.mrb[0].mxu0 %v387
    %v1068 = vpop.f32.mrb[0].mxu0
    %v1069 = vadd.f32 %v192, %v1068
    %v1070 = vpop.f32.mrb[0].mxu0
    %v1071 = vadd.f32 %v196, %v1070
    %v1072 = vpop.f32.mrb[0].mxu0
    %v1073 = vadd.f32 %v192, %v1072
    %v1074 = vpop.f32.mrb[0].mxu0
    %v1075 = vadd.f32 %v196, %v1074
    %1076 = vmatprep.mubr.bf16.mxu0 0
    %1077 = vmatmul.mubr.bf16.gmra.mrb[0].mxu0 %v388
    %v1078 = vpop.f32.mrb[0].mxu0
    %v1079 = vadd.f32 %v192, %v1078
    %v1080 = vpop.f32.mrb[0].mxu0
    %v1081 = vadd.f32 %v196, %v1080
    %v1082 = vpop.f32.mrb[0].mxu0
    %v1083 = vadd.f32 %v192, %v1082
    %v1084 = vpop.f32.mrb[0].mxu0
    %v1085 = vadd.f32 %v196, %v1084
    %1086 = vmatprep.mubr.bf16.mxu0 0
    %1087 = vmatmul.mubr.bf16.gmra.mrb[0].mxu0 %v389
    %v1088 = vpop.f32.mrb[0].mxu0
    %v1089 = vadd.f32 %v192, %v1088
    %v1090 = vpop.f32.mrb[0].mxu0
    %v1091 = vadd.f32 %v196, %v1090
    %v1092 = vpop.f32.mrb[0].mxu0
    %v1093 = vadd.f32 %v192, %v1092
    %v1094 = vpop.f32.mrb[0].mxu0
    %v1095 = vadd.f32 %v196, %v1094
    %1096 = vmatprep.mubr.bf16.mxu0 0
    %1097 = vmatmul.mubr.bf16.gmra.mrb[0].mxu0 %v390
    %v1098 = vpop.f32.mrb[0].mxu0
    %v1099 = vadd.f32 %v192, %v1098
    %v1100 = vpop.f32.mrb[0].mxu0
    %v1101 = vadd.f32 %v196, %v1100
    %v1102 = vpop.f32.mrb[0].mxu0
    %v1103 = vadd.f32 %v192, %v1102
    %v1104 = vpop.f32.mrb[0].mxu0
    %v1105 = vadd.f32 %v196, %v1104
    %1106 = vmatprep.mubr.bf16.mxu0 0
    %1107 = vmatmul.mubr.bf16.gmra.mrb[0].mxu0 %v391
    %v1108 = vpop.f32.mrb[0].mxu0
    %v1109 = vadd.f32 %v192, %v1108
    %v1110 = vpop.f32.mrb[0].mxu0
    %v1111 = vadd.f32 %v196, %v1110
    %v1112 = vpop.f32.mrb[0].mxu0
    %v1113 = vadd.f32 %v192, %v1112
    %v1114 = vpop.f32.mrb[0].mxu0
    %v1115 = vadd.f32 %v196, %v1114
    %1116 = vmatprep.mubr.bf16.mxu0 0
    %1117 = vmatmul.mubr.bf16.gmra.mrb[0].mxu0 %v392
    %v1118 = vpop.f32.mrb[0].mxu0
    %v1119 = vadd.f32 %v192, %v1118
    %v1120 = vpop.f32.mrb[0].mxu0
    %v1121 = vadd.f32 %v196, %v1120
    %v1122 = vpop.f32.mrb[0].mxu0
    %v1123 = vadd.f32 %v192, %v1122
    %v1124 = vpop.f32.mrb[0].mxu0
    %v1125 = vadd.f32 %v196, %v1124
    %1126 = vmatprep.mubr.bf16.mxu0 0
    %1127 = vmatmul.mubr.bf16.gmra.mrb[0].mxu0 %v393
    %v1128 = vpop.f32.mrb[0].mxu0
    %v1129 = vadd.f32 %v192, %v1128
    %v1130 = vpop.f32.mrb[0].mxu0
    %v1131 = vadd.f32 %v196, %v1130
    %v1132 = vpop.f32.mrb[0].mxu0
    %v1133 = vadd.f32 %v192, %v1132
    %v1134 = vpop.f32.mrb[0].mxu0
    %v1135 = vadd.f32 %v196, %v1134
    %1136 = vmatprep.mubr.bf16.mxu0 0
    %1137 = vmatmul.mubr.bf16.gmra.mrb[0].mxu0 %v394
    %v1138 = vpop.f32.mrb[0].mxu0
    %v1139 = vadd.f32 %v192, %v1138
    %v1140 = vpop.f32.mrb[0].mxu0
    %v1141 = vadd.f32 %v196, %v1140
    %v1142 = vpop.f32.mrb[0].mxu0
    %v1143 = vadd.f32 %v192, %v1142
    %v1144 = vpop.f32.mrb[0].mxu0
    %v1145 = vadd.f32 %v196, %v1144
    %1146 = vmatprep.mubr.bf16.mxu0 0
    %1147 = vmatmul.mubr.bf16.gmra.mrb[0].mxu0 %v395
    %v1148 = vpop.f32.mrb[0].mxu0
    %v1149 = vadd.f32 %v192, %v1148
    %v1150 = vpop.f32.mrb[0].mxu0
    %v1151 = vadd.f32 %v196, %v1150
    %v1152 = vpop.f32.mrb[0].mxu0
    %v1153 = vadd.f32 %v192, %v1152
    %v1154 = vpop.f32.mrb[0].mxu0
    %v1155 = vadd.f32 %v196, %v1154
    %1156 = vmatprep.mubr.bf16.mxu0 0
    %1157 = vmatmul.mubr.bf16.gmra.mrb[0].mxu0 %v396
    %v1158 = vpop.f32.mrb[0].mxu0
    %v1159 = vadd.f32 %v192, %v1158
    %v1160 = vpop.f32.mrb[0].mxu0
    %v1161 = vadd.f32 %v196, %v1160
    %v1162 = vpop.f32.mrb[0].mxu0
    %v1163 = vadd.f32 %v192, %v1162
    %v1164 = vpop.f32.mrb[0].mxu0
    %v1165 = vadd.f32 %v196, %v1164
    %1166 = vmatprep.mubr.bf16.mxu0 0
    %1167 = vmatmul.mubr.bf16.gmra.mrb[0].mxu0 %v397
    %v1168 = vpop.f32.mrb[0].mxu0
    %v1169 = vadd.f32 %v192, %v1168
    %v1170 = vpop.f32.mrb[0].mxu0
    %v1171 = vadd.f32 %v196, %v1170
    %v1172 = vpop.f32.mrb[0].mxu0
    %v1173 = vadd.f32 %v192, %v1172
    %v1174 = vpop.f32.mrb[0].mxu0
    %v1175 = vadd.f32 %v196, %v1174
    %1176 = vmatprep.mubr.bf16.mxu0 0
    %1177 = vmatmul.mubr.bf16.gmra.mrb[0].mxu0 %v398
    %v1178 = vpop.f32.mrb[0].mxu0
    %v1179 = vadd.f32 %v192, %v1178
    %v1180 = vpop.f32.mrb[0].mxu0
    %v1181 = vadd.f32 %v196, %v1180
    %v1182 = vpop.f32.mrb[0].mxu0
    %v1183 = vadd.f32 %v192, %v1182
    %v1184 = vpop.f32.mrb[0].mxu0
    %v1185 = vadd.f32 %v196, %v1184
    %1186 = vmatprep.mubr.bf16.mxu0 0
    %1187 = vmatmul.mubr.bf16.gmra.mrb[0].mxu0 %v399
    %v1188 = vpop.f32.mrb[0].mxu0
    %v1189 = vadd.f32 %v192, %v1188
    %v1190 = vpop.f32.mrb[0].mxu0
    %v1191 = vadd.f32 %v196, %v1190
    %v1192 = vpop.f32.mrb[0].mxu0
    %v1193 = vadd.f32 %v192, %v1192
    %v1194 = vpop.f32.mrb[0].mxu0
    %v1195 = vadd.f32 %v196, %v1194
    %1196 = vmatprep.mubr.bf16.mxu0 0
    %1197 = vmatmul.mubr.bf16.gmra.mrb[0].mxu0 %v400
    %v1198 = vpop.f32.mrb[0].mxu0
    %v1199 = vadd.f32 %v192, %v1198
    %v1200 = vpop.f32.mrb[0].mxu0
    %v1201 = vadd.f32 %v196, %v1200
    %v1202 = vpop.f32.mrb[0].mxu0
    %v1203 = vadd.f32 %v192, %v1202
    %v1204 = vpop.f32.mrb[0].mxu0
    %v1205 = vadd.f32 %v196, %v1204
    %1206 = vmatprep.mubr.bf16.mxu0 0
    %1207 = vmatmul.mubr.bf16.gmra.mrb[0].mxu0 %v401
    %v1208 = vpop.f32.mrb[0].mxu0
    %v1209 = vadd.f32 %v192, %v1208
    %v1210 = vpop.f32.mrb[0].mxu0
    %v1211 = vadd.f32 %v196, %v1210
    %v1212 = vpop.f32.mrb[0].mxu0
    %v1213 = vadd.f32 %v192, %v1212
    %v1214 = vpop.f32.mrb[0].mxu0
    %v1215 = vadd.f32 %v196, %v1214
    %1216 = vmatprep.mubr.bf16.mxu0 0
    %1217 = vmatmul.mubr.bf16.gmra.mrb[0].mxu0 %v402
    %v1218 = vpop.f32.mrb[0].mxu0
    %v1219 = vadd.f32 %v192, %v1218
    %v1220 = vpop.f32.mrb[0].mxu0
    %v1221 = vadd.f32 %v196, %v1220
    %v1222 = vpop.f32.mrb[0].mxu0
    %v1223 = vadd.f32 %v192, %v1222
    %v1224 = vpop.f32.mrb[0].mxu0
    %v1225 = vadd.f32 %v196, %v1224
    %1226 = vmatprep.mubr.bf16.mxu0 0
    %1227 = vmatmul.mubr.bf16.gmra.mrb[0].mxu0 %v403
    %v1228 = vpop.f32.mrb[0].mxu0
    %v1229 = vadd.f32 %v192, %v1228
    %v1230 = vpop.f32.mrb[0].mxu0
    %v1231 = vadd.f32 %v196, %v1230
    %v1232 = vpop.f32.mrb[0].mxu0
    %v1233 = vadd.f32 %v192, %v1232
    %v1234 = vpop.f32.mrb[0].mxu0
    %v1235 = vadd.f32 %v196, %v1234
    %1236 = vdwg.mxu0
    %1237 = vmatprep.subr.bf16.mxu0 %v711
    %1238 = vmatpush1.bf16.msra.mxu0 %v710
    %1239 = vmatprep.subr.bf16.mxu0 %v722
    %1240 = vmatpush1.bf16.msra.mxu0 %v721
    %1241 = vmatprep.subr.bf16.mxu0 %v733
    %1242 = vmatpush1.bf16.msra.mxu0 %v732
    %1243 = vmatprep.subr.bf16.mxu0 %v744
    %1244 = vmatpush1.bf16.msra.mxu0 %v743
    %1245 = vmatprep.subr.bf16.mxu0 %v755
    %1246 = vmatpush1.bf16.msra.mxu0 %v754
    %1247 = vmatprep.subr.bf16.mxu0 %v766
    %1248 = vmatpush1.bf16.msra.mxu0 %v765
    %1249 = vmatprep.subr.bf16.mxu0 %v777
    %1250 = vmatpush1.bf16.msra.mxu0 %v776
    %1251 = vmatprep.subr.bf16.mxu0 %v788
    %1252 = vmatpush1.bf16.msra.mxu0 %v787
    %1253 = vmatprep.subr.bf16.mxu0 0
    %1254 = vmatpush1.bf16.msra.mxu0 0
    %1255 = vmatprep.subr.bf16.mxu0 0
    %1256 = vmatpush1.bf16.msra.mxu0 0
    %1257 = vmatprep.subr.bf16.mxu0 0
    %1258 = vmatpush1.bf16.msra.mxu0 0
    %1259 = vmatprep.subr.bf16.mxu0 0
    %1260 = vmatpush1.bf16.msra.mxu0 0
    %1261 = vmatprep.subr.bf16.mxu0 0
    %1262 = vmatpush1.bf16.msra.mxu0 0
    %1263 = vmatprep.subr.bf16.mxu0 0
    %1264 = vmatpush1.bf16.msra.mxu0 0
    %1265 = vmatprep.subr.bf16.mxu0 0
    %1266 = vmatpush1.bf16.msra.mxu0 0
    %1267 = vmatprep.subr.bf16.mxu0 0
    %1268 = vmatpush1.bf16.msra.mxu0 0
    %1269 = vmatprep.mubr.bf16.mxu0 0
    %1270 = vmatmul.mubr.bf16.gmra.mrb[0].mxu0 %v372
    %v1271 = vpop.f32.mrb[0].mxu0
    %v1272 = vadd.f32 %v200, %v1271
    %v1273 = vpop.f32.mrb[0].mxu0
    %v1274 = vadd.f32 %v204, %v1273
    %v1275 = vpop.f32.mrb[0].mxu0
    %v1276 = vadd.f32 %v200, %v1275
    %v1277 = vpop.f32.mrb[0].mxu0
    %v1278 = vadd.f32 %v204, %v1277
    %1279 = vmatprep.mubr.bf16.mxu0 0
    %1280 = vmatmul.mubr.bf16.gmra.mrb[0].mxu0 %v373
    %v1281 = vpop.f32.mrb[0].mxu0
    %v1282 = vadd.f32 %v200, %v1281
    %v1283 = vpop.f32.mrb[0].mxu0
    %v1284 = vadd.f32 %v204, %v1283
    %v1285 = vpop.f32.mrb[0].mxu0
    %v1286 = vadd.f32 %v200, %v1285
    %v1287 = vpop.f32.mrb[0].mxu0
    %v1288 = vadd.f32 %v204, %v1287
    %1289 = vmatprep.mubr.bf16.mxu0 0
    %1290 = vmatmul.mubr.bf16.gmra.mrb[0].mxu0 %v374
    %v1291 = vpop.f32.mrb[0].mxu0
    %v1292 = vadd.f32 %v200, %v1291
    %v1293 = vpop.f32.mrb[0].mxu0
    %v1294 = vadd.f32 %v204, %v1293
    %v1295 = vpop.f32.mrb[0].mxu0
    %v1296 = vadd.f32 %v200, %v1295
    %v1297 = vpop.f32.mrb[0].mxu0
    %v1298 = vadd.f32 %v204, %v1297
    %1299 = vmatprep.mubr.bf16.mxu0 0
    %1300 = vmatmul.mubr.bf16.gmra.mrb[0].mxu0 %v375
    %v1301 = vpop.f32.mrb[0].mxu0
    %v1302 = vadd.f32 %v200, %v1301
    %v1303 = vpop.f32.mrb[0].mxu0
    %v1304 = vadd.f32 %v204, %v1303
    %v1305 = vpop.f32.mrb[0].mxu0
    %v1306 = vadd.f32 %v200, %v1305
    %v1307 = vpop.f32.mrb[0].mxu0
    %v1308 = vadd.f32 %v204, %v1307
    %1309 = vmatprep.mubr.bf16.mxu0 0
    %1310 = vmatmul.mubr.bf16.gmra.mrb[0].mxu0 %v376
    %v1311 = vpop.f32.mrb[0].mxu0
    %v1312 = vadd.f32 %v200, %v1311
    %v1313 = vpop.f32.mrb[0].mxu0
    %v1314 = vadd.f32 %v204, %v1313
    %v1315 = vpop.f32.mrb[0].mxu0
    %v1316 = vadd.f32 %v200, %v1315
    %v1317 = vpop.f32.mrb[0].mxu0
    %v1318 = vadd.f32 %v204, %v1317
    %1319 = vmatprep.mubr.bf16.mxu0 0
    %1320 = vmatmul.mubr.bf16.gmra.mrb[0].mxu0 %v377
    %v1321 = vpop.f32.mrb[0].mxu0
    %v1322 = vadd.f32 %v200, %v1321
    %v1323 = vpop.f32.mrb[0].mxu0
    %v1324 = vadd.f32 %v204, %v1323
    %v1325 = vpop.f32.mrb[0].mxu0
    %v1326 = vadd.f32 %v200, %v1325
    %v1327 = vpop.f32.mrb[0].mxu0
    %v1328 = vadd.f32 %v204, %v1327
    %1329 = vmatprep.mubr.bf16.mxu0 0
    %1330 = vmatmul.mubr.bf16.gmra.mrb[0].mxu0 %v378
    %v1331 = vpop.f32.mrb[0].mxu0
    %v1332 = vadd.f32 %v200, %v1331
    %v1333 = vpop.f32.mrb[0].mxu0
    %v1334 = vadd.f32 %v204, %v1333
    %v1335 = vpop.f32.mrb[0].mxu0
    %v1336 = vadd.f32 %v200, %v1335
    %v1337 = vpop.f32.mrb[0].mxu0
    %v1338 = vadd.f32 %v204, %v1337
    %1339 = vmatprep.mubr.bf16.mxu0 0
    %1340 = vmatmul.mubr.bf16.gmra.mrb[0].mxu0 %v379
    %v1341 = vpop.f32.mrb[0].mxu0
    %v1342 = vadd.f32 %v200, %v1341
    %v1343 = vpop.f32.mrb[0].mxu0
    %v1344 = vadd.f32 %v204, %v1343
    %v1345 = vpop.f32.mrb[0].mxu0
    %v1346 = vadd.f32 %v200, %v1345
    %v1347 = vpop.f32.mrb[0].mxu0
    %v1348 = vadd.f32 %v204, %v1347
    %1349 = vmatprep.mubr.bf16.mxu0 0
    %1350 = vmatmul.mubr.bf16.gmra.mrb[0].mxu0 %v380
    %v1351 = vpop.f32.mrb[0].mxu0
    %v1352 = vadd.f32 %v200, %v1351
    %v1353 = vpop.f32.mrb[0].mxu0
    %v1354 = vadd.f32 %v204, %v1353
    %v1355 = vpop.f32.mrb[0].mxu0
    %v1356 = vadd.f32 %v200, %v1355
    %v1357 = vpop.f32.mrb[0].mxu0
    %v1358 = vadd.f32 %v204, %v1357
    %1359 = vmatprep.mubr.bf16.mxu0 0
    %1360 = vmatmul.mubr.bf16.gmra.mrb[0].mxu0 %v381
    %v1361 = vpop.f32.mrb[0].mxu0
    %v1362 = vadd.f32 %v200, %v1361
    %v1363 = vpop.f32.mrb[0].mxu0
    %v1364 = vadd.f32 %v204, %v1363
    %v1365 = vpop.f32.mrb[0].mxu0
    %v1366 = vadd.f32 %v200, %v1365
    %v1367 = vpop.f32.mrb[0].mxu0
    %v1368 = vadd.f32 %v204, %v1367
    %1369 = vmatprep.mubr.bf16.mxu0 0
    %1370 = vmatmul.mubr.bf16.gmra.mrb[0].mxu0 %v382
    %v1371 = vpop.f32.mrb[0].mxu0
    %v1372 = vadd.f32 %v200, %v1371
    %v1373 = vpop.f32.mrb[0].mxu0
    %v1374 = vadd.f32 %v204, %v1373
    %v1375 = vpop.f32.mrb[0].mxu0
    %v1376 = vadd.f32 %v200, %v1375
    %v1377 = vpop.f32.mrb[0].mxu0
    %v1378 = vadd.f32 %v204, %v1377
    %1379 = vmatprep.mubr.bf16.mxu0 0
    %1380 = vmatmul.mubr.bf16.gmra.mrb[0].mxu0 %v383
    %v1381 = vpop.f32.mrb[0].mxu0
    %v1382 = vadd.f32 %v200, %v1381
    %v1383 = vpop.f32.mrb[0].mxu0
    %v1384 = vadd.f32 %v204, %v1383
    %v1385 = vpop.f32.mrb[0].mxu0
    %v1386 = vadd.f32 %v200, %v1385
    %v1387 = vpop.f32.mrb[0].mxu0
    %v1388 = vadd.f32 %v204, %v1387
    %1389 = vmatprep.mubr.bf16.mxu0 0
    %1390 = vmatmul.mubr.bf16.gmra.mrb[0].mxu0 %v384
    %v1391 = vpop.f32.mrb[0].mxu0
    %v1392 = vadd.f32 %v200, %v1391
    %v1393 = vpop.f32.mrb[0].mxu0
    %v1394 = vadd.f32 %v204, %v1393
    %v1395 = vpop.f32.mrb[0].mxu0
    %v1396 = vadd.f32 %v200, %v1395
    %v1397 = vpop.f32.mrb[0].mxu0
    %v1398 = vadd.f32 %v204, %v1397
    %1399 = vmatprep.mubr.bf16.mxu0 0
    %1400 = vmatmul.mubr.bf16.gmra.mrb[0].mxu0 %v385
    %v1401 = vpop.f32.mrb[0].mxu0
    %v1402 = vadd.f32 %v200, %v1401
    %v1403 = vpop.f32.mrb[0].mxu0
    %v1404 = vadd.f32 %v204, %v1403
    %v1405 = vpop.f32.mrb[0].mxu0
    %v1406 = vadd.f32 %v200, %v1405
    %v1407 = vpop.f32.mrb[0].mxu0
    %v1408 = vadd.f32 %v204, %v1407
    %1409 = vmatprep.mubr.bf16.mxu0 0
    %1410 = vmatmul.mubr.bf16.gmra.mrb[0].mxu0 %v386
    %v1411 = vpop.f32.mrb[0].mxu0
    %v1412 = vadd.f32 %v200, %v1411
    %v1413 = vpop.f32.mrb[0].mxu0
    %v1414 = vadd.f32 %v204, %v1413
    %v1415 = vpop.f32.mrb[0].mxu0
    %v1416 = vadd.f32 %v200, %v1415
    %v1417 = vpop.f32.mrb[0].mxu0
    %v1418 = vadd.f32 %v204, %v1417
    %1419 = vmatprep.mubr.bf16.mxu0 0
    %1420 = vmatmul.mubr.bf16.gmra.mrb[0].mxu0 %v387
    %v1421 = vpop.f32.mrb[0].mxu0
    %v1422 = vadd.f32 %v200, %v1421
    %v1423 = vpop.f32.mrb[0].mxu0
    %v1424 = vadd.f32 %v204, %v1423
    %v1425 = vpop.f32.mrb[0].mxu0
    %v1426 = vadd.f32 %v200, %v1425
    %v1427 = vpop.f32.mrb[0].mxu0
    %v1428 = vadd.f32 %v204, %v1427
    %1429 = vmatprep.mubr.bf16.mxu0 0
    %1430 = vmatmul.mubr.bf16.gmra.mrb[0].mxu0 %v388
    %v1431 = vpop.f32.mrb[0].mxu0
    %v1432 = vadd.f32 %v200, %v1431
    %v1433 = vpop.f32.mrb[0].mxu0
    %v1434 = vadd.f32 %v204, %v1433
    %v1435 = vpop.f32.mrb[0].mxu0
    %v1436 = vadd.f32 %v200, %v1435
    %v1437 = vpop.f32.mrb[0].mxu0
    %v1438 = vadd.f32 %v204, %v1437
    %1439 = vmatprep.mubr.bf16.mxu0 0
    %1440 = vmatmul.mubr.bf16.gmra.mrb[0].mxu0 %v389
    %v1441 = vpop.f32.mrb[0].mxu0
    %v1442 = vadd.f32 %v200, %v1441
    %v1443 = vpop.f32.mrb[0].mxu0
    %v1444 = vadd.f32 %v204, %v1443
    %v1445 = vpop.f32.mrb[0].mxu0
    %v1446 = vadd.f32 %v200, %v1445
    %v1447 = vpop.f32.mrb[0].mxu0
    %v1448 = vadd.f32 %v204, %v1447
    %1449 = vmatprep.mubr.bf16.mxu0 0
    %1450 = vmatmul.mubr.bf16.gmra.mrb[0].mxu0 %v390
    %v1451 = vpop.f32.mrb[0].mxu0
    %v1452 = vadd.f32 %v200, %v1451
    %v1453 = vpop.f32.mrb[0].mxu0
    %v1454 = vadd.f32 %v204, %v1453
    %v1455 = vpop.f32.mrb[0].mxu0
    %v1456 = vadd.f32 %v200, %v1455
    %v1457 = vpop.f32.mrb[0].mxu0
    %v1458 = vadd.f32 %v204, %v1457
    %1459 = vmatprep.mubr.bf16.mxu0 0
    %1460 = vmatmul.mubr.bf16.gmra.mrb[0].mxu0 %v391
    %v1461 = vpop.f32.mrb[0].mxu0
    %v1462 = vadd.f32 %v200, %v1461
    %v1463 = vpop.f32.mrb[0].mxu0
    %v1464 = vadd.f32 %v204, %v1463
    %v1465 = vpop.f32.mrb[0].mxu0
    %v1466 = vadd.f32 %v200, %v1465
    %v1467 = vpop.f32.mrb[0].mxu0
    %v1468 = vadd.f32 %v204, %v1467
    %1469 = vmatprep.mubr.bf16.mxu0 0
    %1470 = vmatmul.mubr.bf16.gmra.mrb[0].mxu0 %v392
    %v1471 = vpop.f32.mrb[0].mxu0
    %v1472 = vadd.f32 %v200, %v1471
    %v1473 = vpop.f32.mrb[0].mxu0
    %v1474 = vadd.f32 %v204, %v1473
    %v1475 = vpop.f32.mrb[0].mxu0
    %v1476 = vadd.f32 %v200, %v1475
    %v1477 = vpop.f32.mrb[0].mxu0
    %v1478 = vadd.f32 %v204, %v1477
    %1479 = vmatprep.mubr.bf16.mxu0 0
    %1480 = vmatmul.mubr.bf16.gmra.mrb[0].mxu0 %v393
    %v1481 = vpop.f32.mrb[0].mxu0
    %v1482 = vadd.f32 %v200, %v1481
    %v1483 = vpop.f32.mrb[0].mxu0
    %v1484 = vadd.f32 %v204, %v1483
    %v1485 = vpop.f32.mrb[0].mxu0
    %v1486 = vadd.f32 %v200, %v1485
    %v1487 = vpop.f32.mrb[0].mxu0
    %v1488 = vadd.f32 %v204, %v1487
    %1489 = vmatprep.mubr.bf16.mxu0 0
    %1490 = vmatmul.mubr.bf16.gmra.mrb[0].mxu0 %v394
    %v1491 = vpop.f32.mrb[0].mxu0
    %v1492 = vadd.f32 %v200, %v1491
    %v1493 = vpop.f32.mrb[0].mxu0
    %v1494 = vadd.f32 %v204, %v1493
    %v1495 = vpop.f32.mrb[0].mxu0
    %v1496 = vadd.f32 %v200, %v1495
    %v1497 = vpop.f32.mrb[0].mxu0
    %v1498 = vadd.f32 %v204, %v1497
    %1499 = vmatprep.mubr.bf16.mxu0 0
    %1500 = vmatmul.mubr.bf16.gmra.mrb[0].mxu0 %v395
    %v1501 = vpop.f32.mrb[0].mxu0
    %v1502 = vadd.f32 %v200, %v1501
    %v1503 = vpop.f32.mrb[0].mxu0
    %v1504 = vadd.f32 %v204, %v1503
    %v1505 = vpop.f32.mrb[0].mxu0
    %v1506 = vadd.f32 %v200, %v1505
    %v1507 = vpop.f32.mrb[0].mxu0
    %v1508 = vadd.f32 %v204, %v1507
    %1509 = vmatprep.mubr.bf16.mxu0 0
    %1510 = vmatmul.mubr.bf16.gmra.mrb[0].mxu0 %v396
    %v1511 = vpop.f32.mrb[0].mxu0
    %v1512 = vadd.f32 %v200, %v1511
    %v1513 = vpop.f32.mrb[0].mxu0
    %v1514 = vadd.f32 %v204, %v1513
    %v1515 = vpop.f32.mrb[0].mxu0
    %v1516 = vadd.f32 %v200, %v1515
    %v1517 = vpop.f32.mrb[0].mxu0
    %v1518 = vadd.f32 %v204, %v1517
    %1519 = vmatprep.mubr.bf16.mxu0 0
    %1520 = vmatmul.mubr.bf16.gmra.mrb[0].mxu0 %v397
    %v1521 = vpop.f32.mrb[0].mxu0
    %v1522 = vadd.f32 %v200, %v1521
    %v1523 = vpop.f32.mrb[0].mxu0
    %v1524 = vadd.f32 %v204, %v1523
    %v1525 = vpop.f32.mrb[0].mxu0
    %v1526 = vadd.f32 %v200, %v1525
    %v1527 = vpop.f32.mrb[0].mxu0
    %v1528 = vadd.f32 %v204, %v1527
    %1529 = vmatprep.mubr.bf16.mxu0 0
    %1530 = vmatmul.mubr.bf16.gmra.mrb[0].mxu0 %v398
    %v1531 = vpop.f32.mrb[0].mxu0
    %v1532 = vadd.f32 %v200, %v1531
    %v1533 = vpop.f32.mrb[0].mxu0
    %v1534 = vadd.f32 %v204, %v1533
    %v1535 = vpop.f32.mrb[0].mxu0
    %v1536 = vadd.f32 %v200, %v1535
    %v1537 = vpop.f32.mrb[0].mxu0
    %v1538 = vadd.f32 %v204, %v1537
    %1539 = vmatprep.mubr.bf16.mxu0 0
    %1540 = vmatmul.mubr.bf16.gmra.mrb[0].mxu0 %v399
    %v1541 = vpop.f32.mrb[0].mxu0
    %v1542 = vadd.f32 %v200, %v1541
    %v1543 = vpop.f32.mrb[0].mxu0
    %v1544 = vadd.f32 %v204, %v1543
    %v1545 = vpop.f32.mrb[0].mxu0
    %v1546 = vadd.f32 %v200, %v1545
    %v1547 = vpop.f32.mrb[0].mxu0
    %v1548 = vadd.f32 %v204, %v1547
    %1549 = vmatprep.mubr.bf16.mxu0 0
    %1550 = vmatmul.mubr.bf16.gmra.mrb[0].mxu0 %v400
    %v1551 = vpop.f32.mrb[0].mxu0
    %v1552 = vadd.f32 %v200, %v1551
    %v1553 = vpop.f32.mrb[0].mxu0
    %v1554 = vadd.f32 %v204, %v1553
    %v1555 = vpop.f32.mrb[0].mxu0
    %v1556 = vadd.f32 %v200, %v1555
    %v1557 = vpop.f32.mrb[0].mxu0
    %v1558 = vadd.f32 %v204, %v1557
    %1559 = vmatprep.mubr.bf16.mxu0 0
    %1560 = vmatmul.mubr.bf16.gmra.mrb[0].mxu0 %v401
    %v1561 = vpop.f32.mrb[0].mxu0
    %v1562 = vadd.f32 %v200, %v1561
    %v1563 = vpop.f32.mrb[0].mxu0
    %v1564 = vadd.f32 %v204, %v1563
    %v1565 = vpop.f32.mrb[0].mxu0
    %v1566 = vadd.f32 %v200, %v1565
    %v1567 = vpop.f32.mrb[0].mxu0
    %v1568 = vadd.f32 %v204, %v1567
    %1569 = vmatprep.mubr.bf16.mxu0 0
    %1570 = vmatmul.mubr.bf16.gmra.mrb[0].mxu0 %v402
    %v1571 = vpop.f32.mrb[0].mxu0
    %v1572 = vadd.f32 %v200, %v1571
    %v1573 = vpop.f32.mrb[0].mxu0
    %v1574 = vadd.f32 %v204, %v1573
    %v1575 = vpop.f32.mrb[0].mxu0
    %v1576 = vadd.f32 %v200, %v1575
    %v1577 = vpop.f32.mrb[0].mxu0
    %v1578 = vadd.f32 %v204, %v1577
    %1579 = vmatprep.mubr.bf16.mxu0 0
    %1580 = vmatmul.mubr.bf16.gmra.mrb[0].mxu0 %v403
    %v1581 = vpop.f32.mrb[0].mxu0
    %v1582 = vadd.f32 %v200, %v1581
    %v1583 = vpop.f32.mrb[0].mxu0
    %v1584 = vadd.f32 %v204, %v1583
    %v1585 = vpop.f32.mrb[0].mxu0
    %v1586 = vadd.f32 %v200, %v1585
    %v1587 = vpop.f32.mrb[0].mxu0
    %v1588 = vadd.f32 %v204, %v1587
    %1589 = vdwg.mxu0
    %1590 = vmatprep.subr.bf16.mxu0 %v713
    %1591 = vmatpush1.bf16.msra.mxu0 %v712
    %1592 = vmatprep.subr.bf16.mxu0 %v724
    %1593 = vmatpush1.bf16.msra.mxu0 %v723
    %1594 = vmatprep.subr.bf16.mxu0 %v735
    %1595 = vmatpush1.bf16.msra.mxu0 %v734
    %1596 = vmatprep.subr.bf16.mxu0 %v746
    %1597 = vmatpush1.bf16.msra.mxu0 %v745
    %1598 = vmatprep.subr.bf16.mxu0 %v757
    %1599 = vmatpush1.bf16.msra.mxu0 %v756
    %1600 = vmatprep.subr.bf16.mxu0 %v768
    %1601 = vmatpush1.bf16.msra.mxu0 %v767
    %1602 = vmatprep.subr.bf16.mxu0 %v779
    %1603 = vmatpush1.bf16.msra.mxu0 %v778
    %1604 = vmatprep.subr.bf16.mxu0 %v790
    %1605 = vmatpush1.bf16.msra.mxu0 %v789
    %1606 = vmatprep.subr.bf16.mxu0 0
    %1607 = vmatpush1.bf16.msra.mxu0 0
    %1608 = vmatprep.subr.bf16.mxu0 0
    %1609 = vmatpush1.bf16.msra.mxu0 0
    %1610 = vmatprep.subr.bf16.mxu0 0
    %1611 = vmatpush1.bf16.msra.mxu0 0
    %1612 = vmatprep.subr.bf16.mxu0 0
    %1613 = vmatpush1.bf16.msra.mxu0 0
    %1614 = vmatprep.subr.bf16.mxu0 0
    %1615 = vmatpush1.bf16.msra.mxu0 0
    %1616 = vmatprep.subr.bf16.mxu0 0
    %1617 = vmatpush1.bf16.msra.mxu0 0
    %1618 = vmatprep.subr.bf16.mxu0 0
    %1619 = vmatpush1.bf16.msra.mxu0 0
    %1620 = vmatprep.subr.bf16.mxu0 0
    %1621 = vmatpush1.bf16.msra.mxu0 0
    %1622 = vmatprep.mubr.bf16.mxu0 0
    %1623 = vmatmul.mubr.bf16.gmra.mrb[0].mxu0 %v372
    %v1624 = vpop.f32.mrb[0].mxu0
    %v1625 = vadd.f32 %v208, %v1624
    %v1626 = vpop.f32.mrb[0].mxu0
    %v1627 = vadd.f32 %v212, %v1626
    %v1628 = vpop.f32.mrb[0].mxu0
    %v1629 = vadd.f32 %v208, %v1628
    %v1630 = vpop.f32.mrb[0].mxu0
    %v1631 = vadd.f32 %v212, %v1630
    %1632 = vmatprep.mubr.bf16.mxu0 0
    %1633 = vmatmul.mubr.bf16.gmra.mrb[0].mxu0 %v373
    %v1634 = vpop.f32.mrb[0].mxu0
    %v1635 = vadd.f32 %v208, %v1634
    %v1636 = vpop.f32.mrb[0].mxu0
    %v1637 = vadd.f32 %v212, %v1636
    %v1638 = vpop.f32.mrb[0].mxu0
    %v1639 = vadd.f32 %v208, %v1638
    %v1640 = vpop.f32.mrb[0].mxu0
    %v1641 = vadd.f32 %v212, %v1640
    %1642 = vmatprep.mubr.bf16.mxu0 0
    %1643 = vmatmul.mubr.bf16.gmra.mrb[0].mxu0 %v374
    %v1644 = vpop.f32.mrb[0].mxu0
    %v1645 = vadd.f32 %v208, %v1644
    %v1646 = vpop.f32.mrb[0].mxu0
    %v1647 = vadd.f32 %v212, %v1646
    %v1648 = vpop.f32.mrb[0].mxu0
    %v1649 = vadd.f32 %v208, %v1648
    %v1650 = vpop.f32.mrb[0].mxu0
    %v1651 = vadd.f32 %v212, %v1650
    %1652 = vmatprep.mubr.bf16.mxu0 0
    %1653 = vmatmul.mubr.bf16.gmra.mrb[0].mxu0 %v375
    %v1654 = vpop.f32.mrb[0].mxu0
    %v1655 = vadd.f32 %v208, %v1654
    %v1656 = vpop.f32.mrb[0].mxu0
    %v1657 = vadd.f32 %v212, %v1656
    %v1658 = vpop.f32.mrb[0].mxu0
    %v1659 = vadd.f32 %v208, %v1658
    %v1660 = vpop.f32.mrb[0].mxu0
    %v1661 = vadd.f32 %v212, %v1660
    %1662 = vmatprep.mubr.bf16.mxu0 0
    %1663 = vmatmul.mubr.bf16.gmra.mrb[0].mxu0 %v376
    %v1664 = vpop.f32.mrb[0].mxu0
    %v1665 = vadd.f32 %v208, %v1664
    %v1666 = vpop.f32.mrb[0].mxu0
    %v1667 = vadd.f32 %v212, %v1666
    %v1668 = vpop.f32.mrb[0].mxu0
    %v1669 = vadd.f32 %v208, %v1668
    %v1670 = vpop.f32.mrb[0].mxu0
    %v1671 = vadd.f32 %v212, %v1670
    %1672 = vmatprep.mubr.bf16.mxu0 0
    %1673 = vmatmul.mubr.bf16.gmra.mrb[0].mxu0 %v377
    %v1674 = vpop.f32.mrb[0].mxu0
    %v1675 = vadd.f32 %v208, %v1674
    %v1676 = vpop.f32.mrb[0].mxu0
    %v1677 = vadd.f32 %v212, %v1676
    %v1678 = vpop.f32.mrb[0].mxu0
    %v1679 = vadd.f32 %v208, %v1678
    %v1680 = vpop.f32.mrb[0].mxu0
    %v1681 = vadd.f32 %v212, %v1680
    %1682 = vmatprep.mubr.bf16.mxu0 0
    %1683 = vmatmul.mubr.bf16.gmra.mrb[0].mxu0 %v378
    %v1684 = vpop.f32.mrb[0].mxu0
    %v1685 = vadd.f32 %v208, %v1684
    %v1686 = vpop.f32.mrb[0].mxu0
    %v1687 = vadd.f32 %v212, %v1686
    %v1688 = vpop.f32.mrb[0].mxu0
    %v1689 = vadd.f32 %v208, %v1688
    %v1690 = vpop.f32.mrb[0].mxu0
    %v1691 = vadd.f32 %v212, %v1690
    %1692 = vmatprep.mubr.bf16.mxu0 0
    %1693 = vmatmul.mubr.bf16.gmra.mrb[0].mxu0 %v379
    %v1694 = vpop.f32.mrb[0].mxu0
    %v1695 = vadd.f32 %v208, %v1694
    %v1696 = vpop.f32.mrb[0].mxu0
    %v1697 = vadd.f32 %v212, %v1696
    %v1698 = vpop.f32.mrb[0].mxu0
    %v1699 = vadd.f32 %v208, %v1698
    %v1700 = vpop.f32.mrb[0].mxu0
    %v1701 = vadd.f32 %v212, %v1700
    %1702 = vmatprep.mubr.bf16.mxu0 0
    %1703 = vmatmul.mubr.bf16.gmra.mrb[0].mxu0 %v380
    %v1704 = vpop.f32.mrb[0].mxu0
    %v1705 = vadd.f32 %v208, %v1704
    %v1706 = vpop.f32.mrb[0].mxu0
    %v1707 = vadd.f32 %v212, %v1706
    %v1708 = vpop.f32.mrb[0].mxu0
    %v1709 = vadd.f32 %v208, %v1708
    %v1710 = vpop.f32.mrb[0].mxu0
    %v1711 = vadd.f32 %v212, %v1710
    %1712 = vmatprep.mubr.bf16.mxu0 0
    %1713 = vmatmul.mubr.bf16.gmra.mrb[0].mxu0 %v381
    %v1714 = vpop.f32.mrb[0].mxu0
    %v1715 = vadd.f32 %v208, %v1714
    %v1716 = vpop.f32.mrb[0].mxu0
    %v1717 = vadd.f32 %v212, %v1716
    %v1718 = vpop.f32.mrb[0].mxu0
    %v1719 = vadd.f32 %v208, %v1718
    %v1720 = vpop.f32.mrb[0].mxu0
    %v1721 = vadd.f32 %v212, %v1720
    %1722 = vmatprep.mubr.bf16.mxu0 0
    %1723 = vmatmul.mubr.bf16.gmra.mrb[0].mxu0 %v382
    %v1724 = vpop.f32.mrb[0].mxu0
    %v1725 = vadd.f32 %v208, %v1724
    %v1726 = vpop.f32.mrb[0].mxu0
    %v1727 = vadd.f32 %v212, %v1726
    %v1728 = vpop.f32.mrb[0].mxu0
    %v1729 = vadd.f32 %v208, %v1728
    %v1730 = vpop.f32.mrb[0].mxu0
    %v1731 = vadd.f32 %v212, %v1730
    %1732 = vmatprep.mubr.bf16.mxu0 0
    %1733 = vmatmul.mubr.bf16.gmra.mrb[0].mxu0 %v383
    %v1734 = vpop.f32.mrb[0].mxu0
    %v1735 = vadd.f32 %v208, %v1734
    %v1736 = vpop.f32.mrb[0].mxu0
    %v1737 = vadd.f32 %v212, %v1736
    %v1738 = vpop.f32.mrb[0].mxu0
    %v1739 = vadd.f32 %v208, %v1738
    %v1740 = vpop.f32.mrb[0].mxu0
    %v1741 = vadd.f32 %v212, %v1740
    %1742 = vmatprep.mubr.bf16.mxu0 0
    %1743 = vmatmul.mubr.bf16.gmra.mrb[0].mxu0 %v384
    %v1744 = vpop.f32.mrb[0].mxu0
    %v1745 = vadd.f32 %v208, %v1744
    %v1746 = vpop.f32.mrb[0].mxu0
    %v1747 = vadd.f32 %v212, %v1746
    %v1748 = vpop.f32.mrb[0].mxu0
    %v1749 = vadd.f32 %v208, %v1748
    %v1750 = vpop.f32.mrb[0].mxu0
    %v1751 = vadd.f32 %v212, %v1750
    %1752 = vmatprep.mubr.bf16.mxu0 0
    %1753 = vmatmul.mubr.bf16.gmra.mrb[0].mxu0 %v385
    %v1754 = vpop.f32.mrb[0].mxu0
    %v1755 = vadd.f32 %v208, %v1754
    %v1756 = vpop.f32.mrb[0].mxu0
    %v1757 = vadd.f32 %v212, %v1756
    %v1758 = vpop.f32.mrb[0].mxu0
    %v1759 = vadd.f32 %v208, %v1758
    %v1760 = vpop.f32.mrb[0].mxu0
    %v1761 = vadd.f32 %v212, %v1760
    %1762 = vmatprep.mubr.bf16.mxu0 0
    %1763 = vmatmul.mubr.bf16.gmra.mrb[0].mxu0 %v386
    %v1764 = vpop.f32.mrb[0].mxu0
    %v1765 = vadd.f32 %v208, %v1764
    %v1766 = vpop.f32.mrb[0].mxu0
    %v1767 = vadd.f32 %v212, %v1766
    %v1768 = vpop.f32.mrb[0].mxu0
    %v1769 = vadd.f32 %v208, %v1768
    %v1770 = vpop.f32.mrb[0].mxu0
    %v1771 = vadd.f32 %v212, %v1770
    %1772 = vmatprep.mubr.bf16.mxu0 0
    %1773 = vmatmul.mubr.bf16.gmra.mrb[0].mxu0 %v387
    %v1774 = vpop.f32.mrb[0].mxu0
    %v1775 = vadd.f32 %v208, %v1774
    %v1776 = vpop.f32.mrb[0].mxu0
    %v1777 = vadd.f32 %v212, %v1776
    %v1778 = vpop.f32.mrb[0].mxu0
    %v1779 = vadd.f32 %v208, %v1778
    %v1780 = vpop.f32.mrb[0].mxu0
    %v1781 = vadd.f32 %v212, %v1780
    %1782 = vmatprep.mubr.bf16.mxu0 0
    %1783 = vmatmul.mubr.bf16.gmra.mrb[0].mxu0 %v388
    %v1784 = vpop.f32.mrb[0].mxu0
    %v1785 = vadd.f32 %v208, %v1784
    %v1786 = vpop.f32.mrb[0].mxu0
    %v1787 = vadd.f32 %v212, %v1786
    %v1788 = vpop.f32.mrb[0].mxu0
    %v1789 = vadd.f32 %v208, %v1788
    %v1790 = vpop.f32.mrb[0].mxu0
    %v1791 = vadd.f32 %v212, %v1790
    %1792 = vmatprep.mubr.bf16.mxu0 0
    %1793 = vmatmul.mubr.bf16.gmra.mrb[0].mxu0 %v389
    %v1794 = vpop.f32.mrb[0].mxu0
    %v1795 = vadd.f32 %v208, %v1794
    %v1796 = vpop.f32.mrb[0].mxu0
    %v1797 = vadd.f32 %v212, %v1796
    %v1798 = vpop.f32.mrb[0].mxu0
    %v1799 = vadd.f32 %v208, %v1798
    %v1800 = vpop.f32.mrb[0].mxu0
    %v1801 = vadd.f32 %v212, %v1800
    %1802 = vmatprep.mubr.bf16.mxu0 0
    %1803 = vmatmul.mubr.bf16.gmra.mrb[0].mxu0 %v390
    %v1804 = vpop.f32.mrb[0].mxu0
    %v1805 = vadd.f32 %v208, %v1804
    %v1806 = vpop.f32.mrb[0].mxu0
    %v1807 = vadd.f32 %v212, %v1806
    %v1808 = vpop.f32.mrb[0].mxu0
    %v1809 = vadd.f32 %v208, %v1808
    %v1810 = vpop.f32.mrb[0].mxu0
    %v1811 = vadd.f32 %v212, %v1810
    %1812 = vmatprep.mubr.bf16.mxu0 0
    %1813 = vmatmul.mubr.bf16.gmra.mrb[0].mxu0 %v391
    %v1814 = vpop.f32.mrb[0].mxu0
    %v1815 = vadd.f32 %v208, %v1814
    %v1816 = vpop.f32.mrb[0].mxu0
    %v1817 = vadd.f32 %v212, %v1816
    %v1818 = vpop.f32.mrb[0].mxu0
    %v1819 = vadd.f32 %v208, %v1818
    %v1820 = vpop.f32.mrb[0].mxu0
    %v1821 = vadd.f32 %v212, %v1820
    %1822 = vmatprep.mubr.bf16.mxu0 0
    %1823 = vmatmul.mubr.bf16.gmra.mrb[0].mxu0 %v392
    %v1824 = vpop.f32.mrb[0].mxu0
    %v1825 = vadd.f32 %v208, %v1824
    %v1826 = vpop.f32.mrb[0].mxu0
    %v1827 = vadd.f32 %v212, %v1826
    %v1828 = vpop.f32.mrb[0].mxu0
    %v1829 = vadd.f32 %v208, %v1828
    %v1830 = vpop.f32.mrb[0].mxu0
    %v1831 = vadd.f32 %v212, %v1830
    %1832 = vmatprep.mubr.bf16.mxu0 0
    %1833 = vmatmul.mubr.bf16.gmra.mrb[0].mxu0 %v393
    %v1834 = vpop.f32.mrb[0].mxu0
    %v1835 = vadd.f32 %v208, %v1834
    %v1836 = vpop.f32.mrb[0].mxu0
    %v1837 = vadd.f32 %v212, %v1836
    %v1838 = vpop.f32.mrb[0].mxu0
    %v1839 = vadd.f32 %v208, %v1838
    %v1840 = vpop.f32.mrb[0].mxu0
    %v1841 = vadd.f32 %v212, %v1840
    %1842 = vmatprep.mubr.bf16.mxu0 0
    %1843 = vmatmul.mubr.bf16.gmra.mrb[0].mxu0 %v394
    %v1844 = vpop.f32.mrb[0].mxu0
    %v1845 = vadd.f32 %v208, %v1844
    %v1846 = vpop.f32.mrb[0].mxu0
    %v1847 = vadd.f32 %v212, %v1846
    %v1848 = vpop.f32.mrb[0].mxu0
    %v1849 = vadd.f32 %v208, %v1848
    %v1850 = vpop.f32.mrb[0].mxu0
    %v1851 = vadd.f32 %v212, %v1850
    %1852 = vmatprep.mubr.bf16.mxu0 0
    %1853 = vmatmul.mubr.bf16.gmra.mrb[0].mxu0 %v395
    %v1854 = vpop.f32.mrb[0].mxu0
    %v1855 = vadd.f32 %v208, %v1854
    %v1856 = vpop.f32.mrb[0].mxu0
    %v1857 = vadd.f32 %v212, %v1856
    %v1858 = vpop.f32.mrb[0].mxu0
    %v1859 = vadd.f32 %v208, %v1858
    %v1860 = vpop.f32.mrb[0].mxu0
    %v1861 = vadd.f32 %v212, %v1860
    %1862 = vmatprep.mubr.bf16.mxu0 0
    %1863 = vmatmul.mubr.bf16.gmra.mrb[0].mxu0 %v396
    %v1864 = vpop.f32.mrb[0].mxu0
    %v1865 = vadd.f32 %v208, %v1864
    %v1866 = vpop.f32.mrb[0].mxu0
    %v1867 = vadd.f32 %v212, %v1866
    %v1868 = vpop.f32.mrb[0].mxu0
    %v1869 = vadd.f32 %v208, %v1868
    %v1870 = vpop.f32.mrb[0].mxu0
    %v1871 = vadd.f32 %v212, %v1870
    %1872 = vmatprep.mubr.bf16.mxu0 0
    %1873 = vmatmul.mubr.bf16.gmra.mrb[0].mxu0 %v397
    %v1874 = vpop.f32.mrb[0].mxu0
    %v1875 = vadd.f32 %v208, %v1874
    %v1876 = vpop.f32.mrb[0].mxu0
    %v1877 = vadd.f32 %v212, %v1876
    %v1878 = vpop.f32.mrb[0].mxu0
    %v1879 = vadd.f32 %v208, %v1878
    %v1880 = vpop.f32.mrb[0].mxu0
    %v1881 = vadd.f32 %v212, %v1880
    %1882 = vmatprep.mubr.bf16.mxu0 0
    %1883 = vmatmul.mubr.bf16.gmra.mrb[0].mxu0 %v398
    %v1884 = vpop.f32.mrb[0].mxu0
    %v1885 = vadd.f32 %v208, %v1884
    %v1886 = vpop.f32.mrb[0].mxu0
    %v1887 = vadd.f32 %v212, %v1886
    %v1888 = vpop.f32.mrb[0].mxu0
    %v1889 = vadd.f32 %v208, %v1888
    %v1890 = vpop.f32.mrb[0].mxu0
    %v1891 = vadd.f32 %v212, %v1890
    %1892 = vmatprep.mubr.bf16.mxu0 0
    %1893 = vmatmul.mubr.bf16.gmra.mrb[0].mxu0 %v399
    %v1894 = vpop.f32.mrb[0].mxu0
    %v1895 = vadd.f32 %v208, %v1894
    %v1896 = vpop.f32.mrb[0].mxu0
    %v1897 = vadd.f32 %v212, %v1896
    %v1898 = vpop.f32.mrb[0].mxu0
    %v1899 = vadd.f32 %v208, %v1898
    %v1900 = vpop.f32.mrb[0].mxu0
    %v1901 = vadd.f32 %v212, %v1900
    %1902 = vmatprep.mubr.bf16.mxu0 0
    %1903 = vmatmul.mubr.bf16.gmra.mrb[0].mxu0 %v400
    %v1904 = vpop.f32.mrb[0].mxu0
    %v1905 = vadd.f32 %v208, %v1904
    %v1906 = vpop.f32.mrb[0].mxu0
    %v1907 = vadd.f32 %v212, %v1906
    %v1908 = vpop.f32.mrb[0].mxu0
    %v1909 = vadd.f32 %v208, %v1908
    %v1910 = vpop.f32.mrb[0].mxu0
    %v1911 = vadd.f32 %v212, %v1910
    %1912 = vmatprep.mubr.bf16.mxu0 0
    %1913 = vmatmul.mubr.bf16.gmra.mrb[0].mxu0 %v401
    %v1914 = vpop.f32.mrb[0].mxu0
    %v1915 = vadd.f32 %v208, %v1914
    %v1916 = vpop.f32.mrb[0].mxu0
    %v1917 = vadd.f32 %v212, %v1916
    %v1918 = vpop.f32.mrb[0].mxu0
    %v1919 = vadd.f32 %v208, %v1918
    %v1920 = vpop.f32.mrb[0].mxu0
    %v1921 = vadd.f32 %v212, %v1920
    %1922 = vmatprep.mubr.bf16.mxu0 0
    %1923 = vmatmul.mubr.bf16.gmra.mrb[0].mxu0 %v402
    %v1924 = vpop.f32.mrb[0].mxu0
    %v1925 = vadd.f32 %v208, %v1924
    %v1926 = vpop.f32.mrb[0].mxu0
    %v1927 = vadd.f32 %v212, %v1926
    %v1928 = vpop.f32.mrb[0].mxu0
    %v1929 = vadd.f32 %v208, %v1928
    %v1930 = vpop.f32.mrb[0].mxu0
    %v1931 = vadd.f32 %v212, %v1930
    %1932 = vmatprep.mubr.bf16.mxu0 0
    %1933 = vmatmul.mubr.bf16.gmra.mrb[0].mxu0 %v403
    %v1934 = vpop.f32.mrb[0].mxu0
    %v1935 = vadd.f32 %v208, %v1934
    %v1936 = vpop.f32.mrb[0].mxu0
    %v1937 = vadd.f32 %v212, %v1936
    %v1938 = vpop.f32.mrb[0].mxu0
    %v1939 = vadd.f32 %v208, %v1938
    %v1940 = vpop.f32.mrb[0].mxu0
    %v1941 = vadd.f32 %v212, %v1940
    %1942 = vdwg.mxu0
    %1943 = vmatprep.subr.bf16.mxu0 %v715
    %1944 = vmatpush1.bf16.msra.mxu0 %v714
    %1945 = vmatprep.subr.bf16.mxu0 %v726
    %1946 = vmatpush1.bf16.msra.mxu0 %v725
    %1947 = vmatprep.subr.bf16.mxu0 %v737
    %1948 = vmatpush1.bf16.msra.mxu0 %v736
    %1949 = vmatprep.subr.bf16.mxu0 %v748
    %1950 = vmatpush1.bf16.msra.mxu0 %v747
    %1951 = vmatprep.subr.bf16.mxu0 %v759
    %1952 = vmatpush1.bf16.msra.mxu0 %v758
    %1953 = vmatprep.subr.bf16.mxu0 %v770
    %1954 = vmatpush1.bf16.msra.mxu0 %v769
    %1955 = vmatprep.subr.bf16.mxu0 %v781
    %1956 = vmatpush1.bf16.msra.mxu0 %v780
    %1957 = vmatprep.subr.bf16.mxu0 %v792
    %1958 = vmatpush1.bf16.msra.mxu0 %v791
    %1959 = vmatprep.subr.bf16.mxu0 0
    %1960 = vmatpush1.bf16.msra.mxu0 0
    %1961 = vmatprep.subr.bf16.mxu0 0
    %1962 = vmatpush1.bf16.msra.mxu0 0
    %1963 = vmatprep.subr.bf16.mxu0 0
    %1964 = vmatpush1.bf16.msra.mxu0 0
    %1965 = vmatprep.subr.bf16.mxu0 0
    %1966 = vmatpush1.bf16.msra.mxu0 0
    %1967 = vmatprep.subr.bf16.mxu0 0
    %1968 = vmatpush1.bf16.msra.mxu0 0
    %1969 = vmatprep.subr.bf16.mxu0 0
    %1970 = vmatpush1.bf16.msra.mxu0 0
    %1971 = vmatprep.subr.bf16.mxu0 0
    %1972 = vmatpush1.bf16.msra.mxu0 0
    %1973 = vmatprep.subr.bf16.mxu0 0
    %1974 = vmatpush1.bf16.msra.mxu0 0
    %1975 = vmatprep.mubr.bf16.mxu0 0
    %1976 = vmatmul.mubr.bf16.gmra.mrb[0].mxu0 %v372
    %v1977 = vpop.f32.mrb[0].mxu0
    %v1978 = vadd.f32 %v216, %v1977
    %v1979 = vpop.f32.mrb[0].mxu0
    %v1980 = vadd.f32 %v220, %v1979
    %v1981 = vpop.f32.mrb[0].mxu0
    %v1982 = vadd.f32 %v216, %v1981
    %v1983 = vpop.f32.mrb[0].mxu0
    %v1984 = vadd.f32 %v220, %v1983
    %1985 = vmatprep.mubr.bf16.mxu0 0
    %1986 = vmatmul.mubr.bf16.gmra.mrb[0].mxu0 %v373
    %v1987 = vpop.f32.mrb[0].mxu0
    %v1988 = vadd.f32 %v216, %v1987
    %v1989 = vpop.f32.mrb[0].mxu0
    %v1990 = vadd.f32 %v220, %v1989
    %v1991 = vpop.f32.mrb[0].mxu0
    %v1992 = vadd.f32 %v216, %v1991
    %v1993 = vpop.f32.mrb[0].mxu0
    %v1994 = vadd.f32 %v220, %v1993
    %1995 = vmatprep.mubr.bf16.mxu0 0
    %1996 = vmatmul.mubr.bf16.gmra.mrb[0].mxu0 %v374
    %v1997 = vpop.f32.mrb[0].mxu0
    %v1998 = vadd.f32 %v216, %v1997
    %v1999 = vpop.f32.mrb[0].mxu0
    %v2000 = vadd.f32 %v220, %v1999
    %v2001 = vpop.f32.mrb[0].mxu0
    %v2002 = vadd.f32 %v216, %v2001
    %v2003 = vpop.f32.mrb[0].mxu0
    %v2004 = vadd.f32 %v220, %v2003
    %2005 = vmatprep.mubr.bf16.mxu0 0
    %2006 = vmatmul.mubr.bf16.gmra.mrb[0].mxu0 %v375
    %v2007 = vpop.f32.mrb[0].mxu0
    %v2008 = vadd.f32 %v216, %v2007
    %v2009 = vpop.f32.mrb[0].mxu0
    %v2010 = vadd.f32 %v220, %v2009
    %v2011 = vpop.f32.mrb[0].mxu0
    %v2012 = vadd.f32 %v216, %v2011
    %v2013 = vpop.f32.mrb[0].mxu0
    %v2014 = vadd.f32 %v220, %v2013
    %2015 = vmatprep.mubr.bf16.mxu0 0
    %2016 = vmatmul.mubr.bf16.gmra.mrb[0].mxu0 %v376
    %v2017 = vpop.f32.mrb[0].mxu0
    %v2018 = vadd.f32 %v216, %v2017
    %v2019 = vpop.f32.mrb[0].mxu0
    %v2020 = vadd.f32 %v220, %v2019
    %v2021 = vpop.f32.mrb[0].mxu0
    %v2022 = vadd.f32 %v216, %v2021
    %v2023 = vpop.f32.mrb[0].mxu0
    %v2024 = vadd.f32 %v220, %v2023
    %2025 = vmatprep.mubr.bf16.mxu0 0
    %2026 = vmatmul.mubr.bf16.gmra.mrb[0].mxu0 %v377
    %v2027 = vpop.f32.mrb[0].mxu0
    %v2028 = vadd.f32 %v216, %v2027
    %v2029 = vpop.f32.mrb[0].mxu0
    %v2030 = vadd.f32 %v220, %v2029
    %v2031 = vpop.f32.mrb[0].mxu0
    %v2032 = vadd.f32 %v216, %v2031
    %v2033 = vpop.f32.mrb[0].mxu0
    %v2034 = vadd.f32 %v220, %v2033
    %2035 = vmatprep.mubr.bf16.mxu0 0
    %2036 = vmatmul.mubr.bf16.gmra.mrb[0].mxu0 %v378
    %v2037 = vpop.f32.mrb[0].mxu0
    %v2038 = vadd.f32 %v216, %v2037
    %v2039 = vpop.f32.mrb[0].mxu0
    %v2040 = vadd.f32 %v220, %v2039
    %v2041 = vpop.f32.mrb[0].mxu0
    %v2042 = vadd.f32 %v216, %v2041
    %v2043 = vpop.f32.mrb[0].mxu0
    %v2044 = vadd.f32 %v220, %v2043
    %2045 = vmatprep.mubr.bf16.mxu0 0
    %2046 = vmatmul.mubr.bf16.gmra.mrb[0].mxu0 %v379
    %v2047 = vpop.f32.mrb[0].mxu0
    %v2048 = vadd.f32 %v216, %v2047
    %v2049 = vpop.f32.mrb[0].mxu0
    %v2050 = vadd.f32 %v220, %v2049
    %v2051 = vpop.f32.mrb[0].mxu0
    %v2052 = vadd.f32 %v216, %v2051
    %v2053 = vpop.f32.mrb[0].mxu0
    %v2054 = vadd.f32 %v220, %v2053
    %2055 = vmatprep.mubr.bf16.mxu0 0
    %2056 = vmatmul.mubr.bf16.gmra.mrb[0].mxu0 %v380
    %v2057 = vpop.f32.mrb[0].mxu0
    %v2058 = vadd.f32 %v216, %v2057
    %v2059 = vpop.f32.mrb[0].mxu0
    %v2060 = vadd.f32 %v220, %v2059
    %v2061 = vpop.f32.mrb[0].mxu0
    %v2062 = vadd.f32 %v216, %v2061
    %v2063 = vpop.f32.mrb[0].mxu0
    %v2064 = vadd.f32 %v220, %v2063
    %2065 = vmatprep.mubr.bf16.mxu0 0
    %2066 = vmatmul.mubr.bf16.gmra.mrb[0].mxu0 %v381
    %v2067 = vpop.f32.mrb[0].mxu0
    %v2068 = vadd.f32 %v216, %v2067
    %v2069 = vpop.f32.mrb[0].mxu0
    %v2070 = vadd.f32 %v220, %v2069
    %v2071 = vpop.f32.mrb[0].mxu0
    %v2072 = vadd.f32 %v216, %v2071
    %v2073 = vpop.f32.mrb[0].mxu0
    %v2074 = vadd.f32 %v220, %v2073
    %2075 = vmatprep.mubr.bf16.mxu0 0
    %2076 = vmatmul.mubr.bf16.gmra.mrb[0].mxu0 %v382
    %v2077 = vpop.f32.mrb[0].mxu0
    %v2078 = vadd.f32 %v216, %v2077
    %v2079 = vpop.f32.mrb[0].mxu0
    %v2080 = vadd.f32 %v220, %v2079
    %v2081 = vpop.f32.mrb[0].mxu0
    %v2082 = vadd.f32 %v216, %v2081
    %v2083 = vpop.f32.mrb[0].mxu0
    %v2084 = vadd.f32 %v220, %v2083
    %2085 = vmatprep.mubr.bf16.mxu0 0
    %2086 = vmatmul.mubr.bf16.gmra.mrb[0].mxu0 %v383
    %v2087 = vpop.f32.mrb[0].mxu0
    %v2088 = vadd.f32 %v216, %v2087
    %v2089 = vpop.f32.mrb[0].mxu0
    %v2090 = vadd.f32 %v220, %v2089
    %v2091 = vpop.f32.mrb[0].mxu0
    %v2092 = vadd.f32 %v216, %v2091
    %v2093 = vpop.f32.mrb[0].mxu0
    %v2094 = vadd.f32 %v220, %v2093
    %2095 = vmatprep.mubr.bf16.mxu0 0
    %2096 = vmatmul.mubr.bf16.gmra.mrb[0].mxu0 %v384
    %v2097 = vpop.f32.mrb[0].mxu0
    %v2098 = vadd.f32 %v216, %v2097
    %v2099 = vpop.f32.mrb[0].mxu0
    %v2100 = vadd.f32 %v220, %v2099
    %v2101 = vpop.f32.mrb[0].mxu0
    %v2102 = vadd.f32 %v216, %v2101
    %v2103 = vpop.f32.mrb[0].mxu0
    %v2104 = vadd.f32 %v220, %v2103
    %2105 = vmatprep.mubr.bf16.mxu0 0
    %2106 = vmatmul.mubr.bf16.gmra.mrb[0].mxu0 %v385
    %v2107 = vpop.f32.mrb[0].mxu0
    %v2108 = vadd.f32 %v216, %v2107
    %v2109 = vpop.f32.mrb[0].mxu0
    %v2110 = vadd.f32 %v220, %v2109
    %v2111 = vpop.f32.mrb[0].mxu0
    %v2112 = vadd.f32 %v216, %v2111
    %v2113 = vpop.f32.mrb[0].mxu0
    %v2114 = vadd.f32 %v220, %v2113
    %2115 = vmatprep.mubr.bf16.mxu0 0
    %2116 = vmatmul.mubr.bf16.gmra.mrb[0].mxu0 %v386
    %v2117 = vpop.f32.mrb[0].mxu0
    %v2118 = vadd.f32 %v216, %v2117
    %v2119 = vpop.f32.mrb[0].mxu0
    %v2120 = vadd.f32 %v220, %v2119
    %v2121 = vpop.f32.mrb[0].mxu0
    %v2122 = vadd.f32 %v216, %v2121
    %v2123 = vpop.f32.mrb[0].mxu0
    %v2124 = vadd.f32 %v220, %v2123
    %2125 = vmatprep.mubr.bf16.mxu0 0
    %2126 = vmatmul.mubr.bf16.gmra.mrb[0].mxu0 %v387
    %v2127 = vpop.f32.mrb[0].mxu0
    %v2128 = vadd.f32 %v216, %v2127
    %v2129 = vpop.f32.mrb[0].mxu0
    %v2130 = vadd.f32 %v220, %v2129
    %v2131 = vpop.f32.mrb[0].mxu0
    %v2132 = vadd.f32 %v216, %v2131
    %v2133 = vpop.f32.mrb[0].mxu0
    %v2134 = vadd.f32 %v220, %v2133
    %2135 = vmatprep.mubr.bf16.mxu0 0
    %2136 = vmatmul.mubr.bf16.gmra.mrb[0].mxu0 %v388
    %v2137 = vpop.f32.mrb[0].mxu0
    %v2138 = vadd.f32 %v216, %v2137
    %v2139 = vpop.f32.mrb[0].mxu0
    %v2140 = vadd.f32 %v220, %v2139
    %v2141 = vpop.f32.mrb[0].mxu0
    %v2142 = vadd.f32 %v216, %v2141
    %v2143 = vpop.f32.mrb[0].mxu0
    %v2144 = vadd.f32 %v220, %v2143
    %2145 = vmatprep.mubr.bf16.mxu0 0
    %2146 = vmatmul.mubr.bf16.gmra.mrb[0].mxu0 %v389
    %v2147 = vpop.f32.mrb[0].mxu0
    %v2148 = vadd.f32 %v216, %v2147
    %v2149 = vpop.f32.mrb[0].mxu0
    %v2150 = vadd.f32 %v220, %v2149
    %v2151 = vpop.f32.mrb[0].mxu0
    %v2152 = vadd.f32 %v216, %v2151
    %v2153 = vpop.f32.mrb[0].mxu0
    %v2154 = vadd.f32 %v220, %v2153
    %2155 = vmatprep.mubr.bf16.mxu0 0
    %2156 = vmatmul.mubr.bf16.gmra.mrb[0].mxu0 %v390
    %v2157 = vpop.f32.mrb[0].mxu0
    %v2158 = vadd.f32 %v216, %v2157
    %v2159 = vpop.f32.mrb[0].mxu0
    %v2160 = vadd.f32 %v220, %v2159
    %v2161 = vpop.f32.mrb[0].mxu0
    %v2162 = vadd.f32 %v216, %v2161
    %v2163 = vpop.f32.mrb[0].mxu0
    %v2164 = vadd.f32 %v220, %v2163
    %2165 = vmatprep.mubr.bf16.mxu0 0
    %2166 = vmatmul.mubr.bf16.gmra.mrb[0].mxu0 %v391
    %v2167 = vpop.f32.mrb[0].mxu0
    %v2168 = vadd.f32 %v216, %v2167
    %v2169 = vpop.f32.mrb[0].mxu0
    %v2170 = vadd.f32 %v220, %v2169
    %v2171 = vpop.f32.mrb[0].mxu0
    %v2172 = vadd.f32 %v216, %v2171
    %v2173 = vpop.f32.mrb[0].mxu0
    %v2174 = vadd.f32 %v220, %v2173
    %2175 = vmatprep.mubr.bf16.mxu0 0
    %2176 = vmatmul.mubr.bf16.gmra.mrb[0].mxu0 %v392
    %v2177 = vpop.f32.mrb[0].mxu0
    %v2178 = vadd.f32 %v216, %v2177
    %v2179 = vpop.f32.mrb[0].mxu0
    %v2180 = vadd.f32 %v220, %v2179
    %v2181 = vpop.f32.mrb[0].mxu0
    %v2182 = vadd.f32 %v216, %v2181
    %v2183 = vpop.f32.mrb[0].mxu0
    %v2184 = vadd.f32 %v220, %v2183
    %2185 = vmatprep.mubr.bf16.mxu0 0
    %2186 = vmatmul.mubr.bf16.gmra.mrb[0].mxu0 %v393
    %v2187 = vpop.f32.mrb[0].mxu0
    %v2188 = vadd.f32 %v216, %v2187
    %v2189 = vpop.f32.mrb[0].mxu0
    %v2190 = vadd.f32 %v220, %v2189
    %v2191 = vpop.f32.mrb[0].mxu0
    %v2192 = vadd.f32 %v216, %v2191
    %v2193 = vpop.f32.mrb[0].mxu0
    %v2194 = vadd.f32 %v220, %v2193
    %2195 = vmatprep.mubr.bf16.mxu0 0
    %2196 = vmatmul.mubr.bf16.gmra.mrb[0].mxu0 %v394
    %v2197 = vpop.f32.mrb[0].mxu0
    %v2198 = vadd.f32 %v216, %v2197
    %v2199 = vpop.f32.mrb[0].mxu0
    %v2200 = vadd.f32 %v220, %v2199
    %v2201 = vpop.f32.mrb[0].mxu0
    %v2202 = vadd.f32 %v216, %v2201
    %v2203 = vpop.f32.mrb[0].mxu0
    %v2204 = vadd.f32 %v220, %v2203
    %2205 = vmatprep.mubr.bf16.mxu0 0
    %2206 = vmatmul.mubr.bf16.gmra.mrb[0].mxu0 %v395
    %v2207 = vpop.f32.mrb[0].mxu0
    %v2208 = vadd.f32 %v216, %v2207
    %v2209 = vpop.f32.mrb[0].mxu0
    %v2210 = vadd.f32 %v220, %v2209
    %v2211 = vpop.f32.mrb[0].mxu0
    %v2212 = vadd.f32 %v216, %v2211
    %v2213 = vpop.f32.mrb[0].mxu0
    %v2214 = vadd.f32 %v220, %v2213
    %2215 = vmatprep.mubr.bf16.mxu0 0
    %2216 = vmatmul.mubr.bf16.gmra.mrb[0].mxu0 %v396
    %v2217 = vpop.f32.mrb[0].mxu0
    %v2218 = vadd.f32 %v216, %v2217
    %v2219 = vpop.f32.mrb[0].mxu0
    %v2220 = vadd.f32 %v220, %v2219
    %v2221 = vpop.f32.mrb[0].mxu0
    %v2222 = vadd.f32 %v216, %v2221
    %v2223 = vpop.f32.mrb[0].mxu0
    %v2224 = vadd.f32 %v220, %v2223
    %2225 = vmatprep.mubr.bf16.mxu0 0
    %2226 = vmatmul.mubr.bf16.gmra.mrb[0].mxu0 %v397
    %v2227 = vpop.f32.mrb[0].mxu0
    %v2228 = vadd.f32 %v216, %v2227
    %v2229 = vpop.f32.mrb[0].mxu0
    %v2230 = vadd.f32 %v220, %v2229
    %v2231 = vpop.f32.mrb[0].mxu0
    %v2232 = vadd.f32 %v216, %v2231
    %v2233 = vpop.f32.mrb[0].mxu0
    %v2234 = vadd.f32 %v220, %v2233
    %2235 = vmatprep.mubr.bf16.mxu0 0
    %2236 = vmatmul.mubr.bf16.gmra.mrb[0].mxu0 %v398
    %v2237 = vpop.f32.mrb[0].mxu0
    %v2238 = vadd.f32 %v216, %v2237
    %v2239 = vpop.f32.mrb[0].mxu0
    %v2240 = vadd.f32 %v220, %v2239
    %v2241 = vpop.f32.mrb[0].mxu0
    %v2242 = vadd.f32 %v216, %v2241
    %v2243 = vpop.f32.mrb[0].mxu0
    %v2244 = vadd.f32 %v220, %v2243
    %2245 = vmatprep.mubr.bf16.mxu0 0
    %2246 = vmatmul.mubr.bf16.gmra.mrb[0].mxu0 %v399
    %v2247 = vpop.f32.mrb[0].mxu0
    %v2248 = vadd.f32 %v216, %v2247
    %v2249 = vpop.f32.mrb[0].mxu0
    %v2250 = vadd.f32 %v220, %v2249
    %v2251 = vpop.f32.mrb[0].mxu0
    %v2252 = vadd.f32 %v216, %v2251
    %v2253 = vpop.f32.mrb[0].mxu0
    %v2254 = vadd.f32 %v220, %v2253
    %2255 = vmatprep.mubr.bf16.mxu0 0
    %2256 = vmatmul.mubr.bf16.gmra.mrb[0].mxu0 %v400
    %v2257 = vpop.f32.mrb[0].mxu0
    %v2258 = vadd.f32 %v216, %v2257
    %v2259 = vpop.f32.mrb[0].mxu0
    %v2260 = vadd.f32 %v220, %v2259
    %v2261 = vpop.f32.mrb[0].mxu0
    %v2262 = vadd.f32 %v216, %v2261
    %v2263 = vpop.f32.mrb[0].mxu0
    %v2264 = vadd.f32 %v220, %v2263
    %2265 = vmatprep.mubr.bf16.mxu0 0
    %2266 = vmatmul.mubr.bf16.gmra.mrb[0].mxu0 %v401
    %v2267 = vpop.f32.mrb[0].mxu0
    %v2268 = vadd.f32 %v216, %v2267
    %v2269 = vpop.f32.mrb[0].mxu0
    %v2270 = vadd.f32 %v220, %v2269
    %v2271 = vpop.f32.mrb[0].mxu0
    %v2272 = vadd.f32 %v216, %v2271
    %v2273 = vpop.f32.mrb[0].mxu0
    %v2274 = vadd.f32 %v220, %v2273
    %2275 = vmatprep.mubr.bf16.mxu0 0
    %2276 = vmatmul.mubr.bf16.gmra.mrb[0].mxu0 %v402
    %v2277 = vpop.f32.mrb[0].mxu0
    %v2278 = vadd.f32 %v216, %v2277
    %v2279 = vpop.f32.mrb[0].mxu0
    %v2280 = vadd.f32 %v220, %v2279
    %v2281 = vpop.f32.mrb[0].mxu0
    %v2282 = vadd.f32 %v216, %v2281
    %v2283 = vpop.f32.mrb[0].mxu0
    %v2284 = vadd.f32 %v220, %v2283
    %2285 = vmatprep.mubr.bf16.mxu0 0
    %2286 = vmatmul.mubr.bf16.gmra.mrb[0].mxu0 %v403
    %v2287 = vpop.f32.mrb[0].mxu0
    %v2288 = vadd.f32 %v216, %v2287
    %v2289 = vpop.f32.mrb[0].mxu0
    %v2290 = vadd.f32 %v220, %v2289
    %v2291 = vpop.f32.mrb[0].mxu0
    %v2292 = vadd.f32 %v216, %v2291
    %v2293 = vpop.f32.mrb[0].mxu0
    %v2294 = vadd.f32 %v220, %v2293
    %2295 = vdwg.mxu0
    %2296 = vmatprep.subr.bf16.mxu0 %v717
    %2297 = vmatpush1.bf16.msra.mxu0 %v716
    %2298 = vmatprep.subr.bf16.mxu0 %v728
    %2299 = vmatpush1.bf16.msra.mxu0 %v727
    %2300 = vmatprep.subr.bf16.mxu0 %v739
    %2301 = vmatpush1.bf16.msra.mxu0 %v738
    %2302 = vmatprep.subr.bf16.mxu0 %v750
    %2303 = vmatpush1.bf16.msra.mxu0 %v749
    %2304 = vmatprep.subr.bf16.mxu0 %v761
    %2305 = vmatpush1.bf16.msra.mxu0 %v760
    %2306 = vmatprep.subr.bf16.mxu0 %v772
    %2307 = vmatpush1.bf16.msra.mxu0 %v771
    %2308 = vmatprep.subr.bf16.mxu0 %v783
    %2309 = vmatpush1.bf16.msra.mxu0 %v782
    %2310 = vmatprep.subr.bf16.mxu0 %v794
    %2311 = vmatpush1.bf16.msra.mxu0 %v793
    %2312 = vmatprep.subr.bf16.mxu0 0
    %2313 = vmatpush1.bf16.msra.mxu0 0
    %2314 = vmatprep.subr.bf16.mxu0 0
    %2315 = vmatpush1.bf16.msra.mxu0 0
    %2316 = vmatprep.subr.bf16.mxu0 0
    %2317 = vmatpush1.bf16.msra.mxu0 0
    %2318 = vmatprep.subr.bf16.mxu0 0
    %2319 = vmatpush1.bf16.msra.mxu0 0
    %2320 = vmatprep.subr.bf16.mxu0 0
    %2321 = vmatpush1.bf16.msra.mxu0 0
    %2322 = vmatprep.subr.bf16.mxu0 0
    %2323 = vmatpush1.bf16.msra.mxu0 0
    %2324 = vmatprep.subr.bf16.mxu0 0
    %2325 = vmatpush1.bf16.msra.mxu0 0
    %2326 = vmatprep.subr.bf16.mxu0 0
    %2327 = vmatpush1.bf16.msra.mxu0 0
    %2328 = vmatprep.mubr.bf16.mxu0 0
    %2329 = vmatmul.mubr.bf16.gmra.mrb[0].mxu0 %v372
    %v2330 = vpop.f32.mrb[0].mxu0
    %v2331 = vadd.f32 %v224, %v2330
    %v2332 = vpop.f32.mrb[0].mxu0
    %v2333 = vadd.f32 %v228, %v2332
    %v2334 = vpop.f32.mrb[0].mxu0
    %v2335 = vadd.f32 %v224, %v2334
    %v2336 = vpop.f32.mrb[0].mxu0
    %v2337 = vadd.f32 %v228, %v2336
    %2338 = vmatprep.mubr.bf16.mxu0 0
    %2339 = vmatmul.mubr.bf16.gmra.mrb[0].mxu0 %v373
    %v2340 = vpop.f32.mrb[0].mxu0
    %v2341 = vadd.f32 %v224, %v2340
    %v2342 = vpop.f32.mrb[0].mxu0
    %v2343 = vadd.f32 %v228, %v2342
    %v2344 = vpop.f32.mrb[0].mxu0
    %v2345 = vadd.f32 %v224, %v2344
    %v2346 = vpop.f32.mrb[0].mxu0
    %v2347 = vadd.f32 %v228, %v2346
    %2348 = vmatprep.mubr.bf16.mxu0 0
    %2349 = vmatmul.mubr.bf16.gmra.mrb[0].mxu0 %v374
    %v2350 = vpop.f32.mrb[0].mxu0
    %v2351 = vadd.f32 %v224, %v2350
    %v2352 = vpop.f32.mrb[0].mxu0
    %v2353 = vadd.f32 %v228, %v2352
    %v2354 = vpop.f32.mrb[0].mxu0
    %v2355 = vadd.f32 %v224, %v2354
    %v2356 = vpop.f32.mrb[0].mxu0
    %v2357 = vadd.f32 %v228, %v2356
    %2358 = vmatprep.mubr.bf16.mxu0 0
    %2359 = vmatmul.mubr.bf16.gmra.mrb[0].mxu0 %v375
    %v2360 = vpop.f32.mrb[0].mxu0
    %v2361 = vadd.f32 %v224, %v2360
    %v2362 = vpop.f32.mrb[0].mxu0
    %v2363 = vadd.f32 %v228, %v2362
    %v2364 = vpop.f32.mrb[0].mxu0
    %v2365 = vadd.f32 %v224, %v2364
    %v2366 = vpop.f32.mrb[0].mxu0
    %v2367 = vadd.f32 %v228, %v2366
    %2368 = vmatprep.mubr.bf16.mxu0 0
    %2369 = vmatmul.mubr.bf16.gmra.mrb[0].mxu0 %v376
    %v2370 = vpop.f32.mrb[0].mxu0
    %v2371 = vadd.f32 %v224, %v2370
    %v2372 = vpop.f32.mrb[0].mxu0
    %v2373 = vadd.f32 %v228, %v2372
    %v2374 = vpop.f32.mrb[0].mxu0
    %v2375 = vadd.f32 %v224, %v2374
    %v2376 = vpop.f32.mrb[0].mxu0
    %v2377 = vadd.f32 %v228, %v2376
    %2378 = vmatprep.mubr.bf16.mxu0 0
    %2379 = vmatmul.mubr.bf16.gmra.mrb[0].mxu0 %v377
    %v2380 = vpop.f32.mrb[0].mxu0
    %v2381 = vadd.f32 %v224, %v2380
    %v2382 = vpop.f32.mrb[0].mxu0
    %v2383 = vadd.f32 %v228, %v2382
    %v2384 = vpop.f32.mrb[0].mxu0
    %v2385 = vadd.f32 %v224, %v2384
    %v2386 = vpop.f32.mrb[0].mxu0
    %v2387 = vadd.f32 %v228, %v2386
    %2388 = vmatprep.mubr.bf16.mxu0 0
    %2389 = vmatmul.mubr.bf16.gmra.mrb[0].mxu0 %v378
    %v2390 = vpop.f32.mrb[0].mxu0
    %v2391 = vadd.f32 %v224, %v2390
    %v2392 = vpop.f32.mrb[0].mxu0
    %v2393 = vadd.f32 %v228, %v2392
    %v2394 = vpop.f32.mrb[0].mxu0
    %v2395 = vadd.f32 %v224, %v2394
    %v2396 = vpop.f32.mrb[0].mxu0
    %v2397 = vadd.f32 %v228, %v2396
    %2398 = vmatprep.mubr.bf16.mxu0 0
    %2399 = vmatmul.mubr.bf16.gmra.mrb[0].mxu0 %v379
    %v2400 = vpop.f32.mrb[0].mxu0
    %v2401 = vadd.f32 %v224, %v2400
    %v2402 = vpop.f32.mrb[0].mxu0
    %v2403 = vadd.f32 %v228, %v2402
    %v2404 = vpop.f32.mrb[0].mxu0
    %v2405 = vadd.f32 %v224, %v2404
    %v2406 = vpop.f32.mrb[0].mxu0
    %v2407 = vadd.f32 %v228, %v2406
    %2408 = vmatprep.mubr.bf16.mxu0 0
    %2409 = vmatmul.mubr.bf16.gmra.mrb[0].mxu0 %v380
    %v2410 = vpop.f32.mrb[0].mxu0
    %v2411 = vadd.f32 %v224, %v2410
    %v2412 = vpop.f32.mrb[0].mxu0
    %v2413 = vadd.f32 %v228, %v2412
    %v2414 = vpop.f32.mrb[0].mxu0
    %v2415 = vadd.f32 %v224, %v2414
    %v2416 = vpop.f32.mrb[0].mxu0
    %v2417 = vadd.f32 %v228, %v2416
    %2418 = vmatprep.mubr.bf16.mxu0 0
    %2419 = vmatmul.mubr.bf16.gmra.mrb[0].mxu0 %v381
    %v2420 = vpop.f32.mrb[0].mxu0
    %v2421 = vadd.f32 %v224, %v2420
    %v2422 = vpop.f32.mrb[0].mxu0
    %v2423 = vadd.f32 %v228, %v2422
    %v2424 = vpop.f32.mrb[0].mxu0
    %v2425 = vadd.f32 %v224, %v2424
    %v2426 = vpop.f32.mrb[0].mxu0
    %v2427 = vadd.f32 %v228, %v2426
    %2428 = vmatprep.mubr.bf16.mxu0 0
    %2429 = vmatmul.mubr.bf16.gmra.mrb[0].mxu0 %v382
    %v2430 = vpop.f32.mrb[0].mxu0
    %v2431 = vadd.f32 %v224, %v2430
    %v2432 = vpop.f32.mrb[0].mxu0
    %v2433 = vadd.f32 %v228, %v2432
    %v2434 = vpop.f32.mrb[0].mxu0
    %v2435 = vadd.f32 %v224, %v2434
    %v2436 = vpop.f32.mrb[0].mxu0
    %v2437 = vadd.f32 %v228, %v2436
    %2438 = vmatprep.mubr.bf16.mxu0 0
    %2439 = vmatmul.mubr.bf16.gmra.mrb[0].mxu0 %v383
    %v2440 = vpop.f32.mrb[0].mxu0
    %v2441 = vadd.f32 %v224, %v2440
    %v2442 = vpop.f32.mrb[0].mxu0
    %v2443 = vadd.f32 %v228, %v2442
    %v2444 = vpop.f32.mrb[0].mxu0
    %v2445 = vadd.f32 %v224, %v2444
    %v2446 = vpop.f32.mrb[0].mxu0
    %v2447 = vadd.f32 %v228, %v2446
    %2448 = vmatprep.mubr.bf16.mxu0 0
    %2449 = vmatmul.mubr.bf16.gmra.mrb[0].mxu0 %v384
    %v2450 = vpop.f32.mrb[0].mxu0
    %v2451 = vadd.f32 %v224, %v2450
    %v2452 = vpop.f32.mrb[0].mxu0
    %v2453 = vadd.f32 %v228, %v2452
    %v2454 = vpop.f32.mrb[0].mxu0
    %v2455 = vadd.f32 %v224, %v2454
    %v2456 = vpop.f32.mrb[0].mxu0
    %v2457 = vadd.f32 %v228, %v2456
    %2458 = vmatprep.mubr.bf16.mxu0 0
    %2459 = vmatmul.mubr.bf16.gmra.mrb[0].mxu0 %v385
    %v2460 = vpop.f32.mrb[0].mxu0
    %v2461 = vadd.f32 %v224, %v2460
    %v2462 = vpop.f32.mrb[0].mxu0
    %v2463 = vadd.f32 %v228, %v2462
    %v2464 = vpop.f32.mrb[0].mxu0
    %v2465 = vadd.f32 %v224, %v2464
    %v2466 = vpop.f32.mrb[0].mxu0
    %v2467 = vadd.f32 %v228, %v2466
    %2468 = vmatprep.mubr.bf16.mxu0 0
    %2469 = vmatmul.mubr.bf16.gmra.mrb[0].mxu0 %v386
    %v2470 = vpop.f32.mrb[0].mxu0
    %v2471 = vadd.f32 %v224, %v2470
    %v2472 = vpop.f32.mrb[0].mxu0
    %v2473 = vadd.f32 %v228, %v2472
    %v2474 = vpop.f32.mrb[0].mxu0
    %v2475 = vadd.f32 %v224, %v2474
    %v2476 = vpop.f32.mrb[0].mxu0
    %v2477 = vadd.f32 %v228, %v2476
    %2478 = vmatprep.mubr.bf16.mxu0 0
    %2479 = vmatmul.mubr.bf16.gmra.mrb[0].mxu0 %v387
    %v2480 = vpop.f32.mrb[0].mxu0
    %v2481 = vadd.f32 %v224, %v2480
    %v2482 = vpop.f32.mrb[0].mxu0
    %v2483 = vadd.f32 %v228, %v2482
    %v2484 = vpop.f32.mrb[0].mxu0
    %v2485 = vadd.f32 %v224, %v2484
    %v2486 = vpop.f32.mrb[0].mxu0
    %v2487 = vadd.f32 %v228, %v2486
    %2488 = vmatprep.mubr.bf16.mxu0 0
    %2489 = vmatmul.mubr.bf16.gmra.mrb[0].mxu0 %v388
    %v2490 = vpop.f32.mrb[0].mxu0
    %v2491 = vadd.f32 %v224, %v2490
    %v2492 = vpop.f32.mrb[0].mxu0
    %v2493 = vadd.f32 %v228, %v2492
    %v2494 = vpop.f32.mrb[0].mxu0
    %v2495 = vadd.f32 %v224, %v2494
    %v2496 = vpop.f32.mrb[0].mxu0
    %v2497 = vadd.f32 %v228, %v2496
    %2498 = vmatprep.mubr.bf16.mxu0 0
    %2499 = vmatmul.mubr.bf16.gmra.mrb[0].mxu0 %v389
    %v2500 = vpop.f32.mrb[0].mxu0
    %v2501 = vadd.f32 %v224, %v2500
    %v2502 = vpop.f32.mrb[0].mxu0
    %v2503 = vadd.f32 %v228, %v2502
    %v2504 = vpop.f32.mrb[0].mxu0
    %v2505 = vadd.f32 %v224, %v2504
    %v2506 = vpop.f32.mrb[0].mxu0
    %v2507 = vadd.f32 %v228, %v2506
    %2508 = vmatprep.mubr.bf16.mxu0 0
    %2509 = vmatmul.mubr.bf16.gmra.mrb[0].mxu0 %v390
    %v2510 = vpop.f32.mrb[0].mxu0
    %v2511 = vadd.f32 %v224, %v2510
    %v2512 = vpop.f32.mrb[0].mxu0
    %v2513 = vadd.f32 %v228, %v2512
    %v2514 = vpop.f32.mrb[0].mxu0
    %v2515 = vadd.f32 %v224, %v2514
    %v2516 = vpop.f32.mrb[0].mxu0
    %v2517 = vadd.f32 %v228, %v2516
    %2518 = vmatprep.mubr.bf16.mxu0 0
    %2519 = vmatmul.mubr.bf16.gmra.mrb[0].mxu0 %v391
    %v2520 = vpop.f32.mrb[0].mxu0
    %v2521 = vadd.f32 %v224, %v2520
    %v2522 = vpop.f32.mrb[0].mxu0
    %v2523 = vadd.f32 %v228, %v2522
    %v2524 = vpop.f32.mrb[0].mxu0
    %v2525 = vadd.f32 %v224, %v2524
    %v2526 = vpop.f32.mrb[0].mxu0
    %v2527 = vadd.f32 %v228, %v2526
    %2528 = vmatprep.mubr.bf16.mxu0 0
    %2529 = vmatmul.mubr.bf16.gmra.mrb[0].mxu0 %v392
    %v2530 = vpop.f32.mrb[0].mxu0
    %v2531 = vadd.f32 %v224, %v2530
    %v2532 = vpop.f32.mrb[0].mxu0
    %v2533 = vadd.f32 %v228, %v2532
    %v2534 = vpop.f32.mrb[0].mxu0
    %v2535 = vadd.f32 %v224, %v2534
    %v2536 = vpop.f32.mrb[0].mxu0
    %v2537 = vadd.f32 %v228, %v2536
    %2538 = vmatprep.mubr.bf16.mxu0 0
    %2539 = vmatmul.mubr.bf16.gmra.mrb[0].mxu0 %v393
    %v2540 = vpop.f32.mrb[0].mxu0
    %v2541 = vadd.f32 %v224, %v2540
    %v2542 = vpop.f32.mrb[0].mxu0
    %v2543 = vadd.f32 %v228, %v2542
    %v2544 = vpop.f32.mrb[0].mxu0
    %v2545 = vadd.f32 %v224, %v2544
    %v2546 = vpop.f32.mrb[0].mxu0
    %v2547 = vadd.f32 %v228, %v2546
    %2548 = vmatprep.mubr.bf16.mxu0 0
    %2549 = vmatmul.mubr.bf16.gmra.mrb[0].mxu0 %v394
    %v2550 = vpop.f32.mrb[0].mxu0
    %v2551 = vadd.f32 %v224, %v2550
    %v2552 = vpop.f32.mrb[0].mxu0
    %v2553 = vadd.f32 %v228, %v2552
    %v2554 = vpop.f32.mrb[0].mxu0
    %v2555 = vadd.f32 %v224, %v2554
    %v2556 = vpop.f32.mrb[0].mxu0
    %v2557 = vadd.f32 %v228, %v2556
    %2558 = vmatprep.mubr.bf16.mxu0 0
    %2559 = vmatmul.mubr.bf16.gmra.mrb[0].mxu0 %v395
    %v2560 = vpop.f32.mrb[0].mxu0
    %v2561 = vadd.f32 %v224, %v2560
    %v2562 = vpop.f32.mrb[0].mxu0
    %v2563 = vadd.f32 %v228, %v2562
    %v2564 = vpop.f32.mrb[0].mxu0
    %v2565 = vadd.f32 %v224, %v2564
    %v2566 = vpop.f32.mrb[0].mxu0
    %v2567 = vadd.f32 %v228, %v2566
    %2568 = vmatprep.mubr.bf16.mxu0 0
    %2569 = vmatmul.mubr.bf16.gmra.mrb[0].mxu0 %v396
    %v2570 = vpop.f32.mrb[0].mxu0
    %v2571 = vadd.f32 %v224, %v2570
    %v2572 = vpop.f32.mrb[0].mxu0
    %v2573 = vadd.f32 %v228, %v2572
    %v2574 = vpop.f32.mrb[0].mxu0
    %v2575 = vadd.f32 %v224, %v2574
    %v2576 = vpop.f32.mrb[0].mxu0
    %v2577 = vadd.f32 %v228, %v2576
    %2578 = vmatprep.mubr.bf16.mxu0 0
    %2579 = vmatmul.mubr.bf16.gmra.mrb[0].mxu0 %v397
    %v2580 = vpop.f32.mrb[0].mxu0
    %v2581 = vadd.f32 %v224, %v2580
    %v2582 = vpop.f32.mrb[0].mxu0
    %v2583 = vadd.f32 %v228, %v2582
    %v2584 = vpop.f32.mrb[0].mxu0
    %v2585 = vadd.f32 %v224, %v2584
    %v2586 = vpop.f32.mrb[0].mxu0
    %v2587 = vadd.f32 %v228, %v2586
    %2588 = vmatprep.mubr.bf16.mxu0 0
    %2589 = vmatmul.mubr.bf16.gmra.mrb[0].mxu0 %v398
    %v2590 = vpop.f32.mrb[0].mxu0
    %v2591 = vadd.f32 %v224, %v2590
    %v2592 = vpop.f32.mrb[0].mxu0
    %v2593 = vadd.f32 %v228, %v2592
    %v2594 = vpop.f32.mrb[0].mxu0
    %v2595 = vadd.f32 %v224, %v2594
    %v2596 = vpop.f32.mrb[0].mxu0
    %v2597 = vadd.f32 %v228, %v2596
    %2598 = vmatprep.mubr.bf16.mxu0 0
    %2599 = vmatmul.mubr.bf16.gmra.mrb[0].mxu0 %v399
    %v2600 = vpop.f32.mrb[0].mxu0
    %v2601 = vadd.f32 %v224, %v2600
    %v2602 = vpop.f32.mrb[0].mxu0
    %v2603 = vadd.f32 %v228, %v2602
    %v2604 = vpop.f32.mrb[0].mxu0
    %v2605 = vadd.f32 %v224, %v2604
    %v2606 = vpop.f32.mrb[0].mxu0
    %v2607 = vadd.f32 %v228, %v2606
    %2608 = vmatprep.mubr.bf16.mxu0 0
    %2609 = vmatmul.mubr.bf16.gmra.mrb[0].mxu0 %v400
    %v2610 = vpop.f32.mrb[0].mxu0
    %v2611 = vadd.f32 %v224, %v2610
    %v2612 = vpop.f32.mrb[0].mxu0
    %v2613 = vadd.f32 %v228, %v2612
    %v2614 = vpop.f32.mrb[0].mxu0
    %v2615 = vadd.f32 %v224, %v2614
    %v2616 = vpop.f32.mrb[0].mxu0
    %v2617 = vadd.f32 %v228, %v2616
    %2618 = vmatprep.mubr.bf16.mxu0 0
    %2619 = vmatmul.mubr.bf16.gmra.mrb[0].mxu0 %v401
    %v2620 = vpop.f32.mrb[0].mxu0
    %v2621 = vadd.f32 %v224, %v2620
    %v2622 = vpop.f32.mrb[0].mxu0
    %v2623 = vadd.f32 %v228, %v2622
    %v2624 = vpop.f32.mrb[0].mxu0
    %v2625 = vadd.f32 %v224, %v2624
    %v2626 = vpop.f32.mrb[0].mxu0
    %v2627 = vadd.f32 %v228, %v2626
    %2628 = vmatprep.mubr.bf16.mxu0 0
    %2629 = vmatmul.mubr.bf16.gmra.mrb[0].mxu0 %v402
    %v2630 = vpop.f32.mrb[0].mxu0
    %v2631 = vadd.f32 %v224, %v2630
    %v2632 = vpop.f32.mrb[0].mxu0
    %v2633 = vadd.f32 %v228, %v2632
    %v2634 = vpop.f32.mrb[0].mxu0
    %v2635 = vadd.f32 %v224, %v2634
    %v2636 = vpop.f32.mrb[0].mxu0
    %v2637 = vadd.f32 %v228, %v2636
    %2638 = vmatprep.mubr.bf16.mxu0 0
    %2639 = vmatmul.mubr.bf16.gmra.mrb[0].mxu0 %v403
    %v2640 = vpop.f32.mrb[0].mxu0
    %v2641 = vadd.f32 %v224, %v2640
    %v2642 = vpop.f32.mrb[0].mxu0
    %v2643 = vadd.f32 %v228, %v2642
    %v2644 = vpop.f32.mrb[0].mxu0
    %v2645 = vadd.f32 %v224, %v2644
    %v2646 = vpop.f32.mrb[0].mxu0
    %v2647 = vadd.f32 %v228, %v2646
    %2648 = vdwg.mxu0
    %2649 = vmatprep.subr.bf16.mxu0 0
    %2650 = vmatpush1.bf16.msra.mxu0 %v718
    %2651 = vmatprep.subr.bf16.mxu0 0
    %2652 = vmatpush1.bf16.msra.mxu0 %v729
    %2653 = vmatprep.subr.bf16.mxu0 0
    %2654 = vmatpush1.bf16.msra.mxu0 %v740
    %2655 = vmatprep.subr.bf16.mxu0 0
    %2656 = vmatpush1.bf16.msra.mxu0 %v751
    %2657 = vmatprep.subr.bf16.mxu0 0
    %2658 = vmatpush1.bf16.msra.mxu0 %v762
    %2659 = vmatprep.subr.bf16.mxu0 0
    %2660 = vmatpush1.bf16.msra.mxu0 %v773
    %2661 = vmatprep.subr.bf16.mxu0 0
    %2662 = vmatpush1.bf16.msra.mxu0 %v784
    %2663 = vmatprep.subr.bf16.mxu0 0
    %2664 = vmatpush1.bf16.msra.mxu0 %v795
    %2665 = vmatprep.subr.bf16.mxu0 0
    %2666 = vmatpush1.bf16.msra.mxu0 0
    %2667 = vmatprep.subr.bf16.mxu0 0
    %2668 = vmatpush1.bf16.msra.mxu0 0
    %2669 = vmatprep.subr.bf16.mxu0 0
    %2670 = vmatpush1.bf16.msra.mxu0 0
    %2671 = vmatprep.subr.bf16.mxu0 0
    %2672 = vmatpush1.bf16.msra.mxu0 0
    %2673 = vmatprep.subr.bf16.mxu0 0
    %2674 = vmatpush1.bf16.msra.mxu0 0
    %2675 = vmatprep.subr.bf16.mxu0 0
    %2676 = vmatpush1.bf16.msra.mxu0 0
    %2677 = vmatprep.subr.bf16.mxu0 0
    %2678 = vmatpush1.bf16.msra.mxu0 0
    %2679 = vmatprep.subr.bf16.mxu0 0
    %2680 = vmatpush1.bf16.msra.mxu0 0
    %2681 = vmatprep.mubr.bf16.mxu0 0
    %2682 = vmatmul.mubr.bf16.gmra.mrb[0].mxu0 %v372
    %v2683 = vpop.f32.mrb[0].mxu0
    %v2684 = vadd.f32 %v232, %v2683
    %v2685 = vpop.f32.mrb[0].mxu0
    %v2686 = vpop.f32.mrb[0].mxu0
    %v2687 = vadd.f32 %v232, %v2686
    %v2688 = vpop.f32.mrb[0].mxu0
    %2689 = vmatprep.mubr.bf16.mxu0 0
    %2690 = vmatmul.mubr.bf16.gmra.mrb[0].mxu0 %v373
    %v2691 = vpop.f32.mrb[0].mxu0
    %v2692 = vadd.f32 %v232, %v2691
    %v2693 = vpop.f32.mrb[0].mxu0
    %v2694 = vpop.f32.mrb[0].mxu0
    %v2695 = vadd.f32 %v232, %v2694
    %v2696 = vpop.f32.mrb[0].mxu0
    %2697 = vmatprep.mubr.bf16.mxu0 0
    %2698 = vmatmul.mubr.bf16.gmra.mrb[0].mxu0 %v374
    %v2699 = vpop.f32.mrb[0].mxu0
    %v2700 = vadd.f32 %v232, %v2699
    %v2701 = vpop.f32.mrb[0].mxu0
    %v2702 = vpop.f32.mrb[0].mxu0
    %v2703 = vadd.f32 %v232, %v2702
    %v2704 = vpop.f32.mrb[0].mxu0
    %2705 = vmatprep.mubr.bf16.mxu0 0
    %2706 = vmatmul.mubr.bf16.gmra.mrb[0].mxu0 %v375
    %v2707 = vpop.f32.mrb[0].mxu0
    %v2708 = vadd.f32 %v232, %v2707
    %v2709 = vpop.f32.mrb[0].mxu0
    %v2710 = vpop.f32.mrb[0].mxu0
    %v2711 = vadd.f32 %v232, %v2710
    %v2712 = vpop.f32.mrb[0].mxu0
    %2713 = vmatprep.mubr.bf16.mxu0 0
    %2714 = vmatmul.mubr.bf16.gmra.mrb[0].mxu0 %v376
    %v2715 = vpop.f32.mrb[0].mxu0
    %v2716 = vadd.f32 %v232, %v2715
    %v2717 = vpop.f32.mrb[0].mxu0
    %v2718 = vpop.f32.mrb[0].mxu0
    %v2719 = vadd.f32 %v232, %v2718
    %v2720 = vpop.f32.mrb[0].mxu0
    %2721 = vmatprep.mubr.bf16.mxu0 0
    %2722 = vmatmul.mubr.bf16.gmra.mrb[0].mxu0 %v377
    %v2723 = vpop.f32.mrb[0].mxu0
    %v2724 = vadd.f32 %v232, %v2723
    %v2725 = vpop.f32.mrb[0].mxu0
    %v2726 = vpop.f32.mrb[0].mxu0
    %v2727 = vadd.f32 %v232, %v2726
    %v2728 = vpop.f32.mrb[0].mxu0
    %2729 = vmatprep.mubr.bf16.mxu0 0
    %2730 = vmatmul.mubr.bf16.gmra.mrb[0].mxu0 %v378
    %v2731 = vpop.f32.mrb[0].mxu0
    %v2732 = vadd.f32 %v232, %v2731
    %v2733 = vpop.f32.mrb[0].mxu0
    %v2734 = vpop.f32.mrb[0].mxu0
    %v2735 = vadd.f32 %v232, %v2734
    %v2736 = vpop.f32.mrb[0].mxu0
    %2737 = vmatprep.mubr.bf16.mxu0 0
    %2738 = vmatmul.mubr.bf16.gmra.mrb[0].mxu0 %v379
    %v2739 = vpop.f32.mrb[0].mxu0
    %v2740 = vadd.f32 %v232, %v2739
    %v2741 = vpop.f32.mrb[0].mxu0
    %v2742 = vpop.f32.mrb[0].mxu0
    %v2743 = vadd.f32 %v232, %v2742
    %v2744 = vpop.f32.mrb[0].mxu0
    %2745 = vmatprep.mubr.bf16.mxu0 0
    %2746 = vmatmul.mubr.bf16.gmra.mrb[0].mxu0 %v380
    %v2747 = vpop.f32.mrb[0].mxu0
    %v2748 = vadd.f32 %v232, %v2747
    %v2749 = vpop.f32.mrb[0].mxu0
    %v2750 = vpop.f32.mrb[0].mxu0
    %v2751 = vadd.f32 %v232, %v2750
    %v2752 = vpop.f32.mrb[0].mxu0
    %2753 = vmatprep.mubr.bf16.mxu0 0
    %2754 = vmatmul.mubr.bf16.gmra.mrb[0].mxu0 %v381
    %v2755 = vpop.f32.mrb[0].mxu0
    %v2756 = vadd.f32 %v232, %v2755
    %v2757 = vpop.f32.mrb[0].mxu0
    %v2758 = vpop.f32.mrb[0].mxu0
    %v2759 = vadd.f32 %v232, %v2758
    %v2760 = vpop.f32.mrb[0].mxu0
    %2761 = vmatprep.mubr.bf16.mxu0 0
    %2762 = vmatmul.mubr.bf16.gmra.mrb[0].mxu0 %v382
    %v2763 = vpop.f32.mrb[0].mxu0
    %v2764 = vadd.f32 %v232, %v2763
    %v2765 = vpop.f32.mrb[0].mxu0
    %v2766 = vpop.f32.mrb[0].mxu0
    %v2767 = vadd.f32 %v232, %v2766
    %v2768 = vpop.f32.mrb[0].mxu0
    %2769 = vmatprep.mubr.bf16.mxu0 0
    %2770 = vmatmul.mubr.bf16.gmra.mrb[0].mxu0 %v383
    %v2771 = vpop.f32.mrb[0].mxu0
    %v2772 = vadd.f32 %v232, %v2771
    %v2773 = vpop.f32.mrb[0].mxu0
    %v2774 = vpop.f32.mrb[0].mxu0
    %v2775 = vadd.f32 %v232, %v2774
    %v2776 = vpop.f32.mrb[0].mxu0
    %2777 = vmatprep.mubr.bf16.mxu0 0
    %2778 = vmatmul.mubr.bf16.gmra.mrb[0].mxu0 %v384
    %v2779 = vpop.f32.mrb[0].mxu0
    %v2780 = vadd.f32 %v232, %v2779
    %v2781 = vpop.f32.mrb[0].mxu0
    %v2782 = vpop.f32.mrb[0].mxu0
    %v2783 = vadd.f32 %v232, %v2782
    %v2784 = vpop.f32.mrb[0].mxu0
    %2785 = vmatprep.mubr.bf16.mxu0 0
    %2786 = vmatmul.mubr.bf16.gmra.mrb[0].mxu0 %v385
    %v2787 = vpop.f32.mrb[0].mxu0
    %v2788 = vadd.f32 %v232, %v2787
    %v2789 = vpop.f32.mrb[0].mxu0
    %v2790 = vpop.f32.mrb[0].mxu0
    %v2791 = vadd.f32 %v232, %v2790
    %v2792 = vpop.f32.mrb[0].mxu0
    %2793 = vmatprep.mubr.bf16.mxu0 0
    %2794 = vmatmul.mubr.bf16.gmra.mrb[0].mxu0 %v386
    %v2795 = vpop.f32.mrb[0].mxu0
    %v2796 = vadd.f32 %v232, %v2795
    %v2797 = vpop.f32.mrb[0].mxu0
    %v2798 = vpop.f32.mrb[0].mxu0
    %v2799 = vadd.f32 %v232, %v2798
    %v2800 = vpop.f32.mrb[0].mxu0
    %2801 = vmatprep.mubr.bf16.mxu0 0
    %2802 = vmatmul.mubr.bf16.gmra.mrb[0].mxu0 %v387
    %v2803 = vpop.f32.mrb[0].mxu0
    %v2804 = vadd.f32 %v232, %v2803
    %v2805 = vpop.f32.mrb[0].mxu0
    %v2806 = vpop.f32.mrb[0].mxu0
    %v2807 = vadd.f32 %v232, %v2806
    %v2808 = vpop.f32.mrb[0].mxu0
    %2809 = vmatprep.mubr.bf16.mxu0 0
    %2810 = vmatmul.mubr.bf16.gmra.mrb[0].mxu0 %v388
    %v2811 = vpop.f32.mrb[0].mxu0
    %v2812 = vadd.f32 %v232, %v2811
    %v2813 = vpop.f32.mrb[0].mxu0
    %v2814 = vpop.f32.mrb[0].mxu0
    %v2815 = vadd.f32 %v232, %v2814
    %v2816 = vpop.f32.mrb[0].mxu0
    %2817 = vmatprep.mubr.bf16.mxu0 0
    %2818 = vmatmul.mubr.bf16.gmra.mrb[0].mxu0 %v389
    %v2819 = vpop.f32.mrb[0].mxu0
    %v2820 = vadd.f32 %v232, %v2819
    %v2821 = vpop.f32.mrb[0].mxu0
    %v2822 = vpop.f32.mrb[0].mxu0
    %v2823 = vadd.f32 %v232, %v2822
    %v2824 = vpop.f32.mrb[0].mxu0
    %2825 = vmatprep.mubr.bf16.mxu0 0
    %2826 = vmatmul.mubr.bf16.gmra.mrb[0].mxu0 %v390
    %v2827 = vpop.f32.mrb[0].mxu0
    %v2828 = vadd.f32 %v232, %v2827
    %v2829 = vpop.f32.mrb[0].mxu0
    %v2830 = vpop.f32.mrb[0].mxu0
    %v2831 = vadd.f32 %v232, %v2830
    %v2832 = vpop.f32.mrb[0].mxu0
    %2833 = vmatprep.mubr.bf16.mxu0 0
    %2834 = vmatmul.mubr.bf16.gmra.mrb[0].mxu0 %v391
    %v2835 = vpop.f32.mrb[0].mxu0
    %v2836 = vadd.f32 %v232, %v2835
    %v2837 = vpop.f32.mrb[0].mxu0
    %v2838 = vpop.f32.mrb[0].mxu0
    %v2839 = vadd.f32 %v232, %v2838
    %v2840 = vpop.f32.mrb[0].mxu0
    %2841 = vmatprep.mubr.bf16.mxu0 0
    %2842 = vmatmul.mubr.bf16.gmra.mrb[0].mxu0 %v392
    %v2843 = vpop.f32.mrb[0].mxu0
    %v2844 = vadd.f32 %v232, %v2843
    %v2845 = vpop.f32.mrb[0].mxu0
    %v2846 = vpop.f32.mrb[0].mxu0
    %v2847 = vadd.f32 %v232, %v2846
    %v2848 = vpop.f32.mrb[0].mxu0
    %2849 = vmatprep.mubr.bf16.mxu0 0
    %2850 = vmatmul.mubr.bf16.gmra.mrb[0].mxu0 %v393
    %v2851 = vpop.f32.mrb[0].mxu0
    %v2852 = vadd.f32 %v232, %v2851
    %v2853 = vpop.f32.mrb[0].mxu0
    %v2854 = vpop.f32.mrb[0].mxu0
    %v2855 = vadd.f32 %v232, %v2854
    %v2856 = vpop.f32.mrb[0].mxu0
    %2857 = vmatprep.mubr.bf16.mxu0 0
    %2858 = vmatmul.mubr.bf16.gmra.mrb[0].mxu0 %v394
    %v2859 = vpop.f32.mrb[0].mxu0
    %v2860 = vadd.f32 %v232, %v2859
    %v2861 = vpop.f32.mrb[0].mxu0
    %v2862 = vpop.f32.mrb[0].mxu0
    %v2863 = vadd.f32 %v232, %v2862
    %v2864 = vpop.f32.mrb[0].mxu0
    %2865 = vmatprep.mubr.bf16.mxu0 0
    %2866 = vmatmul.mubr.bf16.gmra.mrb[0].mxu0 %v395
    %v2867 = vpop.f32.mrb[0].mxu0
    %v2868 = vadd.f32 %v232, %v2867
    %v2869 = vpop.f32.mrb[0].mxu0
    %v2870 = vpop.f32.mrb[0].mxu0
    %v2871 = vadd.f32 %v232, %v2870
    %v2872 = vpop.f32.mrb[0].mxu0
    %2873 = vmatprep.mubr.bf16.mxu0 0
    %2874 = vmatmul.mubr.bf16.gmra.mrb[0].mxu0 %v396
    %v2875 = vpop.f32.mrb[0].mxu0
    %v2876 = vadd.f32 %v232, %v2875
    %v2877 = vpop.f32.mrb[0].mxu0
    %v2878 = vpop.f32.mrb[0].mxu0
    %v2879 = vadd.f32 %v232, %v2878
    %v2880 = vpop.f32.mrb[0].mxu0
    %2881 = vmatprep.mubr.bf16.mxu0 0
    %2882 = vmatmul.mubr.bf16.gmra.mrb[0].mxu0 %v397
    %v2883 = vpop.f32.mrb[0].mxu0
    %v2884 = vadd.f32 %v232, %v2883
    %v2885 = vpop.f32.mrb[0].mxu0
    %v2886 = vpop.f32.mrb[0].mxu0
    %v2887 = vadd.f32 %v232, %v2886
    %v2888 = vpop.f32.mrb[0].mxu0
    %2889 = vmatprep.mubr.bf16.mxu0 0
    %2890 = vmatmul.mubr.bf16.gmra.mrb[0].mxu0 %v398
    %v2891 = vpop.f32.mrb[0].mxu0
    %v2892 = vadd.f32 %v232, %v2891
    %v2893 = vpop.f32.mrb[0].mxu0
    %v2894 = vpop.f32.mrb[0].mxu0
    %v2895 = vadd.f32 %v232, %v2894
    %v2896 = vpop.f32.mrb[0].mxu0
    %2897 = vmatprep.mubr.bf16.mxu0 0
    %2898 = vmatmul.mubr.bf16.gmra.mrb[0].mxu0 %v399
    %v2899 = vpop.f32.mrb[0].mxu0
    %v2900 = vadd.f32 %v232, %v2899
    %v2901 = vpop.f32.mrb[0].mxu0
    %v2902 = vpop.f32.mrb[0].mxu0
    %v2903 = vadd.f32 %v232, %v2902
    %v2904 = vpop.f32.mrb[0].mxu0
    %2905 = vmatprep.mubr.bf16.mxu0 0
    %2906 = vmatmul.mubr.bf16.gmra.mrb[0].mxu0 %v400
    %v2907 = vpop.f32.mrb[0].mxu0
    %v2908 = vadd.f32 %v232, %v2907
    %v2909 = vpop.f32.mrb[0].mxu0
    %v2910 = vpop.f32.mrb[0].mxu0
    %v2911 = vadd.f32 %v232, %v2910
    %v2912 = vpop.f32.mrb[0].mxu0
    %2913 = vmatprep.mubr.bf16.mxu0 0
    %2914 = vmatmul.mubr.bf16.gmra.mrb[0].mxu0 %v401
    %v2915 = vpop.f32.mrb[0].mxu0
    %v2916 = vadd.f32 %v232, %v2915
    %v2917 = vpop.f32.mrb[0].mxu0
    %v2918 = vpop.f32.mrb[0].mxu0
    %v2919 = vadd.f32 %v232, %v2918
    %v2920 = vpop.f32.mrb[0].mxu0
    %2921 = vmatprep.mubr.bf16.mxu0 0
    %2922 = vmatmul.mubr.bf16.gmra.mrb[0].mxu0 %v402
    %v2923 = vpop.f32.mrb[0].mxu0
    %v2924 = vadd.f32 %v232, %v2923
    %v2925 = vpop.f32.mrb[0].mxu0
    %v2926 = vpop.f32.mrb[0].mxu0
    %v2927 = vadd.f32 %v232, %v2926
    %v2928 = vpop.f32.mrb[0].mxu0
    %2929 = vmatprep.mubr.bf16.mxu0 0
    %2930 = vmatmul.mubr.bf16.gmra.mrb[0].mxu0 %v403
    %v2931 = vpop.f32.mrb[0].mxu0
    %v2932 = vadd.f32 %v232, %v2931
    %v2933 = vpop.f32.mrb[0].mxu0
    %v2934 = vpop.f32.mrb[0].mxu0
    %v2935 = vadd.f32 %v232, %v2934
    %v2936 = vpop.f32.mrb[0].mxu0
    %2937 = vdwg.mxu0
    %v2938 = vmul.f32 %v919, 0.5
    %v2939 = vmul.f32 %v921, 0.5
    %v2940 = vmul.f32 %v1272, 0.5
    %v2941 = vmul.f32 %v1274, 0.5
    %v2942 = vmul.f32 %v1625, 0.5
    %v2943 = vmul.f32 %v1627, 0.5
    %v2944 = vmul.f32 %v1978, 0.5
    %v2945 = vmul.f32 %v1980, 0.5
    %v2946 = vmul.f32 %v2331, 0.5
    %v2947 = vmul.f32 %v2333, 0.5
    %v2948 = vmul.f32 %v2684, 0.5
    %v2949 = vmul.f32 %v923, 0.5
    %v2950 = vmul.f32 %v925, 0.5
    %v2951 = vmul.f32 %v1276, 0.5
    %v2952 = vmul.f32 %v1278, 0.5
    %v2953 = vmul.f32 %v1629, 0.5
    %v2954 = vmul.f32 %v1631, 0.5
    %v2955 = vmul.f32 %v1982, 0.5
    %v2956 = vmul.f32 %v1984, 0.5
    %v2957 = vmul.f32 %v2335, 0.5
    %v2958 = vmul.f32 %v2337, 0.5
    %v2959 = vmul.f32 %v2687, 0.5
    %v2960 = vmul.f32 %v929, 0.5
    %v2961 = vmul.f32 %v931, 0.5
    %v2962 = vmul.f32 %v1282, 0.5
    %v2963 = vmul.f32 %v1284, 0.5
    %v2964 = vmul.f32 %v1635, 0.5
    %v2965 = vmul.f32 %v1637, 0.5
    %v2966 = vmul.f32 %v1988, 0.5
    %v2967 = vmul.f32 %v1990, 0.5
    %v2968 = vmul.f32 %v2341, 0.5
    %v2969 = vmul.f32 %v2343, 0.5
    %v2970 = vmul.f32 %v2692, 0.5
    %v2971 = vmul.f32 %v933, 0.5
    %v2972 = vmul.f32 %v935, 0.5
    %v2973 = vmul.f32 %v1286, 0.5
    %v2974 = vmul.f32 %v1288, 0.5
    %v2975 = vmul.f32 %v1639, 0.5
    %v2976 = vmul.f32 %v1641, 0.5
    %v2977 = vmul.f32 %v1992, 0.5
    %v2978 = vmul.f32 %v1994, 0.5
    %v2979 = vmul.f32 %v2345, 0.5
    %v2980 = vmul.f32 %v2347, 0.5
    %v2981 = vmul.f32 %v2695, 0.5
    %v2982 = vmul.f32 %v939, 0.5
    %v2983 = vmul.f32 %v941, 0.5
    %v2984 = vmul.f32 %v1292, 0.5
    %v2985 = vmul.f32 %v1294, 0.5
    %v2986 = vmul.f32 %v1645, 0.5
    %v2987 = vmul.f32 %v1647, 0.5
    %v2988 = vmul.f32 %v1998, 0.5
    %v2989 = vmul.f32 %v2000, 0.5
    %v2990 = vmul.f32 %v2351, 0.5
    %v2991 = vmul.f32 %v2353, 0.5
    %v2992 = vmul.f32 %v2700, 0.5
    %v2993 = vmul.f32 %v943, 0.5
    %v2994 = vmul.f32 %v945, 0.5
    %v2995 = vmul.f32 %v1296, 0.5
    %v2996 = vmul.f32 %v1298, 0.5
    %v2997 = vmul.f32 %v1649, 0.5
    %v2998 = vmul.f32 %v1651, 0.5
    %v2999 = vmul.f32 %v2002, 0.5
    %v3000 = vmul.f32 %v2004, 0.5
    %v3001 = vmul.f32 %v2355, 0.5
    %v3002 = vmul.f32 %v2357, 0.5
    %v3003 = vmul.f32 %v2703, 0.5
    %v3004 = vmul.f32 %v949, 0.5
    %v3005 = vmul.f32 %v951, 0.5
    %v3006 = vmul.f32 %v1302, 0.5
    %v3007 = vmul.f32 %v1304, 0.5
    %v3008 = vmul.f32 %v1655, 0.5
    %v3009 = vmul.f32 %v1657, 0.5
    %v3010 = vmul.f32 %v2008, 0.5
    %v3011 = vmul.f32 %v2010, 0.5
    %v3012 = vmul.f32 %v2361, 0.5
    %v3013 = vmul.f32 %v2363, 0.5
    %v3014 = vmul.f32 %v2708, 0.5
    %v3015 = vmul.f32 %v953, 0.5
    %v3016 = vmul.f32 %v955, 0.5
    %v3017 = vmul.f32 %v1306, 0.5
    %v3018 = vmul.f32 %v1308, 0.5
    %v3019 = vmul.f32 %v1659, 0.5
    %v3020 = vmul.f32 %v1661, 0.5
    %v3021 = vmul.f32 %v2012, 0.5
    %v3022 = vmul.f32 %v2014, 0.5
    %v3023 = vmul.f32 %v2365, 0.5
    %v3024 = vmul.f32 %v2367, 0.5
    %v3025 = vmul.f32 %v2711, 0.5
    %v3026 = vmul.f32 %v959, 0.5
    %v3027 = vmul.f32 %v961, 0.5
    %v3028 = vmul.f32 %v1312, 0.5
    %v3029 = vmul.f32 %v1314, 0.5
    %v3030 = vmul.f32 %v1665, 0.5
    %v3031 = vmul.f32 %v1667, 0.5
    %v3032 = vmul.f32 %v2018, 0.5
    %v3033 = vmul.f32 %v2020, 0.5
    %v3034 = vmul.f32 %v2371, 0.5
    %v3035 = vmul.f32 %v2373, 0.5
    %v3036 = vmul.f32 %v2716, 0.5
    %v3037 = vmul.f32 %v963, 0.5
    %v3038 = vmul.f32 %v965, 0.5
    %v3039 = vmul.f32 %v1316, 0.5
    %v3040 = vmul.f32 %v1318, 0.5
    %v3041 = vmul.f32 %v1669, 0.5
    %v3042 = vmul.f32 %v1671, 0.5
    %v3043 = vmul.f32 %v2022, 0.5
    %v3044 = vmul.f32 %v2024, 0.5
    %v3045 = vmul.f32 %v2375, 0.5
    %v3046 = vmul.f32 %v2377, 0.5
    %v3047 = vmul.f32 %v2719, 0.5
    %v3048 = vmul.f32 %v969, 0.5
    %v3049 = vmul.f32 %v971, 0.5
    %v3050 = vmul.f32 %v1322, 0.5
    %v3051 = vmul.f32 %v1324, 0.5
    %v3052 = vmul.f32 %v1675, 0.5
    %v3053 = vmul.f32 %v1677, 0.5
    %v3054 = vmul.f32 %v2028, 0.5
    %v3055 = vmul.f32 %v2030, 0.5
    %v3056 = vmul.f32 %v2381, 0.5
    %v3057 = vmul.f32 %v2383, 0.5
    %v3058 = vmul.f32 %v2724, 0.5
    %v3059 = vmul.f32 %v973, 0.5
    %v3060 = vmul.f32 %v975, 0.5
    %v3061 = vmul.f32 %v1326, 0.5
    %v3062 = vmul.f32 %v1328, 0.5
    %v3063 = vmul.f32 %v1679, 0.5
    %v3064 = vmul.f32 %v1681, 0.5
    %v3065 = vmul.f32 %v2032, 0.5
    %v3066 = vmul.f32 %v2034, 0.5
    %v3067 = vmul.f32 %v2385, 0.5
    %v3068 = vmul.f32 %v2387, 0.5
    %v3069 = vmul.f32 %v2727, 0.5
    %v3070 = vmul.f32 %v979, 0.5
    %v3071 = vmul.f32 %v981, 0.5
    %v3072 = vmul.f32 %v1332, 0.5
    %v3073 = vmul.f32 %v1334, 0.5
    %v3074 = vmul.f32 %v1685, 0.5
    %v3075 = vmul.f32 %v1687, 0.5
    %v3076 = vmul.f32 %v2038, 0.5
    %v3077 = vmul.f32 %v2040, 0.5
    %v3078 = vmul.f32 %v2391, 0.5
    %v3079 = vmul.f32 %v2393, 0.5
    %v3080 = vmul.f32 %v2732, 0.5
    %v3081 = vmul.f32 %v983, 0.5
    %v3082 = vmul.f32 %v985, 0.5
    %v3083 = vmul.f32 %v1336, 0.5
    %v3084 = vmul.f32 %v1338, 0.5
    %v3085 = vmul.f32 %v1689, 0.5
    %v3086 = vmul.f32 %v1691, 0.5
    %v3087 = vmul.f32 %v2042, 0.5
    %v3088 = vmul.f32 %v2044, 0.5
    %v3089 = vmul.f32 %v2395, 0.5
    %v3090 = vmul.f32 %v2397, 0.5
    %v3091 = vmul.f32 %v2735, 0.5
    %v3092 = vmul.f32 %v989, 0.5
    %v3093 = vmul.f32 %v991, 0.5
    %v3094 = vmul.f32 %v1342, 0.5
    %v3095 = vmul.f32 %v1344, 0.5
    %v3096 = vmul.f32 %v1695, 0.5
    %v3097 = vmul.f32 %v1697, 0.5
    %v3098 = vmul.f32 %v2048, 0.5
    %v3099 = vmul.f32 %v2050, 0.5
    %v3100 = vmul.f32 %v2401, 0.5
    %v3101 = vmul.f32 %v2403, 0.5
    %v3102 = vmul.f32 %v2740, 0.5
    %v3103 = vmul.f32 %v993, 0.5
    %v3104 = vmul.f32 %v995, 0.5
    %v3105 = vmul.f32 %v1346, 0.5
    %v3106 = vmul.f32 %v1348, 0.5
    %v3107 = vmul.f32 %v1699, 0.5
    %v3108 = vmul.f32 %v1701, 0.5
    %v3109 = vmul.f32 %v2052, 0.5
    %v3110 = vmul.f32 %v2054, 0.5
    %v3111 = vmul.f32 %v2405, 0.5
    %v3112 = vmul.f32 %v2407, 0.5
    %v3113 = vmul.f32 %v2743, 0.5
    %v3114 = vmul.f32 %v999, 0.5
    %v3115 = vmul.f32 %v1001, 0.5
    %v3116 = vmul.f32 %v1352, 0.5
    %v3117 = vmul.f32 %v1354, 0.5
    %v3118 = vmul.f32 %v1705, 0.5
    %v3119 = vmul.f32 %v1707, 0.5
    %v3120 = vmul.f32 %v2058, 0.5
    %v3121 = vmul.f32 %v2060, 0.5
    %v3122 = vmul.f32 %v2411, 0.5
    %v3123 = vmul.f32 %v2413, 0.5
    %v3124 = vmul.f32 %v2748, 0.5
    %v3125 = vmul.f32 %v1003, 0.5
    %v3126 = vmul.f32 %v1005, 0.5
    %v3127 = vmul.f32 %v1356, 0.5
    %v3128 = vmul.f32 %v1358, 0.5
    %v3129 = vmul.f32 %v1709, 0.5
    %v3130 = vmul.f32 %v1711, 0.5
    %v3131 = vmul.f32 %v2062, 0.5
    %v3132 = vmul.f32 %v2064, 0.5
    %v3133 = vmul.f32 %v2415, 0.5
    %v3134 = vmul.f32 %v2417, 0.5
    %v3135 = vmul.f32 %v2751, 0.5
    %v3136 = vmul.f32 %v1009, 0.5
    %v3137 = vmul.f32 %v1011, 0.5
    %v3138 = vmul.f32 %v1362, 0.5
    %v3139 = vmul.f32 %v1364, 0.5
    %v3140 = vmul.f32 %v1715, 0.5
    %v3141 = vmul.f32 %v1717, 0.5
    %v3142 = vmul.f32 %v2068, 0.5
    %v3143 = vmul.f32 %v2070, 0.5
    %v3144 = vmul.f32 %v2421, 0.5
    %v3145 = vmul.f32 %v2423, 0.5
    %v3146 = vmul.f32 %v2756, 0.5
    %v3147 = vmul.f32 %v1013, 0.5
    %v3148 = vmul.f32 %v1015, 0.5
    %v3149 = vmul.f32 %v1366, 0.5
    %v3150 = vmul.f32 %v1368, 0.5
    %v3151 = vmul.f32 %v1719, 0.5
    %v3152 = vmul.f32 %v1721, 0.5
    %v3153 = vmul.f32 %v2072, 0.5
    %v3154 = vmul.f32 %v2074, 0.5
    %v3155 = vmul.f32 %v2425, 0.5
    %v3156 = vmul.f32 %v2427, 0.5
    %v3157 = vmul.f32 %v2759, 0.5
    %v3158 = vmul.f32 %v1019, 0.5
    %v3159 = vmul.f32 %v1021, 0.5
    %v3160 = vmul.f32 %v1372, 0.5
    %v3161 = vmul.f32 %v1374, 0.5
    %v3162 = vmul.f32 %v1725, 0.5
    %v3163 = vmul.f32 %v1727, 0.5
    %v3164 = vmul.f32 %v2078, 0.5
    %v3165 = vmul.f32 %v2080, 0.5
    %v3166 = vmul.f32 %v2431, 0.5
    %v3167 = vmul.f32 %v2433, 0.5
    %v3168 = vmul.f32 %v2764, 0.5
    %v3169 = vmul.f32 %v1023, 0.5
    %v3170 = vmul.f32 %v1025, 0.5
    %v3171 = vmul.f32 %v1376, 0.5
    %v3172 = vmul.f32 %v1378, 0.5
    %v3173 = vmul.f32 %v1729, 0.5
    %v3174 = vmul.f32 %v1731, 0.5
    %v3175 = vmul.f32 %v2082, 0.5
    %v3176 = vmul.f32 %v2084, 0.5
    %v3177 = vmul.f32 %v2435, 0.5
    %v3178 = vmul.f32 %v2437, 0.5
    %v3179 = vmul.f32 %v2767, 0.5
    %v3180 = vmul.f32 %v1029, 0.5
    %v3181 = vmul.f32 %v1031, 0.5
    %v3182 = vmul.f32 %v1382, 0.5
    %v3183 = vmul.f32 %v1384, 0.5
    %v3184 = vmul.f32 %v1735, 0.5
    %v3185 = vmul.f32 %v1737, 0.5
    %v3186 = vmul.f32 %v2088, 0.5
    %v3187 = vmul.f32 %v2090, 0.5
    %v3188 = vmul.f32 %v2441, 0.5
    %v3189 = vmul.f32 %v2443, 0.5
    %v3190 = vmul.f32 %v2772, 0.5
    %v3191 = vmul.f32 %v1033, 0.5
    %v3192 = vmul.f32 %v1035, 0.5
    %v3193 = vmul.f32 %v1386, 0.5
    %v3194 = vmul.f32 %v1388, 0.5
    %v3195 = vmul.f32 %v1739, 0.5
    %v3196 = vmul.f32 %v1741, 0.5
    %v3197 = vmul.f32 %v2092, 0.5
    %v3198 = vmul.f32 %v2094, 0.5
    %v3199 = vmul.f32 %v2445, 0.5
    %v3200 = vmul.f32 %v2447, 0.5
    %v3201 = vmul.f32 %v2775, 0.5
    %v3202 = vmul.f32 %v1039, 0.5
    %v3203 = vmul.f32 %v1041, 0.5
    %v3204 = vmul.f32 %v1392, 0.5
    %v3205 = vmul.f32 %v1394, 0.5
    %v3206 = vmul.f32 %v1745, 0.5
    %v3207 = vmul.f32 %v1747, 0.5
    %v3208 = vmul.f32 %v2098, 0.5
    %v3209 = vmul.f32 %v2100, 0.5
    %v3210 = vmul.f32 %v2451, 0.5
    %v3211 = vmul.f32 %v2453, 0.5
    %v3212 = vmul.f32 %v2780, 0.5
    %v3213 = vmul.f32 %v1043, 0.5
    %v3214 = vmul.f32 %v1045, 0.5
    %v3215 = vmul.f32 %v1396, 0.5
    %v3216 = vmul.f32 %v1398, 0.5
    %v3217 = vmul.f32 %v1749, 0.5
    %v3218 = vmul.f32 %v1751, 0.5
    %v3219 = vmul.f32 %v2102, 0.5
    %v3220 = vmul.f32 %v2104, 0.5
    %v3221 = vmul.f32 %v2455, 0.5
    %v3222 = vmul.f32 %v2457, 0.5
    %v3223 = vmul.f32 %v2783, 0.5
    %v3224 = vmul.f32 %v1049, 0.5
    %v3225 = vmul.f32 %v1051, 0.5
    %v3226 = vmul.f32 %v1402, 0.5
    %v3227 = vmul.f32 %v1404, 0.5
    %v3228 = vmul.f32 %v1755, 0.5
    %v3229 = vmul.f32 %v1757, 0.5
    %v3230 = vmul.f32 %v2108, 0.5
    %v3231 = vmul.f32 %v2110, 0.5
    %v3232 = vmul.f32 %v2461, 0.5
    %v3233 = vmul.f32 %v2463, 0.5
    %v3234 = vmul.f32 %v2788, 0.5
    %v3235 = vmul.f32 %v1053, 0.5
    %v3236 = vmul.f32 %v1055, 0.5
    %v3237 = vmul.f32 %v1406, 0.5
    %v3238 = vmul.f32 %v1408, 0.5
    %v3239 = vmul.f32 %v1759, 0.5
    %v3240 = vmul.f32 %v1761, 0.5
    %v3241 = vmul.f32 %v2112, 0.5
    %v3242 = vmul.f32 %v2114, 0.5
    %v3243 = vmul.f32 %v2465, 0.5
    %v3244 = vmul.f32 %v2467, 0.5
    %v3245 = vmul.f32 %v2791, 0.5
    %v3246 = vmul.f32 %v1059, 0.5
    %v3247 = vmul.f32 %v1061, 0.5
    %v3248 = vmul.f32 %v1412, 0.5
    %v3249 = vmul.f32 %v1414, 0.5
    %v3250 = vmul.f32 %v1765, 0.5
    %v3251 = vmul.f32 %v1767, 0.5
    %v3252 = vmul.f32 %v2118, 0.5
    %v3253 = vmul.f32 %v2120, 0.5
    %v3254 = vmul.f32 %v2471, 0.5
    %v3255 = vmul.f32 %v2473, 0.5
    %v3256 = vmul.f32 %v2796, 0.5
    %v3257 = vmul.f32 %v1063, 0.5
    %v3258 = vmul.f32 %v1065, 0.5
    %v3259 = vmul.f32 %v1416, 0.5
    %v3260 = vmul.f32 %v1418, 0.5
    %v3261 = vmul.f32 %v1769, 0.5
    %v3262 = vmul.f32 %v1771, 0.5
    %v3263 = vmul.f32 %v2122, 0.5
    %v3264 = vmul.f32 %v2124, 0.5
    %v3265 = vmul.f32 %v2475, 0.5
    %v3266 = vmul.f32 %v2477, 0.5
    %v3267 = vmul.f32 %v2799, 0.5
    %v3268 = vmul.f32 %v1069, 0.5
    %v3269 = vmul.f32 %v1071, 0.5
    %v3270 = vmul.f32 %v1422, 0.5
    %v3271 = vmul.f32 %v1424, 0.5
    %v3272 = vmul.f32 %v1775, 0.5
    %v3273 = vmul.f32 %v1777, 0.5
    %v3274 = vmul.f32 %v2128, 0.5
    %v3275 = vmul.f32 %v2130, 0.5
    %v3276 = vmul.f32 %v2481, 0.5
    %v3277 = vmul.f32 %v2483, 0.5
    %v3278 = vmul.f32 %v2804, 0.5
    %v3279 = vmul.f32 %v1073, 0.5
    %v3280 = vmul.f32 %v1075, 0.5
    %v3281 = vmul.f32 %v1426, 0.5
    %v3282 = vmul.f32 %v1428, 0.5
    %v3283 = vmul.f32 %v1779, 0.5
    %v3284 = vmul.f32 %v1781, 0.5
    %v3285 = vmul.f32 %v2132, 0.5
    %v3286 = vmul.f32 %v2134, 0.5
    %v3287 = vmul.f32 %v2485, 0.5
    %v3288 = vmul.f32 %v2487, 0.5
    %v3289 = vmul.f32 %v2807, 0.5
    %v3290 = vmul.f32 %v1079, 0.5
    %v3291 = vmul.f32 %v1081, 0.5
    %v3292 = vmul.f32 %v1432, 0.5
    %v3293 = vmul.f32 %v1434, 0.5
    %v3294 = vmul.f32 %v1785, 0.5
    %v3295 = vmul.f32 %v1787, 0.5
    %v3296 = vmul.f32 %v2138, 0.5
    %v3297 = vmul.f32 %v2140, 0.5
    %v3298 = vmul.f32 %v2491, 0.5
    %v3299 = vmul.f32 %v2493, 0.5
    %v3300 = vmul.f32 %v2812, 0.5
    %v3301 = vmul.f32 %v1083, 0.5
    %v3302 = vmul.f32 %v1085, 0.5
    %v3303 = vmul.f32 %v1436, 0.5
    %v3304 = vmul.f32 %v1438, 0.5
    %v3305 = vmul.f32 %v1789, 0.5
    %v3306 = vmul.f32 %v1791, 0.5
    %v3307 = vmul.f32 %v2142, 0.5
    %v3308 = vmul.f32 %v2144, 0.5
    %v3309 = vmul.f32 %v2495, 0.5
    %v3310 = vmul.f32 %v2497, 0.5
    %v3311 = vmul.f32 %v2815, 0.5
    %v3312 = vmul.f32 %v1089, 0.5
    %v3313 = vmul.f32 %v1091, 0.5
    %v3314 = vmul.f32 %v1442, 0.5
    %v3315 = vmul.f32 %v1444, 0.5
    %v3316 = vmul.f32 %v1795, 0.5
    %v3317 = vmul.f32 %v1797, 0.5
    %v3318 = vmul.f32 %v2148, 0.5
    %v3319 = vmul.f32 %v2150, 0.5
    %v3320 = vmul.f32 %v2501, 0.5
    %v3321 = vmul.f32 %v2503, 0.5
    %v3322 = vmul.f32 %v2820, 0.5
    %v3323 = vmul.f32 %v1093, 0.5
    %v3324 = vmul.f32 %v1095, 0.5
    %v3325 = vmul.f32 %v1446, 0.5
    %v3326 = vmul.f32 %v1448, 0.5
    %v3327 = vmul.f32 %v1799, 0.5
    %v3328 = vmul.f32 %v1801, 0.5
    %v3329 = vmul.f32 %v2152, 0.5
    %v3330 = vmul.f32 %v2154, 0.5
    %v3331 = vmul.f32 %v2505, 0.5
    %v3332 = vmul.f32 %v2507, 0.5
    %v3333 = vmul.f32 %v2823, 0.5
    %v3334 = vmul.f32 %v1099, 0.5
    %v3335 = vmul.f32 %v1101, 0.5
    %v3336 = vmul.f32 %v1452, 0.5
    %v3337 = vmul.f32 %v1454, 0.5
    %v3338 = vmul.f32 %v1805, 0.5
    %v3339 = vmul.f32 %v1807, 0.5
    %v3340 = vmul.f32 %v2158, 0.5
    %v3341 = vmul.f32 %v2160, 0.5
    %v3342 = vmul.f32 %v2511, 0.5
    %v3343 = vmul.f32 %v2513, 0.5
    %v3344 = vmul.f32 %v2828, 0.5
    %v3345 = vmul.f32 %v1103, 0.5
    %v3346 = vmul.f32 %v1105, 0.5
    %v3347 = vmul.f32 %v1456, 0.5
    %v3348 = vmul.f32 %v1458, 0.5
    %v3349 = vmul.f32 %v1809, 0.5
    %v3350 = vmul.f32 %v1811, 0.5
    %v3351 = vmul.f32 %v2162, 0.5
    %v3352 = vmul.f32 %v2164, 0.5
    %v3353 = vmul.f32 %v2515, 0.5
    %v3354 = vmul.f32 %v2517, 0.5
    %v3355 = vmul.f32 %v2831, 0.5
    %v3356 = vmul.f32 %v1109, 0.5
    %v3357 = vmul.f32 %v1111, 0.5
    %v3358 = vmul.f32 %v1462, 0.5
    %v3359 = vmul.f32 %v1464, 0.5
    %v3360 = vmul.f32 %v1815, 0.5
    %v3361 = vmul.f32 %v1817, 0.5
    %v3362 = vmul.f32 %v2168, 0.5
    %v3363 = vmul.f32 %v2170, 0.5
    %v3364 = vmul.f32 %v2521, 0.5
    %v3365 = vmul.f32 %v2523, 0.5
    %v3366 = vmul.f32 %v2836, 0.5
    %v3367 = vmul.f32 %v1113, 0.5
    %v3368 = vmul.f32 %v1115, 0.5
    %v3369 = vmul.f32 %v1466, 0.5
    %v3370 = vmul.f32 %v1468, 0.5
    %v3371 = vmul.f32 %v1819, 0.5
    %v3372 = vmul.f32 %v1821, 0.5
    %v3373 = vmul.f32 %v2172, 0.5
    %v3374 = vmul.f32 %v2174, 0.5
    %v3375 = vmul.f32 %v2525, 0.5
    %v3376 = vmul.f32 %v2527, 0.5
    %v3377 = vmul.f32 %v2839, 0.5
    %v3378 = vmul.f32 %v1119, 0.5
    %v3379 = vmul.f32 %v1121, 0.5
    %v3380 = vmul.f32 %v1472, 0.5
    %v3381 = vmul.f32 %v1474, 0.5
    %v3382 = vmul.f32 %v1825, 0.5
    %v3383 = vmul.f32 %v1827, 0.5
    %v3384 = vmul.f32 %v2178, 0.5
    %v3385 = vmul.f32 %v2180, 0.5
    %v3386 = vmul.f32 %v2531, 0.5
    %v3387 = vmul.f32 %v2533, 0.5
    %v3388 = vmul.f32 %v2844, 0.5
    %v3389 = vmul.f32 %v1123, 0.5
    %v3390 = vmul.f32 %v1125, 0.5
    %v3391 = vmul.f32 %v1476, 0.5
    %v3392 = vmul.f32 %v1478, 0.5
    %v3393 = vmul.f32 %v1829, 0.5
    %v3394 = vmul.f32 %v1831, 0.5
    %v3395 = vmul.f32 %v2182, 0.5
    %v3396 = vmul.f32 %v2184, 0.5
    %v3397 = vmul.f32 %v2535, 0.5
    %v3398 = vmul.f32 %v2537, 0.5
    %v3399 = vmul.f32 %v2847, 0.5
    %v3400 = vmul.f32 %v1129, 0.5
    %v3401 = vmul.f32 %v1131, 0.5
    %v3402 = vmul.f32 %v1482, 0.5
    %v3403 = vmul.f32 %v1484, 0.5
    %v3404 = vmul.f32 %v1835, 0.5
    %v3405 = vmul.f32 %v1837, 0.5
    %v3406 = vmul.f32 %v2188, 0.5
    %v3407 = vmul.f32 %v2190, 0.5
    %v3408 = vmul.f32 %v2541, 0.5
    %v3409 = vmul.f32 %v2543, 0.5
    %v3410 = vmul.f32 %v2852, 0.5
    %v3411 = vmul.f32 %v1133, 0.5
    %v3412 = vmul.f32 %v1135, 0.5
    %v3413 = vmul.f32 %v1486, 0.5
    %v3414 = vmul.f32 %v1488, 0.5
    %v3415 = vmul.f32 %v1839, 0.5
    %v3416 = vmul.f32 %v1841, 0.5
    %v3417 = vmul.f32 %v2192, 0.5
    %v3418 = vmul.f32 %v2194, 0.5
    %v3419 = vmul.f32 %v2545, 0.5
    %v3420 = vmul.f32 %v2547, 0.5
    %v3421 = vmul.f32 %v2855, 0.5
    %v3422 = vmul.f32 %v1139, 0.5
    %v3423 = vmul.f32 %v1141, 0.5
    %v3424 = vmul.f32 %v1492, 0.5
    %v3425 = vmul.f32 %v1494, 0.5
    %v3426 = vmul.f32 %v1845, 0.5
    %v3427 = vmul.f32 %v1847, 0.5
    %v3428 = vmul.f32 %v2198, 0.5
    %v3429 = vmul.f32 %v2200, 0.5
    %v3430 = vmul.f32 %v2551, 0.5
    %v3431 = vmul.f32 %v2553, 0.5
    %v3432 = vmul.f32 %v2860, 0.5
    %v3433 = vmul.f32 %v1143, 0.5
    %v3434 = vmul.f32 %v1145, 0.5
    %v3435 = vmul.f32 %v1496, 0.5
    %v3436 = vmul.f32 %v1498, 0.5
    %v3437 = vmul.f32 %v1849, 0.5
    %v3438 = vmul.f32 %v1851, 0.5
    %v3439 = vmul.f32 %v2202, 0.5
    %v3440 = vmul.f32 %v2204, 0.5
    %v3441 = vmul.f32 %v2555, 0.5
    %v3442 = vmul.f32 %v2557, 0.5
    %v3443 = vmul.f32 %v2863, 0.5
    %v3444 = vmul.f32 %v1149, 0.5
    %v3445 = vmul.f32 %v1151, 0.5
    %v3446 = vmul.f32 %v1502, 0.5
    %v3447 = vmul.f32 %v1504, 0.5
    %v3448 = vmul.f32 %v1855, 0.5
    %v3449 = vmul.f32 %v1857, 0.5
    %v3450 = vmul.f32 %v2208, 0.5
    %v3451 = vmul.f32 %v2210, 0.5
    %v3452 = vmul.f32 %v2561, 0.5
    %v3453 = vmul.f32 %v2563, 0.5
    %v3454 = vmul.f32 %v2868, 0.5
    %v3455 = vmul.f32 %v1153, 0.5
    %v3456 = vmul.f32 %v1155, 0.5
    %v3457 = vmul.f32 %v1506, 0.5
    %v3458 = vmul.f32 %v1508, 0.5
    %v3459 = vmul.f32 %v1859, 0.5
    %v3460 = vmul.f32 %v1861, 0.5
    %v3461 = vmul.f32 %v2212, 0.5
    %v3462 = vmul.f32 %v2214, 0.5
    %v3463 = vmul.f32 %v2565, 0.5
    %v3464 = vmul.f32 %v2567, 0.5
    %v3465 = vmul.f32 %v2871, 0.5
    %v3466 = vmul.f32 %v1159, 0.5
    %v3467 = vmul.f32 %v1161, 0.5
    %v3468 = vmul.f32 %v1512, 0.5
    %v3469 = vmul.f32 %v1514, 0.5
    %v3470 = vmul.f32 %v1865, 0.5
    %v3471 = vmul.f32 %v1867, 0.5
    %v3472 = vmul.f32 %v2218, 0.5
    %v3473 = vmul.f32 %v2220, 0.5
    %v3474 = vmul.f32 %v2571, 0.5
    %v3475 = vmul.f32 %v2573, 0.5
    %v3476 = vmul.f32 %v2876, 0.5
    %v3477 = vmul.f32 %v1163, 0.5
    %v3478 = vmul.f32 %v1165, 0.5
    %v3479 = vmul.f32 %v1516, 0.5
    %v3480 = vmul.f32 %v1518, 0.5
    %v3481 = vmul.f32 %v1869, 0.5
    %v3482 = vmul.f32 %v1871, 0.5
    %v3483 = vmul.f32 %v2222, 0.5
    %v3484 = vmul.f32 %v2224, 0.5
    %v3485 = vmul.f32 %v2575, 0.5
    %v3486 = vmul.f32 %v2577, 0.5
    %v3487 = vmul.f32 %v2879, 0.5
    %v3488 = vmul.f32 %v1169, 0.5
    %v3489 = vmul.f32 %v1171, 0.5
    %v3490 = vmul.f32 %v1522, 0.5
    %v3491 = vmul.f32 %v1524, 0.5
    %v3492 = vmul.f32 %v1875, 0.5
    %v3493 = vmul.f32 %v1877, 0.5
    %v3494 = vmul.f32 %v2228, 0.5
    %v3495 = vmul.f32 %v2230, 0.5
    %v3496 = vmul.f32 %v2581, 0.5
    %v3497 = vmul.f32 %v2583, 0.5
    %v3498 = vmul.f32 %v2884, 0.5
    %v3499 = vmul.f32 %v1173, 0.5
    %v3500 = vmul.f32 %v1175, 0.5
    %v3501 = vmul.f32 %v1526, 0.5
    %v3502 = vmul.f32 %v1528, 0.5
    %v3503 = vmul.f32 %v1879, 0.5
    %v3504 = vmul.f32 %v1881, 0.5
    %v3505 = vmul.f32 %v2232, 0.5
    %v3506 = vmul.f32 %v2234, 0.5
    %v3507 = vmul.f32 %v2585, 0.5
    %v3508 = vmul.f32 %v2587, 0.5
    %v3509 = vmul.f32 %v2887, 0.5
    %v3510 = vmul.f32 %v1179, 0.5
    %v3511 = vmul.f32 %v1181, 0.5
    %v3512 = vmul.f32 %v1532, 0.5
    %v3513 = vmul.f32 %v1534, 0.5
    %v3514 = vmul.f32 %v1885, 0.5
    %v3515 = vmul.f32 %v1887, 0.5
    %v3516 = vmul.f32 %v2238, 0.5
    %v3517 = vmul.f32 %v2240, 0.5
    %v3518 = vmul.f32 %v2591, 0.5
    %v3519 = vmul.f32 %v2593, 0.5
    %v3520 = vmul.f32 %v2892, 0.5
    %v3521 = vmul.f32 %v1183, 0.5
    %v3522 = vmul.f32 %v1185, 0.5
    %v3523 = vmul.f32 %v1536, 0.5
    %v3524 = vmul.f32 %v1538, 0.5
    %v3525 = vmul.f32 %v1889, 0.5
    %v3526 = vmul.f32 %v1891, 0.5
    %v3527 = vmul.f32 %v2242, 0.5
    %v3528 = vmul.f32 %v2244, 0.5
    %v3529 = vmul.f32 %v2595, 0.5
    %v3530 = vmul.f32 %v2597, 0.5
    %v3531 = vmul.f32 %v2895, 0.5
    %v3532 = vmul.f32 %v1189, 0.5
    %v3533 = vmul.f32 %v1191, 0.5
    %v3534 = vmul.f32 %v1542, 0.5
    %v3535 = vmul.f32 %v1544, 0.5
    %v3536 = vmul.f32 %v1895, 0.5
    %v3537 = vmul.f32 %v1897, 0.5
    %v3538 = vmul.f32 %v2248, 0.5
    %v3539 = vmul.f32 %v2250, 0.5
    %v3540 = vmul.f32 %v2601, 0.5
    %v3541 = vmul.f32 %v2603, 0.5
    %v3542 = vmul.f32 %v2900, 0.5
    %v3543 = vmul.f32 %v1193, 0.5
    %v3544 = vmul.f32 %v1195, 0.5
    %v3545 = vmul.f32 %v1546, 0.5
    %v3546 = vmul.f32 %v1548, 0.5
    %v3547 = vmul.f32 %v1899, 0.5
    %v3548 = vmul.f32 %v1901, 0.5
    %v3549 = vmul.f32 %v2252, 0.5
    %v3550 = vmul.f32 %v2254, 0.5
    %v3551 = vmul.f32 %v2605, 0.5
    %v3552 = vmul.f32 %v2607, 0.5
    %v3553 = vmul.f32 %v2903, 0.5
    %v3554 = vmul.f32 %v1199, 0.5
    %v3555 = vmul.f32 %v1201, 0.5
    %v3556 = vmul.f32 %v1552, 0.5
    %v3557 = vmul.f32 %v1554, 0.5
    %v3558 = vmul.f32 %v1905, 0.5
    %v3559 = vmul.f32 %v1907, 0.5
    %v3560 = vmul.f32 %v2258, 0.5
    %v3561 = vmul.f32 %v2260, 0.5
    %v3562 = vmul.f32 %v2611, 0.5
    %v3563 = vmul.f32 %v2613, 0.5
    %v3564 = vmul.f32 %v2908, 0.5
    %v3565 = vmul.f32 %v1203, 0.5
    %v3566 = vmul.f32 %v1205, 0.5
    %v3567 = vmul.f32 %v1556, 0.5
    %v3568 = vmul.f32 %v1558, 0.5
    %v3569 = vmul.f32 %v1909, 0.5
    %v3570 = vmul.f32 %v1911, 0.5
    %v3571 = vmul.f32 %v2262, 0.5
    %v3572 = vmul.f32 %v2264, 0.5
    %v3573 = vmul.f32 %v2615, 0.5
    %v3574 = vmul.f32 %v2617, 0.5
    %v3575 = vmul.f32 %v2911, 0.5
    %v3576 = vmul.f32 %v1209, 0.5
    %v3577 = vmul.f32 %v1211, 0.5
    %v3578 = vmul.f32 %v1562, 0.5
    %v3579 = vmul.f32 %v1564, 0.5
    %v3580 = vmul.f32 %v1915, 0.5
    %v3581 = vmul.f32 %v1917, 0.5
    %v3582 = vmul.f32 %v2268, 0.5
    %v3583 = vmul.f32 %v2270, 0.5
    %v3584 = vmul.f32 %v2621, 0.5
    %v3585 = vmul.f32 %v2623, 0.5
    %v3586 = vmul.f32 %v2916, 0.5
    %v3587 = vmul.f32 %v1213, 0.5
    %v3588 = vmul.f32 %v1215, 0.5
    %v3589 = vmul.f32 %v1566, 0.5
    %v3590 = vmul.f32 %v1568, 0.5
    %v3591 = vmul.f32 %v1919, 0.5
    %v3592 = vmul.f32 %v1921, 0.5
    %v3593 = vmul.f32 %v2272, 0.5
    %v3594 = vmul.f32 %v2274, 0.5
    %v3595 = vmul.f32 %v2625, 0.5
    %v3596 = vmul.f32 %v2627, 0.5
    %v3597 = vmul.f32 %v2919, 0.5
    %v3598 = vmul.f32 %v1219, 0.5
    %v3599 = vmul.f32 %v1221, 0.5
    %v3600 = vmul.f32 %v1572, 0.5
    %v3601 = vmul.f32 %v1574, 0.5
    %v3602 = vmul.f32 %v1925, 0.5
    %v3603 = vmul.f32 %v1927, 0.5
    %v3604 = vmul.f32 %v2278, 0.5
    %v3605 = vmul.f32 %v2280, 0.5
    %v3606 = vmul.f32 %v2631, 0.5
    %v3607 = vmul.f32 %v2633, 0.5
    %v3608 = vmul.f32 %v2924, 0.5
    %v3609 = vmul.f32 %v1223, 0.5
    %v3610 = vmul.f32 %v1225, 0.5
    %v3611 = vmul.f32 %v1576, 0.5
    %v3612 = vmul.f32 %v1578, 0.5
    %v3613 = vmul.f32 %v1929, 0.5
    %v3614 = vmul.f32 %v1931, 0.5
    %v3615 = vmul.f32 %v2282, 0.5
    %v3616 = vmul.f32 %v2284, 0.5
    %v3617 = vmul.f32 %v2635, 0.5
    %v3618 = vmul.f32 %v2637, 0.5
    %v3619 = vmul.f32 %v2927, 0.5
    %v3620 = vmul.f32 %v1229, 0.5
    %v3621 = vmul.f32 %v1231, 0.5
    %v3622 = vmul.f32 %v1582, 0.5
    %v3623 = vmul.f32 %v1584, 0.5
    %v3624 = vmul.f32 %v1935, 0.5
    %v3625 = vmul.f32 %v1937, 0.5
    %v3626 = vmul.f32 %v2288, 0.5
    %v3627 = vmul.f32 %v2290, 0.5
    %v3628 = vmul.f32 %v2641, 0.5
    %v3629 = vmul.f32 %v2643, 0.5
    %v3630 = vmul.f32 %v2932, 0.5
    %v3631 = vmul.f32 %v1233, 0.5
    %v3632 = vmul.f32 %v1235, 0.5
    %v3633 = vmul.f32 %v1586, 0.5
    %v3634 = vmul.f32 %v1588, 0.5
    %v3635 = vmul.f32 %v1939, 0.5
    %v3636 = vmul.f32 %v1941, 0.5
    %v3637 = vmul.f32 %v2292, 0.5
    %v3638 = vmul.f32 %v2294, 0.5
    %v3639 = vmul.f32 %v2645, 0.5
    %v3640 = vmul.f32 %v2647, 0.5
    %v3641 = vmul.f32 %v2935, 0.5
    %v3642 = vtanh.pop %v2938
    %v3643 = vtanh.pop %v2939
    %v3644 = vtanh.pop %v2940
    %v3645 = vtanh.pop %v2941
    %v3646 = vtanh.pop %v2942
    %v3647 = vtanh.pop %v2943
    %v3648 = vtanh.pop %v2944
    %v3649 = vtanh.pop %v2945
    %v3650 = vtanh.pop %v2946
    %v3651 = vtanh.pop %v2947
    %v3652 = vtanh.pop %v2948
    %v3653 = vtanh.pop %v2949
    %v3654 = vtanh.pop %v2950
    %v3655 = vtanh.pop %v2951
    %v3656 = vtanh.pop %v2952
    %v3657 = vtanh.pop %v2953
    %v3658 = vtanh.pop %v2954
    %v3659 = vtanh.pop %v2955
    %v3660 = vtanh.pop %v2956
    %v3661 = vtanh.pop %v2957
    %v3662 = vtanh.pop %v2958
    %v3663 = vtanh.pop %v2959
    %v3664 = vtanh.pop %v2960
    %v3665 = vtanh.pop %v2961
    %v3666 = vtanh.pop %v2962
    %v3667 = vtanh.pop %v2963
    %v3668 = vtanh.pop %v2964
    %v3669 = vtanh.pop %v2965
    %v3670 = vtanh.pop %v2966
    %v3671 = vtanh.pop %v2967
    %v3672 = vtanh.pop %v2968
    %v3673 = vtanh.pop %v2969
    %v3674 = vtanh.pop %v2970
    %v3675 = vtanh.pop %v2971
    %v3676 = vtanh.pop %v2972
    %v3677 = vtanh.pop %v2973
    %v3678 = vtanh.pop %v2974
    %v3679 = vtanh.pop %v2975
    %v3680 = vtanh.pop %v2976
    %v3681 = vtanh.pop %v2977
    %v3682 = vtanh.pop %v2978
    %v3683 = vtanh.pop %v2979
    %v3684 = vtanh.pop %v2980
    %v3685 = vtanh.pop %v2981
    %v3686 = vtanh.pop %v2982
    %v3687 = vtanh.pop %v2983
    %v3688 = vtanh.pop %v2984
    %v3689 = vtanh.pop %v2985
    %v3690 = vtanh.pop %v2986
    %v3691 = vtanh.pop %v2987
    %v3692 = vtanh.pop %v2988
    %v3693 = vtanh.pop %v2989
    %v3694 = vtanh.pop %v2990
    %v3695 = vtanh.pop %v2991
    %v3696 = vtanh.pop %v2992
    %v3697 = vtanh.pop %v2993
    %v3698 = vtanh.pop %v2994
    %v3699 = vtanh.pop %v2995
    %v3700 = vtanh.pop %v2996
    %v3701 = vtanh.pop %v2997
    %v3702 = vtanh.pop %v2998
    %v3703 = vtanh.pop %v2999
    %v3704 = vtanh.pop %v3000
    %v3705 = vtanh.pop %v3001
    %v3706 = vtanh.pop %v3002
    %v3707 = vtanh.pop %v3003
    %v3708 = vtanh.pop %v3004
    %v3709 = vtanh.pop %v3005
    %v3710 = vtanh.pop %v3006
    %v3711 = vtanh.pop %v3007
    %v3712 = vtanh.pop %v3008
    %v3713 = vtanh.pop %v3009
    %v3714 = vtanh.pop %v3010
    %v3715 = vtanh.pop %v3011
    %v3716 = vtanh.pop %v3012
    %v3717 = vtanh.pop %v3013
    %v3718 = vtanh.pop %v3014
    %v3719 = vtanh.pop %v3015
    %v3720 = vtanh.pop %v3016
    %v3721 = vtanh.pop %v3017
    %v3722 = vtanh.pop %v3018
    %v3723 = vtanh.pop %v3019
    %v3724 = vtanh.pop %v3020
    %v3725 = vtanh.pop %v3021
    %v3726 = vtanh.pop %v3022
    %v3727 = vtanh.pop %v3023
    %v3728 = vtanh.pop %v3024
    %v3729 = vtanh.pop %v3025
    %v3730 = vtanh.pop %v3026
    %v3731 = vtanh.pop %v3027
    %v3732 = vtanh.pop %v3028
    %v3733 = vtanh.pop %v3029
    %v3734 = vtanh.pop %v3030
    %v3735 = vtanh.pop %v3031
    %v3736 = vtanh.pop %v3032
    %v3737 = vtanh.pop %v3033
    %v3738 = vtanh.pop %v3034
    %v3739 = vtanh.pop %v3035
    %v3740 = vtanh.pop %v3036
    %v3741 = vtanh.pop %v3037
    %v3742 = vtanh.pop %v3038
    %v3743 = vtanh.pop %v3039
    %v3744 = vtanh.pop %v3040
    %v3745 = vtanh.pop %v3041
    %v3746 = vtanh.pop %v3042
    %v3747 = vtanh.pop %v3043
    %v3748 = vtanh.pop %v3044
    %v3749 = vtanh.pop %v3045
    %v3750 = vtanh.pop %v3046
    %v3751 = vtanh.pop %v3047
    %v3752 = vtanh.pop %v3048
    %v3753 = vtanh.pop %v3049
    %v3754 = vtanh.pop %v3050
    %v3755 = vtanh.pop %v3051
    %v3756 = vtanh.pop %v3052
    %v3757 = vtanh.pop %v3053
    %v3758 = vtanh.pop %v3054
    %v3759 = vtanh.pop %v3055
    %v3760 = vtanh.pop %v3056
    %v3761 = vtanh.pop %v3057
    %v3762 = vtanh.pop %v3058
    %v3763 = vtanh.pop %v3059
    %v3764 = vtanh.pop %v3060
    %v3765 = vtanh.pop %v3061
    %v3766 = vtanh.pop %v3062
    %v3767 = vtanh.pop %v3063
    %v3768 = vtanh.pop %v3064
    %v3769 = vtanh.pop %v3065
    %v3770 = vtanh.pop %v3066
    %v3771 = vtanh.pop %v3067
    %v3772 = vtanh.pop %v3068
    %v3773 = vtanh.pop %v3069
    %v3774 = vtanh.pop %v3070
    %v3775 = vtanh.pop %v3071
    %v3776 = vtanh.pop %v3072
    %v3777 = vtanh.pop %v3073
    %v3778 = vtanh.pop %v3074
    %v3779 = vtanh.pop %v3075
    %v3780 = vtanh.pop %v3076
    %v3781 = vtanh.pop %v3077
    %v3782 = vtanh.pop %v3078
    %v3783 = vtanh.pop %v3079
    %v3784 = vtanh.pop %v3080
    %v3785 = vtanh.pop %v3081
    %v3786 = vtanh.pop %v3082
    %v3787 = vtanh.pop %v3083
    %v3788 = vtanh.pop %v3084
    %v3789 = vtanh.pop %v3085
    %v3790 = vtanh.pop %v3086
    %v3791 = vtanh.pop %v3087
    %v3792 = vtanh.pop %v3088
    %v3793 = vtanh.pop %v3089
    %v3794 = vtanh.pop %v3090
    %v3795 = vtanh.pop %v3091
    %v3796 = vtanh.pop %v3092
    %v3797 = vtanh.pop %v3093
    %v3798 = vtanh.pop %v3094
    %v3799 = vtanh.pop %v3095
    %v3800 = vtanh.pop %v3096
    %v3801 = vtanh.pop %v3097
    %v3802 = vtanh.pop %v3098
    %v3803 = vtanh.pop %v3099
    %v3804 = vtanh.pop %v3100
    %v3805 = vtanh.pop %v3101
    %v3806 = vtanh.pop %v3102
    %v3807 = vtanh.pop %v3103
    %v3808 = vtanh.pop %v3104
    %v3809 = vtanh.pop %v3105
    %v3810 = vtanh.pop %v3106
    %v3811 = vtanh.pop %v3107
    %v3812 = vtanh.pop %v3108
    %v3813 = vtanh.pop %v3109
    %v3814 = vtanh.pop %v3110
    %v3815 = vtanh.pop %v3111
    %v3816 = vtanh.pop %v3112
    %v3817 = vtanh.pop %v3113
    %v3818 = vtanh.pop %v3114
    %v3819 = vtanh.pop %v3115
    %v3820 = vtanh.pop %v3116
    %v3821 = vtanh.pop %v3117
    %v3822 = vtanh.pop %v3118
    %v3823 = vtanh.pop %v3119
    %v3824 = vtanh.pop %v3120
    %v3825 = vtanh.pop %v3121
    %v3826 = vtanh.pop %v3122
    %v3827 = vtanh.pop %v3123
    %v3828 = vtanh.pop %v3124
    %v3829 = vtanh.pop %v3125
    %v3830 = vtanh.pop %v3126
    %v3831 = vtanh.pop %v3127
    %v3832 = vtanh.pop %v3128
    %v3833 = vtanh.pop %v3129
    %v3834 = vtanh.pop %v3130
    %v3835 = vtanh.pop %v3131
    %v3836 = vtanh.pop %v3132
    %v3837 = vtanh.pop %v3133
    %v3838 = vtanh.pop %v3134
    %v3839 = vtanh.pop %v3135
    %v3840 = vtanh.pop %v3136
    %v3841 = vtanh.pop %v3137
    %v3842 = vtanh.pop %v3138
    %v3843 = vtanh.pop %v3139
    %v3844 = vtanh.pop %v3140
    %v3845 = vtanh.pop %v3141
    %v3846 = vtanh.pop %v3142
    %v3847 = vtanh.pop %v3143
    %v3848 = vtanh.pop %v3144
    %v3849 = vtanh.pop %v3145
    %v3850 = vtanh.pop %v3146
    %v3851 = vtanh.pop %v3147
    %v3852 = vtanh.pop %v3148
    %v3853 = vtanh.pop %v3149
    %v3854 = vtanh.pop %v3150
    %v3855 = vtanh.pop %v3151
    %v3856 = vtanh.pop %v3152
    %v3857 = vtanh.pop %v3153
    %v3858 = vtanh.pop %v3154
    %v3859 = vtanh.pop %v3155
    %v3860 = vtanh.pop %v3156
    %v3861 = vtanh.pop %v3157
    %v3862 = vtanh.pop %v3158
    %v3863 = vtanh.pop %v3159
    %v3864 = vtanh.pop %v3160
    %v3865 = vtanh.pop %v3161
    %v3866 = vtanh.pop %v3162
    %v3867 = vtanh.pop %v3163
    %v3868 = vtanh.pop %v3164
    %v3869 = vtanh.pop %v3165
    %v3870 = vtanh.pop %v3166
    %v3871 = vtanh.pop %v3167
    %v3872 = vtanh.pop %v3168
    %v3873 = vtanh.pop %v3169
    %v3874 = vtanh.pop %v3170
    %v3875 = vtanh.pop %v3171
    %v3876 = vtanh.pop %v3172
    %v3877 = vtanh.pop %v3173
    %v3878 = vtanh.pop %v3174
    %v3879 = vtanh.pop %v3175
    %v3880 = vtanh.pop %v3176
    %v3881 = vtanh.pop %v3177
    %v3882 = vtanh.pop %v3178
    %v3883 = vtanh.pop %v3179
    %v3884 = vtanh.pop %v3180
    %v3885 = vtanh.pop %v3181
    %v3886 = vtanh.pop %v3182
    %v3887 = vtanh.pop %v3183
    %v3888 = vtanh.pop %v3184
    %v3889 = vtanh.pop %v3185
    %v3890 = vtanh.pop %v3186
    %v3891 = vtanh.pop %v3187
    %v3892 = vtanh.pop %v3188
    %v3893 = vtanh.pop %v3189
    %v3894 = vtanh.pop %v3190
    %v3895 = vtanh.pop %v3191
    %v3896 = vtanh.pop %v3192
    %v3897 = vtanh.pop %v3193
    %v3898 = vtanh.pop %v3194
    %v3899 = vtanh.pop %v3195
    %v3900 = vtanh.pop %v3196
    %v3901 = vtanh.pop %v3197
    %v3902 = vtanh.pop %v3198
    %v3903 = vtanh.pop %v3199
    %v3904 = vtanh.pop %v3200
    %v3905 = vtanh.pop %v3201
    %v3906 = vtanh.pop %v3202
    %v3907 = vtanh.pop %v3203
    %v3908 = vtanh.pop %v3204
    %v3909 = vtanh.pop %v3205
    %v3910 = vtanh.pop %v3206
    %v3911 = vtanh.pop %v3207
    %v3912 = vtanh.pop %v3208
    %v3913 = vtanh.pop %v3209
    %v3914 = vtanh.pop %v3210
    %v3915 = vtanh.pop %v3211
    %v3916 = vtanh.pop %v3212
    %v3917 = vtanh.pop %v3213
    %v3918 = vtanh.pop %v3214
    %v3919 = vtanh.pop %v3215
    %v3920 = vtanh.pop %v3216
    %v3921 = vtanh.pop %v3217
    %v3922 = vtanh.pop %v3218
    %v3923 = vtanh.pop %v3219
    %v3924 = vtanh.pop %v3220
    %v3925 = vtanh.pop %v3221
    %v3926 = vtanh.pop %v3222
    %v3927 = vtanh.pop %v3223
    %v3928 = vtanh.pop %v3224
    %v3929 = vtanh.pop %v3225
    %v3930 = vtanh.pop %v3226
    %v3931 = vtanh.pop %v3227
    %v3932 = vtanh.pop %v3228
    %v3933 = vtanh.pop %v3229
    %v3934 = vtanh.pop %v3230
    %v3935 = vtanh.pop %v3231
    %v3936 = vtanh.pop %v3232
    %v3937 = vtanh.pop %v3233
    %v3938 = vtanh.pop %v3234
    %v3939 = vtanh.pop %v3235
    %v3940 = vtanh.pop %v3236
    %v3941 = vtanh.pop %v3237
    %v3942 = vtanh.pop %v3238
    %v3943 = vtanh.pop %v3239
    %v3944 = vtanh.pop %v3240
    %v3945 = vtanh.pop %v3241
    %v3946 = vtanh.pop %v3242
    %v3947 = vtanh.pop %v3243
    %v3948 = vtanh.pop %v3244
    %v3949 = vtanh.pop %v3245
    %v3950 = vtanh.pop %v3246
    %v3951 = vtanh.pop %v3247
    %v3952 = vtanh.pop %v3248
    %v3953 = vtanh.pop %v3249
    %v3954 = vtanh.pop %v3250
    %v3955 = vtanh.pop %v3251
    %v3956 = vtanh.pop %v3252
    %v3957 = vtanh.pop %v3253
    %v3958 = vtanh.pop %v3254
    %v3959 = vtanh.pop %v3255
    %v3960 = vtanh.pop %v3256
    %v3961 = vtanh.pop %v3257
    %v3962 = vtanh.pop %v3258
    %v3963 = vtanh.pop %v3259
    %v3964 = vtanh.pop %v3260
    %v3965 = vtanh.pop %v3261
    %v3966 = vtanh.pop %v3262
    %v3967 = vtanh.pop %v3263
    %v3968 = vtanh.pop %v3264
    %v3969 = vtanh.pop %v3265
    %v3970 = vtanh.pop %v3266
    %v3971 = vtanh.pop %v3267
    %v3972 = vtanh.pop %v3268
    %v3973 = vtanh.pop %v3269
    %v3974 = vtanh.pop %v3270
    %v3975 = vtanh.pop %v3271
    %v3976 = vtanh.pop %v3272
    %v3977 = vtanh.pop %v3273
    %v3978 = vtanh.pop %v3274
    %v3979 = vtanh.pop %v3275
    %v3980 = vtanh.pop %v3276
    %v3981 = vtanh.pop %v3277
    %v3982 = vtanh.pop %v3278
    %v3983 = vtanh.pop %v3279
    %v3984 = vtanh.pop %v3280
    %v3985 = vtanh.pop %v3281
    %v3986 = vtanh.pop %v3282
    %v3987 = vtanh.pop %v3283
    %v3988 = vtanh.pop %v3284
    %v3989 = vtanh.pop %v3285
    %v3990 = vtanh.pop %v3286
    %v3991 = vtanh.pop %v3287
    %v3992 = vtanh.pop %v3288
    %v3993 = vtanh.pop %v3289
    %v3994 = vtanh.pop %v3290
    %v3995 = vtanh.pop %v3291
    %v3996 = vtanh.pop %v3292
    %v3997 = vtanh.pop %v3293
    %v3998 = vtanh.pop %v3294
    %v3999 = vtanh.pop %v3295
    %v4000 = vtanh.pop %v3296
    %v4001 = vtanh.pop %v3297
    %v4002 = vtanh.pop %v3298
    %v4003 = vtanh.pop %v3299
    %v4004 = vtanh.pop %v3300
    %v4005 = vtanh.pop %v3301
    %v4006 = vtanh.pop %v3302
    %v4007 = vtanh.pop %v3303
    %v4008 = vtanh.pop %v3304
    %v4009 = vtanh.pop %v3305
    %v4010 = vtanh.pop %v3306
    %v4011 = vtanh.pop %v3307
    %v4012 = vtanh.pop %v3308
    %v4013 = vtanh.pop %v3309
    %v4014 = vtanh.pop %v3310
    %v4015 = vtanh.pop %v3311
    %v4016 = vtanh.pop %v3312
    %v4017 = vtanh.pop %v3313
    %v4018 = vtanh.pop %v3314
    %v4019 = vtanh.pop %v3315
    %v4020 = vtanh.pop %v3316
    %v4021 = vtanh.pop %v3317
    %v4022 = vtanh.pop %v3318
    %v4023 = vtanh.pop %v3319
    %v4024 = vtanh.pop %v3320
    %v4025 = vtanh.pop %v3321
    %v4026 = vtanh.pop %v3322
    %v4027 = vtanh.pop %v3323
    %v4028 = vtanh.pop %v3324
    %v4029 = vtanh.pop %v3325
    %v4030 = vtanh.pop %v3326
    %v4031 = vtanh.pop %v3327
    %v4032 = vtanh.pop %v3328
    %v4033 = vtanh.pop %v3329
    %v4034 = vtanh.pop %v3330
    %v4035 = vtanh.pop %v3331
    %v4036 = vtanh.pop %v3332
    %v4037 = vtanh.pop %v3333
    %v4038 = vtanh.pop %v3334
    %v4039 = vtanh.pop %v3335
    %v4040 = vtanh.pop %v3336
    %v4041 = vtanh.pop %v3337
    %v4042 = vtanh.pop %v3338
    %v4043 = vtanh.pop %v3339
    %v4044 = vtanh.pop %v3340
    %v4045 = vtanh.pop %v3341
    %v4046 = vtanh.pop %v3342
    %v4047 = vtanh.pop %v3343
    %v4048 = vtanh.pop %v3344
    %v4049 = vtanh.pop %v3345
    %v4050 = vtanh.pop %v3346
    %v4051 = vtanh.pop %v3347
    %v4052 = vtanh.pop %v3348
    %v4053 = vtanh.pop %v3349
    %v4054 = vtanh.pop %v3350
    %v4055 = vtanh.pop %v3351
    %v4056 = vtanh.pop %v3352
    %v4057 = vtanh.pop %v3353
    %v4058 = vtanh.pop %v3354
    %v4059 = vtanh.pop %v3355
    %v4060 = vtanh.pop %v3356
    %v4061 = vtanh.pop %v3357
    %v4062 = vtanh.pop %v3358
    %v4063 = vtanh.pop %v3359
    %v4064 = vtanh.pop %v3360
    %v4065 = vtanh.pop %v3361
    %v4066 = vtanh.pop %v3362
    %v4067 = vtanh.pop %v3363
    %v4068 = vtanh.pop %v3364
    %v4069 = vtanh.pop %v3365
    %v4070 = vtanh.pop %v3366
    %v4071 = vtanh.pop %v3367
    %v4072 = vtanh.pop %v3368
    %v4073 = vtanh.pop %v3369
    %v4074 = vtanh.pop %v3370
    %v4075 = vtanh.pop %v3371
    %v4076 = vtanh.pop %v3372
    %v4077 = vtanh.pop %v3373
    %v4078 = vtanh.pop %v3374
    %v4079 = vtanh.pop %v3375
    %v4080 = vtanh.pop %v3376
    %v4081 = vtanh.pop %v3377
    %v4082 = vtanh.pop %v3378
    %v4083 = vtanh.pop %v3379
    %v4084 = vtanh.pop %v3380
    %v4085 = vtanh.pop %v3381
    %v4086 = vtanh.pop %v3382
    %v4087 = vtanh.pop %v3383
    %v4088 = vtanh.pop %v3384
    %v4089 = vtanh.pop %v3385
    %v4090 = vtanh.pop %v3386
    %v4091 = vtanh.pop %v3387
    %v4092 = vtanh.pop %v3388
    %v4093 = vtanh.pop %v3389
    %v4094 = vtanh.pop %v3390
    %v4095 = vtanh.pop %v3391
    %v4096 = vtanh.pop %v3392
    %v4097 = vtanh.pop %v3393
    %v4098 = vtanh.pop %v3394
    %v4099 = vtanh.pop %v3395
    %v4100 = vtanh.pop %v3396
    %v4101 = vtanh.pop %v3397
    %v4102 = vtanh.pop %v3398
    %v4103 = vtanh.pop %v3399
    %v4104 = vtanh.pop %v3400
    %v4105 = vtanh.pop %v3401
    %v4106 = vtanh.pop %v3402
    %v4107 = vtanh.pop %v3403
    %v4108 = vtanh.pop %v3404
    %v4109 = vtanh.pop %v3405
    %v4110 = vtanh.pop %v3406
    %v4111 = vtanh.pop %v3407
    %v4112 = vtanh.pop %v3408
    %v4113 = vtanh.pop %v3409
    %v4114 = vtanh.pop %v3410
    %v4115 = vtanh.pop %v3411
    %v4116 = vtanh.pop %v3412
    %v4117 = vtanh.pop %v3413
    %v4118 = vtanh.pop %v3414
    %v4119 = vtanh.pop %v3415
    %v4120 = vtanh.pop %v3416
    %v4121 = vtanh.pop %v3417
    %v4122 = vtanh.pop %v3418
    %v4123 = vtanh.pop %v3419
    %v4124 = vtanh.pop %v3420
    %v4125 = vtanh.pop %v3421
    %v4126 = vtanh.pop %v3422
    %v4127 = vtanh.pop %v3423
    %v4128 = vtanh.pop %v3424
    %v4129 = vtanh.pop %v3425
    %v4130 = vtanh.pop %v3426
    %v4131 = vtanh.pop %v3427
    %v4132 = vtanh.pop %v3428
    %v4133 = vtanh.pop %v3429
    %v4134 = vtanh.pop %v3430
    %v4135 = vtanh.pop %v3431
    %v4136 = vtanh.pop %v3432
    %v4137 = vtanh.pop %v3433
    %v4138 = vtanh.pop %v3434
    %v4139 = vtanh.pop %v3435
    %v4140 = vtanh.pop %v3436
    %v4141 = vtanh.pop %v3437
    %v4142 = vtanh.pop %v3438
    %v4143 = vtanh.pop %v3439
    %v4144 = vtanh.pop %v3440
    %v4145 = vtanh.pop %v3441
    %v4146 = vtanh.pop %v3442
    %v4147 = vtanh.pop %v3443
    %v4148 = vtanh.pop %v3444
    %v4149 = vtanh.pop %v3445
    %v4150 = vtanh.pop %v3446
    %v4151 = vtanh.pop %v3447
    %v4152 = vtanh.pop %v3448
    %v4153 = vtanh.pop %v3449
    %v4154 = vtanh.pop %v3450
    %v4155 = vtanh.pop %v3451
    %v4156 = vtanh.pop %v3452
    %v4157 = vtanh.pop %v3453
    %v4158 = vtanh.pop %v3454
    %v4159 = vtanh.pop %v3455
    %v4160 = vtanh.pop %v3456
    %v4161 = vtanh.pop %v3457
    %v4162 = vtanh.pop %v3458
    %v4163 = vtanh.pop %v3459
    %v4164 = vtanh.pop %v3460
    %v4165 = vtanh.pop %v3461
    %v4166 = vtanh.pop %v3462
    %v4167 = vtanh.pop %v3463
    %v4168 = vtanh.pop %v3464
    %v4169 = vtanh.pop %v3465
    %v4170 = vtanh.pop %v3466
    %v4171 = vtanh.pop %v3467
    %v4172 = vtanh.pop %v3468
    %v4173 = vtanh.pop %v3469
    %v4174 = vtanh.pop %v3470
    %v4175 = vtanh.pop %v3471
    %v4176 = vtanh.pop %v3472
    %v4177 = vtanh.pop %v3473
    %v4178 = vtanh.pop %v3474
    %v4179 = vtanh.pop %v3475
    %v4180 = vtanh.pop %v3476
    %v4181 = vtanh.pop %v3477
    %v4182 = vtanh.pop %v3478
    %v4183 = vtanh.pop %v3479
    %v4184 = vtanh.pop %v3480
    %v4185 = vtanh.pop %v3481
    %v4186 = vtanh.pop %v3482
    %v4187 = vtanh.pop %v3483
    %v4188 = vtanh.pop %v3484
    %v4189 = vtanh.pop %v3485
    %v4190 = vtanh.pop %v3486
    %v4191 = vtanh.pop %v3487
    %v4192 = vtanh.pop %v3488
    %v4193 = vtanh.pop %v3489
    %v4194 = vtanh.pop %v3490
    %v4195 = vtanh.pop %v3491
    %v4196 = vtanh.pop %v3492
    %v4197 = vtanh.pop %v3493
    %v4198 = vtanh.pop %v3494
    %v4199 = vtanh.pop %v3495
    %v4200 = vtanh.pop %v3496
    %v4201 = vtanh.pop %v3497
    %v4202 = vtanh.pop %v3498
    %v4203 = vtanh.pop %v3499
    %v4204 = vtanh.pop %v3500
    %v4205 = vtanh.pop %v3501
    %v4206 = vtanh.pop %v3502
    %v4207 = vtanh.pop %v3503
    %v4208 = vtanh.pop %v3504
    %v4209 = vtanh.pop %v3505
    %v4210 = vtanh.pop %v3506
    %v4211 = vtanh.pop %v3507
    %v4212 = vtanh.pop %v3508
    %v4213 = vtanh.pop %v3509
    %v4214 = vtanh.pop %v3510
    %v4215 = vtanh.pop %v3511
    %v4216 = vtanh.pop %v3512
    %v4217 = vtanh.pop %v3513
    %v4218 = vtanh.pop %v3514
    %v4219 = vtanh.pop %v3515
    %v4220 = vtanh.pop %v3516
    %v4221 = vtanh.pop %v3517
    %v4222 = vtanh.pop %v3518
    %v4223 = vtanh.pop %v3519
    %v4224 = vtanh.pop %v3520
    %v4225 = vtanh.pop %v3521
    %v4226 = vtanh.pop %v3522
    %v4227 = vtanh.pop %v3523
    %v4228 = vtanh.pop %v3524
    %v4229 = vtanh.pop %v3525
    %v4230 = vtanh.pop %v3526
    %v4231 = vtanh.pop %v3527
    %v4232 = vtanh.pop %v3528
    %v4233 = vtanh.pop %v3529
    %v4234 = vtanh.pop %v3530
    %v4235 = vtanh.pop %v3531
    %v4236 = vtanh.pop %v3532
    %v4237 = vtanh.pop %v3533
    %v4238 = vtanh.pop %v3534
    %v4239 = vtanh.pop %v3535
    %v4240 = vtanh.pop %v3536
    %v4241 = vtanh.pop %v3537
    %v4242 = vtanh.pop %v3538
    %v4243 = vtanh.pop %v3539
    %v4244 = vtanh.pop %v3540
    %v4245 = vtanh.pop %v3541
    %v4246 = vtanh.pop %v3542
    %v4247 = vtanh.pop %v3543
    %v4248 = vtanh.pop %v3544
    %v4249 = vtanh.pop %v3545
    %v4250 = vtanh.pop %v3546
    %v4251 = vtanh.pop %v3547
    %v4252 = vtanh.pop %v3548
    %v4253 = vtanh.pop %v3549
    %v4254 = vtanh.pop %v3550
    %v4255 = vtanh.pop %v3551
    %v4256 = vtanh.pop %v3552
    %v4257 = vtanh.pop %v3553
    %v4258 = vtanh.pop %v3554
    %v4259 = vtanh.pop %v3555
    %v4260 = vtanh.pop %v3556
    %v4261 = vtanh.pop %v3557
    %v4262 = vtanh.pop %v3558
    %v4263 = vtanh.pop %v3559
    %v4264 = vtanh.pop %v3560
    %v4265 = vtanh.pop %v3561
    %v4266 = vtanh.pop %v3562
    %v4267 = vtanh.pop %v3563
    %v4268 = vtanh.pop %v3564
    %v4269 = vtanh.pop %v3565
    %v4270 = vtanh.pop %v3566
    %v4271 = vtanh.pop %v3567
    %v4272 = vtanh.pop %v3568
    %v4273 = vtanh.pop %v3569
    %v4274 = vtanh.pop %v3570
    %v4275 = vtanh.pop %v3571
    %v4276 = vtanh.pop %v3572
    %v4277 = vtanh.pop %v3573
    %v4278 = vtanh.pop %v3574
    %v4279 = vtanh.pop %v3575
    %v4280 = vtanh.pop %v3576
    %v4281 = vtanh.pop %v3577
    %v4282 = vtanh.pop %v3578
    %v4283 = vtanh.pop %v3579
    %v4284 = vtanh.pop %v3580
    %v4285 = vtanh.pop %v3581
    %v4286 = vtanh.pop %v3582
    %v4287 = vtanh.pop %v3583
    %v4288 = vtanh.pop %v3584
    %v4289 = vtanh.pop %v3585
    %v4290 = vtanh.pop %v3586
    %v4291 = vtanh.pop %v3587
    %v4292 = vtanh.pop %v3588
    %v4293 = vtanh.pop %v3589
    %v4294 = vtanh.pop %v3590
    %v4295 = vtanh.pop %v3591
    %v4296 = vtanh.pop %v3592
    %v4297 = vtanh.pop %v3593
    %v4298 = vtanh.pop %v3594
    %v4299 = vtanh.pop %v3595
    %v4300 = vtanh.pop %v3596
    %v4301 = vtanh.pop %v3597
    %v4302 = vtanh.pop %v3598
    %v4303 = vtanh.pop %v3599
    %v4304 = vtanh.pop %v3600
    %v4305 = vtanh.pop %v3601
    %v4306 = vtanh.pop %v3602
    %v4307 = vtanh.pop %v3603
    %v4308 = vtanh.pop %v3604
    %v4309 = vtanh.pop %v3605
    %v4310 = vtanh.pop %v3606
    %v4311 = vtanh.pop %v3607
    %v4312 = vtanh.pop %v3608
    %v4313 = vtanh.pop %v3609
    %v4314 = vtanh.pop %v3610
    %v4315 = vtanh.pop %v3611
    %v4316 = vtanh.pop %v3612
    %v4317 = vtanh.pop %v3613
    %v4318 = vtanh.pop %v3614
    %v4319 = vtanh.pop %v3615
    %v4320 = vtanh.pop %v3616
    %v4321 = vtanh.pop %v3617
    %v4322 = vtanh.pop %v3618
    %v4323 = vtanh.pop %v3619
    %v4324 = vtanh.pop %v3620
    %v4325 = vtanh.pop %v3621
    %v4326 = vtanh.pop %v3622
    %v4327 = vtanh.pop %v3623
    %v4328 = vtanh.pop %v3624
    %v4329 = vtanh.pop %v3625
    %v4330 = vtanh.pop %v3626
    %v4331 = vtanh.pop %v3627
    %v4332 = vtanh.pop %v3628
    %v4333 = vtanh.pop %v3629
    %v4334 = vtanh.pop %v3630
    %v4335 = vtanh.pop %v3631
    %v4336 = vtanh.pop %v3632
    %v4337 = vtanh.pop %v3633
    %v4338 = vtanh.pop %v3634
    %v4339 = vtanh.pop %v3635
    %v4340 = vtanh.pop %v3636
    %v4341 = vtanh.pop %v3637
    %v4342 = vtanh.pop %v3638
    %v4343 = vtanh.pop %v3639
    %v4344 = vtanh.pop %v3640
    %v4345 = vtanh.pop %v3641
    %v4346 = vmul.f32 %v3642, 0.5
    %v4347 = vmul.f32 %v3643, 0.5
    %v4348 = vmul.f32 %v3644, 0.5
    %v4349 = vmul.f32 %v3645, 0.5
    %v4350 = vmul.f32 %v3646, 0.5
    %v4351 = vmul.f32 %v3647, 0.5
    %v4352 = vmul.f32 %v3648, 0.5
    %v4353 = vmul.f32 %v3649, 0.5
    %v4354 = vmul.f32 %v3650, 0.5
    %v4355 = vmul.f32 %v3651, 0.5
    %v4356 = vmul.f32 %v3652, 0.5
    %v4357 = vmul.f32 %v3653, 0.5
    %v4358 = vmul.f32 %v3654, 0.5
    %v4359 = vmul.f32 %v3655, 0.5
    %v4360 = vmul.f32 %v3656, 0.5
    %v4361 = vmul.f32 %v3657, 0.5
    %v4362 = vmul.f32 %v3658, 0.5
    %v4363 = vmul.f32 %v3659, 0.5
    %v4364 = vmul.f32 %v3660, 0.5
    %v4365 = vmul.f32 %v3661, 0.5
    %v4366 = vmul.f32 %v3662, 0.5
    %v4367 = vmul.f32 %v3663, 0.5
    %v4368 = vmul.f32 %v3664, 0.5
    %v4369 = vmul.f32 %v3665, 0.5
    %v4370 = vmul.f32 %v3666, 0.5
    %v4371 = vmul.f32 %v3667, 0.5
    %v4372 = vmul.f32 %v3668, 0.5
    %v4373 = vmul.f32 %v3669, 0.5
    %v4374 = vmul.f32 %v3670, 0.5
    %v4375 = vmul.f32 %v3671, 0.5
    %v4376 = vmul.f32 %v3672, 0.5
    %v4377 = vmul.f32 %v3673, 0.5
    %v4378 = vmul.f32 %v3674, 0.5
    %v4379 = vmul.f32 %v3675, 0.5
    %v4380 = vmul.f32 %v3676, 0.5
    %v4381 = vmul.f32 %v3677, 0.5
    %v4382 = vmul.f32 %v3678, 0.5
    %v4383 = vmul.f32 %v3679, 0.5
    %v4384 = vmul.f32 %v3680, 0.5
    %v4385 = vmul.f32 %v3681, 0.5
    %v4386 = vmul.f32 %v3682, 0.5
    %v4387 = vmul.f32 %v3683, 0.5
    %v4388 = vmul.f32 %v3684, 0.5
    %v4389 = vmul.f32 %v3685, 0.5
    %v4390 = vmul.f32 %v3686, 0.5
    %v4391 = vmul.f32 %v3687, 0.5
    %v4392 = vmul.f32 %v3688, 0.5
    %v4393 = vmul.f32 %v3689, 0.5
    %v4394 = vmul.f32 %v3690, 0.5
    %v4395 = vmul.f32 %v3691, 0.5
    %v4396 = vmul.f32 %v3692, 0.5
    %v4397 = vmul.f32 %v3693, 0.5
    %v4398 = vmul.f32 %v3694, 0.5
    %v4399 = vmul.f32 %v3695, 0.5
    %v4400 = vmul.f32 %v3696, 0.5
    %v4401 = vmul.f32 %v3697, 0.5
    %v4402 = vmul.f32 %v3698, 0.5
    %v4403 = vmul.f32 %v3699, 0.5
    %v4404 = vmul.f32 %v3700, 0.5
    %v4405 = vmul.f32 %v3701, 0.5
    %v4406 = vmul.f32 %v3702, 0.5
    %v4407 = vmul.f32 %v3703, 0.5
    %v4408 = vmul.f32 %v3704, 0.5
    %v4409 = vmul.f32 %v3705, 0.5
    %v4410 = vmul.f32 %v3706, 0.5
    %v4411 = vmul.f32 %v3707, 0.5
    %v4412 = vmul.f32 %v3708, 0.5
    %v4413 = vmul.f32 %v3709, 0.5
    %v4414 = vmul.f32 %v3710, 0.5
    %v4415 = vmul.f32 %v3711, 0.5
    %v4416 = vmul.f32 %v3712, 0.5
    %v4417 = vmul.f32 %v3713, 0.5
    %v4418 = vmul.f32 %v3714, 0.5
    %v4419 = vmul.f32 %v3715, 0.5
    %v4420 = vmul.f32 %v3716, 0.5
    %v4421 = vmul.f32 %v3717, 0.5
    %v4422 = vmul.f32 %v3718, 0.5
    %v4423 = vmul.f32 %v3719, 0.5
    %v4424 = vmul.f32 %v3720, 0.5
    %v4425 = vmul.f32 %v3721, 0.5
    %v4426 = vmul.f32 %v3722, 0.5
    %v4427 = vmul.f32 %v3723, 0.5
    %v4428 = vmul.f32 %v3724, 0.5
    %v4429 = vmul.f32 %v3725, 0.5
    %v4430 = vmul.f32 %v3726, 0.5
    %v4431 = vmul.f32 %v3727, 0.5
    %v4432 = vmul.f32 %v3728, 0.5
    %v4433 = vmul.f32 %v3729, 0.5
    %v4434 = vmul.f32 %v3730, 0.5
    %v4435 = vmul.f32 %v3731, 0.5
    %v4436 = vmul.f32 %v3732, 0.5
    %v4437 = vmul.f32 %v3733, 0.5
    %v4438 = vmul.f32 %v3734, 0.5
    %v4439 = vmul.f32 %v3735, 0.5
    %v4440 = vmul.f32 %v3736, 0.5
    %v4441 = vmul.f32 %v3737, 0.5
    %v4442 = vmul.f32 %v3738, 0.5
    %v4443 = vmul.f32 %v3739, 0.5
    %v4444 = vmul.f32 %v3740, 0.5
    %v4445 = vmul.f32 %v3741, 0.5
    %v4446 = vmul.f32 %v3742, 0.5
    %v4447 = vmul.f32 %v3743, 0.5
    %v4448 = vmul.f32 %v3744, 0.5
    %v4449 = vmul.f32 %v3745, 0.5
    %v4450 = vmul.f32 %v3746, 0.5
    %v4451 = vmul.f32 %v3747, 0.5
    %v4452 = vmul.f32 %v3748, 0.5
    %v4453 = vmul.f32 %v3749, 0.5
    %v4454 = vmul.f32 %v3750, 0.5
    %v4455 = vmul.f32 %v3751, 0.5
    %v4456 = vmul.f32 %v3752, 0.5
    %v4457 = vmul.f32 %v3753, 0.5
    %v4458 = vmul.f32 %v3754, 0.5
    %v4459 = vmul.f32 %v3755, 0.5
    %v4460 = vmul.f32 %v3756, 0.5
    %v4461 = vmul.f32 %v3757, 0.5
    %v4462 = vmul.f32 %v3758, 0.5
    %v4463 = vmul.f32 %v3759, 0.5
    %v4464 = vmul.f32 %v3760, 0.5
    %v4465 = vmul.f32 %v3761, 0.5
    %v4466 = vmul.f32 %v3762, 0.5
    %v4467 = vmul.f32 %v3763, 0.5
    %v4468 = vmul.f32 %v3764, 0.5
    %v4469 = vmul.f32 %v3765, 0.5
    %v4470 = vmul.f32 %v3766, 0.5
    %v4471 = vmul.f32 %v3767, 0.5
    %v4472 = vmul.f32 %v3768, 0.5
    %v4473 = vmul.f32 %v3769, 0.5
    %v4474 = vmul.f32 %v3770, 0.5
    %v4475 = vmul.f32 %v3771, 0.5
    %v4476 = vmul.f32 %v3772, 0.5
    %v4477 = vmul.f32 %v3773, 0.5
    %v4478 = vmul.f32 %v3774, 0.5
    %v4479 = vmul.f32 %v3775, 0.5
    %v4480 = vmul.f32 %v3776, 0.5
    %v4481 = vmul.f32 %v3777, 0.5
    %v4482 = vmul.f32 %v3778, 0.5
    %v4483 = vmul.f32 %v3779, 0.5
    %v4484 = vmul.f32 %v3780, 0.5
    %v4485 = vmul.f32 %v3781, 0.5
    %v4486 = vmul.f32 %v3782, 0.5
    %v4487 = vmul.f32 %v3783, 0.5
    %v4488 = vmul.f32 %v3784, 0.5
    %v4489 = vmul.f32 %v3785, 0.5
    %v4490 = vmul.f32 %v3786, 0.5
    %v4491 = vmul.f32 %v3787, 0.5
    %v4492 = vmul.f32 %v3788, 0.5
    %v4493 = vmul.f32 %v3789, 0.5
    %v4494 = vmul.f32 %v3790, 0.5
    %v4495 = vmul.f32 %v3791, 0.5
    %v4496 = vmul.f32 %v3792, 0.5
    %v4497 = vmul.f32 %v3793, 0.5
    %v4498 = vmul.f32 %v3794, 0.5
    %v4499 = vmul.f32 %v3795, 0.5
    %v4500 = vmul.f32 %v3796, 0.5
    %v4501 = vmul.f32 %v3797, 0.5
    %v4502 = vmul.f32 %v3798, 0.5
    %v4503 = vmul.f32 %v3799, 0.5
    %v4504 = vmul.f32 %v3800, 0.5
    %v4505 = vmul.f32 %v3801, 0.5
    %v4506 = vmul.f32 %v3802, 0.5
    %v4507 = vmul.f32 %v3803, 0.5
    %v4508 = vmul.f32 %v3804, 0.5
    %v4509 = vmul.f32 %v3805, 0.5
    %v4510 = vmul.f32 %v3806, 0.5
    %v4511 = vmul.f32 %v3807, 0.5
    %v4512 = vmul.f32 %v3808, 0.5
    %v4513 = vmul.f32 %v3809, 0.5
    %v4514 = vmul.f32 %v3810, 0.5
    %v4515 = vmul.f32 %v3811, 0.5
    %v4516 = vmul.f32 %v3812, 0.5
    %v4517 = vmul.f32 %v3813, 0.5
    %v4518 = vmul.f32 %v3814, 0.5
    %v4519 = vmul.f32 %v3815, 0.5
    %v4520 = vmul.f32 %v3816, 0.5
    %v4521 = vmul.f32 %v3817, 0.5
    %v4522 = vmul.f32 %v3818, 0.5
    %v4523 = vmul.f32 %v3819, 0.5
    %v4524 = vmul.f32 %v3820, 0.5
    %v4525 = vmul.f32 %v3821, 0.5
    %v4526 = vmul.f32 %v3822, 0.5
    %v4527 = vmul.f32 %v3823, 0.5
    %v4528 = vmul.f32 %v3824, 0.5
    %v4529 = vmul.f32 %v3825, 0.5
    %v4530 = vmul.f32 %v3826, 0.5
    %v4531 = vmul.f32 %v3827, 0.5
    %v4532 = vmul.f32 %v3828, 0.5
    %v4533 = vmul.f32 %v3829, 0.5
    %v4534 = vmul.f32 %v3830, 0.5
    %v4535 = vmul.f32 %v3831, 0.5
    %v4536 = vmul.f32 %v3832, 0.5
    %v4537 = vmul.f32 %v3833, 0.5
    %v4538 = vmul.f32 %v3834, 0.5
    %v4539 = vmul.f32 %v3835, 0.5
    %v4540 = vmul.f32 %v3836, 0.5
    %v4541 = vmul.f32 %v3837, 0.5
    %v4542 = vmul.f32 %v3838, 0.5
    %v4543 = vmul.f32 %v3839, 0.5
    %v4544 = vmul.f32 %v3840, 0.5
    %v4545 = vmul.f32 %v3841, 0.5
    %v4546 = vmul.f32 %v3842, 0.5
    %v4547 = vmul.f32 %v3843, 0.5
    %v4548 = vmul.f32 %v3844, 0.5
    %v4549 = vmul.f32 %v3845, 0.5
    %v4550 = vmul.f32 %v3846, 0.5
    %v4551 = vmul.f32 %v3847, 0.5
    %v4552 = vmul.f32 %v3848, 0.5
    %v4553 = vmul.f32 %v3849, 0.5
    %v4554 = vmul.f32 %v3850, 0.5
    %v4555 = vmul.f32 %v3851, 0.5
    %v4556 = vmul.f32 %v3852, 0.5
    %v4557 = vmul.f32 %v3853, 0.5
    %v4558 = vmul.f32 %v3854, 0.5
    %v4559 = vmul.f32 %v3855, 0.5
    %v4560 = vmul.f32 %v3856, 0.5
    %v4561 = vmul.f32 %v3857, 0.5
    %v4562 = vmul.f32 %v3858, 0.5
    %v4563 = vmul.f32 %v3859, 0.5
    %v4564 = vmul.f32 %v3860, 0.5
    %v4565 = vmul.f32 %v3861, 0.5
    %v4566 = vmul.f32 %v3862, 0.5
    %v4567 = vmul.f32 %v3863, 0.5
    %v4568 = vmul.f32 %v3864, 0.5
    %v4569 = vmul.f32 %v3865, 0.5
    %v4570 = vmul.f32 %v3866, 0.5
    %v4571 = vmul.f32 %v3867, 0.5
    %v4572 = vmul.f32 %v3868, 0.5
    %v4573 = vmul.f32 %v3869, 0.5
    %v4574 = vmul.f32 %v3870, 0.5
    %v4575 = vmul.f32 %v3871, 0.5
    %v4576 = vmul.f32 %v3872, 0.5
    %v4577 = vmul.f32 %v3873, 0.5
    %v4578 = vmul.f32 %v3874, 0.5
    %v4579 = vmul.f32 %v3875, 0.5
    %v4580 = vmul.f32 %v3876, 0.5
    %v4581 = vmul.f32 %v3877, 0.5
    %v4582 = vmul.f32 %v3878, 0.5
    %v4583 = vmul.f32 %v3879, 0.5
    %v4584 = vmul.f32 %v3880, 0.5
    %v4585 = vmul.f32 %v3881, 0.5
    %v4586 = vmul.f32 %v3882, 0.5
    %v4587 = vmul.f32 %v3883, 0.5
    %v4588 = vmul.f32 %v3884, 0.5
    %v4589 = vmul.f32 %v3885, 0.5
    %v4590 = vmul.f32 %v3886, 0.5
    %v4591 = vmul.f32 %v3887, 0.5
    %v4592 = vmul.f32 %v3888, 0.5
    %v4593 = vmul.f32 %v3889, 0.5
    %v4594 = vmul.f32 %v3890, 0.5
    %v4595 = vmul.f32 %v3891, 0.5
    %v4596 = vmul.f32 %v3892, 0.5
    %v4597 = vmul.f32 %v3893, 0.5
    %v4598 = vmul.f32 %v3894, 0.5
    %v4599 = vmul.f32 %v3895, 0.5
    %v4600 = vmul.f32 %v3896, 0.5
    %v4601 = vmul.f32 %v3897, 0.5
    %v4602 = vmul.f32 %v3898, 0.5
    %v4603 = vmul.f32 %v3899, 0.5
    %v4604 = vmul.f32 %v3900, 0.5
    %v4605 = vmul.f32 %v3901, 0.5
    %v4606 = vmul.f32 %v3902, 0.5
    %v4607 = vmul.f32 %v3903, 0.5
    %v4608 = vmul.f32 %v3904, 0.5
    %v4609 = vmul.f32 %v3905, 0.5
    %v4610 = vmul.f32 %v3906, 0.5
    %v4611 = vmul.f32 %v3907, 0.5
    %v4612 = vmul.f32 %v3908, 0.5
    %v4613 = vmul.f32 %v3909, 0.5
    %v4614 = vmul.f32 %v3910, 0.5
    %v4615 = vmul.f32 %v3911, 0.5
    %v4616 = vmul.f32 %v3912, 0.5
    %v4617 = vmul.f32 %v3913, 0.5
    %v4618 = vmul.f32 %v3914, 0.5
    %v4619 = vmul.f32 %v3915, 0.5
    %v4620 = vmul.f32 %v3916, 0.5
    %v4621 = vmul.f32 %v3917, 0.5
    %v4622 = vmul.f32 %v3918, 0.5
    %v4623 = vmul.f32 %v3919, 0.5
    %v4624 = vmul.f32 %v3920, 0.5
    %v4625 = vmul.f32 %v3921, 0.5
    %v4626 = vmul.f32 %v3922, 0.5
    %v4627 = vmul.f32 %v3923, 0.5
    %v4628 = vmul.f32 %v3924, 0.5
    %v4629 = vmul.f32 %v3925, 0.5
    %v4630 = vmul.f32 %v3926, 0.5
    %v4631 = vmul.f32 %v3927, 0.5
    %v4632 = vmul.f32 %v3928, 0.5
    %v4633 = vmul.f32 %v3929, 0.5
    %v4634 = vmul.f32 %v3930, 0.5
    %v4635 = vmul.f32 %v3931, 0.5
    %v4636 = vmul.f32 %v3932, 0.5
    %v4637 = vmul.f32 %v3933, 0.5
    %v4638 = vmul.f32 %v3934, 0.5
    %v4639 = vmul.f32 %v3935, 0.5
    %v4640 = vmul.f32 %v3936, 0.5
    %v4641 = vmul.f32 %v3937, 0.5
    %v4642 = vmul.f32 %v3938, 0.5
    %v4643 = vmul.f32 %v3939, 0.5
    %v4644 = vmul.f32 %v3940, 0.5
    %v4645 = vmul.f32 %v3941, 0.5
    %v4646 = vmul.f32 %v3942, 0.5
    %v4647 = vmul.f32 %v3943, 0.5
    %v4648 = vmul.f32 %v3944, 0.5
    %v4649 = vmul.f32 %v3945, 0.5
    %v4650 = vmul.f32 %v3946, 0.5
    %v4651 = vmul.f32 %v3947, 0.5
    %v4652 = vmul.f32 %v3948, 0.5
    %v4653 = vmul.f32 %v3949, 0.5
    %v4654 = vmul.f32 %v3950, 0.5
    %v4655 = vmul.f32 %v3951, 0.5
    %v4656 = vmul.f32 %v3952, 0.5
    %v4657 = vmul.f32 %v3953, 0.5
    %v4658 = vmul.f32 %v3954, 0.5
    %v4659 = vmul.f32 %v3955, 0.5
    %v4660 = vmul.f32 %v3956, 0.5
    %v4661 = vmul.f32 %v3957, 0.5
    %v4662 = vmul.f32 %v3958, 0.5
    %v4663 = vmul.f32 %v3959, 0.5
    %v4664 = vmul.f32 %v3960, 0.5
    %v4665 = vmul.f32 %v3961, 0.5
    %v4666 = vmul.f32 %v3962, 0.5
    %v4667 = vmul.f32 %v3963, 0.5
    %v4668 = vmul.f32 %v3964, 0.5
    %v4669 = vmul.f32 %v3965, 0.5
    %v4670 = vmul.f32 %v3966, 0.5
    %v4671 = vmul.f32 %v3967, 0.5
    %v4672 = vmul.f32 %v3968, 0.5
    %v4673 = vmul.f32 %v3969, 0.5
    %v4674 = vmul.f32 %v3970, 0.5
    %v4675 = vmul.f32 %v3971, 0.5
    %v4676 = vmul.f32 %v3972, 0.5
    %v4677 = vmul.f32 %v3973, 0.5
    %v4678 = vmul.f32 %v3974, 0.5
    %v4679 = vmul.f32 %v3975, 0.5
    %v4680 = vmul.f32 %v3976, 0.5
    %v4681 = vmul.f32 %v3977, 0.5
    %v4682 = vmul.f32 %v3978, 0.5
    %v4683 = vmul.f32 %v3979, 0.5
    %v4684 = vmul.f32 %v3980, 0.5
    %v4685 = vmul.f32 %v3981, 0.5
    %v4686 = vmul.f32 %v3982, 0.5
    %v4687 = vmul.f32 %v3983, 0.5
    %v4688 = vmul.f32 %v3984, 0.5
    %v4689 = vmul.f32 %v3985, 0.5
    %v4690 = vmul.f32 %v3986, 0.5
    %v4691 = vmul.f32 %v3987, 0.5
    %v4692 = vmul.f32 %v3988, 0.5
    %v4693 = vmul.f32 %v3989, 0.5
    %v4694 = vmul.f32 %v3990, 0.5
    %v4695 = vmul.f32 %v3991, 0.5
    %v4696 = vmul.f32 %v3992, 0.5
    %v4697 = vmul.f32 %v3993, 0.5
    %v4698 = vmul.f32 %v3994, 0.5
    %v4699 = vmul.f32 %v3995, 0.5
    %v4700 = vmul.f32 %v3996, 0.5
    %v4701 = vmul.f32 %v3997, 0.5
    %v4702 = vmul.f32 %v3998, 0.5
    %v4703 = vmul.f32 %v3999, 0.5
    %v4704 = vmul.f32 %v4000, 0.5
    %v4705 = vmul.f32 %v4001, 0.5
    %v4706 = vmul.f32 %v4002, 0.5
    %v4707 = vmul.f32 %v4003, 0.5
    %v4708 = vmul.f32 %v4004, 0.5
    %v4709 = vmul.f32 %v4005, 0.5
    %v4710 = vmul.f32 %v4006, 0.5
    %v4711 = vmul.f32 %v4007, 0.5
    %v4712 = vmul.f32 %v4008, 0.5
    %v4713 = vmul.f32 %v4009, 0.5
    %v4714 = vmul.f32 %v4010, 0.5
    %v4715 = vmul.f32 %v4011, 0.5
    %v4716 = vmul.f32 %v4012, 0.5
    %v4717 = vmul.f32 %v4013, 0.5
    %v4718 = vmul.f32 %v4014, 0.5
    %v4719 = vmul.f32 %v4015, 0.5
    %v4720 = vmul.f32 %v4016, 0.5
    %v4721 = vmul.f32 %v4017, 0.5
    %v4722 = vmul.f32 %v4018, 0.5
    %v4723 = vmul.f32 %v4019, 0.5
    %v4724 = vmul.f32 %v4020, 0.5
    %v4725 = vmul.f32 %v4021, 0.5
    %v4726 = vmul.f32 %v4022, 0.5
    %v4727 = vmul.f32 %v4023, 0.5
    %v4728 = vmul.f32 %v4024, 0.5
    %v4729 = vmul.f32 %v4025, 0.5
    %v4730 = vmul.f32 %v4026, 0.5
    %v4731 = vmul.f32 %v4027, 0.5
    %v4732 = vmul.f32 %v4028, 0.5
    %v4733 = vmul.f32 %v4029, 0.5
    %v4734 = vmul.f32 %v4030, 0.5
    %v4735 = vmul.f32 %v4031, 0.5
    %v4736 = vmul.f32 %v4032, 0.5
    %v4737 = vmul.f32 %v4033, 0.5
    %v4738 = vmul.f32 %v4034, 0.5
    %v4739 = vmul.f32 %v4035, 0.5
    %v4740 = vmul.f32 %v4036, 0.5
    %v4741 = vmul.f32 %v4037, 0.5
    %v4742 = vmul.f32 %v4038, 0.5
    %v4743 = vmul.f32 %v4039, 0.5
    %v4744 = vmul.f32 %v4040, 0.5
    %v4745 = vmul.f32 %v4041, 0.5
    %v4746 = vmul.f32 %v4042, 0.5
    %v4747 = vmul.f32 %v4043, 0.5
    %v4748 = vmul.f32 %v4044, 0.5
    %v4749 = vmul.f32 %v4045, 0.5
    %v4750 = vmul.f32 %v4046, 0.5
    %v4751 = vmul.f32 %v4047, 0.5
    %v4752 = vmul.f32 %v4048, 0.5
    %v4753 = vmul.f32 %v4049, 0.5
    %v4754 = vmul.f32 %v4050, 0.5
    %v4755 = vmul.f32 %v4051, 0.5
    %v4756 = vmul.f32 %v4052, 0.5
    %v4757 = vmul.f32 %v4053, 0.5
    %v4758 = vmul.f32 %v4054, 0.5
    %v4759 = vmul.f32 %v4055, 0.5
    %v4760 = vmul.f32 %v4056, 0.5
    %v4761 = vmul.f32 %v4057, 0.5
    %v4762 = vmul.f32 %v4058, 0.5
    %v4763 = vmul.f32 %v4059, 0.5
    %v4764 = vmul.f32 %v4060, 0.5
    %v4765 = vmul.f32 %v4061, 0.5
    %v4766 = vmul.f32 %v4062, 0.5
    %v4767 = vmul.f32 %v4063, 0.5
    %v4768 = vmul.f32 %v4064, 0.5
    %v4769 = vmul.f32 %v4065, 0.5
    %v4770 = vmul.f32 %v4066, 0.5
    %v4771 = vmul.f32 %v4067, 0.5
    %v4772 = vmul.f32 %v4068, 0.5
    %v4773 = vmul.f32 %v4069, 0.5
    %v4774 = vmul.f32 %v4070, 0.5
    %v4775 = vmul.f32 %v4071, 0.5
    %v4776 = vmul.f32 %v4072, 0.5
    %v4777 = vmul.f32 %v4073, 0.5
    %v4778 = vmul.f32 %v4074, 0.5
    %v4779 = vmul.f32 %v4075, 0.5
    %v4780 = vmul.f32 %v4076, 0.5
    %v4781 = vmul.f32 %v4077, 0.5
    %v4782 = vmul.f32 %v4078, 0.5
    %v4783 = vmul.f32 %v4079, 0.5
    %v4784 = vmul.f32 %v4080, 0.5
    %v4785 = vmul.f32 %v4081, 0.5
    %v4786 = vmul.f32 %v4082, 0.5
    %v4787 = vmul.f32 %v4083, 0.5
    %v4788 = vmul.f32 %v4084, 0.5
    %v4789 = vmul.f32 %v4085, 0.5
    %v4790 = vmul.f32 %v4086, 0.5
    %v4791 = vmul.f32 %v4087, 0.5
    %v4792 = vmul.f32 %v4088, 0.5
    %v4793 = vmul.f32 %v4089, 0.5
    %v4794 = vmul.f32 %v4090, 0.5
    %v4795 = vmul.f32 %v4091, 0.5
    %v4796 = vmul.f32 %v4092, 0.5
    %v4797 = vmul.f32 %v4093, 0.5
    %v4798 = vmul.f32 %v4094, 0.5
    %v4799 = vmul.f32 %v4095, 0.5
    %v4800 = vmul.f32 %v4096, 0.5
    %v4801 = vmul.f32 %v4097, 0.5
    %v4802 = vmul.f32 %v4098, 0.5
    %v4803 = vmul.f32 %v4099, 0.5
    %v4804 = vmul.f32 %v4100, 0.5
    %v4805 = vmul.f32 %v4101, 0.5
    %v4806 = vmul.f32 %v4102, 0.5
    %v4807 = vmul.f32 %v4103, 0.5
    %v4808 = vmul.f32 %v4104, 0.5
    %v4809 = vmul.f32 %v4105, 0.5
    %v4810 = vmul.f32 %v4106, 0.5
    %v4811 = vmul.f32 %v4107, 0.5
    %v4812 = vmul.f32 %v4108, 0.5
    %v4813 = vmul.f32 %v4109, 0.5
    %v4814 = vmul.f32 %v4110, 0.5
    %v4815 = vmul.f32 %v4111, 0.5
    %v4816 = vmul.f32 %v4112, 0.5
    %v4817 = vmul.f32 %v4113, 0.5
    %v4818 = vmul.f32 %v4114, 0.5
    %v4819 = vmul.f32 %v4115, 0.5
    %v4820 = vmul.f32 %v4116, 0.5
    %v4821 = vmul.f32 %v4117, 0.5
    %v4822 = vmul.f32 %v4118, 0.5
    %v4823 = vmul.f32 %v4119, 0.5
    %v4824 = vmul.f32 %v4120, 0.5
    %v4825 = vmul.f32 %v4121, 0.5
    %v4826 = vmul.f32 %v4122, 0.5
    %v4827 = vmul.f32 %v4123, 0.5
    %v4828 = vmul.f32 %v4124, 0.5
    %v4829 = vmul.f32 %v4125, 0.5
    %v4830 = vmul.f32 %v4126, 0.5
    %v4831 = vmul.f32 %v4127, 0.5
    %v4832 = vmul.f32 %v4128, 0.5
    %v4833 = vmul.f32 %v4129, 0.5
    %v4834 = vmul.f32 %v4130, 0.5
    %v4835 = vmul.f32 %v4131, 0.5
    %v4836 = vmul.f32 %v4132, 0.5
    %v4837 = vmul.f32 %v4133, 0.5
    %v4838 = vmul.f32 %v4134, 0.5
    %v4839 = vmul.f32 %v4135, 0.5
    %v4840 = vmul.f32 %v4136, 0.5
    %v4841 = vmul.f32 %v4137, 0.5
    %v4842 = vmul.f32 %v4138, 0.5
    %v4843 = vmul.f32 %v4139, 0.5
    %v4844 = vmul.f32 %v4140, 0.5
    %v4845 = vmul.f32 %v4141, 0.5
    %v4846 = vmul.f32 %v4142, 0.5
    %v4847 = vmul.f32 %v4143, 0.5
    %v4848 = vmul.f32 %v4144, 0.5
    %v4849 = vmul.f32 %v4145, 0.5
    %v4850 = vmul.f32 %v4146, 0.5
    %v4851 = vmul.f32 %v4147, 0.5
    %v4852 = vmul.f32 %v4148, 0.5
    %v4853 = vmul.f32 %v4149, 0.5
    %v4854 = vmul.f32 %v4150, 0.5
    %v4855 = vmul.f32 %v4151, 0.5
    %v4856 = vmul.f32 %v4152, 0.5
    %v4857 = vmul.f32 %v4153, 0.5
    %v4858 = vmul.f32 %v4154, 0.5
    %v4859 = vmul.f32 %v4155, 0.5
    %v4860 = vmul.f32 %v4156, 0.5
    %v4861 = vmul.f32 %v4157, 0.5
    %v4862 = vmul.f32 %v4158, 0.5
    %v4863 = vmul.f32 %v4159, 0.5
    %v4864 = vmul.f32 %v4160, 0.5
    %v4865 = vmul.f32 %v4161, 0.5
    %v4866 = vmul.f32 %v4162, 0.5
    %v4867 = vmul.f32 %v4163, 0.5
    %v4868 = vmul.f32 %v4164, 0.5
    %v4869 = vmul.f32 %v4165, 0.5
    %v4870 = vmul.f32 %v4166, 0.5
    %v4871 = vmul.f32 %v4167, 0.5
    %v4872 = vmul.f32 %v4168, 0.5
    %v4873 = vmul.f32 %v4169, 0.5
    %v4874 = vmul.f32 %v4170, 0.5
    %v4875 = vmul.f32 %v4171, 0.5
    %v4876 = vmul.f32 %v4172, 0.5
    %v4877 = vmul.f32 %v4173, 0.5
    %v4878 = vmul.f32 %v4174, 0.5
    %v4879 = vmul.f32 %v4175, 0.5
    %v4880 = vmul.f32 %v4176, 0.5
    %v4881 = vmul.f32 %v4177, 0.5
    %v4882 = vmul.f32 %v4178, 0.5
    %v4883 = vmul.f32 %v4179, 0.5
    %v4884 = vmul.f32 %v4180, 0.5
    %v4885 = vmul.f32 %v4181, 0.5
    %v4886 = vmul.f32 %v4182, 0.5
    %v4887 = vmul.f32 %v4183, 0.5
    %v4888 = vmul.f32 %v4184, 0.5
    %v4889 = vmul.f32 %v4185, 0.5
    %v4890 = vmul.f32 %v4186, 0.5
    %v4891 = vmul.f32 %v4187, 0.5
    %v4892 = vmul.f32 %v4188, 0.5
    %v4893 = vmul.f32 %v4189, 0.5
    %v4894 = vmul.f32 %v4190, 0.5
    %v4895 = vmul.f32 %v4191, 0.5
    %v4896 = vmul.f32 %v4192, 0.5
    %v4897 = vmul.f32 %v4193, 0.5
    %v4898 = vmul.f32 %v4194, 0.5
    %v4899 = vmul.f32 %v4195, 0.5
    %v4900 = vmul.f32 %v4196, 0.5
    %v4901 = vmul.f32 %v4197, 0.5
    %v4902 = vmul.f32 %v4198, 0.5
    %v4903 = vmul.f32 %v4199, 0.5
    %v4904 = vmul.f32 %v4200, 0.5
    %v4905 = vmul.f32 %v4201, 0.5
    %v4906 = vmul.f32 %v4202, 0.5
    %v4907 = vmul.f32 %v4203, 0.5
    %v4908 = vmul.f32 %v4204, 0.5
    %v4909 = vmul.f32 %v4205, 0.5
    %v4910 = vmul.f32 %v4206, 0.5
    %v4911 = vmul.f32 %v4207, 0.5
    %v4912 = vmul.f32 %v4208, 0.5
    %v4913 = vmul.f32 %v4209, 0.5
    %v4914 = vmul.f32 %v4210, 0.5
    %v4915 = vmul.f32 %v4211, 0.5
    %v4916 = vmul.f32 %v4212, 0.5
    %v4917 = vmul.f32 %v4213, 0.5
    %v4918 = vmul.f32 %v4214, 0.5
    %v4919 = vmul.f32 %v4215, 0.5
    %v4920 = vmul.f32 %v4216, 0.5
    %v4921 = vmul.f32 %v4217, 0.5
    %v4922 = vmul.f32 %v4218, 0.5
    %v4923 = vmul.f32 %v4219, 0.5
    %v4924 = vmul.f32 %v4220, 0.5
    %v4925 = vmul.f32 %v4221, 0.5
    %v4926 = vmul.f32 %v4222, 0.5
    %v4927 = vmul.f32 %v4223, 0.5
    %v4928 = vmul.f32 %v4224, 0.5
    %v4929 = vmul.f32 %v4225, 0.5
    %v4930 = vmul.f32 %v4226, 0.5
    %v4931 = vmul.f32 %v4227, 0.5
    %v4932 = vmul.f32 %v4228, 0.5
    %v4933 = vmul.f32 %v4229, 0.5
    %v4934 = vmul.f32 %v4230, 0.5
    %v4935 = vmul.f32 %v4231, 0.5
    %v4936 = vmul.f32 %v4232, 0.5
    %v4937 = vmul.f32 %v4233, 0.5
    %v4938 = vmul.f32 %v4234, 0.5
    %v4939 = vmul.f32 %v4235, 0.5
    %v4940 = vmul.f32 %v4236, 0.5
    %v4941 = vmul.f32 %v4237, 0.5
    %v4942 = vmul.f32 %v4238, 0.5
    %v4943 = vmul.f32 %v4239, 0.5
    %v4944 = vmul.f32 %v4240, 0.5
    %v4945 = vmul.f32 %v4241, 0.5
    %v4946 = vmul.f32 %v4242, 0.5
    %v4947 = vmul.f32 %v4243, 0.5
    %v4948 = vmul.f32 %v4244, 0.5
    %v4949 = vmul.f32 %v4245, 0.5
    %v4950 = vmul.f32 %v4246, 0.5
    %v4951 = vmul.f32 %v4247, 0.5
    %v4952 = vmul.f32 %v4248, 0.5
    %v4953 = vmul.f32 %v4249, 0.5
    %v4954 = vmul.f32 %v4250, 0.5
    %v4955 = vmul.f32 %v4251, 0.5
    %v4956 = vmul.f32 %v4252, 0.5
    %v4957 = vmul.f32 %v4253, 0.5
    %v4958 = vmul.f32 %v4254, 0.5
    %v4959 = vmul.f32 %v4255, 0.5
    %v4960 = vmul.f32 %v4256, 0.5
    %v4961 = vmul.f32 %v4257, 0.5
    %v4962 = vmul.f32 %v4258, 0.5
    %v4963 = vmul.f32 %v4259, 0.5
    %v4964 = vmul.f32 %v4260, 0.5
    %v4965 = vmul.f32 %v4261, 0.5
    %v4966 = vmul.f32 %v4262, 0.5
    %v4967 = vmul.f32 %v4263, 0.5
    %v4968 = vmul.f32 %v4264, 0.5
    %v4969 = vmul.f32 %v4265, 0.5
    %v4970 = vmul.f32 %v4266, 0.5
    %v4971 = vmul.f32 %v4267, 0.5
    %v4972 = vmul.f32 %v4268, 0.5
    %v4973 = vmul.f32 %v4269, 0.5
    %v4974 = vmul.f32 %v4270, 0.5
    %v4975 = vmul.f32 %v4271, 0.5
    %v4976 = vmul.f32 %v4272, 0.5
    %v4977 = vmul.f32 %v4273, 0.5
    %v4978 = vmul.f32 %v4274, 0.5
    %v4979 = vmul.f32 %v4275, 0.5
    %v4980 = vmul.f32 %v4276, 0.5
    %v4981 = vmul.f32 %v4277, 0.5
    %v4982 = vmul.f32 %v4278, 0.5
    %v4983 = vmul.f32 %v4279, 0.5
    %v4984 = vmul.f32 %v4280, 0.5
    %v4985 = vmul.f32 %v4281, 0.5
    %v4986 = vmul.f32 %v4282, 0.5
    %v4987 = vmul.f32 %v4283, 0.5
    %v4988 = vmul.f32 %v4284, 0.5
    %v4989 = vmul.f32 %v4285, 0.5
    %v4990 = vmul.f32 %v4286, 0.5
    %v4991 = vmul.f32 %v4287, 0.5
    %v4992 = vmul.f32 %v4288, 0.5
    %v4993 = vmul.f32 %v4289, 0.5
    %v4994 = vmul.f32 %v4290, 0.5
    %v4995 = vmul.f32 %v4291, 0.5
    %v4996 = vmul.f32 %v4292, 0.5
    %v4997 = vmul.f32 %v4293, 0.5
    %v4998 = vmul.f32 %v4294, 0.5
    %v4999 = vmul.f32 %v4295, 0.5
    %v5000 = vmul.f32 %v4296, 0.5
    %v5001 = vmul.f32 %v4297, 0.5
    %v5002 = vmul.f32 %v4298, 0.5
    %v5003 = vmul.f32 %v4299, 0.5
    %v5004 = vmul.f32 %v4300, 0.5
    %v5005 = vmul.f32 %v4301, 0.5
    %v5006 = vmul.f32 %v4302, 0.5
    %v5007 = vmul.f32 %v4303, 0.5
    %v5008 = vmul.f32 %v4304, 0.5
    %v5009 = vmul.f32 %v4305, 0.5
    %v5010 = vmul.f32 %v4306, 0.5
    %v5011 = vmul.f32 %v4307, 0.5
    %v5012 = vmul.f32 %v4308, 0.5
    %v5013 = vmul.f32 %v4309, 0.5
    %v5014 = vmul.f32 %v4310, 0.5
    %v5015 = vmul.f32 %v4311, 0.5
    %v5016 = vmul.f32 %v4312, 0.5
    %v5017 = vmul.f32 %v4313, 0.5
    %v5018 = vmul.f32 %v4314, 0.5
    %v5019 = vmul.f32 %v4315, 0.5
    %v5020 = vmul.f32 %v4316, 0.5
    %v5021 = vmul.f32 %v4317, 0.5
    %v5022 = vmul.f32 %v4318, 0.5
    %v5023 = vmul.f32 %v4319, 0.5
    %v5024 = vmul.f32 %v4320, 0.5
    %v5025 = vmul.f32 %v4321, 0.5
    %v5026 = vmul.f32 %v4322, 0.5
    %v5027 = vmul.f32 %v4323, 0.5
    %v5028 = vmul.f32 %v4324, 0.5
    %v5029 = vmul.f32 %v4325, 0.5
    %v5030 = vmul.f32 %v4326, 0.5
    %v5031 = vmul.f32 %v4327, 0.5
    %v5032 = vmul.f32 %v4328, 0.5
    %v5033 = vmul.f32 %v4329, 0.5
    %v5034 = vmul.f32 %v4330, 0.5
    %v5035 = vmul.f32 %v4331, 0.5
    %v5036 = vmul.f32 %v4332, 0.5
    %v5037 = vmul.f32 %v4333, 0.5
    %v5038 = vmul.f32 %v4334, 0.5
    %v5039 = vmul.f32 %v4335, 0.5
    %v5040 = vmul.f32 %v4336, 0.5
    %v5041 = vmul.f32 %v4337, 0.5
    %v5042 = vmul.f32 %v4338, 0.5
    %v5043 = vmul.f32 %v4339, 0.5
    %v5044 = vmul.f32 %v4340, 0.5
    %v5045 = vmul.f32 %v4341, 0.5
    %v5046 = vmul.f32 %v4342, 0.5
    %v5047 = vmul.f32 %v4343, 0.5
    %v5048 = vmul.f32 %v4344, 0.5
    %v5049 = vmul.f32 %v4345, 0.5
    %v5050 = vadd.f32 %v4346, 0.5
    %v5051 = vadd.f32 %v4347, 0.5
    %v5052 = vadd.f32 %v4348, 0.5
    %v5053 = vadd.f32 %v4349, 0.5
    %v5054 = vadd.f32 %v4350, 0.5
    %v5055 = vadd.f32 %v4351, 0.5
    %v5056 = vadd.f32 %v4352, 0.5
    %v5057 = vadd.f32 %v4353, 0.5
    %v5058 = vadd.f32 %v4354, 0.5
    %v5059 = vadd.f32 %v4355, 0.5
    %v5060 = vadd.f32 %v4356, 0.5
    %v5061 = vadd.f32 %v4357, 0.5
    %v5062 = vadd.f32 %v4358, 0.5
    %v5063 = vadd.f32 %v4359, 0.5
    %v5064 = vadd.f32 %v4360, 0.5
    %v5065 = vadd.f32 %v4361, 0.5
    %v5066 = vadd.f32 %v4362, 0.5
    %v5067 = vadd.f32 %v4363, 0.5
    %v5068 = vadd.f32 %v4364, 0.5
    %v5069 = vadd.f32 %v4365, 0.5
    %v5070 = vadd.f32 %v4366, 0.5
    %v5071 = vadd.f32 %v4367, 0.5
    %v5072 = vadd.f32 %v4368, 0.5
    %v5073 = vadd.f32 %v4369, 0.5
    %v5074 = vadd.f32 %v4370, 0.5
    %v5075 = vadd.f32 %v4371, 0.5
    %v5076 = vadd.f32 %v4372, 0.5
    %v5077 = vadd.f32 %v4373, 0.5
    %v5078 = vadd.f32 %v4374, 0.5
    %v5079 = vadd.f32 %v4375, 0.5
    %v5080 = vadd.f32 %v4376, 0.5
    %v5081 = vadd.f32 %v4377, 0.5
    %v5082 = vadd.f32 %v4378, 0.5
    %v5083 = vadd.f32 %v4379, 0.5
    %v5084 = vadd.f32 %v4380, 0.5
    %v5085 = vadd.f32 %v4381, 0.5
    %v5086 = vadd.f32 %v4382, 0.5
    %v5087 = vadd.f32 %v4383, 0.5
    %v5088 = vadd.f32 %v4384, 0.5
    %v5089 = vadd.f32 %v4385, 0.5
    %v5090 = vadd.f32 %v4386, 0.5
    %v5091 = vadd.f32 %v4387, 0.5
    %v5092 = vadd.f32 %v4388, 0.5
    %v5093 = vadd.f32 %v4389, 0.5
    %v5094 = vadd.f32 %v4390, 0.5
    %v5095 = vadd.f32 %v4391, 0.5
    %v5096 = vadd.f32 %v4392, 0.5
    %v5097 = vadd.f32 %v4393, 0.5
    %v5098 = vadd.f32 %v4394, 0.5
    %v5099 = vadd.f32 %v4395, 0.5
    %v5100 = vadd.f32 %v4396, 0.5
    %v5101 = vadd.f32 %v4397, 0.5
    %v5102 = vadd.f32 %v4398, 0.5
    %v5103 = vadd.f32 %v4399, 0.5
    %v5104 = vadd.f32 %v4400, 0.5
    %v5105 = vadd.f32 %v4401, 0.5
    %v5106 = vadd.f32 %v4402, 0.5
    %v5107 = vadd.f32 %v4403, 0.5
    %v5108 = vadd.f32 %v4404, 0.5
    %v5109 = vadd.f32 %v4405, 0.5
    %v5110 = vadd.f32 %v4406, 0.5
    %v5111 = vadd.f32 %v4407, 0.5
    %v5112 = vadd.f32 %v4408, 0.5
    %v5113 = vadd.f32 %v4409, 0.5
    %v5114 = vadd.f32 %v4410, 0.5
    %v5115 = vadd.f32 %v4411, 0.5
    %v5116 = vadd.f32 %v4412, 0.5
    %v5117 = vadd.f32 %v4413, 0.5
    %v5118 = vadd.f32 %v4414, 0.5
    %v5119 = vadd.f32 %v4415, 0.5
    %v5120 = vadd.f32 %v4416, 0.5
    %v5121 = vadd.f32 %v4417, 0.5
    %v5122 = vadd.f32 %v4418, 0.5
    %v5123 = vadd.f32 %v4419, 0.5
    %v5124 = vadd.f32 %v4420, 0.5
    %v5125 = vadd.f32 %v4421, 0.5
    %v5126 = vadd.f32 %v4422, 0.5
    %v5127 = vadd.f32 %v4423, 0.5
    %v5128 = vadd.f32 %v4424, 0.5
    %v5129 = vadd.f32 %v4425, 0.5
    %v5130 = vadd.f32 %v4426, 0.5
    %v5131 = vadd.f32 %v4427, 0.5
    %v5132 = vadd.f32 %v4428, 0.5
    %v5133 = vadd.f32 %v4429, 0.5
    %v5134 = vadd.f32 %v4430, 0.5
    %v5135 = vadd.f32 %v4431, 0.5
    %v5136 = vadd.f32 %v4432, 0.5
    %v5137 = vadd.f32 %v4433, 0.5
    %v5138 = vadd.f32 %v4434, 0.5
    %v5139 = vadd.f32 %v4435, 0.5
    %v5140 = vadd.f32 %v4436, 0.5
    %v5141 = vadd.f32 %v4437, 0.5
    %v5142 = vadd.f32 %v4438, 0.5
    %v5143 = vadd.f32 %v4439, 0.5
    %v5144 = vadd.f32 %v4440, 0.5
    %v5145 = vadd.f32 %v4441, 0.5
    %v5146 = vadd.f32 %v4442, 0.5
    %v5147 = vadd.f32 %v4443, 0.5
    %v5148 = vadd.f32 %v4444, 0.5
    %v5149 = vadd.f32 %v4445, 0.5
    %v5150 = vadd.f32 %v4446, 0.5
    %v5151 = vadd.f32 %v4447, 0.5
    %v5152 = vadd.f32 %v4448, 0.5
    %v5153 = vadd.f32 %v4449, 0.5
    %v5154 = vadd.f32 %v4450, 0.5
    %v5155 = vadd.f32 %v4451, 0.5
    %v5156 = vadd.f32 %v4452, 0.5
    %v5157 = vadd.f32 %v4453, 0.5
    %v5158 = vadd.f32 %v4454, 0.5
    %v5159 = vadd.f32 %v4455, 0.5
    %v5160 = vadd.f32 %v4456, 0.5
    %v5161 = vadd.f32 %v4457, 0.5
    %v5162 = vadd.f32 %v4458, 0.5
    %v5163 = vadd.f32 %v4459, 0.5
    %v5164 = vadd.f32 %v4460, 0.5
    %v5165 = vadd.f32 %v4461, 0.5
    %v5166 = vadd.f32 %v4462, 0.5
    %v5167 = vadd.f32 %v4463, 0.5
    %v5168 = vadd.f32 %v4464, 0.5
    %v5169 = vadd.f32 %v4465, 0.5
    %v5170 = vadd.f32 %v4466, 0.5
    %v5171 = vadd.f32 %v4467, 0.5
    %v5172 = vadd.f32 %v4468, 0.5
    %v5173 = vadd.f32 %v4469, 0.5
    %v5174 = vadd.f32 %v4470, 0.5
    %v5175 = vadd.f32 %v4471, 0.5
    %v5176 = vadd.f32 %v4472, 0.5
    %v5177 = vadd.f32 %v4473, 0.5
    %v5178 = vadd.f32 %v4474, 0.5
    %v5179 = vadd.f32 %v4475, 0.5
    %v5180 = vadd.f32 %v4476, 0.5
    %v5181 = vadd.f32 %v4477, 0.5
    %v5182 = vadd.f32 %v4478, 0.5
    %v5183 = vadd.f32 %v4479, 0.5
    %v5184 = vadd.f32 %v4480, 0.5
    %v5185 = vadd.f32 %v4481, 0.5
    %v5186 = vadd.f32 %v4482, 0.5
    %v5187 = vadd.f32 %v4483, 0.5
    %v5188 = vadd.f32 %v4484, 0.5
    %v5189 = vadd.f32 %v4485, 0.5
    %v5190 = vadd.f32 %v4486, 0.5
    %v5191 = vadd.f32 %v4487, 0.5
    %v5192 = vadd.f32 %v4488, 0.5
    %v5193 = vadd.f32 %v4489, 0.5
    %v5194 = vadd.f32 %v4490, 0.5
    %v5195 = vadd.f32 %v4491, 0.5
    %v5196 = vadd.f32 %v4492, 0.5
    %v5197 = vadd.f32 %v4493, 0.5
    %v5198 = vadd.f32 %v4494, 0.5
    %v5199 = vadd.f32 %v4495, 0.5
    %v5200 = vadd.f32 %v4496, 0.5
    %v5201 = vadd.f32 %v4497, 0.5
    %v5202 = vadd.f32 %v4498, 0.5
    %v5203 = vadd.f32 %v4499, 0.5
    %v5204 = vadd.f32 %v4500, 0.5
    %v5205 = vadd.f32 %v4501, 0.5
    %v5206 = vadd.f32 %v4502, 0.5
    %v5207 = vadd.f32 %v4503, 0.5
    %v5208 = vadd.f32 %v4504, 0.5
    %v5209 = vadd.f32 %v4505, 0.5
    %v5210 = vadd.f32 %v4506, 0.5
    %v5211 = vadd.f32 %v4507, 0.5
    %v5212 = vadd.f32 %v4508, 0.5
    %v5213 = vadd.f32 %v4509, 0.5
    %v5214 = vadd.f32 %v4510, 0.5
    %v5215 = vadd.f32 %v4511, 0.5
    %v5216 = vadd.f32 %v4512, 0.5
    %v5217 = vadd.f32 %v4513, 0.5
    %v5218 = vadd.f32 %v4514, 0.5
    %v5219 = vadd.f32 %v4515, 0.5
    %v5220 = vadd.f32 %v4516, 0.5
    %v5221 = vadd.f32 %v4517, 0.5
    %v5222 = vadd.f32 %v4518, 0.5
    %v5223 = vadd.f32 %v4519, 0.5
    %v5224 = vadd.f32 %v4520, 0.5
    %v5225 = vadd.f32 %v4521, 0.5
    %v5226 = vadd.f32 %v4522, 0.5
    %v5227 = vadd.f32 %v4523, 0.5
    %v5228 = vadd.f32 %v4524, 0.5
    %v5229 = vadd.f32 %v4525, 0.5
    %v5230 = vadd.f32 %v4526, 0.5
    %v5231 = vadd.f32 %v4527, 0.5
    %v5232 = vadd.f32 %v4528, 0.5
    %v5233 = vadd.f32 %v4529, 0.5
    %v5234 = vadd.f32 %v4530, 0.5
    %v5235 = vadd.f32 %v4531, 0.5
    %v5236 = vadd.f32 %v4532, 0.5
    %v5237 = vadd.f32 %v4533, 0.5
    %v5238 = vadd.f32 %v4534, 0.5
    %v5239 = vadd.f32 %v4535, 0.5
    %v5240 = vadd.f32 %v4536, 0.5
    %v5241 = vadd.f32 %v4537, 0.5
    %v5242 = vadd.f32 %v4538, 0.5
    %v5243 = vadd.f32 %v4539, 0.5
    %v5244 = vadd.f32 %v4540, 0.5
    %v5245 = vadd.f32 %v4541, 0.5
    %v5246 = vadd.f32 %v4542, 0.5
    %v5247 = vadd.f32 %v4543, 0.5
    %v5248 = vadd.f32 %v4544, 0.5
    %v5249 = vadd.f32 %v4545, 0.5
    %v5250 = vadd.f32 %v4546, 0.5
    %v5251 = vadd.f32 %v4547, 0.5
    %v5252 = vadd.f32 %v4548, 0.5
    %v5253 = vadd.f32 %v4549, 0.5
    %v5254 = vadd.f32 %v4550, 0.5
    %v5255 = vadd.f32 %v4551, 0.5
    %v5256 = vadd.f32 %v4552, 0.5
    %v5257 = vadd.f32 %v4553, 0.5
    %v5258 = vadd.f32 %v4554, 0.5
    %v5259 = vadd.f32 %v4555, 0.5
    %v5260 = vadd.f32 %v4556, 0.5
    %v5261 = vadd.f32 %v4557, 0.5
    %v5262 = vadd.f32 %v4558, 0.5
    %v5263 = vadd.f32 %v4559, 0.5
    %v5264 = vadd.f32 %v4560, 0.5
    %v5265 = vadd.f32 %v4561, 0.5
    %v5266 = vadd.f32 %v4562, 0.5
    %v5267 = vadd.f32 %v4563, 0.5
    %v5268 = vadd.f32 %v4564, 0.5
    %v5269 = vadd.f32 %v4565, 0.5
    %v5270 = vadd.f32 %v4566, 0.5
    %v5271 = vadd.f32 %v4567, 0.5
    %v5272 = vadd.f32 %v4568, 0.5
    %v5273 = vadd.f32 %v4569, 0.5
    %v5274 = vadd.f32 %v4570, 0.5
    %v5275 = vadd.f32 %v4571, 0.5
    %v5276 = vadd.f32 %v4572, 0.5
    %v5277 = vadd.f32 %v4573, 0.5
    %v5278 = vadd.f32 %v4574, 0.5
    %v5279 = vadd.f32 %v4575, 0.5
    %v5280 = vadd.f32 %v4576, 0.5
    %v5281 = vadd.f32 %v4577, 0.5
    %v5282 = vadd.f32 %v4578, 0.5
    %v5283 = vadd.f32 %v4579, 0.5
    %v5284 = vadd.f32 %v4580, 0.5
    %v5285 = vadd.f32 %v4581, 0.5
    %v5286 = vadd.f32 %v4582, 0.5
    %v5287 = vadd.f32 %v4583, 0.5
    %v5288 = vadd.f32 %v4584, 0.5
    %v5289 = vadd.f32 %v4585, 0.5
    %v5290 = vadd.f32 %v4586, 0.5
    %v5291 = vadd.f32 %v4587, 0.5
    %v5292 = vadd.f32 %v4588, 0.5
    %v5293 = vadd.f32 %v4589, 0.5
    %v5294 = vadd.f32 %v4590, 0.5
    %v5295 = vadd.f32 %v4591, 0.5
    %v5296 = vadd.f32 %v4592, 0.5
    %v5297 = vadd.f32 %v4593, 0.5
    %v5298 = vadd.f32 %v4594, 0.5
    %v5299 = vadd.f32 %v4595, 0.5
    %v5300 = vadd.f32 %v4596, 0.5
    %v5301 = vadd.f32 %v4597, 0.5
    %v5302 = vadd.f32 %v4598, 0.5
    %v5303 = vadd.f32 %v4599, 0.5
    %v5304 = vadd.f32 %v4600, 0.5
    %v5305 = vadd.f32 %v4601, 0.5
    %v5306 = vadd.f32 %v4602, 0.5
    %v5307 = vadd.f32 %v4603, 0.5
    %v5308 = vadd.f32 %v4604, 0.5
    %v5309 = vadd.f32 %v4605, 0.5
    %v5310 = vadd.f32 %v4606, 0.5
    %v5311 = vadd.f32 %v4607, 0.5
    %v5312 = vadd.f32 %v4608, 0.5
    %v5313 = vadd.f32 %v4609, 0.5
    %v5314 = vadd.f32 %v4610, 0.5
    %v5315 = vadd.f32 %v4611, 0.5
    %v5316 = vadd.f32 %v4612, 0.5
    %v5317 = vadd.f32 %v4613, 0.5
    %v5318 = vadd.f32 %v4614, 0.5
    %v5319 = vadd.f32 %v4615, 0.5
    %v5320 = vadd.f32 %v4616, 0.5
    %v5321 = vadd.f32 %v4617, 0.5
    %v5322 = vadd.f32 %v4618, 0.5
    %v5323 = vadd.f32 %v4619, 0.5
    %v5324 = vadd.f32 %v4620, 0.5
    %v5325 = vadd.f32 %v4621, 0.5
    %v5326 = vadd.f32 %v4622, 0.5
    %v5327 = vadd.f32 %v4623, 0.5
    %v5328 = vadd.f32 %v4624, 0.5
    %v5329 = vadd.f32 %v4625, 0.5
    %v5330 = vadd.f32 %v4626, 0.5
    %v5331 = vadd.f32 %v4627, 0.5
    %v5332 = vadd.f32 %v4628, 0.5
    %v5333 = vadd.f32 %v4629, 0.5
    %v5334 = vadd.f32 %v4630, 0.5
    %v5335 = vadd.f32 %v4631, 0.5
    %v5336 = vadd.f32 %v4632, 0.5
    %v5337 = vadd.f32 %v4633, 0.5
    %v5338 = vadd.f32 %v4634, 0.5
    %v5339 = vadd.f32 %v4635, 0.5
    %v5340 = vadd.f32 %v4636, 0.5
    %v5341 = vadd.f32 %v4637, 0.5
    %v5342 = vadd.f32 %v4638, 0.5
    %v5343 = vadd.f32 %v4639, 0.5
    %v5344 = vadd.f32 %v4640, 0.5
    %v5345 = vadd.f32 %v4641, 0.5
    %v5346 = vadd.f32 %v4642, 0.5
    %v5347 = vadd.f32 %v4643, 0.5
    %v5348 = vadd.f32 %v4644, 0.5
    %v5349 = vadd.f32 %v4645, 0.5
    %v5350 = vadd.f32 %v4646, 0.5
    %v5351 = vadd.f32 %v4647, 0.5
    %v5352 = vadd.f32 %v4648, 0.5
    %v5353 = vadd.f32 %v4649, 0.5
    %v5354 = vadd.f32 %v4650, 0.5
    %v5355 = vadd.f32 %v4651, 0.5
    %v5356 = vadd.f32 %v4652, 0.5
    %v5357 = vadd.f32 %v4653, 0.5
    %v5358 = vadd.f32 %v4654, 0.5
    %v5359 = vadd.f32 %v4655, 0.5
    %v5360 = vadd.f32 %v4656, 0.5
    %v5361 = vadd.f32 %v4657, 0.5
    %v5362 = vadd.f32 %v4658, 0.5
    %v5363 = vadd.f32 %v4659, 0.5
    %v5364 = vadd.f32 %v4660, 0.5
    %v5365 = vadd.f32 %v4661, 0.5
    %v5366 = vadd.f32 %v4662, 0.5
    %v5367 = vadd.f32 %v4663, 0.5
    %v5368 = vadd.f32 %v4664, 0.5
    %v5369 = vadd.f32 %v4665, 0.5
    %v5370 = vadd.f32 %v4666, 0.5
    %v5371 = vadd.f32 %v4667, 0.5
    %v5372 = vadd.f32 %v4668, 0.5
    %v5373 = vadd.f32 %v4669, 0.5
    %v5374 = vadd.f32 %v4670, 0.5
    %v5375 = vadd.f32 %v4671, 0.5
    %v5376 = vadd.f32 %v4672, 0.5
    %v5377 = vadd.f32 %v4673, 0.5
    %v5378 = vadd.f32 %v4674, 0.5
    %v5379 = vadd.f32 %v4675, 0.5
    %v5380 = vadd.f32 %v4676, 0.5
    %v5381 = vadd.f32 %v4677, 0.5
    %v5382 = vadd.f32 %v4678, 0.5
    %v5383 = vadd.f32 %v4679, 0.5
    %v5384 = vadd.f32 %v4680, 0.5
    %v5385 = vadd.f32 %v4681, 0.5
    %v5386 = vadd.f32 %v4682, 0.5
    %v5387 = vadd.f32 %v4683, 0.5
    %v5388 = vadd.f32 %v4684, 0.5
    %v5389 = vadd.f32 %v4685, 0.5
    %v5390 = vadd.f32 %v4686, 0.5
    %v5391 = vadd.f32 %v4687, 0.5
    %v5392 = vadd.f32 %v4688, 0.5
    %v5393 = vadd.f32 %v4689, 0.5
    %v5394 = vadd.f32 %v4690, 0.5
    %v5395 = vadd.f32 %v4691, 0.5
    %v5396 = vadd.f32 %v4692, 0.5
    %v5397 = vadd.f32 %v4693, 0.5
    %v5398 = vadd.f32 %v4694, 0.5
    %v5399 = vadd.f32 %v4695, 0.5
    %v5400 = vadd.f32 %v4696, 0.5
    %v5401 = vadd.f32 %v4697, 0.5
    %v5402 = vadd.f32 %v4698, 0.5
    %v5403 = vadd.f32 %v4699, 0.5
    %v5404 = vadd.f32 %v4700, 0.5
    %v5405 = vadd.f32 %v4701, 0.5
    %v5406 = vadd.f32 %v4702, 0.5
    %v5407 = vadd.f32 %v4703, 0.5
    %v5408 = vadd.f32 %v4704, 0.5
    %v5409 = vadd.f32 %v4705, 0.5
    %v5410 = vadd.f32 %v4706, 0.5
    %v5411 = vadd.f32 %v4707, 0.5
    %v5412 = vadd.f32 %v4708, 0.5
    %v5413 = vadd.f32 %v4709, 0.5
    %v5414 = vadd.f32 %v4710, 0.5
    %v5415 = vadd.f32 %v4711, 0.5
    %v5416 = vadd.f32 %v4712, 0.5
    %v5417 = vadd.f32 %v4713, 0.5
    %v5418 = vadd.f32 %v4714, 0.5
    %v5419 = vadd.f32 %v4715, 0.5
    %v5420 = vadd.f32 %v4716, 0.5
    %v5421 = vadd.f32 %v4717, 0.5
    %v5422 = vadd.f32 %v4718, 0.5
    %v5423 = vadd.f32 %v4719, 0.5
    %v5424 = vadd.f32 %v4720, 0.5
    %v5425 = vadd.f32 %v4721, 0.5
    %v5426 = vadd.f32 %v4722, 0.5
    %v5427 = vadd.f32 %v4723, 0.5
    %v5428 = vadd.f32 %v4724, 0.5
    %v5429 = vadd.f32 %v4725, 0.5
    %v5430 = vadd.f32 %v4726, 0.5
    %v5431 = vadd.f32 %v4727, 0.5
    %v5432 = vadd.f32 %v4728, 0.5
    %v5433 = vadd.f32 %v4729, 0.5
    %v5434 = vadd.f32 %v4730, 0.5
    %v5435 = vadd.f32 %v4731, 0.5
    %v5436 = vadd.f32 %v4732, 0.5
    %v5437 = vadd.f32 %v4733, 0.5
    %v5438 = vadd.f32 %v4734, 0.5
    %v5439 = vadd.f32 %v4735, 0.5
    %v5440 = vadd.f32 %v4736, 0.5
    %v5441 = vadd.f32 %v4737, 0.5
    %v5442 = vadd.f32 %v4738, 0.5
    %v5443 = vadd.f32 %v4739, 0.5
    %v5444 = vadd.f32 %v4740, 0.5
    %v5445 = vadd.f32 %v4741, 0.5
    %v5446 = vadd.f32 %v4742, 0.5
    %v5447 = vadd.f32 %v4743, 0.5
    %v5448 = vadd.f32 %v4744, 0.5
    %v5449 = vadd.f32 %v4745, 0.5
    %v5450 = vadd.f32 %v4746, 0.5
    %v5451 = vadd.f32 %v4747, 0.5
    %v5452 = vadd.f32 %v4748, 0.5
    %v5453 = vadd.f32 %v4749, 0.5
    %v5454 = vadd.f32 %v4750, 0.5
    %v5455 = vadd.f32 %v4751, 0.5
    %v5456 = vadd.f32 %v4752, 0.5
    %v5457 = vadd.f32 %v4753, 0.5
    %v5458 = vadd.f32 %v4754, 0.5
    %v5459 = vadd.f32 %v4755, 0.5
    %v5460 = vadd.f32 %v4756, 0.5
    %v5461 = vadd.f32 %v4757, 0.5
    %v5462 = vadd.f32 %v4758, 0.5
    %v5463 = vadd.f32 %v4759, 0.5
    %v5464 = vadd.f32 %v4760, 0.5
    %v5465 = vadd.f32 %v4761, 0.5
    %v5466 = vadd.f32 %v4762, 0.5
    %v5467 = vadd.f32 %v4763, 0.5
    %v5468 = vadd.f32 %v4764, 0.5
    %v5469 = vadd.f32 %v4765, 0.5
    %v5470 = vadd.f32 %v4766, 0.5
    %v5471 = vadd.f32 %v4767, 0.5
    %v5472 = vadd.f32 %v4768, 0.5
    %v5473 = vadd.f32 %v4769, 0.5
    %v5474 = vadd.f32 %v4770, 0.5
    %v5475 = vadd.f32 %v4771, 0.5
    %v5476 = vadd.f32 %v4772, 0.5
    %v5477 = vadd.f32 %v4773, 0.5
    %v5478 = vadd.f32 %v4774, 0.5
    %v5479 = vadd.f32 %v4775, 0.5
    %v5480 = vadd.f32 %v4776, 0.5
    %v5481 = vadd.f32 %v4777, 0.5
    %v5482 = vadd.f32 %v4778, 0.5
    %v5483 = vadd.f32 %v4779, 0.5
    %v5484 = vadd.f32 %v4780, 0.5
    %v5485 = vadd.f32 %v4781, 0.5
    %v5486 = vadd.f32 %v4782, 0.5
    %v5487 = vadd.f32 %v4783, 0.5
    %v5488 = vadd.f32 %v4784, 0.5
    %v5489 = vadd.f32 %v4785, 0.5
    %v5490 = vadd.f32 %v4786, 0.5
    %v5491 = vadd.f32 %v4787, 0.5
    %v5492 = vadd.f32 %v4788, 0.5
    %v5493 = vadd.f32 %v4789, 0.5
    %v5494 = vadd.f32 %v4790, 0.5
    %v5495 = vadd.f32 %v4791, 0.5
    %v5496 = vadd.f32 %v4792, 0.5
    %v5497 = vadd.f32 %v4793, 0.5
    %v5498 = vadd.f32 %v4794, 0.5
    %v5499 = vadd.f32 %v4795, 0.5
    %v5500 = vadd.f32 %v4796, 0.5
    %v5501 = vadd.f32 %v4797, 0.5
    %v5502 = vadd.f32 %v4798, 0.5
    %v5503 = vadd.f32 %v4799, 0.5
    %v5504 = vadd.f32 %v4800, 0.5
    %v5505 = vadd.f32 %v4801, 0.5
    %v5506 = vadd.f32 %v4802, 0.5
    %v5507 = vadd.f32 %v4803, 0.5
    %v5508 = vadd.f32 %v4804, 0.5
    %v5509 = vadd.f32 %v4805, 0.5
    %v5510 = vadd.f32 %v4806, 0.5
    %v5511 = vadd.f32 %v4807, 0.5
    %v5512 = vadd.f32 %v4808, 0.5
    %v5513 = vadd.f32 %v4809, 0.5
    %v5514 = vadd.f32 %v4810, 0.5
    %v5515 = vadd.f32 %v4811, 0.5
    %v5516 = vadd.f32 %v4812, 0.5
    %v5517 = vadd.f32 %v4813, 0.5
    %v5518 = vadd.f32 %v4814, 0.5
    %v5519 = vadd.f32 %v4815, 0.5
    %v5520 = vadd.f32 %v4816, 0.5
    %v5521 = vadd.f32 %v4817, 0.5
    %v5522 = vadd.f32 %v4818, 0.5
    %v5523 = vadd.f32 %v4819, 0.5
    %v5524 = vadd.f32 %v4820, 0.5
    %v5525 = vadd.f32 %v4821, 0.5
    %v5526 = vadd.f32 %v4822, 0.5
    %v5527 = vadd.f32 %v4823, 0.5
    %v5528 = vadd.f32 %v4824, 0.5
    %v5529 = vadd.f32 %v4825, 0.5
    %v5530 = vadd.f32 %v4826, 0.5
    %v5531 = vadd.f32 %v4827, 0.5
    %v5532 = vadd.f32 %v4828, 0.5
    %v5533 = vadd.f32 %v4829, 0.5
    %v5534 = vadd.f32 %v4830, 0.5
    %v5535 = vadd.f32 %v4831, 0.5
    %v5536 = vadd.f32 %v4832, 0.5
    %v5537 = vadd.f32 %v4833, 0.5
    %v5538 = vadd.f32 %v4834, 0.5
    %v5539 = vadd.f32 %v4835, 0.5
    %v5540 = vadd.f32 %v4836, 0.5
    %v5541 = vadd.f32 %v4837, 0.5
    %v5542 = vadd.f32 %v4838, 0.5
    %v5543 = vadd.f32 %v4839, 0.5
    %v5544 = vadd.f32 %v4840, 0.5
    %v5545 = vadd.f32 %v4841, 0.5
    %v5546 = vadd.f32 %v4842, 0.5
    %v5547 = vadd.f32 %v4843, 0.5
    %v5548 = vadd.f32 %v4844, 0.5
    %v5549 = vadd.f32 %v4845, 0.5
    %v5550 = vadd.f32 %v4846, 0.5
    %v5551 = vadd.f32 %v4847, 0.5
    %v5552 = vadd.f32 %v4848, 0.5
    %v5553 = vadd.f32 %v4849, 0.5
    %v5554 = vadd.f32 %v4850, 0.5
    %v5555 = vadd.f32 %v4851, 0.5
    %v5556 = vadd.f32 %v4852, 0.5
    %v5557 = vadd.f32 %v4853, 0.5
    %v5558 = vadd.f32 %v4854, 0.5
    %v5559 = vadd.f32 %v4855, 0.5
    %v5560 = vadd.f32 %v4856, 0.5
    %v5561 = vadd.f32 %v4857, 0.5
    %v5562 = vadd.f32 %v4858, 0.5
    %v5563 = vadd.f32 %v4859, 0.5
    %v5564 = vadd.f32 %v4860, 0.5
    %v5565 = vadd.f32 %v4861, 0.5
    %v5566 = vadd.f32 %v4862, 0.5
    %v5567 = vadd.f32 %v4863, 0.5
    %v5568 = vadd.f32 %v4864, 0.5
    %v5569 = vadd.f32 %v4865, 0.5
    %v5570 = vadd.f32 %v4866, 0.5
    %v5571 = vadd.f32 %v4867, 0.5
    %v5572 = vadd.f32 %v4868, 0.5
    %v5573 = vadd.f32 %v4869, 0.5
    %v5574 = vadd.f32 %v4870, 0.5
    %v5575 = vadd.f32 %v4871, 0.5
    %v5576 = vadd.f32 %v4872, 0.5
    %v5577 = vadd.f32 %v4873, 0.5
    %v5578 = vadd.f32 %v4874, 0.5
    %v5579 = vadd.f32 %v4875, 0.5
    %v5580 = vadd.f32 %v4876, 0.5
    %v5581 = vadd.f32 %v4877, 0.5
    %v5582 = vadd.f32 %v4878, 0.5
    %v5583 = vadd.f32 %v4879, 0.5
    %v5584 = vadd.f32 %v4880, 0.5
    %v5585 = vadd.f32 %v4881, 0.5
    %v5586 = vadd.f32 %v4882, 0.5
    %v5587 = vadd.f32 %v4883, 0.5
    %v5588 = vadd.f32 %v4884, 0.5
    %v5589 = vadd.f32 %v4885, 0.5
    %v5590 = vadd.f32 %v4886, 0.5
    %v5591 = vadd.f32 %v4887, 0.5
    %v5592 = vadd.f32 %v4888, 0.5
    %v5593 = vadd.f32 %v4889, 0.5
    %v5594 = vadd.f32 %v4890, 0.5
    %v5595 = vadd.f32 %v4891, 0.5
    %v5596 = vadd.f32 %v4892, 0.5
    %v5597 = vadd.f32 %v4893, 0.5
    %v5598 = vadd.f32 %v4894, 0.5
    %v5599 = vadd.f32 %v4895, 0.5
    %v5600 = vadd.f32 %v4896, 0.5
    %v5601 = vadd.f32 %v4897, 0.5
    %v5602 = vadd.f32 %v4898, 0.5
    %v5603 = vadd.f32 %v4899, 0.5
    %v5604 = vadd.f32 %v4900, 0.5
    %v5605 = vadd.f32 %v4901, 0.5
    %v5606 = vadd.f32 %v4902, 0.5
    %v5607 = vadd.f32 %v4903, 0.5
    %v5608 = vadd.f32 %v4904, 0.5
    %v5609 = vadd.f32 %v4905, 0.5
    %v5610 = vadd.f32 %v4906, 0.5
    %v5611 = vadd.f32 %v4907, 0.5
    %v5612 = vadd.f32 %v4908, 0.5
    %v5613 = vadd.f32 %v4909, 0.5
    %v5614 = vadd.f32 %v4910, 0.5
    %v5615 = vadd.f32 %v4911, 0.5
    %v5616 = vadd.f32 %v4912, 0.5
    %v5617 = vadd.f32 %v4913, 0.5
    %v5618 = vadd.f32 %v4914, 0.5
    %v5619 = vadd.f32 %v4915, 0.5
    %v5620 = vadd.f32 %v4916, 0.5
    %v5621 = vadd.f32 %v4917, 0.5
    %v5622 = vadd.f32 %v4918, 0.5
    %v5623 = vadd.f32 %v4919, 0.5
    %v5624 = vadd.f32 %v4920, 0.5
    %v5625 = vadd.f32 %v4921, 0.5
    %v5626 = vadd.f32 %v4922, 0.5
    %v5627 = vadd.f32 %v4923, 0.5
    %v5628 = vadd.f32 %v4924, 0.5
    %v5629 = vadd.f32 %v4925, 0.5
    %v5630 = vadd.f32 %v4926, 0.5
    %v5631 = vadd.f32 %v4927, 0.5
    %v5632 = vadd.f32 %v4928, 0.5
    %v5633 = vadd.f32 %v4929, 0.5
    %v5634 = vadd.f32 %v4930, 0.5
    %v5635 = vadd.f32 %v4931, 0.5
    %v5636 = vadd.f32 %v4932, 0.5
    %v5637 = vadd.f32 %v4933, 0.5
    %v5638 = vadd.f32 %v4934, 0.5
    %v5639 = vadd.f32 %v4935, 0.5
    %v5640 = vadd.f32 %v4936, 0.5
    %v5641 = vadd.f32 %v4937, 0.5
    %v5642 = vadd.f32 %v4938, 0.5
    %v5643 = vadd.f32 %v4939, 0.5
    %v5644 = vadd.f32 %v4940, 0.5
    %v5645 = vadd.f32 %v4941, 0.5
    %v5646 = vadd.f32 %v4942, 0.5
    %v5647 = vadd.f32 %v4943, 0.5
    %v5648 = vadd.f32 %v4944, 0.5
    %v5649 = vadd.f32 %v4945, 0.5
    %v5650 = vadd.f32 %v4946, 0.5
    %v5651 = vadd.f32 %v4947, 0.5
    %v5652 = vadd.f32 %v4948, 0.5
    %v5653 = vadd.f32 %v4949, 0.5
    %v5654 = vadd.f32 %v4950, 0.5
    %v5655 = vadd.f32 %v4951, 0.5
    %v5656 = vadd.f32 %v4952, 0.5
    %v5657 = vadd.f32 %v4953, 0.5
    %v5658 = vadd.f32 %v4954, 0.5
    %v5659 = vadd.f32 %v4955, 0.5
    %v5660 = vadd.f32 %v4956, 0.5
    %v5661 = vadd.f32 %v4957, 0.5
    %v5662 = vadd.f32 %v4958, 0.5
    %v5663 = vadd.f32 %v4959, 0.5
    %v5664 = vadd.f32 %v4960, 0.5
    %v5665 = vadd.f32 %v4961, 0.5
    %v5666 = vadd.f32 %v4962, 0.5
    %v5667 = vadd.f32 %v4963, 0.5
    %v5668 = vadd.f32 %v4964, 0.5
    %v5669 = vadd.f32 %v4965, 0.5
    %v5670 = vadd.f32 %v4966, 0.5
    %v5671 = vadd.f32 %v4967, 0.5
    %v5672 = vadd.f32 %v4968, 0.5
    %v5673 = vadd.f32 %v4969, 0.5
    %v5674 = vadd.f32 %v4970, 0.5
    %v5675 = vadd.f32 %v4971, 0.5
    %v5676 = vadd.f32 %v4972, 0.5
    %v5677 = vadd.f32 %v4973, 0.5
    %v5678 = vadd.f32 %v4974, 0.5
    %v5679 = vadd.f32 %v4975, 0.5
    %v5680 = vadd.f32 %v4976, 0.5
    %v5681 = vadd.f32 %v4977, 0.5
    %v5682 = vadd.f32 %v4978, 0.5
    %v5683 = vadd.f32 %v4979, 0.5
    %v5684 = vadd.f32 %v4980, 0.5
    %v5685 = vadd.f32 %v4981, 0.5
    %v5686 = vadd.f32 %v4982, 0.5
    %v5687 = vadd.f32 %v4983, 0.5
    %v5688 = vadd.f32 %v4984, 0.5
    %v5689 = vadd.f32 %v4985, 0.5
    %v5690 = vadd.f32 %v4986, 0.5
    %v5691 = vadd.f32 %v4987, 0.5
    %v5692 = vadd.f32 %v4988, 0.5
    %v5693 = vadd.f32 %v4989, 0.5
    %v5694 = vadd.f32 %v4990, 0.5
    %v5695 = vadd.f32 %v4991, 0.5
    %v5696 = vadd.f32 %v4992, 0.5
    %v5697 = vadd.f32 %v4993, 0.5
    %v5698 = vadd.f32 %v4994, 0.5
    %v5699 = vadd.f32 %v4995, 0.5
    %v5700 = vadd.f32 %v4996, 0.5
    %v5701 = vadd.f32 %v4997, 0.5
    %v5702 = vadd.f32 %v4998, 0.5
    %v5703 = vadd.f32 %v4999, 0.5
    %v5704 = vadd.f32 %v5000, 0.5
    %v5705 = vadd.f32 %v5001, 0.5
    %v5706 = vadd.f32 %v5002, 0.5
    %v5707 = vadd.f32 %v5003, 0.5
    %v5708 = vadd.f32 %v5004, 0.5
    %v5709 = vadd.f32 %v5005, 0.5
    %v5710 = vadd.f32 %v5006, 0.5
    %v5711 = vadd.f32 %v5007, 0.5
    %v5712 = vadd.f32 %v5008, 0.5
    %v5713 = vadd.f32 %v5009, 0.5
    %v5714 = vadd.f32 %v5010, 0.5
    %v5715 = vadd.f32 %v5011, 0.5
    %v5716 = vadd.f32 %v5012, 0.5
    %v5717 = vadd.f32 %v5013, 0.5
    %v5718 = vadd.f32 %v5014, 0.5
    %v5719 = vadd.f32 %v5015, 0.5
    %v5720 = vadd.f32 %v5016, 0.5
    %v5721 = vadd.f32 %v5017, 0.5
    %v5722 = vadd.f32 %v5018, 0.5
    %v5723 = vadd.f32 %v5019, 0.5
    %v5724 = vadd.f32 %v5020, 0.5
    %v5725 = vadd.f32 %v5021, 0.5
    %v5726 = vadd.f32 %v5022, 0.5
    %v5727 = vadd.f32 %v5023, 0.5
    %v5728 = vadd.f32 %v5024, 0.5
    %v5729 = vadd.f32 %v5025, 0.5
    %v5730 = vadd.f32 %v5026, 0.5
    %v5731 = vadd.f32 %v5027, 0.5
    %v5732 = vadd.f32 %v5028, 0.5
    %v5733 = vadd.f32 %v5029, 0.5
    %v5734 = vadd.f32 %v5030, 0.5
    %v5735 = vadd.f32 %v5031, 0.5
    %v5736 = vadd.f32 %v5032, 0.5
    %v5737 = vadd.f32 %v5033, 0.5
    %v5738 = vadd.f32 %v5034, 0.5
    %v5739 = vadd.f32 %v5035, 0.5
    %v5740 = vadd.f32 %v5036, 0.5
    %v5741 = vadd.f32 %v5037, 0.5
    %v5742 = vadd.f32 %v5038, 0.5
    %v5743 = vadd.f32 %v5039, 0.5
    %v5744 = vadd.f32 %v5040, 0.5
    %v5745 = vadd.f32 %v5041, 0.5
    %v5746 = vadd.f32 %v5042, 0.5
    %v5747 = vadd.f32 %v5043, 0.5
    %v5748 = vadd.f32 %v5044, 0.5
    %v5749 = vadd.f32 %v5045, 0.5
    %v5750 = vadd.f32 %v5046, 0.5
    %v5751 = vadd.f32 %v5047, 0.5
    %v5752 = vadd.f32 %v5048, 0.5
    %v5753 = vadd.f32 %v5049, 0.5
    %v5754 = vmul.f32 %v919, %v5050
    %v5755 = vmul.f32 %v921, %v5051
    %v5756 = vmul.f32 %v1272, %v5052
    %v5757 = vmul.f32 %v1274, %v5053
    %v5758 = vmul.f32 %v1625, %v5054
    %v5759 = vmul.f32 %v1627, %v5055
    %v5760 = vmul.f32 %v1978, %v5056
    %v5761 = vmul.f32 %v1980, %v5057
    %v5762 = vmul.f32 %v2331, %v5058
    %v5763 = vmul.f32 %v2333, %v5059
    %v5764 = vmul.f32 %v2684, %v5060
    %v5765 = vmul.f32 %v923, %v5061
    %v5766 = vmul.f32 %v925, %v5062
    %v5767 = vmul.f32 %v1276, %v5063
    %v5768 = vmul.f32 %v1278, %v5064
    %v5769 = vmul.f32 %v1629, %v5065
    %v5770 = vmul.f32 %v1631, %v5066
    %v5771 = vmul.f32 %v1982, %v5067
    %v5772 = vmul.f32 %v1984, %v5068
    %v5773 = vmul.f32 %v2335, %v5069
    %v5774 = vmul.f32 %v2337, %v5070
    %v5775 = vmul.f32 %v2687, %v5071
    %v5776 = vmul.f32 %v929, %v5072
    %v5777 = vmul.f32 %v931, %v5073
    %v5778 = vmul.f32 %v1282, %v5074
    %v5779 = vmul.f32 %v1284, %v5075
    %v5780 = vmul.f32 %v1635, %v5076
    %v5781 = vmul.f32 %v1637, %v5077
    %v5782 = vmul.f32 %v1988, %v5078
    %v5783 = vmul.f32 %v1990, %v5079
    %v5784 = vmul.f32 %v2341, %v5080
    %v5785 = vmul.f32 %v2343, %v5081
    %v5786 = vmul.f32 %v2692, %v5082
    %v5787 = vmul.f32 %v933, %v5083
    %v5788 = vmul.f32 %v935, %v5084
    %v5789 = vmul.f32 %v1286, %v5085
    %v5790 = vmul.f32 %v1288, %v5086
    %v5791 = vmul.f32 %v1639, %v5087
    %v5792 = vmul.f32 %v1641, %v5088
    %v5793 = vmul.f32 %v1992, %v5089
    %v5794 = vmul.f32 %v1994, %v5090
    %v5795 = vmul.f32 %v2345, %v5091
    %v5796 = vmul.f32 %v2347, %v5092
    %v5797 = vmul.f32 %v2695, %v5093
    %v5798 = vmul.f32 %v939, %v5094
    %v5799 = vmul.f32 %v941, %v5095
    %v5800 = vmul.f32 %v1292, %v5096
    %v5801 = vmul.f32 %v1294, %v5097
    %v5802 = vmul.f32 %v1645, %v5098
    %v5803 = vmul.f32 %v1647, %v5099
    %v5804 = vmul.f32 %v1998, %v5100
    %v5805 = vmul.f32 %v2000, %v5101
    %v5806 = vmul.f32 %v2351, %v5102
    %v5807 = vmul.f32 %v2353, %v5103
    %v5808 = vmul.f32 %v2700, %v5104
    %v5809 = vmul.f32 %v943, %v5105
    %v5810 = vmul.f32 %v945, %v5106
    %v5811 = vmul.f32 %v1296, %v5107
    %v5812 = vmul.f32 %v1298, %v5108
    %v5813 = vmul.f32 %v1649, %v5109
    %v5814 = vmul.f32 %v1651, %v5110
    %v5815 = vmul.f32 %v2002, %v5111
    %v5816 = vmul.f32 %v2004, %v5112
    %v5817 = vmul.f32 %v2355, %v5113
    %v5818 = vmul.f32 %v2357, %v5114
    %v5819 = vmul.f32 %v2703, %v5115
    %v5820 = vmul.f32 %v949, %v5116
    %v5821 = vmul.f32 %v951, %v5117
    %v5822 = vmul.f32 %v1302, %v5118
    %v5823 = vmul.f32 %v1304, %v5119
    %v5824 = vmul.f32 %v1655, %v5120
    %v5825 = vmul.f32 %v1657, %v5121
    %v5826 = vmul.f32 %v2008, %v5122
    %v5827 = vmul.f32 %v2010, %v5123
    %v5828 = vmul.f32 %v2361, %v5124
    %v5829 = vmul.f32 %v2363, %v5125
    %v5830 = vmul.f32 %v2708, %v5126
    %v5831 = vmul.f32 %v953, %v5127
    %v5832 = vmul.f32 %v955, %v5128
    %v5833 = vmul.f32 %v1306, %v5129
    %v5834 = vmul.f32 %v1308, %v5130
    %v5835 = vmul.f32 %v1659, %v5131
    %v5836 = vmul.f32 %v1661, %v5132
    %v5837 = vmul.f32 %v2012, %v5133
    %v5838 = vmul.f32 %v2014, %v5134
    %v5839 = vmul.f32 %v2365, %v5135
    %v5840 = vmul.f32 %v2367, %v5136
    %v5841 = vmul.f32 %v2711, %v5137
    %v5842 = vmul.f32 %v959, %v5138
    %v5843 = vmul.f32 %v961, %v5139
    %v5844 = vmul.f32 %v1312, %v5140
    %v5845 = vmul.f32 %v1314, %v5141
    %v5846 = vmul.f32 %v1665, %v5142
    %v5847 = vmul.f32 %v1667, %v5143
    %v5848 = vmul.f32 %v2018, %v5144
    %v5849 = vmul.f32 %v2020, %v5145
    %v5850 = vmul.f32 %v2371, %v5146
    %v5851 = vmul.f32 %v2373, %v5147
    %v5852 = vmul.f32 %v2716, %v5148
    %v5853 = vmul.f32 %v963, %v5149
    %v5854 = vmul.f32 %v965, %v5150
    %v5855 = vmul.f32 %v1316, %v5151
    %v5856 = vmul.f32 %v1318, %v5152
    %v5857 = vmul.f32 %v1669, %v5153
    %v5858 = vmul.f32 %v1671, %v5154
    %v5859 = vmul.f32 %v2022, %v5155
    %v5860 = vmul.f32 %v2024, %v5156
    %v5861 = vmul.f32 %v2375, %v5157
    %v5862 = vmul.f32 %v2377, %v5158
    %v5863 = vmul.f32 %v2719, %v5159
    %v5864 = vmul.f32 %v969, %v5160
    %v5865 = vmul.f32 %v971, %v5161
    %v5866 = vmul.f32 %v1322, %v5162
    %v5867 = vmul.f32 %v1324, %v5163
    %v5868 = vmul.f32 %v1675, %v5164
    %v5869 = vmul.f32 %v1677, %v5165
    %v5870 = vmul.f32 %v2028, %v5166
    %v5871 = vmul.f32 %v2030, %v5167
    %v5872 = vmul.f32 %v2381, %v5168
    %v5873 = vmul.f32 %v2383, %v5169
    %v5874 = vmul.f32 %v2724, %v5170
    %v5875 = vmul.f32 %v973, %v5171
    %v5876 = vmul.f32 %v975, %v5172
    %v5877 = vmul.f32 %v1326, %v5173
    %v5878 = vmul.f32 %v1328, %v5174
    %v5879 = vmul.f32 %v1679, %v5175
    %v5880 = vmul.f32 %v1681, %v5176
    %v5881 = vmul.f32 %v2032, %v5177
    %v5882 = vmul.f32 %v2034, %v5178
    %v5883 = vmul.f32 %v2385, %v5179
    %v5884 = vmul.f32 %v2387, %v5180
    %v5885 = vmul.f32 %v2727, %v5181
    %v5886 = vmul.f32 %v979, %v5182
    %v5887 = vmul.f32 %v981, %v5183
    %v5888 = vmul.f32 %v1332, %v5184
    %v5889 = vmul.f32 %v1334, %v5185
    %v5890 = vmul.f32 %v1685, %v5186
    %v5891 = vmul.f32 %v1687, %v5187
    %v5892 = vmul.f32 %v2038, %v5188
    %v5893 = vmul.f32 %v2040, %v5189
    %v5894 = vmul.f32 %v2391, %v5190
    %v5895 = vmul.f32 %v2393, %v5191
    %v5896 = vmul.f32 %v2732, %v5192
    %v5897 = vmul.f32 %v983, %v5193
    %v5898 = vmul.f32 %v985, %v5194
    %v5899 = vmul.f32 %v1336, %v5195
    %v5900 = vmul.f32 %v1338, %v5196
    %v5901 = vmul.f32 %v1689, %v5197
    %v5902 = vmul.f32 %v1691, %v5198
    %v5903 = vmul.f32 %v2042, %v5199
    %v5904 = vmul.f32 %v2044, %v5200
    %v5905 = vmul.f32 %v2395, %v5201
    %v5906 = vmul.f32 %v2397, %v5202
    %v5907 = vmul.f32 %v2735, %v5203
    %v5908 = vmul.f32 %v989, %v5204
    %v5909 = vmul.f32 %v991, %v5205
    %v5910 = vmul.f32 %v1342, %v5206
    %v5911 = vmul.f32 %v1344, %v5207
    %v5912 = vmul.f32 %v1695, %v5208
    %v5913 = vmul.f32 %v1697, %v5209
    %v5914 = vmul.f32 %v2048, %v5210
    %v5915 = vmul.f32 %v2050, %v5211
    %v5916 = vmul.f32 %v2401, %v5212
    %v5917 = vmul.f32 %v2403, %v5213
    %v5918 = vmul.f32 %v2740, %v5214
    %v5919 = vmul.f32 %v993, %v5215
    %v5920 = vmul.f32 %v995, %v5216
    %v5921 = vmul.f32 %v1346, %v5217
    %v5922 = vmul.f32 %v1348, %v5218
    %v5923 = vmul.f32 %v1699, %v5219
    %v5924 = vmul.f32 %v1701, %v5220
    %v5925 = vmul.f32 %v2052, %v5221
    %v5926 = vmul.f32 %v2054, %v5222
    %v5927 = vmul.f32 %v2405, %v5223
    %v5928 = vmul.f32 %v2407, %v5224
    %v5929 = vmul.f32 %v2743, %v5225
    %v5930 = vmul.f32 %v999, %v5226
    %v5931 = vmul.f32 %v1001, %v5227
    %v5932 = vmul.f32 %v1352, %v5228
    %v5933 = vmul.f32 %v1354, %v5229
    %v5934 = vmul.f32 %v1705, %v5230
    %v5935 = vmul.f32 %v1707, %v5231
    %v5936 = vmul.f32 %v2058, %v5232
    %v5937 = vmul.f32 %v2060, %v5233
    %v5938 = vmul.f32 %v2411, %v5234
    %v5939 = vmul.f32 %v2413, %v5235
    %v5940 = vmul.f32 %v2748, %v5236
    %v5941 = vmul.f32 %v1003, %v5237
    %v5942 = vmul.f32 %v1005, %v5238
    %v5943 = vmul.f32 %v1356, %v5239
    %v5944 = vmul.f32 %v1358, %v5240
    %v5945 = vmul.f32 %v1709, %v5241
    %v5946 = vmul.f32 %v1711, %v5242
    %v5947 = vmul.f32 %v2062, %v5243
    %v5948 = vmul.f32 %v2064, %v5244
    %v5949 = vmul.f32 %v2415, %v5245
    %v5950 = vmul.f32 %v2417, %v5246
    %v5951 = vmul.f32 %v2751, %v5247
    %v5952 = vmul.f32 %v1009, %v5248
    %v5953 = vmul.f32 %v1011, %v5249
    %v5954 = vmul.f32 %v1362, %v5250
    %v5955 = vmul.f32 %v1364, %v5251
    %v5956 = vmul.f32 %v1715, %v5252
    %v5957 = vmul.f32 %v1717, %v5253
    %v5958 = vmul.f32 %v2068, %v5254
    %v5959 = vmul.f32 %v2070, %v5255
    %v5960 = vmul.f32 %v2421, %v5256
    %v5961 = vmul.f32 %v2423, %v5257
    %v5962 = vmul.f32 %v2756, %v5258
    %v5963 = vmul.f32 %v1013, %v5259
    %v5964 = vmul.f32 %v1015, %v5260
    %v5965 = vmul.f32 %v1366, %v5261
    %v5966 = vmul.f32 %v1368, %v5262
    %v5967 = vmul.f32 %v1719, %v5263
    %v5968 = vmul.f32 %v1721, %v5264
    %v5969 = vmul.f32 %v2072, %v5265
    %v5970 = vmul.f32 %v2074, %v5266
    %v5971 = vmul.f32 %v2425, %v5267
    %v5972 = vmul.f32 %v2427, %v5268
    %v5973 = vmul.f32 %v2759, %v5269
    %v5974 = vmul.f32 %v1019, %v5270
    %v5975 = vmul.f32 %v1021, %v5271
    %v5976 = vmul.f32 %v1372, %v5272
    %v5977 = vmul.f32 %v1374, %v5273
    %v5978 = vmul.f32 %v1725, %v5274
    %v5979 = vmul.f32 %v1727, %v5275
    %v5980 = vmul.f32 %v2078, %v5276
    %v5981 = vmul.f32 %v2080, %v5277
    %v5982 = vmul.f32 %v2431, %v5278
    %v5983 = vmul.f32 %v2433, %v5279
    %v5984 = vmul.f32 %v2764, %v5280
    %v5985 = vmul.f32 %v1023, %v5281
    %v5986 = vmul.f32 %v1025, %v5282
    %v5987 = vmul.f32 %v1376, %v5283
    %v5988 = vmul.f32 %v1378, %v5284
    %v5989 = vmul.f32 %v1729, %v5285
    %v5990 = vmul.f32 %v1731, %v5286
    %v5991 = vmul.f32 %v2082, %v5287
    %v5992 = vmul.f32 %v2084, %v5288
    %v5993 = vmul.f32 %v2435, %v5289
    %v5994 = vmul.f32 %v2437, %v5290
    %v5995 = vmul.f32 %v2767, %v5291
    %v5996 = vmul.f32 %v1029, %v5292
    %v5997 = vmul.f32 %v1031, %v5293
    %v5998 = vmul.f32 %v1382, %v5294
    %v5999 = vmul.f32 %v1384, %v5295
    %v6000 = vmul.f32 %v1735, %v5296
    %v6001 = vmul.f32 %v1737, %v5297
    %v6002 = vmul.f32 %v2088, %v5298
    %v6003 = vmul.f32 %v2090, %v5299
    %v6004 = vmul.f32 %v2441, %v5300
    %v6005 = vmul.f32 %v2443, %v5301
    %v6006 = vmul.f32 %v2772, %v5302
    %v6007 = vmul.f32 %v1033, %v5303
    %v6008 = vmul.f32 %v1035, %v5304
    %v6009 = vmul.f32 %v1386, %v5305
    %v6010 = vmul.f32 %v1388, %v5306
    %v6011 = vmul.f32 %v1739, %v5307
    %v6012 = vmul.f32 %v1741, %v5308
    %v6013 = vmul.f32 %v2092, %v5309
    %v6014 = vmul.f32 %v2094, %v5310
    %v6015 = vmul.f32 %v2445, %v5311
    %v6016 = vmul.f32 %v2447, %v5312
    %v6017 = vmul.f32 %v2775, %v5313
    %v6018 = vmul.f32 %v1039, %v5314
    %v6019 = vmul.f32 %v1041, %v5315
    %v6020 = vmul.f32 %v1392, %v5316
    %v6021 = vmul.f32 %v1394, %v5317
    %v6022 = vmul.f32 %v1745, %v5318
    %v6023 = vmul.f32 %v1747, %v5319
    %v6024 = vmul.f32 %v2098, %v5320
    %v6025 = vmul.f32 %v2100, %v5321
    %v6026 = vmul.f32 %v2451, %v5322
    %v6027 = vmul.f32 %v2453, %v5323
    %v6028 = vmul.f32 %v2780, %v5324
    %v6029 = vmul.f32 %v1043, %v5325
    %v6030 = vmul.f32 %v1045, %v5326
    %v6031 = vmul.f32 %v1396, %v5327
    %v6032 = vmul.f32 %v1398, %v5328
    %v6033 = vmul.f32 %v1749, %v5329
    %v6034 = vmul.f32 %v1751, %v5330
    %v6035 = vmul.f32 %v2102, %v5331
    %v6036 = vmul.f32 %v2104, %v5332
    %v6037 = vmul.f32 %v2455, %v5333
    %v6038 = vmul.f32 %v2457, %v5334
    %v6039 = vmul.f32 %v2783, %v5335
    %v6040 = vmul.f32 %v1049, %v5336
    %v6041 = vmul.f32 %v1051, %v5337
    %v6042 = vmul.f32 %v1402, %v5338
    %v6043 = vmul.f32 %v1404, %v5339
    %v6044 = vmul.f32 %v1755, %v5340
    %v6045 = vmul.f32 %v1757, %v5341
    %v6046 = vmul.f32 %v2108, %v5342
    %v6047 = vmul.f32 %v2110, %v5343
    %v6048 = vmul.f32 %v2461, %v5344
    %v6049 = vmul.f32 %v2463, %v5345
    %v6050 = vmul.f32 %v2788, %v5346
    %v6051 = vmul.f32 %v1053, %v5347
    %v6052 = vmul.f32 %v1055, %v5348
    %v6053 = vmul.f32 %v1406, %v5349
    %v6054 = vmul.f32 %v1408, %v5350
    %v6055 = vmul.f32 %v1759, %v5351
    %v6056 = vmul.f32 %v1761, %v5352
    %v6057 = vmul.f32 %v2112, %v5353
    %v6058 = vmul.f32 %v2114, %v5354
    %v6059 = vmul.f32 %v2465, %v5355
    %v6060 = vmul.f32 %v2467, %v5356
    %v6061 = vmul.f32 %v2791, %v5357
    %v6062 = vmul.f32 %v1059, %v5358
    %v6063 = vmul.f32 %v1061, %v5359
    %v6064 = vmul.f32 %v1412, %v5360
    %v6065 = vmul.f32 %v1414, %v5361
    %v6066 = vmul.f32 %v1765, %v5362
    %v6067 = vmul.f32 %v1767, %v5363
    %v6068 = vmul.f32 %v2118, %v5364
    %v6069 = vmul.f32 %v2120, %v5365
    %v6070 = vmul.f32 %v2471, %v5366
    %v6071 = vmul.f32 %v2473, %v5367
    %v6072 = vmul.f32 %v2796, %v5368
    %v6073 = vmul.f32 %v1063, %v5369
    %v6074 = vmul.f32 %v1065, %v5370
    %v6075 = vmul.f32 %v1416, %v5371
    %v6076 = vmul.f32 %v1418, %v5372
    %v6077 = vmul.f32 %v1769, %v5373
    %v6078 = vmul.f32 %v1771, %v5374
    %v6079 = vmul.f32 %v2122, %v5375
    %v6080 = vmul.f32 %v2124, %v5376
    %v6081 = vmul.f32 %v2475, %v5377
    %v6082 = vmul.f32 %v2477, %v5378
    %v6083 = vmul.f32 %v2799, %v5379
    %v6084 = vmul.f32 %v1069, %v5380
    %v6085 = vmul.f32 %v1071, %v5381
    %v6086 = vmul.f32 %v1422, %v5382
    %v6087 = vmul.f32 %v1424, %v5383
    %v6088 = vmul.f32 %v1775, %v5384
    %v6089 = vmul.f32 %v1777, %v5385
    %v6090 = vmul.f32 %v2128, %v5386
    %v6091 = vmul.f32 %v2130, %v5387
    %v6092 = vmul.f32 %v2481, %v5388
    %v6093 = vmul.f32 %v2483, %v5389
    %v6094 = vmul.f32 %v2804, %v5390
    %v6095 = vmul.f32 %v1073, %v5391
    %v6096 = vmul.f32 %v1075, %v5392
    %v6097 = vmul.f32 %v1426, %v5393
    %v6098 = vmul.f32 %v1428, %v5394
    %v6099 = vmul.f32 %v1779, %v5395
    %v6100 = vmul.f32 %v1781, %v5396
    %v6101 = vmul.f32 %v2132, %v5397
    %v6102 = vmul.f32 %v2134, %v5398
    %v6103 = vmul.f32 %v2485, %v5399
    %v6104 = vmul.f32 %v2487, %v5400
    %v6105 = vmul.f32 %v2807, %v5401
    %v6106 = vmul.f32 %v1079, %v5402
    %v6107 = vmul.f32 %v1081, %v5403
    %v6108 = vmul.f32 %v1432, %v5404
    %v6109 = vmul.f32 %v1434, %v5405
    %v6110 = vmul.f32 %v1785, %v5406
    %v6111 = vmul.f32 %v1787, %v5407
    %v6112 = vmul.f32 %v2138, %v5408
    %v6113 = vmul.f32 %v2140, %v5409
    %v6114 = vmul.f32 %v2491, %v5410
    %v6115 = vmul.f32 %v2493, %v5411
    %v6116 = vmul.f32 %v2812, %v5412
    %v6117 = vmul.f32 %v1083, %v5413
    %v6118 = vmul.f32 %v1085, %v5414
    %v6119 = vmul.f32 %v1436, %v5415
    %v6120 = vmul.f32 %v1438, %v5416
    %v6121 = vmul.f32 %v1789, %v5417
    %v6122 = vmul.f32 %v1791, %v5418
    %v6123 = vmul.f32 %v2142, %v5419
    %v6124 = vmul.f32 %v2144, %v5420
    %v6125 = vmul.f32 %v2495, %v5421
    %v6126 = vmul.f32 %v2497, %v5422
    %v6127 = vmul.f32 %v2815, %v5423
    %v6128 = vmul.f32 %v1089, %v5424
    %v6129 = vmul.f32 %v1091, %v5425
    %v6130 = vmul.f32 %v1442, %v5426
    %v6131 = vmul.f32 %v1444, %v5427
    %v6132 = vmul.f32 %v1795, %v5428
    %v6133 = vmul.f32 %v1797, %v5429
    %v6134 = vmul.f32 %v2148, %v5430
    %v6135 = vmul.f32 %v2150, %v5431
    %v6136 = vmul.f32 %v2501, %v5432
    %v6137 = vmul.f32 %v2503, %v5433
    %v6138 = vmul.f32 %v2820, %v5434
    %v6139 = vmul.f32 %v1093, %v5435
    %v6140 = vmul.f32 %v1095, %v5436
    %v6141 = vmul.f32 %v1446, %v5437
    %v6142 = vmul.f32 %v1448, %v5438
    %v6143 = vmul.f32 %v1799, %v5439
    %v6144 = vmul.f32 %v1801, %v5440
    %v6145 = vmul.f32 %v2152, %v5441
    %v6146 = vmul.f32 %v2154, %v5442
    %v6147 = vmul.f32 %v2505, %v5443
    %v6148 = vmul.f32 %v2507, %v5444
    %v6149 = vmul.f32 %v2823, %v5445
    %v6150 = vmul.f32 %v1099, %v5446
    %v6151 = vmul.f32 %v1101, %v5447
    %v6152 = vmul.f32 %v1452, %v5448
    %v6153 = vmul.f32 %v1454, %v5449
    %v6154 = vmul.f32 %v1805, %v5450
    %v6155 = vmul.f32 %v1807, %v5451
    %v6156 = vmul.f32 %v2158, %v5452
    %v6157 = vmul.f32 %v2160, %v5453
    %v6158 = vmul.f32 %v2511, %v5454
    %v6159 = vmul.f32 %v2513, %v5455
    %v6160 = vmul.f32 %v2828, %v5456
    %v6161 = vmul.f32 %v1103, %v5457
    %v6162 = vmul.f32 %v1105, %v5458
    %v6163 = vmul.f32 %v1456, %v5459
    %v6164 = vmul.f32 %v1458, %v5460
    %v6165 = vmul.f32 %v1809, %v5461
    %v6166 = vmul.f32 %v1811, %v5462
    %v6167 = vmul.f32 %v2162, %v5463
    %v6168 = vmul.f32 %v2164, %v5464
    %v6169 = vmul.f32 %v2515, %v5465
    %v6170 = vmul.f32 %v2517, %v5466
    %v6171 = vmul.f32 %v2831, %v5467
    %v6172 = vmul.f32 %v1109, %v5468
    %v6173 = vmul.f32 %v1111, %v5469
    %v6174 = vmul.f32 %v1462, %v5470
    %v6175 = vmul.f32 %v1464, %v5471
    %v6176 = vmul.f32 %v1815, %v5472
    %v6177 = vmul.f32 %v1817, %v5473
    %v6178 = vmul.f32 %v2168, %v5474
    %v6179 = vmul.f32 %v2170, %v5475
    %v6180 = vmul.f32 %v2521, %v5476
    %v6181 = vmul.f32 %v2523, %v5477
    %v6182 = vmul.f32 %v2836, %v5478
    %v6183 = vmul.f32 %v1113, %v5479
    %v6184 = vmul.f32 %v1115, %v5480
    %v6185 = vmul.f32 %v1466, %v5481
    %v6186 = vmul.f32 %v1468, %v5482
    %v6187 = vmul.f32 %v1819, %v5483
    %v6188 = vmul.f32 %v1821, %v5484
    %v6189 = vmul.f32 %v2172, %v5485
    %v6190 = vmul.f32 %v2174, %v5486
    %v6191 = vmul.f32 %v2525, %v5487
    %v6192 = vmul.f32 %v2527, %v5488
    %v6193 = vmul.f32 %v2839, %v5489
    %v6194 = vmul.f32 %v1119, %v5490
    %v6195 = vmul.f32 %v1121, %v5491
    %v6196 = vmul.f32 %v1472, %v5492
    %v6197 = vmul.f32 %v1474, %v5493
    %v6198 = vmul.f32 %v1825, %v5494
    %v6199 = vmul.f32 %v1827, %v5495
    %v6200 = vmul.f32 %v2178, %v5496
    %v6201 = vmul.f32 %v2180, %v5497
    %v6202 = vmul.f32 %v2531, %v5498
    %v6203 = vmul.f32 %v2533, %v5499
    %v6204 = vmul.f32 %v2844, %v5500
    %v6205 = vmul.f32 %v1123, %v5501
    %v6206 = vmul.f32 %v1125, %v5502
    %v6207 = vmul.f32 %v1476, %v5503
    %v6208 = vmul.f32 %v1478, %v5504
    %v6209 = vmul.f32 %v1829, %v5505
    %v6210 = vmul.f32 %v1831, %v5506
    %v6211 = vmul.f32 %v2182, %v5507
    %v6212 = vmul.f32 %v2184, %v5508
    %v6213 = vmul.f32 %v2535, %v5509
    %v6214 = vmul.f32 %v2537, %v5510
    %v6215 = vmul.f32 %v2847, %v5511
    %v6216 = vmul.f32 %v1129, %v5512
    %v6217 = vmul.f32 %v1131, %v5513
    %v6218 = vmul.f32 %v1482, %v5514
    %v6219 = vmul.f32 %v1484, %v5515
    %v6220 = vmul.f32 %v1835, %v5516
    %v6221 = vmul.f32 %v1837, %v5517
    %v6222 = vmul.f32 %v2188, %v5518
    %v6223 = vmul.f32 %v2190, %v5519
    %v6224 = vmul.f32 %v2541, %v5520
    %v6225 = vmul.f32 %v2543, %v5521
    %v6226 = vmul.f32 %v2852, %v5522
    %v6227 = vmul.f32 %v1133, %v5523
    %v6228 = vmul.f32 %v1135, %v5524
    %v6229 = vmul.f32 %v1486, %v5525
    %v6230 = vmul.f32 %v1488, %v5526
    %v6231 = vmul.f32 %v1839, %v5527
    %v6232 = vmul.f32 %v1841, %v5528
    %v6233 = vmul.f32 %v2192, %v5529
    %v6234 = vmul.f32 %v2194, %v5530
    %v6235 = vmul.f32 %v2545, %v5531
    %v6236 = vmul.f32 %v2547, %v5532
    %v6237 = vmul.f32 %v2855, %v5533
    %v6238 = vmul.f32 %v1139, %v5534
    %v6239 = vmul.f32 %v1141, %v5535
    %v6240 = vmul.f32 %v1492, %v5536
    %v6241 = vmul.f32 %v1494, %v5537
    %v6242 = vmul.f32 %v1845, %v5538
    %v6243 = vmul.f32 %v1847, %v5539
    %v6244 = vmul.f32 %v2198, %v5540
    %v6245 = vmul.f32 %v2200, %v5541
    %v6246 = vmul.f32 %v2551, %v5542
    %v6247 = vmul.f32 %v2553, %v5543
    %v6248 = vmul.f32 %v2860, %v5544
    %v6249 = vmul.f32 %v1143, %v5545
    %v6250 = vmul.f32 %v1145, %v5546
    %v6251 = vmul.f32 %v1496, %v5547
    %v6252 = vmul.f32 %v1498, %v5548
    %v6253 = vmul.f32 %v1849, %v5549
    %v6254 = vmul.f32 %v1851, %v5550
    %v6255 = vmul.f32 %v2202, %v5551
    %v6256 = vmul.f32 %v2204, %v5552
    %v6257 = vmul.f32 %v2555, %v5553
    %v6258 = vmul.f32 %v2557, %v5554
    %v6259 = vmul.f32 %v2863, %v5555
    %v6260 = vmul.f32 %v1149, %v5556
    %v6261 = vmul.f32 %v1151, %v5557
    %v6262 = vmul.f32 %v1502, %v5558
    %v6263 = vmul.f32 %v1504, %v5559
    %v6264 = vmul.f32 %v1855, %v5560
    %v6265 = vmul.f32 %v1857, %v5561
    %v6266 = vmul.f32 %v2208, %v5562
    %v6267 = vmul.f32 %v2210, %v5563
    %v6268 = vmul.f32 %v2561, %v5564
    %v6269 = vmul.f32 %v2563, %v5565
    %v6270 = vmul.f32 %v2868, %v5566
    %v6271 = vmul.f32 %v1153, %v5567
    %v6272 = vmul.f32 %v1155, %v5568
    %v6273 = vmul.f32 %v1506, %v5569
    %v6274 = vmul.f32 %v1508, %v5570
    %v6275 = vmul.f32 %v1859, %v5571
    %v6276 = vmul.f32 %v1861, %v5572
    %v6277 = vmul.f32 %v2212, %v5573
    %v6278 = vmul.f32 %v2214, %v5574
    %v6279 = vmul.f32 %v2565, %v5575
    %v6280 = vmul.f32 %v2567, %v5576
    %v6281 = vmul.f32 %v2871, %v5577
    %v6282 = vmul.f32 %v1159, %v5578
    %v6283 = vmul.f32 %v1161, %v5579
    %v6284 = vmul.f32 %v1512, %v5580
    %v6285 = vmul.f32 %v1514, %v5581
    %v6286 = vmul.f32 %v1865, %v5582
    %v6287 = vmul.f32 %v1867, %v5583
    %v6288 = vmul.f32 %v2218, %v5584
    %v6289 = vmul.f32 %v2220, %v5585
    %v6290 = vmul.f32 %v2571, %v5586
    %v6291 = vmul.f32 %v2573, %v5587
    %v6292 = vmul.f32 %v2876, %v5588
    %v6293 = vmul.f32 %v1163, %v5589
    %v6294 = vmul.f32 %v1165, %v5590
    %v6295 = vmul.f32 %v1516, %v5591
    %v6296 = vmul.f32 %v1518, %v5592
    %v6297 = vmul.f32 %v1869, %v5593
    %v6298 = vmul.f32 %v1871, %v5594
    %v6299 = vmul.f32 %v2222, %v5595
    %v6300 = vmul.f32 %v2224, %v5596
    %v6301 = vmul.f32 %v2575, %v5597
    %v6302 = vmul.f32 %v2577, %v5598
    %v6303 = vmul.f32 %v2879, %v5599
    %v6304 = vmul.f32 %v1169, %v5600
    %v6305 = vmul.f32 %v1171, %v5601
    %v6306 = vmul.f32 %v1522, %v5602
    %v6307 = vmul.f32 %v1524, %v5603
    %v6308 = vmul.f32 %v1875, %v5604
    %v6309 = vmul.f32 %v1877, %v5605
    %v6310 = vmul.f32 %v2228, %v5606
    %v6311 = vmul.f32 %v2230, %v5607
    %v6312 = vmul.f32 %v2581, %v5608
    %v6313 = vmul.f32 %v2583, %v5609
    %v6314 = vmul.f32 %v2884, %v5610
    %v6315 = vmul.f32 %v1173, %v5611
    %v6316 = vmul.f32 %v1175, %v5612
    %v6317 = vmul.f32 %v1526, %v5613
    %v6318 = vmul.f32 %v1528, %v5614
    %v6319 = vmul.f32 %v1879, %v5615
    %v6320 = vmul.f32 %v1881, %v5616
    %v6321 = vmul.f32 %v2232, %v5617
    %v6322 = vmul.f32 %v2234, %v5618
    %v6323 = vmul.f32 %v2585, %v5619
    %v6324 = vmul.f32 %v2587, %v5620
    %v6325 = vmul.f32 %v2887, %v5621
    %v6326 = vmul.f32 %v1179, %v5622
    %v6327 = vmul.f32 %v1181, %v5623
    %v6328 = vmul.f32 %v1532, %v5624
    %v6329 = vmul.f32 %v1534, %v5625
    %v6330 = vmul.f32 %v1885, %v5626
    %v6331 = vmul.f32 %v1887, %v5627
    %v6332 = vmul.f32 %v2238, %v5628
    %v6333 = vmul.f32 %v2240, %v5629
    %v6334 = vmul.f32 %v2591, %v5630
    %v6335 = vmul.f32 %v2593, %v5631
    %v6336 = vmul.f32 %v2892, %v5632
    %v6337 = vmul.f32 %v1183, %v5633
    %v6338 = vmul.f32 %v1185, %v5634
    %v6339 = vmul.f32 %v1536, %v5635
    %v6340 = vmul.f32 %v1538, %v5636
    %v6341 = vmul.f32 %v1889, %v5637
    %v6342 = vmul.f32 %v1891, %v5638
    %v6343 = vmul.f32 %v2242, %v5639
    %v6344 = vmul.f32 %v2244, %v5640
    %v6345 = vmul.f32 %v2595, %v5641
    %v6346 = vmul.f32 %v2597, %v5642
    %v6347 = vmul.f32 %v2895, %v5643
    %v6348 = vmul.f32 %v1189, %v5644
    %v6349 = vmul.f32 %v1191, %v5645
    %v6350 = vmul.f32 %v1542, %v5646
    %v6351 = vmul.f32 %v1544, %v5647
    %v6352 = vmul.f32 %v1895, %v5648
    %v6353 = vmul.f32 %v1897, %v5649
    %v6354 = vmul.f32 %v2248, %v5650
    %v6355 = vmul.f32 %v2250, %v5651
    %v6356 = vmul.f32 %v2601, %v5652
    %v6357 = vmul.f32 %v2603, %v5653
    %v6358 = vmul.f32 %v2900, %v5654
    %v6359 = vmul.f32 %v1193, %v5655
    %v6360 = vmul.f32 %v1195, %v5656
    %v6361 = vmul.f32 %v1546, %v5657
    %v6362 = vmul.f32 %v1548, %v5658
    %v6363 = vmul.f32 %v1899, %v5659
    %v6364 = vmul.f32 %v1901, %v5660
    %v6365 = vmul.f32 %v2252, %v5661
    %v6366 = vmul.f32 %v2254, %v5662
    %v6367 = vmul.f32 %v2605, %v5663
    %v6368 = vmul.f32 %v2607, %v5664
    %v6369 = vmul.f32 %v2903, %v5665
    %v6370 = vmul.f32 %v1199, %v5666
    %v6371 = vmul.f32 %v1201, %v5667
    %v6372 = vmul.f32 %v1552, %v5668
    %v6373 = vmul.f32 %v1554, %v5669
    %v6374 = vmul.f32 %v1905, %v5670
    %v6375 = vmul.f32 %v1907, %v5671
    %v6376 = vmul.f32 %v2258, %v5672
    %v6377 = vmul.f32 %v2260, %v5673
    %v6378 = vmul.f32 %v2611, %v5674
    %v6379 = vmul.f32 %v2613, %v5675
    %v6380 = vmul.f32 %v2908, %v5676
    %v6381 = vmul.f32 %v1203, %v5677
    %v6382 = vmul.f32 %v1205, %v5678
    %v6383 = vmul.f32 %v1556, %v5679
    %v6384 = vmul.f32 %v1558, %v5680
    %v6385 = vmul.f32 %v1909, %v5681
    %v6386 = vmul.f32 %v1911, %v5682
    %v6387 = vmul.f32 %v2262, %v5683
    %v6388 = vmul.f32 %v2264, %v5684
    %v6389 = vmul.f32 %v2615, %v5685
    %v6390 = vmul.f32 %v2617, %v5686
    %v6391 = vmul.f32 %v2911, %v5687
    %v6392 = vmul.f32 %v1209, %v5688
    %v6393 = vmul.f32 %v1211, %v5689
    %v6394 = vmul.f32 %v1562, %v5690
    %v6395 = vmul.f32 %v1564, %v5691
    %v6396 = vmul.f32 %v1915, %v5692
    %v6397 = vmul.f32 %v1917, %v5693
    %v6398 = vmul.f32 %v2268, %v5694
    %v6399 = vmul.f32 %v2270, %v5695
    %v6400 = vmul.f32 %v2621, %v5696
    %v6401 = vmul.f32 %v2623, %v5697
    %v6402 = vmul.f32 %v2916, %v5698
    %v6403 = vmul.f32 %v1213, %v5699
    %v6404 = vmul.f32 %v1215, %v5700
    %v6405 = vmul.f32 %v1566, %v5701
    %v6406 = vmul.f32 %v1568, %v5702
    %v6407 = vmul.f32 %v1919, %v5703
    %v6408 = vmul.f32 %v1921, %v5704
    %v6409 = vmul.f32 %v2272, %v5705
    %v6410 = vmul.f32 %v2274, %v5706
    %v6411 = vmul.f32 %v2625, %v5707
    %v6412 = vmul.f32 %v2627, %v5708
    %v6413 = vmul.f32 %v2919, %v5709
    %v6414 = vmul.f32 %v1219, %v5710
    %v6415 = vmul.f32 %v1221, %v5711
    %v6416 = vmul.f32 %v1572, %v5712
    %v6417 = vmul.f32 %v1574, %v5713
    %v6418 = vmul.f32 %v1925, %v5714
    %v6419 = vmul.f32 %v1927, %v5715
    %v6420 = vmul.f32 %v2278, %v5716
    %v6421 = vmul.f32 %v2280, %v5717
    %v6422 = vmul.f32 %v2631, %v5718
    %v6423 = vmul.f32 %v2633, %v5719
    %v6424 = vmul.f32 %v2924, %v5720
    %v6425 = vmul.f32 %v1223, %v5721
    %v6426 = vmul.f32 %v1225, %v5722
    %v6427 = vmul.f32 %v1576, %v5723
    %v6428 = vmul.f32 %v1578, %v5724
    %v6429 = vmul.f32 %v1929, %v5725
    %v6430 = vmul.f32 %v1931, %v5726
    %v6431 = vmul.f32 %v2282, %v5727
    %v6432 = vmul.f32 %v2284, %v5728
    %v6433 = vmul.f32 %v2635, %v5729
    %v6434 = vmul.f32 %v2637, %v5730
    %v6435 = vmul.f32 %v2927, %v5731
    %v6436 = vmul.f32 %v1229, %v5732
    %v6437 = vmul.f32 %v1231, %v5733
    %v6438 = vmul.f32 %v1582, %v5734
    %v6439 = vmul.f32 %v1584, %v5735
    %v6440 = vmul.f32 %v1935, %v5736
    %v6441 = vmul.f32 %v1937, %v5737
    %v6442 = vmul.f32 %v2288, %v5738
    %v6443 = vmul.f32 %v2290, %v5739
    %v6444 = vmul.f32 %v2641, %v5740
    %v6445 = vmul.f32 %v2643, %v5741
    %v6446 = vmul.f32 %v2932, %v5742
    %v6447 = vmul.f32 %v1233, %v5743
    %v6448 = vmul.f32 %v1235, %v5744
    %v6449 = vmul.f32 %v1586, %v5745
    %v6450 = vmul.f32 %v1588, %v5746
    %v6451 = vmul.f32 %v1939, %v5747
    %v6452 = vmul.f32 %v1941, %v5748
    %v6453 = vmul.f32 %v2292, %v5749
    %v6454 = vmul.f32 %v2294, %v5750
    %v6455 = vmul.f32 %v2645, %v5751
    %v6456 = vmul.f32 %v2647, %v5752
    %v6457 = vmul.f32 %v2935, %v5753
    %v6458 = vld [vmem:[%s3] sm:$0xff]
    %v6460 = vcombine.high %v6458, %v6458
    %v6462 = vunpack.c.l.s4 1983009808
    %v6463 = vunpack.c.0.s8 %v6462
    %v6464 = vlaneseq
    %v6465 = vshrl.u32 %v6464, 7
    %v6466 = vsub.s32 %v6463, %v6465
    %v6467 = vrot.slane %v6458, %v6466
    %v6469 = vunpack.c.l.s4 1983009808
    %v6470 = vunpack.c.0.s8 %v6469
    %v6471 = vlaneseq
    %v6472 = vshrl.u32 %v6471, 7
    %v6473 = vsub.s32 %v6470, %v6472
    %v6474 = vrot.slane %v6460, %v6473
    %v6475 = vcombine.high %v6467, %v6467
    %v6476 = vcombine.high %v6474, %v6474
    %6481 = vmatprep.subr.mxu0 %v5755
    %6482 = vmatpush1.msra.mxu0 %v5754
    %6483 = vmatprep.subr.mxu0 %v5766
    %6484 = vmatpush1.msra.mxu0 %v5765
    %6485 = vmatprep.subr.mxu0 %v5777
    %6486 = vmatpush1.msra.mxu0 %v5776
    %6487 = vmatprep.subr.mxu0 %v5788
    %6488 = vmatpush1.msra.mxu0 %v5787
    %6489 = vmatprep.subr.mxu0 %v5799
    %6490 = vmatpush1.msra.mxu0 %v5798
    %6491 = vmatprep.subr.mxu0 %v5810
    %6492 = vmatpush1.msra.mxu0 %v5809
    %6493 = vmatprep.subr.mxu0 %v5821
    %6494 = vmatpush1.msra.mxu0 %v5820
    %6495 = vmatprep.subr.mxu0 %v5832
    %6496 = vmatpush1.msra.mxu0 %v5831
    %6497 = vmatprep.subr.mxu0 %v5843
    %6498 = vmatpush1.msra.mxu0 %v5842
    %6499 = vmatprep.subr.mxu0 %v5854
    %6500 = vmatpush1.msra.mxu0 %v5853
    %6501 = vmatprep.subr.mxu0 %v5865
    %6502 = vmatpush1.msra.mxu0 %v5864
    %6503 = vmatprep.subr.mxu0 %v5876
    %6504 = vmatpush1.msra.mxu0 %v5875
    %6505 = vmatprep.subr.mxu0 %v5887
    %6506 = vmatpush1.msra.mxu0 %v5886
    %6507 = vmatprep.subr.mxu0 %v5898
    %6508 = vmatpush1.msra.mxu0 %v5897
    %6509 = vmatprep.subr.mxu0 %v5909
    %6510 = vmatpush1.msra.mxu0 %v5908
    %6511 = vmatprep.subr.mxu0 %v5920
    %6512 = vmatpush1.msra.mxu0 %v5919
    %6513 = vmatprep.subr.mxu0 %v5931
    %6514 = vmatpush1.msra.mxu0 %v5930
    %6515 = vmatprep.subr.mxu0 %v5942
    %6516 = vmatpush1.msra.mxu0 %v5941
    %6517 = vmatprep.subr.mxu0 %v5953
    %6518 = vmatpush1.msra.mxu0 %v5952
    %6519 = vmatprep.subr.mxu0 %v5964
    %6520 = vmatpush1.msra.mxu0 %v5963
    %6521 = vmatprep.subr.mxu0 %v5975
    %6522 = vmatpush1.msra.mxu0 %v5974
    %6523 = vmatprep.subr.mxu0 %v5986
    %6524 = vmatpush1.msra.mxu0 %v5985
    %6525 = vmatprep.subr.mxu0 %v5997
    %6526 = vmatpush1.msra.mxu0 %v5996
    %6527 = vmatprep.subr.mxu0 %v6008
    %6528 = vmatpush1.msra.mxu0 %v6007
    %6529 = vmatprep.subr.mxu0 %v6019
    %6530 = vmatpush1.msra.mxu0 %v6018
    %6531 = vmatprep.subr.mxu0 %v6030
    %6532 = vmatpush1.msra.mxu0 %v6029
    %6533 = vmatprep.subr.mxu0 %v6041
    %6534 = vmatpush1.msra.mxu0 %v6040
    %6535 = vmatprep.subr.mxu0 %v6052
    %6536 = vmatpush1.msra.mxu0 %v6051
    %6537 = vmatprep.subr.mxu0 %v6063
    %6538 = vmatpush1.msra.mxu0 %v6062
    %6539 = vmatprep.subr.mxu0 %v6074
    %6540 = vmatpush1.msra.mxu0 %v6073
    %6541 = vmatprep.subr.mxu0 %v6085
    %6542 = vmatpush1.msra.mxu0 %v6084
    %6543 = vmatprep.subr.mxu0 %v6096
    %6544 = vmatpush1.msra.mxu0 %v6095
    %6545 = vmatprep.mubr.f32.mxu0 %v6475
    %6546 = vmatmul.mubr.f32.gmra.mrb[0].mxu0 %v6467
    %v6547 = vpop.f32.mrb[0].mxu0
    %v6548 = vadd.f32 0.0, %v6547
    %v6549 = vpop.f32.mrb[0].mxu0
    %v6550 = vadd.f32 0.0, %v6549
    %6551 = vdwg.mxu0
    %6552 = vmatprep.subr.mxu0 %v6107
    %6553 = vmatpush1.msra.mxu0 %v6106
    %6554 = vmatprep.subr.mxu0 %v6118
    %6555 = vmatpush1.msra.mxu0 %v6117
    %6556 = vmatprep.subr.mxu0 %v6129
    %6557 = vmatpush1.msra.mxu0 %v6128
    %6558 = vmatprep.subr.mxu0 %v6140
    %6559 = vmatpush1.msra.mxu0 %v6139
    %6560 = vmatprep.subr.mxu0 %v6151
    %6561 = vmatpush1.msra.mxu0 %v6150
    %6562 = vmatprep.subr.mxu0 %v6162
    %6563 = vmatpush1.msra.mxu0 %v6161
    %6564 = vmatprep.subr.mxu0 %v6173
    %6565 = vmatpush1.msra.mxu0 %v6172
    %6566 = vmatprep.subr.mxu0 %v6184
    %6567 = vmatpush1.msra.mxu0 %v6183
    %6568 = vmatprep.subr.mxu0 %v6195
    %6569 = vmatpush1.msra.mxu0 %v6194
    %6570 = vmatprep.subr.mxu0 %v6206
    %6571 = vmatpush1.msra.mxu0 %v6205
    %6572 = vmatprep.subr.mxu0 %v6217
    %6573 = vmatpush1.msra.mxu0 %v6216
    %6574 = vmatprep.subr.mxu0 %v6228
    %6575 = vmatpush1.msra.mxu0 %v6227
    %6576 = vmatprep.subr.mxu0 %v6239
    %6577 = vmatpush1.msra.mxu0 %v6238
    %6578 = vmatprep.subr.mxu0 %v6250
    %6579 = vmatpush1.msra.mxu0 %v6249
    %6580 = vmatprep.subr.mxu0 %v6261
    %6581 = vmatpush1.msra.mxu0 %v6260
    %6582 = vmatprep.subr.mxu0 %v6272
    %6583 = vmatpush1.msra.mxu0 %v6271
    %6584 = vmatprep.subr.mxu0 %v6283
    %6585 = vmatpush1.msra.mxu0 %v6282
    %6586 = vmatprep.subr.mxu0 %v6294
    %6587 = vmatpush1.msra.mxu0 %v6293
    %6588 = vmatprep.subr.mxu0 %v6305
    %6589 = vmatpush1.msra.mxu0 %v6304
    %6590 = vmatprep.subr.mxu0 %v6316
    %6591 = vmatpush1.msra.mxu0 %v6315
    %6592 = vmatprep.subr.mxu0 %v6327
    %6593 = vmatpush1.msra.mxu0 %v6326
    %6594 = vmatprep.subr.mxu0 %v6338
    %6595 = vmatpush1.msra.mxu0 %v6337
    %6596 = vmatprep.subr.mxu0 %v6349
    %6597 = vmatpush1.msra.mxu0 %v6348
    %6598 = vmatprep.subr.mxu0 %v6360
    %6599 = vmatpush1.msra.mxu0 %v6359
    %6600 = vmatprep.subr.mxu0 %v6371
    %6601 = vmatpush1.msra.mxu0 %v6370
    %6602 = vmatprep.subr.mxu0 %v6382
    %6603 = vmatpush1.msra.mxu0 %v6381
    %6604 = vmatprep.subr.mxu0 %v6393
    %6605 = vmatpush1.msra.mxu0 %v6392
    %6606 = vmatprep.subr.mxu0 %v6404
    %6607 = vmatpush1.msra.mxu0 %v6403
    %6608 = vmatprep.subr.mxu0 %v6415
    %6609 = vmatpush1.msra.mxu0 %v6414
    %6610 = vmatprep.subr.mxu0 %v6426
    %6611 = vmatpush1.msra.mxu0 %v6425
    %6612 = vmatprep.subr.mxu0 %v6437
    %6613 = vmatpush1.msra.mxu0 %v6436
    %6614 = vmatprep.subr.mxu0 %v6448
    %6615 = vmatpush1.msra.mxu0 %v6447
    %6616 = vmatprep.mubr.f32.mxu0 %v6476
    %6617 = vmatmul.mubr.f32.gmra.mrb[0].mxu0 %v6474
    %v6618 = vpop.f32.mrb[0].mxu0
    %v6619 = vadd.f32 %v6548, %v6618
    %v6620 = vpop.f32.mrb[0].mxu0
    %v6621 = vadd.f32 %v6550, %v6620
    %6622 = vdwg.mxu0
    %6623 = vmatprep.subr.mxu0 %v5757
    %6624 = vmatpush1.msra.mxu0 %v5756
    %6625 = vmatprep.subr.mxu0 %v5768
    %6626 = vmatpush1.msra.mxu0 %v5767
    %6627 = vmatprep.subr.mxu0 %v5779
    %6628 = vmatpush1.msra.mxu0 %v5778
    %6629 = vmatprep.subr.mxu0 %v5790
    %6630 = vmatpush1.msra.mxu0 %v5789
    %6631 = vmatprep.subr.mxu0 %v5801
    %6632 = vmatpush1.msra.mxu0 %v5800
    %6633 = vmatprep.subr.mxu0 %v5812
    %6634 = vmatpush1.msra.mxu0 %v5811
    %6635 = vmatprep.subr.mxu0 %v5823
    %6636 = vmatpush1.msra.mxu0 %v5822
    %6637 = vmatprep.subr.mxu0 %v5834
    %6638 = vmatpush1.msra.mxu0 %v5833
    %6639 = vmatprep.subr.mxu0 %v5845
    %6640 = vmatpush1.msra.mxu0 %v5844
    %6641 = vmatprep.subr.mxu0 %v5856
    %6642 = vmatpush1.msra.mxu0 %v5855
    %6643 = vmatprep.subr.mxu0 %v5867
    %6644 = vmatpush1.msra.mxu0 %v5866
    %6645 = vmatprep.subr.mxu0 %v5878
    %6646 = vmatpush1.msra.mxu0 %v5877
    %6647 = vmatprep.subr.mxu0 %v5889
    %6648 = vmatpush1.msra.mxu0 %v5888
    %6649 = vmatprep.subr.mxu0 %v5900
    %6650 = vmatpush1.msra.mxu0 %v5899
    %6651 = vmatprep.subr.mxu0 %v5911
    %6652 = vmatpush1.msra.mxu0 %v5910
    %6653 = vmatprep.subr.mxu0 %v5922
    %6654 = vmatpush1.msra.mxu0 %v5921
    %6655 = vmatprep.subr.mxu0 %v5933
    %6656 = vmatpush1.msra.mxu0 %v5932
    %6657 = vmatprep.subr.mxu0 %v5944
    %6658 = vmatpush1.msra.mxu0 %v5943
    %6659 = vmatprep.subr.mxu0 %v5955
    %6660 = vmatpush1.msra.mxu0 %v5954
    %6661 = vmatprep.subr.mxu0 %v5966
    %6662 = vmatpush1.msra.mxu0 %v5965
    %6663 = vmatprep.subr.mxu0 %v5977
    %6664 = vmatpush1.msra.mxu0 %v5976
    %6665 = vmatprep.subr.mxu0 %v5988
    %6666 = vmatpush1.msra.mxu0 %v5987
    %6667 = vmatprep.subr.mxu0 %v5999
    %6668 = vmatpush1.msra.mxu0 %v5998
    %6669 = vmatprep.subr.mxu0 %v6010
    %6670 = vmatpush1.msra.mxu0 %v6009
    %6671 = vmatprep.subr.mxu0 %v6021
    %6672 = vmatpush1.msra.mxu0 %v6020
    %6673 = vmatprep.subr.mxu0 %v6032
    %6674 = vmatpush1.msra.mxu0 %v6031
    %6675 = vmatprep.subr.mxu0 %v6043
    %6676 = vmatpush1.msra.mxu0 %v6042
    %6677 = vmatprep.subr.mxu0 %v6054
    %6678 = vmatpush1.msra.mxu0 %v6053
    %6679 = vmatprep.subr.mxu0 %v6065
    %6680 = vmatpush1.msra.mxu0 %v6064
    %6681 = vmatprep.subr.mxu0 %v6076
    %6682 = vmatpush1.msra.mxu0 %v6075
    %6683 = vmatprep.subr.mxu0 %v6087
    %6684 = vmatpush1.msra.mxu0 %v6086
    %6685 = vmatprep.subr.mxu0 %v6098
    %6686 = vmatpush1.msra.mxu0 %v6097
    %6687 = vmatprep.mubr.f32.mxu0 %v6475
    %6688 = vmatmul.mubr.f32.gmra.mrb[0].mxu0 %v6467
    %v6689 = vpop.f32.mrb[0].mxu0
    %v6690 = vadd.f32 0.0, %v6689
    %v6691 = vpop.f32.mrb[0].mxu0
    %v6692 = vadd.f32 0.0, %v6691
    %6693 = vdwg.mxu0
    %6694 = vmatprep.subr.mxu0 %v6109
    %6695 = vmatpush1.msra.mxu0 %v6108
    %6696 = vmatprep.subr.mxu0 %v6120
    %6697 = vmatpush1.msra.mxu0 %v6119
    %6698 = vmatprep.subr.mxu0 %v6131
    %6699 = vmatpush1.msra.mxu0 %v6130
    %6700 = vmatprep.subr.mxu0 %v6142
    %6701 = vmatpush1.msra.mxu0 %v6141
    %6702 = vmatprep.subr.mxu0 %v6153
    %6703 = vmatpush1.msra.mxu0 %v6152
    %6704 = vmatprep.subr.mxu0 %v6164
    %6705 = vmatpush1.msra.mxu0 %v6163
    %6706 = vmatprep.subr.mxu0 %v6175
    %6707 = vmatpush1.msra.mxu0 %v6174
    %6708 = vmatprep.subr.mxu0 %v6186
    %6709 = vmatpush1.msra.mxu0 %v6185
    %6710 = vmatprep.subr.mxu0 %v6197
    %6711 = vmatpush1.msra.mxu0 %v6196
    %6712 = vmatprep.subr.mxu0 %v6208
    %6713 = vmatpush1.msra.mxu0 %v6207
    %6714 = vmatprep.subr.mxu0 %v6219
    %6715 = vmatpush1.msra.mxu0 %v6218
    %6716 = vmatprep.subr.mxu0 %v6230
    %6717 = vmatpush1.msra.mxu0 %v6229
    %6718 = vmatprep.subr.mxu0 %v6241
    %6719 = vmatpush1.msra.mxu0 %v6240
    %6720 = vmatprep.subr.mxu0 %v6252
    %6721 = vmatpush1.msra.mxu0 %v6251
    %6722 = vmatprep.subr.mxu0 %v6263
    %6723 = vmatpush1.msra.mxu0 %v6262
    %6724 = vmatprep.subr.mxu0 %v6274
    %6725 = vmatpush1.msra.mxu0 %v6273
    %6726 = vmatprep.subr.mxu0 %v6285
    %6727 = vmatpush1.msra.mxu0 %v6284
    %6728 = vmatprep.subr.mxu0 %v6296
    %6729 = vmatpush1.msra.mxu0 %v6295
    %6730 = vmatprep.subr.mxu0 %v6307
    %6731 = vmatpush1.msra.mxu0 %v6306
    %6732 = vmatprep.subr.mxu0 %v6318
    %6733 = vmatpush1.msra.mxu0 %v6317
    %6734 = vmatprep.subr.mxu0 %v6329
    %6735 = vmatpush1.msra.mxu0 %v6328
    %6736 = vmatprep.subr.mxu0 %v6340
    %6737 = vmatpush1.msra.mxu0 %v6339
    %6738 = vmatprep.subr.mxu0 %v6351
    %6739 = vmatpush1.msra.mxu0 %v6350
    %6740 = vmatprep.subr.mxu0 %v6362
    %6741 = vmatpush1.msra.mxu0 %v6361
    %6742 = vmatprep.subr.mxu0 %v6373
    %6743 = vmatpush1.msra.mxu0 %v6372
    %6744 = vmatprep.subr.mxu0 %v6384
    %6745 = vmatpush1.msra.mxu0 %v6383
    %6746 = vmatprep.subr.mxu0 %v6395
    %6747 = vmatpush1.msra.mxu0 %v6394
    %6748 = vmatprep.subr.mxu0 %v6406
    %6749 = vmatpush1.msra.mxu0 %v6405
    %6750 = vmatprep.subr.mxu0 %v6417
    %6751 = vmatpush1.msra.mxu0 %v6416
    %6752 = vmatprep.subr.mxu0 %v6428
    %6753 = vmatpush1.msra.mxu0 %v6427
    %6754 = vmatprep.subr.mxu0 %v6439
    %6755 = vmatpush1.msra.mxu0 %v6438
    %6756 = vmatprep.subr.mxu0 %v6450
    %6757 = vmatpush1.msra.mxu0 %v6449
    %6758 = vmatprep.mubr.f32.mxu0 %v6476
    %6759 = vmatmul.mubr.f32.gmra.mrb[0].mxu0 %v6474
    %v6760 = vpop.f32.mrb[0].mxu0
    %v6761 = vadd.f32 %v6690, %v6760
    %v6762 = vpop.f32.mrb[0].mxu0
    %v6763 = vadd.f32 %v6692, %v6762
    %6764 = vdwg.mxu0
    %6765 = vmatprep.subr.mxu0 %v5759
    %6766 = vmatpush1.msra.mxu0 %v5758
    %6767 = vmatprep.subr.mxu0 %v5770
    %6768 = vmatpush1.msra.mxu0 %v5769
    %6769 = vmatprep.subr.mxu0 %v5781
    %6770 = vmatpush1.msra.mxu0 %v5780
    %6771 = vmatprep.subr.mxu0 %v5792
    %6772 = vmatpush1.msra.mxu0 %v5791
    %6773 = vmatprep.subr.mxu0 %v5803
    %6774 = vmatpush1.msra.mxu0 %v5802
    %6775 = vmatprep.subr.mxu0 %v5814
    %6776 = vmatpush1.msra.mxu0 %v5813
    %6777 = vmatprep.subr.mxu0 %v5825
    %6778 = vmatpush1.msra.mxu0 %v5824
    %6779 = vmatprep.subr.mxu0 %v5836
    %6780 = vmatpush1.msra.mxu0 %v5835
    %6781 = vmatprep.subr.mxu0 %v5847
    %6782 = vmatpush1.msra.mxu0 %v5846
    %6783 = vmatprep.subr.mxu0 %v5858
    %6784 = vmatpush1.msra.mxu0 %v5857
    %6785 = vmatprep.subr.mxu0 %v5869
    %6786 = vmatpush1.msra.mxu0 %v5868
    %6787 = vmatprep.subr.mxu0 %v5880
    %6788 = vmatpush1.msra.mxu0 %v5879
    %6789 = vmatprep.subr.mxu0 %v5891
    %6790 = vmatpush1.msra.mxu0 %v5890
    %6791 = vmatprep.subr.mxu0 %v5902
    %6792 = vmatpush1.msra.mxu0 %v5901
    %6793 = vmatprep.subr.mxu0 %v5913
    %6794 = vmatpush1.msra.mxu0 %v5912
    %6795 = vmatprep.subr.mxu0 %v5924
    %6796 = vmatpush1.msra.mxu0 %v5923
    %6797 = vmatprep.subr.mxu0 %v5935
    %6798 = vmatpush1.msra.mxu0 %v5934
    %6799 = vmatprep.subr.mxu0 %v5946
    %6800 = vmatpush1.msra.mxu0 %v5945
    %6801 = vmatprep.subr.mxu0 %v5957
    %6802 = vmatpush1.msra.mxu0 %v5956
    %6803 = vmatprep.subr.mxu0 %v5968
    %6804 = vmatpush1.msra.mxu0 %v5967
    %6805 = vmatprep.subr.mxu0 %v5979
    %6806 = vmatpush1.msra.mxu0 %v5978
    %6807 = vmatprep.subr.mxu0 %v5990
    %6808 = vmatpush1.msra.mxu0 %v5989
    %6809 = vmatprep.subr.mxu0 %v6001
    %6810 = vmatpush1.msra.mxu0 %v6000
    %6811 = vmatprep.subr.mxu0 %v6012
    %6812 = vmatpush1.msra.mxu0 %v6011
    %6813 = vmatprep.subr.mxu0 %v6023
    %6814 = vmatpush1.msra.mxu0 %v6022
    %6815 = vmatprep.subr.mxu0 %v6034
    %6816 = vmatpush1.msra.mxu0 %v6033
    %6817 = vmatprep.subr.mxu0 %v6045
    %6818 = vmatpush1.msra.mxu0 %v6044
    %6819 = vmatprep.subr.mxu0 %v6056
    %6820 = vmatpush1.msra.mxu0 %v6055
    %6821 = vmatprep.subr.mxu0 %v6067
    %6822 = vmatpush1.msra.mxu0 %v6066
    %6823 = vmatprep.subr.mxu0 %v6078
    %6824 = vmatpush1.msra.mxu0 %v6077
    %6825 = vmatprep.subr.mxu0 %v6089
    %6826 = vmatpush1.msra.mxu0 %v6088
    %6827 = vmatprep.subr.mxu0 %v6100
    %6828 = vmatpush1.msra.mxu0 %v6099
    %6829 = vmatprep.mubr.f32.mxu0 %v6475
    %6830 = vmatmul.mubr.f32.gmra.mrb[0].mxu0 %v6467
    %v6831 = vpop.f32.mrb[0].mxu0
    %v6832 = vadd.f32 0.0, %v6831
    %v6833 = vpop.f32.mrb[0].mxu0
    %v6834 = vadd.f32 0.0, %v6833
    %6835 = vdwg.mxu0
    %6836 = vmatprep.subr.mxu0 %v6111
    %6837 = vmatpush1.msra.mxu0 %v6110
    %6838 = vmatprep.subr.mxu0 %v6122
    %6839 = vmatpush1.msra.mxu0 %v6121
    %6840 = vmatprep.subr.mxu0 %v6133
    %6841 = vmatpush1.msra.mxu0 %v6132
    %6842 = vmatprep.subr.mxu0 %v6144
    %6843 = vmatpush1.msra.mxu0 %v6143
    %6844 = vmatprep.subr.mxu0 %v6155
    %6845 = vmatpush1.msra.mxu0 %v6154
    %6846 = vmatprep.subr.mxu0 %v6166
    %6847 = vmatpush1.msra.mxu0 %v6165
    %6848 = vmatprep.subr.mxu0 %v6177
    %6849 = vmatpush1.msra.mxu0 %v6176
    %6850 = vmatprep.subr.mxu0 %v6188
    %6851 = vmatpush1.msra.mxu0 %v6187
    %6852 = vmatprep.subr.mxu0 %v6199
    %6853 = vmatpush1.msra.mxu0 %v6198
    %6854 = vmatprep.subr.mxu0 %v6210
    %6855 = vmatpush1.msra.mxu0 %v6209
    %6856 = vmatprep.subr.mxu0 %v6221
    %6857 = vmatpush1.msra.mxu0 %v6220
    %6858 = vmatprep.subr.mxu0 %v6232
    %6859 = vmatpush1.msra.mxu0 %v6231
    %6860 = vmatprep.subr.mxu0 %v6243
    %6861 = vmatpush1.msra.mxu0 %v6242
    %6862 = vmatprep.subr.mxu0 %v6254
    %6863 = vmatpush1.msra.mxu0 %v6253
    %6864 = vmatprep.subr.mxu0 %v6265
    %6865 = vmatpush1.msra.mxu0 %v6264
    %6866 = vmatprep.subr.mxu0 %v6276
    %6867 = vmatpush1.msra.mxu0 %v6275
    %6868 = vmatprep.subr.mxu0 %v6287
    %6869 = vmatpush1.msra.mxu0 %v6286
    %6870 = vmatprep.subr.mxu0 %v6298
    %6871 = vmatpush1.msra.mxu0 %v6297
    %6872 = vmatprep.subr.mxu0 %v6309
    %6873 = vmatpush1.msra.mxu0 %v6308
    %6874 = vmatprep.subr.mxu0 %v6320
    %6875 = vmatpush1.msra.mxu0 %v6319
    %6876 = vmatprep.subr.mxu0 %v6331
    %6877 = vmatpush1.msra.mxu0 %v6330
    %6878 = vmatprep.subr.mxu0 %v6342
    %6879 = vmatpush1.msra.mxu0 %v6341
    %6880 = vmatprep.subr.mxu0 %v6353
    %6881 = vmatpush1.msra.mxu0 %v6352
    %6882 = vmatprep.subr.mxu0 %v6364
    %6883 = vmatpush1.msra.mxu0 %v6363
    %6884 = vmatprep.subr.mxu0 %v6375
    %6885 = vmatpush1.msra.mxu0 %v6374
    %6886 = vmatprep.subr.mxu0 %v6386
    %6887 = vmatpush1.msra.mxu0 %v6385
    %6888 = vmatprep.subr.mxu0 %v6397
    %6889 = vmatpush1.msra.mxu0 %v6396
    %6890 = vmatprep.subr.mxu0 %v6408
    %6891 = vmatpush1.msra.mxu0 %v6407
    %6892 = vmatprep.subr.mxu0 %v6419
    %6893 = vmatpush1.msra.mxu0 %v6418
    %6894 = vmatprep.subr.mxu0 %v6430
    %6895 = vmatpush1.msra.mxu0 %v6429
    %6896 = vmatprep.subr.mxu0 %v6441
    %6897 = vmatpush1.msra.mxu0 %v6440
    %6898 = vmatprep.subr.mxu0 %v6452
    %6899 = vmatpush1.msra.mxu0 %v6451
    %6900 = vmatprep.mubr.f32.mxu0 %v6476
    %6901 = vmatmul.mubr.f32.gmra.mrb[0].mxu0 %v6474
    %v6902 = vpop.f32.mrb[0].mxu0
    %v6903 = vadd.f32 %v6832, %v6902
    %v6904 = vpop.f32.mrb[0].mxu0
    %v6905 = vadd.f32 %v6834, %v6904
    %6906 = vdwg.mxu0
    %6907 = vmatprep.subr.mxu0 %v5761
    %6908 = vmatpush1.msra.mxu0 %v5760
    %6909 = vmatprep.subr.mxu0 %v5772
    %6910 = vmatpush1.msra.mxu0 %v5771
    %6911 = vmatprep.subr.mxu0 %v5783
    %6912 = vmatpush1.msra.mxu0 %v5782
    %6913 = vmatprep.subr.mxu0 %v5794
    %6914 = vmatpush1.msra.mxu0 %v5793
    %6915 = vmatprep.subr.mxu0 %v5805
    %6916 = vmatpush1.msra.mxu0 %v5804
    %6917 = vmatprep.subr.mxu0 %v5816
    %6918 = vmatpush1.msra.mxu0 %v5815
    %6919 = vmatprep.subr.mxu0 %v5827
    %6920 = vmatpush1.msra.mxu0 %v5826
    %6921 = vmatprep.subr.mxu0 %v5838
    %6922 = vmatpush1.msra.mxu0 %v5837
    %6923 = vmatprep.subr.mxu0 %v5849
    %6924 = vmatpush1.msra.mxu0 %v5848
    %6925 = vmatprep.subr.mxu0 %v5860
    %6926 = vmatpush1.msra.mxu0 %v5859
    %6927 = vmatprep.subr.mxu0 %v5871
    %6928 = vmatpush1.msra.mxu0 %v5870
    %6929 = vmatprep.subr.mxu0 %v5882
    %6930 = vmatpush1.msra.mxu0 %v5881
    %6931 = vmatprep.subr.mxu0 %v5893
    %6932 = vmatpush1.msra.mxu0 %v5892
    %6933 = vmatprep.subr.mxu0 %v5904
    %6934 = vmatpush1.msra.mxu0 %v5903
    %6935 = vmatprep.subr.mxu0 %v5915
    %6936 = vmatpush1.msra.mxu0 %v5914
    %6937 = vmatprep.subr.mxu0 %v5926
    %6938 = vmatpush1.msra.mxu0 %v5925
    %6939 = vmatprep.subr.mxu0 %v5937
    %6940 = vmatpush1.msra.mxu0 %v5936
    %6941 = vmatprep.subr.mxu0 %v5948
    %6942 = vmatpush1.msra.mxu0 %v5947
    %6943 = vmatprep.subr.mxu0 %v5959
    %6944 = vmatpush1.msra.mxu0 %v5958
    %6945 = vmatprep.subr.mxu0 %v5970
    %6946 = vmatpush1.msra.mxu0 %v5969
    %6947 = vmatprep.subr.mxu0 %v5981
    %6948 = vmatpush1.msra.mxu0 %v5980
    %6949 = vmatprep.subr.mxu0 %v5992
    %6950 = vmatpush1.msra.mxu0 %v5991
    %6951 = vmatprep.subr.mxu0 %v6003
    %6952 = vmatpush1.msra.mxu0 %v6002
    %6953 = vmatprep.subr.mxu0 %v6014
    %6954 = vmatpush1.msra.mxu0 %v6013
    %6955 = vmatprep.subr.mxu0 %v6025
    %6956 = vmatpush1.msra.mxu0 %v6024
    %6957 = vmatprep.subr.mxu0 %v6036
    %6958 = vmatpush1.msra.mxu0 %v6035
    %6959 = vmatprep.subr.mxu0 %v6047
    %6960 = vmatpush1.msra.mxu0 %v6046
    %6961 = vmatprep.subr.mxu0 %v6058
    %6962 = vmatpush1.msra.mxu0 %v6057
    %6963 = vmatprep.subr.mxu0 %v6069
    %6964 = vmatpush1.msra.mxu0 %v6068
    %6965 = vmatprep.subr.mxu0 %v6080
    %6966 = vmatpush1.msra.mxu0 %v6079
    %6967 = vmatprep.subr.mxu0 %v6091
    %6968 = vmatpush1.msra.mxu0 %v6090
    %6969 = vmatprep.subr.mxu0 %v6102
    %6970 = vmatpush1.msra.mxu0 %v6101
    %6971 = vmatprep.mubr.f32.mxu0 %v6475
    %6972 = vmatmul.mubr.f32.gmra.mrb[0].mxu0 %v6467
    %v6973 = vpop.f32.mrb[0].mxu0
    %v6974 = vadd.f32 0.0, %v6973
    %v6975 = vpop.f32.mrb[0].mxu0
    %v6976 = vadd.f32 0.0, %v6975
    %6977 = vdwg.mxu0
    %6978 = vmatprep.subr.mxu0 %v6113
    %6979 = vmatpush1.msra.mxu0 %v6112
    %6980 = vmatprep.subr.mxu0 %v6124
    %6981 = vmatpush1.msra.mxu0 %v6123
    %6982 = vmatprep.subr.mxu0 %v6135
    %6983 = vmatpush1.msra.mxu0 %v6134
    %6984 = vmatprep.subr.mxu0 %v6146
    %6985 = vmatpush1.msra.mxu0 %v6145
    %6986 = vmatprep.subr.mxu0 %v6157
    %6987 = vmatpush1.msra.mxu0 %v6156
    %6988 = vmatprep.subr.mxu0 %v6168
    %6989 = vmatpush1.msra.mxu0 %v6167
    %6990 = vmatprep.subr.mxu0 %v6179
    %6991 = vmatpush1.msra.mxu0 %v6178
    %6992 = vmatprep.subr.mxu0 %v6190
    %6993 = vmatpush1.msra.mxu0 %v6189
    %6994 = vmatprep.subr.mxu0 %v6201
    %6995 = vmatpush1.msra.mxu0 %v6200
    %6996 = vmatprep.subr.mxu0 %v6212
    %6997 = vmatpush1.msra.mxu0 %v6211
    %6998 = vmatprep.subr.mxu0 %v6223
    %6999 = vmatpush1.msra.mxu0 %v6222
    %7000 = vmatprep.subr.mxu0 %v6234
    %7001 = vmatpush1.msra.mxu0 %v6233
    %7002 = vmatprep.subr.mxu0 %v6245
    %7003 = vmatpush1.msra.mxu0 %v6244
    %7004 = vmatprep.subr.mxu0 %v6256
    %7005 = vmatpush1.msra.mxu0 %v6255
    %7006 = vmatprep.subr.mxu0 %v6267
    %7007 = vmatpush1.msra.mxu0 %v6266
    %7008 = vmatprep.subr.mxu0 %v6278
    %7009 = vmatpush1.msra.mxu0 %v6277
    %7010 = vmatprep.subr.mxu0 %v6289
    %7011 = vmatpush1.msra.mxu0 %v6288
    %7012 = vmatprep.subr.mxu0 %v6300
    %7013 = vmatpush1.msra.mxu0 %v6299
    %7014 = vmatprep.subr.mxu0 %v6311
    %7015 = vmatpush1.msra.mxu0 %v6310
    %7016 = vmatprep.subr.mxu0 %v6322
    %7017 = vmatpush1.msra.mxu0 %v6321
    %7018 = vmatprep.subr.mxu0 %v6333
    %7019 = vmatpush1.msra.mxu0 %v6332
    %7020 = vmatprep.subr.mxu0 %v6344
    %7021 = vmatpush1.msra.mxu0 %v6343
    %7022 = vmatprep.subr.mxu0 %v6355
    %7023 = vmatpush1.msra.mxu0 %v6354
    %7024 = vmatprep.subr.mxu0 %v6366
    %7025 = vmatpush1.msra.mxu0 %v6365
    %7026 = vmatprep.subr.mxu0 %v6377
    %7027 = vmatpush1.msra.mxu0 %v6376
    %7028 = vmatprep.subr.mxu0 %v6388
    %7029 = vmatpush1.msra.mxu0 %v6387
    %7030 = vmatprep.subr.mxu0 %v6399
    %7031 = vmatpush1.msra.mxu0 %v6398
    %7032 = vmatprep.subr.mxu0 %v6410
    %7033 = vmatpush1.msra.mxu0 %v6409
    %7034 = vmatprep.subr.mxu0 %v6421
    %7035 = vmatpush1.msra.mxu0 %v6420
    %7036 = vmatprep.subr.mxu0 %v6432
    %7037 = vmatpush1.msra.mxu0 %v6431
    %7038 = vmatprep.subr.mxu0 %v6443
    %7039 = vmatpush1.msra.mxu0 %v6442
    %7040 = vmatprep.subr.mxu0 %v6454
    %7041 = vmatpush1.msra.mxu0 %v6453
    %7042 = vmatprep.mubr.f32.mxu0 %v6476
    %7043 = vmatmul.mubr.f32.gmra.mrb[0].mxu0 %v6474
    %v7044 = vpop.f32.mrb[0].mxu0
    %v7045 = vadd.f32 %v6974, %v7044
    %v7046 = vpop.f32.mrb[0].mxu0
    %v7047 = vadd.f32 %v6976, %v7046
    %7048 = vdwg.mxu0
    %7049 = vmatprep.subr.mxu0 %v5763
    %7050 = vmatpush1.msra.mxu0 %v5762
    %7051 = vmatprep.subr.mxu0 %v5774
    %7052 = vmatpush1.msra.mxu0 %v5773
    %7053 = vmatprep.subr.mxu0 %v5785
    %7054 = vmatpush1.msra.mxu0 %v5784
    %7055 = vmatprep.subr.mxu0 %v5796
    %7056 = vmatpush1.msra.mxu0 %v5795
    %7057 = vmatprep.subr.mxu0 %v5807
    %7058 = vmatpush1.msra.mxu0 %v5806
    %7059 = vmatprep.subr.mxu0 %v5818
    %7060 = vmatpush1.msra.mxu0 %v5817
    %7061 = vmatprep.subr.mxu0 %v5829
    %7062 = vmatpush1.msra.mxu0 %v5828
    %7063 = vmatprep.subr.mxu0 %v5840
    %7064 = vmatpush1.msra.mxu0 %v5839
    %7065 = vmatprep.subr.mxu0 %v5851
    %7066 = vmatpush1.msra.mxu0 %v5850
    %7067 = vmatprep.subr.mxu0 %v5862
    %7068 = vmatpush1.msra.mxu0 %v5861
    %7069 = vmatprep.subr.mxu0 %v5873
    %7070 = vmatpush1.msra.mxu0 %v5872
    %7071 = vmatprep.subr.mxu0 %v5884
    %7072 = vmatpush1.msra.mxu0 %v5883
    %7073 = vmatprep.subr.mxu0 %v5895
    %7074 = vmatpush1.msra.mxu0 %v5894
    %7075 = vmatprep.subr.mxu0 %v5906
    %7076 = vmatpush1.msra.mxu0 %v5905
    %7077 = vmatprep.subr.mxu0 %v5917
    %7078 = vmatpush1.msra.mxu0 %v5916
    %7079 = vmatprep.subr.mxu0 %v5928
    %7080 = vmatpush1.msra.mxu0 %v5927
    %7081 = vmatprep.subr.mxu0 %v5939
    %7082 = vmatpush1.msra.mxu0 %v5938
    %7083 = vmatprep.subr.mxu0 %v5950
    %7084 = vmatpush1.msra.mxu0 %v5949
    %7085 = vmatprep.subr.mxu0 %v5961
    %7086 = vmatpush1.msra.mxu0 %v5960
    %7087 = vmatprep.subr.mxu0 %v5972
    %7088 = vmatpush1.msra.mxu0 %v5971
    %7089 = vmatprep.subr.mxu0 %v5983
    %7090 = vmatpush1.msra.mxu0 %v5982
    %7091 = vmatprep.subr.mxu0 %v5994
    %7092 = vmatpush1.msra.mxu0 %v5993
    %7093 = vmatprep.subr.mxu0 %v6005
    %7094 = vmatpush1.msra.mxu0 %v6004
    %7095 = vmatprep.subr.mxu0 %v6016
    %7096 = vmatpush1.msra.mxu0 %v6015
    %7097 = vmatprep.subr.mxu0 %v6027
    %7098 = vmatpush1.msra.mxu0 %v6026
    %7099 = vmatprep.subr.mxu0 %v6038
    %7100 = vmatpush1.msra.mxu0 %v6037
    %7101 = vmatprep.subr.mxu0 %v6049
    %7102 = vmatpush1.msra.mxu0 %v6048
    %7103 = vmatprep.subr.mxu0 %v6060
    %7104 = vmatpush1.msra.mxu0 %v6059
    %7105 = vmatprep.subr.mxu0 %v6071
    %7106 = vmatpush1.msra.mxu0 %v6070
    %7107 = vmatprep.subr.mxu0 %v6082
    %7108 = vmatpush1.msra.mxu0 %v6081
    %7109 = vmatprep.subr.mxu0 %v6093
    %7110 = vmatpush1.msra.mxu0 %v6092
    %7111 = vmatprep.subr.mxu0 %v6104
    %7112 = vmatpush1.msra.mxu0 %v6103
    %7113 = vmatprep.mubr.f32.mxu0 %v6475
    %7114 = vmatmul.mubr.f32.gmra.mrb[0].mxu0 %v6467
    %v7115 = vpop.f32.mrb[0].mxu0
    %v7116 = vadd.f32 0.0, %v7115
    %v7117 = vpop.f32.mrb[0].mxu0
    %v7118 = vadd.f32 0.0, %v7117
    %7119 = vdwg.mxu0
    %7120 = vmatprep.subr.mxu0 %v6115
    %7121 = vmatpush1.msra.mxu0 %v6114
    %7122 = vmatprep.subr.mxu0 %v6126
    %7123 = vmatpush1.msra.mxu0 %v6125
    %7124 = vmatprep.subr.mxu0 %v6137
    %7125 = vmatpush1.msra.mxu0 %v6136
    %7126 = vmatprep.subr.mxu0 %v6148
    %7127 = vmatpush1.msra.mxu0 %v6147
    %7128 = vmatprep.subr.mxu0 %v6159
    %7129 = vmatpush1.msra.mxu0 %v6158
    %7130 = vmatprep.subr.mxu0 %v6170
    %7131 = vmatpush1.msra.mxu0 %v6169
    %7132 = vmatprep.subr.mxu0 %v6181
    %7133 = vmatpush1.msra.mxu0 %v6180
    %7134 = vmatprep.subr.mxu0 %v6192
    %7135 = vmatpush1.msra.mxu0 %v6191
    %7136 = vmatprep.subr.mxu0 %v6203
    %7137 = vmatpush1.msra.mxu0 %v6202
    %7138 = vmatprep.subr.mxu0 %v6214
    %7139 = vmatpush1.msra.mxu0 %v6213
    %7140 = vmatprep.subr.mxu0 %v6225
    %7141 = vmatpush1.msra.mxu0 %v6224
    %7142 = vmatprep.subr.mxu0 %v6236
    %7143 = vmatpush1.msra.mxu0 %v6235
    %7144 = vmatprep.subr.mxu0 %v6247
    %7145 = vmatpush1.msra.mxu0 %v6246
    %7146 = vmatprep.subr.mxu0 %v6258
    %7147 = vmatpush1.msra.mxu0 %v6257
    %7148 = vmatprep.subr.mxu0 %v6269
    %7149 = vmatpush1.msra.mxu0 %v6268
    %7150 = vmatprep.subr.mxu0 %v6280
    %7151 = vmatpush1.msra.mxu0 %v6279
    %7152 = vmatprep.subr.mxu0 %v6291
    %7153 = vmatpush1.msra.mxu0 %v6290
    %7154 = vmatprep.subr.mxu0 %v6302
    %7155 = vmatpush1.msra.mxu0 %v6301
    %7156 = vmatprep.subr.mxu0 %v6313
    %7157 = vmatpush1.msra.mxu0 %v6312
    %7158 = vmatprep.subr.mxu0 %v6324
    %7159 = vmatpush1.msra.mxu0 %v6323
    %7160 = vmatprep.subr.mxu0 %v6335
    %7161 = vmatpush1.msra.mxu0 %v6334
    %7162 = vmatprep.subr.mxu0 %v6346
    %7163 = vmatpush1.msra.mxu0 %v6345
    %7164 = vmatprep.subr.mxu0 %v6357
    %7165 = vmatpush1.msra.mxu0 %v6356
    %7166 = vmatprep.subr.mxu0 %v6368
    %7167 = vmatpush1.msra.mxu0 %v6367
    %7168 = vmatprep.subr.mxu0 %v6379
    %7169 = vmatpush1.msra.mxu0 %v6378
    %7170 = vmatprep.subr.mxu0 %v6390
    %7171 = vmatpush1.msra.mxu0 %v6389
    %7172 = vmatprep.subr.mxu0 %v6401
    %7173 = vmatpush1.msra.mxu0 %v6400
    %7174 = vmatprep.subr.mxu0 %v6412
    %7175 = vmatpush1.msra.mxu0 %v6411
    %7176 = vmatprep.subr.mxu0 %v6423
    %7177 = vmatpush1.msra.mxu0 %v6422
    %7178 = vmatprep.subr.mxu0 %v6434
    %7179 = vmatpush1.msra.mxu0 %v6433
    %7180 = vmatprep.subr.mxu0 %v6445
    %7181 = vmatpush1.msra.mxu0 %v6444
    %7182 = vmatprep.subr.mxu0 %v6456
    %7183 = vmatpush1.msra.mxu0 %v6455
    %7184 = vmatprep.mubr.f32.mxu0 %v6476
    %7185 = vmatmul.mubr.f32.gmra.mrb[0].mxu0 %v6474
    %v7186 = vpop.f32.mrb[0].mxu0
    %v7187 = vadd.f32 %v7116, %v7186
    %v7188 = vpop.f32.mrb[0].mxu0
    %v7189 = vadd.f32 %v7118, %v7188
    %7190 = vdwg.mxu0
    %7191 = vmatprep.subr.mxu0 0.0
    %7192 = vmatpush1.msra.mxu0 %v5764
    %7193 = vmatprep.subr.mxu0 0.0
    %7194 = vmatpush1.msra.mxu0 %v5775
    %7195 = vmatprep.subr.mxu0 0.0
    %7196 = vmatpush1.msra.mxu0 %v5786
    %7197 = vmatprep.subr.mxu0 0.0
    %7198 = vmatpush1.msra.mxu0 %v5797
    %7199 = vmatprep.subr.mxu0 0.0
    %7200 = vmatpush1.msra.mxu0 %v5808
    %7201 = vmatprep.subr.mxu0 0.0
    %7202 = vmatpush1.msra.mxu0 %v5819
    %7203 = vmatprep.subr.mxu0 0.0
    %7204 = vmatpush1.msra.mxu0 %v5830
    %7205 = vmatprep.subr.mxu0 0.0
    %7206 = vmatpush1.msra.mxu0 %v5841
    %7207 = vmatprep.subr.mxu0 0.0
    %7208 = vmatpush1.msra.mxu0 %v5852
    %7209 = vmatprep.subr.mxu0 0.0
    %7210 = vmatpush1.msra.mxu0 %v5863
    %7211 = vmatprep.subr.mxu0 0.0
    %7212 = vmatpush1.msra.mxu0 %v5874
    %7213 = vmatprep.subr.mxu0 0.0
    %7214 = vmatpush1.msra.mxu0 %v5885
    %7215 = vmatprep.subr.mxu0 0.0
    %7216 = vmatpush1.msra.mxu0 %v5896
    %7217 = vmatprep.subr.mxu0 0.0
    %7218 = vmatpush1.msra.mxu0 %v5907
    %7219 = vmatprep.subr.mxu0 0.0
    %7220 = vmatpush1.msra.mxu0 %v5918
    %7221 = vmatprep.subr.mxu0 0.0
    %7222 = vmatpush1.msra.mxu0 %v5929
    %7223 = vmatprep.subr.mxu0 0.0
    %7224 = vmatpush1.msra.mxu0 %v5940
    %7225 = vmatprep.subr.mxu0 0.0
    %7226 = vmatpush1.msra.mxu0 %v5951
    %7227 = vmatprep.subr.mxu0 0.0
    %7228 = vmatpush1.msra.mxu0 %v5962
    %7229 = vmatprep.subr.mxu0 0.0
    %7230 = vmatpush1.msra.mxu0 %v5973
    %7231 = vmatprep.subr.mxu0 0.0
    %7232 = vmatpush1.msra.mxu0 %v5984
    %7233 = vmatprep.subr.mxu0 0.0
    %7234 = vmatpush1.msra.mxu0 %v5995
    %7235 = vmatprep.subr.mxu0 0.0
    %7236 = vmatpush1.msra.mxu0 %v6006
    %7237 = vmatprep.subr.mxu0 0.0
    %7238 = vmatpush1.msra.mxu0 %v6017
    %7239 = vmatprep.subr.mxu0 0.0
    %7240 = vmatpush1.msra.mxu0 %v6028
    %7241 = vmatprep.subr.mxu0 0.0
    %7242 = vmatpush1.msra.mxu0 %v6039
    %7243 = vmatprep.subr.mxu0 0.0
    %7244 = vmatpush1.msra.mxu0 %v6050
    %7245 = vmatprep.subr.mxu0 0.0
    %7246 = vmatpush1.msra.mxu0 %v6061
    %7247 = vmatprep.subr.mxu0 0.0
    %7248 = vmatpush1.msra.mxu0 %v6072
    %7249 = vmatprep.subr.mxu0 0.0
    %7250 = vmatpush1.msra.mxu0 %v6083
    %7251 = vmatprep.subr.mxu0 0.0
    %7252 = vmatpush1.msra.mxu0 %v6094
    %7253 = vmatprep.subr.mxu0 0.0
    %7254 = vmatpush1.msra.mxu0 %v6105
    %7255 = vmatprep.mubr.f32.mxu0 %v6475
    %7256 = vmatmul.mubr.f32.gmra.mrb[0].mxu0 %v6467
    %v7257 = vpop.f32.mrb[0].mxu0
    %v7258 = vadd.f32 0.0, %v7257
    %v7259 = vpop.f32.mrb[0].mxu0
    %7260 = vdwg.mxu0
    %7261 = vmatprep.subr.mxu0 0.0
    %7262 = vmatpush1.msra.mxu0 %v6116
    %7263 = vmatprep.subr.mxu0 0.0
    %7264 = vmatpush1.msra.mxu0 %v6127
    %7265 = vmatprep.subr.mxu0 0.0
    %7266 = vmatpush1.msra.mxu0 %v6138
    %7267 = vmatprep.subr.mxu0 0.0
    %7268 = vmatpush1.msra.mxu0 %v6149
    %7269 = vmatprep.subr.mxu0 0.0
    %7270 = vmatpush1.msra.mxu0 %v6160
    %7271 = vmatprep.subr.mxu0 0.0
    %7272 = vmatpush1.msra.mxu0 %v6171
    %7273 = vmatprep.subr.mxu0 0.0
    %7274 = vmatpush1.msra.mxu0 %v6182
    %7275 = vmatprep.subr.mxu0 0.0
    %7276 = vmatpush1.msra.mxu0 %v6193
    %7277 = vmatprep.subr.mxu0 0.0
    %7278 = vmatpush1.msra.mxu0 %v6204
    %7279 = vmatprep.subr.mxu0 0.0
    %7280 = vmatpush1.msra.mxu0 %v6215
    %7281 = vmatprep.subr.mxu0 0.0
    %7282 = vmatpush1.msra.mxu0 %v6226
    %7283 = vmatprep.subr.mxu0 0.0
    %7284 = vmatpush1.msra.mxu0 %v6237
    %7285 = vmatprep.subr.mxu0 0.0
    %7286 = vmatpush1.msra.mxu0 %v6248
    %7287 = vmatprep.subr.mxu0 0.0
    %7288 = vmatpush1.msra.mxu0 %v6259
    %7289 = vmatprep.subr.mxu0 0.0
    %7290 = vmatpush1.msra.mxu0 %v6270
    %7291 = vmatprep.subr.mxu0 0.0
    %7292 = vmatpush1.msra.mxu0 %v6281
    %7293 = vmatprep.subr.mxu0 0.0
    %7294 = vmatpush1.msra.mxu0 %v6292
    %7295 = vmatprep.subr.mxu0 0.0
    %7296 = vmatpush1.msra.mxu0 %v6303
    %7297 = vmatprep.subr.mxu0 0.0
    %7298 = vmatpush1.msra.mxu0 %v6314
    %7299 = vmatprep.subr.mxu0 0.0
    %7300 = vmatpush1.msra.mxu0 %v6325
    %7301 = vmatprep.subr.mxu0 0.0
    %7302 = vmatpush1.msra.mxu0 %v6336
    %7303 = vmatprep.subr.mxu0 0.0
    %7304 = vmatpush1.msra.mxu0 %v6347
    %7305 = vmatprep.subr.mxu0 0.0
    %7306 = vmatpush1.msra.mxu0 %v6358
    %7307 = vmatprep.subr.mxu0 0.0
    %7308 = vmatpush1.msra.mxu0 %v6369
    %7309 = vmatprep.subr.mxu0 0.0
    %7310 = vmatpush1.msra.mxu0 %v6380
    %7311 = vmatprep.subr.mxu0 0.0
    %7312 = vmatpush1.msra.mxu0 %v6391
    %7313 = vmatprep.subr.mxu0 0.0
    %7314 = vmatpush1.msra.mxu0 %v6402
    %7315 = vmatprep.subr.mxu0 0.0
    %7316 = vmatpush1.msra.mxu0 %v6413
    %7317 = vmatprep.subr.mxu0 0.0
    %7318 = vmatpush1.msra.mxu0 %v6424
    %7319 = vmatprep.subr.mxu0 0.0
    %7320 = vmatpush1.msra.mxu0 %v6435
    %7321 = vmatprep.subr.mxu0 0.0
    %7322 = vmatpush1.msra.mxu0 %v6446
    %7323 = vmatprep.subr.mxu0 0.0
    %7324 = vmatpush1.msra.mxu0 %v6457
    %7325 = vmatprep.mubr.f32.mxu0 %v6476
    %7326 = vmatmul.mubr.f32.gmra.mrb[0].mxu0 %v6474
    %v7327 = vpop.f32.mrb[0].mxu0
    %v7328 = vadd.f32 %v7258, %v7327
    %v7329 = vpop.f32.mrb[0].mxu0
    %7330 = vdwg.mxu0
    %v7331 = vld [vmem:[%s4] sm:$0xff]
    %v7332 = vld [vmem:[%s4 + $0x8] sm:$0xff]
    %v7333 = vld [vmem:[%s4 + $0x10] sm:$0xff]
    %v7334 = vld [vmem:[%s4 + $0x18] sm:$0xff]
    %v7335 = vld [vmem:[%s4 + $0x20] sm:$0xff]
    %v7336 = vld [vmem:[%s4 + $0x28] sm:$0xff]
    %v7337 = vld [vmem:[%s4 + $0x30] sm:$0xff]
    %v7338 = vld [vmem:[%s4 + $0x38] sm:$0xff]
    %v7339 = vld [vmem:[%s4 + $0x40] sm:$0xff]
    %v7340 = vld [vmem:[%s4 + $0x48] sm:$0xff]
    %v7341 = vld [vmem:[%s4 + $0x50] sm:$0xff]
    %v7342 = vld [vmem:[%s4 + $0x58] sm:$0xff]
    %v7343 = vld [vmem:[%s4 + $0x60] sm:$0xff]
    %v7344 = vld [vmem:[%s4 + $0x68] sm:$0xff]
    %v7345 = vld [vmem:[%s4 + $0x70] sm:$0xff]
    %v7346 = vld [vmem:[%s4 + $0x78] sm:$0xff]
    %v7347 = vld [vmem:[%s4 + $0x80] sm:$0xff]
    %v7348 = vld [vmem:[%s4 + $0x88] sm:$0xff]
    %v7349 = vld [vmem:[%s4 + $0x90] sm:$0xff]
    %v7350 = vld [vmem:[%s4 + $0x98] sm:$0xff]
    %v7351 = vld [vmem:[%s4 + $0xa0] sm:$0xff]
    %v7352 = vld [vmem:[%s4 + $0xa8] sm:$0xff]
    %v7353 = vld [vmem:[%s4 + $0xb0] sm:$0xff]
    %v7354 = vld [vmem:[%s4 + $0xb8] sm:$0xff]
    %v7355 = vld [vmem:[%s4 + $0xc0] sm:$0xff]
    %v7356 = vld [vmem:[%s4 + $0xc8] sm:$0xff]
    %v7357 = vld [vmem:[%s4 + $0xd0] sm:$0xff]
    %v7358 = vld [vmem:[%s4 + $0xd8] sm:$0xff]
    %v7359 = vld [vmem:[%s4 + $0xe0] sm:$0xff]
    %v7360 = vld [vmem:[%s4 + $0xe8] sm:$0xff]
    %v7361 = vld [vmem:[%s4 + $0xf0] sm:$0xff]
    %v7362 = vld [vmem:[%s4 + $0xf8] sm:$0xff]
    %v7363 = vld [vmem:[%s4 + $0x100] sm:$0xff]
    %v7364 = vld [vmem:[%s4 + $0x108] sm:$0xff]
    %v7365 = vld [vmem:[%s4 + $0x110] sm:$0xff]
    %v7366 = vld [vmem:[%s4 + $0x118] sm:$0xff]
    %v7367 = vld [vmem:[%s4 + $0x120] sm:$0xff]
    %v7368 = vld [vmem:[%s4 + $0x128] sm:$0xff]
    %v7369 = vld [vmem:[%s4 + $0x130] sm:$0xff]
    %v7370 = vld [vmem:[%s4 + $0x138] sm:$0xff]
    %v7371 = vld [vmem:[%s4 + $0x140] sm:$0xff]
    %v7372 = vld [vmem:[%s4 + $0x148] sm:$0xff]
    %v7373 = vld [vmem:[%s4 + $0x150] sm:$0xff]
    %v7374 = vld [vmem:[%s4 + $0x158] sm:$0xff]
    %v7375 = vld [vmem:[%s4 + $0x160] sm:$0xff]
    %v7376 = vld [vmem:[%s4 + $0x168] sm:$0xff]
    %v7377 = vld [vmem:[%s4 + $0x170] sm:$0xff]
    %v7378 = vld [vmem:[%s4 + $0x178] sm:$0xff]
    %v7379 = vld [vmem:[%s4 + $0x180] sm:$0xff]
    %v7380 = vld [vmem:[%s4 + $0x188] sm:$0xff]
    %v7381 = vld [vmem:[%s4 + $0x190] sm:$0xff]
    %v7382 = vld [vmem:[%s4 + $0x198] sm:$0xff]
    %v7383 = vld [vmem:[%s4 + $0x1a0] sm:$0xff]
    %v7384 = vld [vmem:[%s4 + $0x1a8] sm:$0xff]
    %v7385 = vld [vmem:[%s4 + $0x1b0] sm:$0xff]
    %v7386 = vld [vmem:[%s4 + $0x1b8] sm:$0xff]
    %v7387 = vld [vmem:[%s4 + $0x1c0] sm:$0xff]
    %v7388 = vld [vmem:[%s4 + $0x1c8] sm:$0xff]
    %v7389 = vld [vmem:[%s4 + $0x1d0] sm:$0xff]
    %v7390 = vld [vmem:[%s4 + $0x1d8] sm:$0xff]
    %v7391 = vld [vmem:[%s4 + $0x1e0] sm:$0xff]
    %v7392 = vld [vmem:[%s4 + $0x1e8] sm:$0xff]
    %v7393 = vld [vmem:[%s4 + $0x1f0] sm:$0xff]
    %v7394 = vld [vmem:[%s4 + $0x1f8] sm:$0xff]
    %v7395 = vld [vmem:[%s4 + $0x200] sm:$0xff]
    %v7396 = vld [vmem:[%s4 + $0x208] sm:$0xff]
    %v7397 = vld [vmem:[%s4 + $0x210] sm:$0xff]
    %v7398 = vld [vmem:[%s4 + $0x218] sm:$0xff]
    %v7399 = vld [vmem:[%s4 + $0x220] sm:$0xff]
    %v7400 = vld [vmem:[%s4 + $0x228] sm:$0xff]
    %v7401 = vld [vmem:[%s4 + $0x230] sm:$0xff]
    %v7402 = vld [vmem:[%s4 + $0x238] sm:$0xff]
    %v7403 = vld [vmem:[%s4 + $0x240] sm:$0xff]
    %v7404 = vld [vmem:[%s4 + $0x248] sm:$0xff]
    %v7405 = vld [vmem:[%s4 + $0x250] sm:$0xff]
    %v7406 = vld [vmem:[%s4 + $0x258] sm:$0xff]
    %v7407 = vld [vmem:[%s4 + $0x260] sm:$0xff]
    %v7408 = vld [vmem:[%s4 + $0x268] sm:$0xff]
    %v7409 = vld [vmem:[%s4 + $0x270] sm:$0xff]
    %v7410 = vld [vmem:[%s4 + $0x278] sm:$0xff]
    %v7411 = vld [vmem:[%s4 + $0x280] sm:$0xff]
    %v7412 = vld [vmem:[%s4 + $0x288] sm:$0xff]
    %v7413 = vld [vmem:[%s4 + $0x290] sm:$0xff]
    %v7414 = vld [vmem:[%s4 + $0x298] sm:$0xff]
    %v7415 = vld [vmem:[%s4 + $0x2a0] sm:$0xff]
    %v7416 = vld [vmem:[%s4 + $0x2a8] sm:$0xff]
    %v7417 = vld [vmem:[%s4 + $0x2b0] sm:$0xff]
    %v7418 = vld [vmem:[%s4 + $0x2b8] sm:$0xff]
    %v7419 = vld [vmem:[%s4 + $0x2c0] sm:$0xff]
    %v7420 = vld [vmem:[%s4 + $0x2c8] sm:$0xff]
    %v7421 = vld [vmem:[%s4 + $0x2d0] sm:$0xff]
    %v7422 = vld [vmem:[%s4 + $0x2d8] sm:$0xff]
    %v7423 = vld [vmem:[%s4 + $0x2e0] sm:$0xff]
    %v7424 = vld [vmem:[%s4 + $0x2e8] sm:$0xff]
    %v7425 = vld [vmem:[%s4 + $0x2f0] sm:$0xff]
    %v7426 = vld [vmem:[%s4 + $0x2f8] sm:$0xff]
    %v7427 = vld [vmem:[%s4 + $0x300] sm:$0xff]
    %v7428 = vld [vmem:[%s4 + $0x308] sm:$0xff]
    %v7429 = vld [vmem:[%s4 + $0x310] sm:$0xff]
    %v7430 = vld [vmem:[%s4 + $0x318] sm:$0xff]
    %v7431 = vld [vmem:[%s4 + $0x320] sm:$0xff]
    %v7432 = vld [vmem:[%s4 + $0x328] sm:$0xff]
    %v7433 = vld [vmem:[%s4 + $0x330] sm:$0xff]
    %v7434 = vld [vmem:[%s4 + $0x338] sm:$0xff]
    %v7435 = vld [vmem:[%s4 + $0x340] sm:$0xff]
    %v7436 = vld [vmem:[%s4 + $0x348] sm:$0xff]
    %v7437 = vld [vmem:[%s4 + $0x350] sm:$0xff]
    %v7438 = vld [vmem:[%s4 + $0x358] sm:$0xff]
    %v7439 = vld [vmem:[%s4 + $0x360] sm:$0xff]
    %v7440 = vld [vmem:[%s4 + $0x368] sm:$0xff]
    %v7441 = vld [vmem:[%s4 + $0x370] sm:$0xff]
    %v7442 = vld [vmem:[%s4 + $0x378] sm:$0xff]
    %v7443 = vld [vmem:[%s4 + $0x380] sm:$0xff]
    %v7444 = vld [vmem:[%s4 + $0x388] sm:$0xff]
    %v7445 = vld [vmem:[%s4 + $0x390] sm:$0xff]
    %v7446 = vld [vmem:[%s4 + $0x398] sm:$0xff]
    %v7447 = vld [vmem:[%s4 + $0x3a0] sm:$0xff]
    %v7448 = vld [vmem:[%s4 + $0x3a8] sm:$0xff]
    %v7449 = vld [vmem:[%s4 + $0x3b0] sm:$0xff]
    %v7450 = vld [vmem:[%s4 + $0x3b8] sm:$0xff]
    %v7451 = vld [vmem:[%s4 + $0x3c0] sm:$0xff]
    %v7452 = vld [vmem:[%s4 + $0x3c8] sm:$0xff]
    %v7453 = vld [vmem:[%s4 + $0x3d0] sm:$0xff]
    %v7454 = vld [vmem:[%s4 + $0x3d8] sm:$0xff]
    %v7455 = vld [vmem:[%s4 + $0x3e0] sm:$0xff]
    %v7456 = vld [vmem:[%s4 + $0x3e8] sm:$0xff]
    %v7457 = vld [vmem:[%s4 + $0x3f0] sm:$0xff]
    %v7458 = vld [vmem:[%s4 + $0x3f8] sm:$0xff]
    %v7459 = vld [vmem:[%s4 + $0x400] sm:$0xff]
    %v7460 = vld [vmem:[%s4 + $0x408] sm:$0xff]
    %v7461 = vld [vmem:[%s4 + $0x410] sm:$0xff]
    %v7462 = vld [vmem:[%s4 + $0x418] sm:$0xff]
    %v7463 = vld [vmem:[%s4 + $0x420] sm:$0xff]
    %v7464 = vld [vmem:[%s4 + $0x428] sm:$0xff]
    %v7465 = vld [vmem:[%s4 + $0x430] sm:$0xff]
    %v7466 = vld [vmem:[%s4 + $0x438] sm:$0xff]
    %v7467 = vld [vmem:[%s4 + $0x440] sm:$0xff]
    %v7468 = vld [vmem:[%s4 + $0x448] sm:$0xff]
    %v7469 = vld [vmem:[%s4 + $0x450] sm:$0xff]
    %v7470 = vld [vmem:[%s4 + $0x458] sm:$0xff]
    %v7471 = vld [vmem:[%s4 + $0x460] sm:$0xff]
    %v7472 = vld [vmem:[%s4 + $0x468] sm:$0xff]
    %v7473 = vld [vmem:[%s4 + $0x470] sm:$0xff]
    %v7474 = vld [vmem:[%s4 + $0x478] sm:$0xff]
    %v7475 = vld [vmem:[%s4 + $0x480] sm:$0xff]
    %v7476 = vld [vmem:[%s4 + $0x488] sm:$0xff]
    %v7477 = vld [vmem:[%s4 + $0x490] sm:$0xff]
    %v7478 = vld [vmem:[%s4 + $0x498] sm:$0xff]
    %v7479 = vld [vmem:[%s4 + $0x4a0] sm:$0xff]
    %v7480 = vld [vmem:[%s4 + $0x4a8] sm:$0xff]
    %v7481 = vld [vmem:[%s4 + $0x4b0] sm:$0xff]
    %v7482 = vld [vmem:[%s4 + $0x4b8] sm:$0xff]
    %v7483 = vld [vmem:[%s4 + $0x4c0] sm:$0xff]
    %v7484 = vld [vmem:[%s4 + $0x4c8] sm:$0xff]
    %v7485 = vld [vmem:[%s4 + $0x4d0] sm:$0xff]
    %v7486 = vld [vmem:[%s4 + $0x4d8] sm:$0xff]
    %v7487 = vld [vmem:[%s4 + $0x4e0] sm:$0xff]
    %v7488 = vld [vmem:[%s4 + $0x4e8] sm:$0xff]
    %v7489 = vld [vmem:[%s4 + $0x4f0] sm:$0xff]
    %v7490 = vld [vmem:[%s4 + $0x4f8] sm:$0xff]
    %v7491 = vld [vmem:[%s4 + $0x500] sm:$0xff]
    %v7492 = vld [vmem:[%s4 + $0x508] sm:$0xff]
    %v7493 = vld [vmem:[%s4 + $0x510] sm:$0xff]
    %v7494 = vld [vmem:[%s4 + $0x518] sm:$0xff]
    %v7495 = vld [vmem:[%s4 + $0x520] sm:$0xff]
    %v7496 = vld [vmem:[%s4 + $0x528] sm:$0xff]
    %v7497 = vld [vmem:[%s4 + $0x530] sm:$0xff]
    %v7498 = vld [vmem:[%s4 + $0x538] sm:$0xff]
    %v7499 = vld [vmem:[%s4 + $0x540] sm:$0xff]
    %v7500 = vld [vmem:[%s4 + $0x548] sm:$0xff]
    %v7501 = vld [vmem:[%s4 + $0x550] sm:$0xff]
    %v7502 = vld [vmem:[%s4 + $0x558] sm:$0xff]
    %v7503 = vld [vmem:[%s4 + $0x560] sm:$0xff]
    %v7504 = vld [vmem:[%s4 + $0x568] sm:$0xff]
    %v7505 = vld [vmem:[%s4 + $0x570] sm:$0xff]
    %v7506 = vld [vmem:[%s4 + $0x578] sm:$0xff]
    %v7507 = vld [vmem:[%s5] sm:$0x1]
    %v7509 = vlaneseq
    %v7510 = vshrl.u32 %v7509, 7
    %v7511 = vsub.s32 0, %v7510
    %v7512 = vrot.slane %v7507, %v7511
    %7514 = vmatprep.subr.mxu0 0.0
    %7515 = vmatpush1.msra.mxu0 %v7331
    %7516 = vmatprep.subr.mxu0 0.0
    %7517 = vmatpush1.msra.mxu0 %v7332
    %7518 = vmatprep.subr.mxu0 0.0
    %7519 = vmatpush1.msra.mxu0 %v7333
    %7520 = vmatprep.subr.mxu0 0.0
    %7521 = vmatpush1.msra.mxu0 %v7334
    %7522 = vmatprep.subr.mxu0 0.0
    %7523 = vmatpush1.msra.mxu0 %v7335
    %7524 = vmatprep.subr.mxu0 0.0
    %7525 = vmatpush1.msra.mxu0 %v7336
    %7526 = vmatprep.subr.mxu0 0.0
    %7527 = vmatpush1.msra.mxu0 %v7337
    %7528 = vmatprep.subr.mxu0 0.0
    %7529 = vmatpush1.msra.mxu0 %v7338
    %7530 = vmatprep.subr.mxu0 0.0
    %7531 = vmatpush1.msra.mxu0 %v7339
    %7532 = vmatprep.subr.mxu0 0.0
    %7533 = vmatpush1.msra.mxu0 %v7340
    %7534 = vmatprep.subr.mxu0 0.0
    %7535 = vmatpush1.msra.mxu0 %v7341
    %7536 = vmatprep.subr.mxu0 0.0
    %7537 = vmatpush1.msra.mxu0 %v7342
    %7538 = vmatprep.subr.mxu0 0.0
    %7539 = vmatpush1.msra.mxu0 %v7343
    %7540 = vmatprep.subr.mxu0 0.0
    %7541 = vmatpush1.msra.mxu0 %v7344
    %7542 = vmatprep.subr.mxu0 0.0
    %7543 = vmatpush1.msra.mxu0 %v7345
    %7544 = vmatprep.subr.mxu0 0.0
    %7545 = vmatpush1.msra.mxu0 %v7346
    %7546 = vmatprep.subr.mxu0 0.0
    %7547 = vmatpush1.msra.mxu0 %v7347
    %7548 = vmatprep.subr.mxu0 0.0
    %7549 = vmatpush1.msra.mxu0 %v7348
    %7550 = vmatprep.subr.mxu0 0.0
    %7551 = vmatpush1.msra.mxu0 %v7349
    %7552 = vmatprep.subr.mxu0 0.0
    %7553 = vmatpush1.msra.mxu0 %v7350
    %7554 = vmatprep.subr.mxu0 0.0
    %7555 = vmatpush1.msra.mxu0 %v7351
    %7556 = vmatprep.subr.mxu0 0.0
    %7557 = vmatpush1.msra.mxu0 %v7352
    %7558 = vmatprep.subr.mxu0 0.0
    %7559 = vmatpush1.msra.mxu0 %v7353
    %7560 = vmatprep.subr.mxu0 0.0
    %7561 = vmatpush1.msra.mxu0 %v7354
    %7562 = vmatprep.subr.mxu0 0.0
    %7563 = vmatpush1.msra.mxu0 %v7355
    %7564 = vmatprep.subr.mxu0 0.0
    %7565 = vmatpush1.msra.mxu0 %v7356
    %7566 = vmatprep.subr.mxu0 0.0
    %7567 = vmatpush1.msra.mxu0 %v7357
    %7568 = vmatprep.subr.mxu0 0.0
    %7569 = vmatpush1.msra.mxu0 %v7358
    %7570 = vmatprep.subr.mxu0 0.0
    %7571 = vmatpush1.msra.mxu0 %v7359
    %7572 = vmatprep.subr.mxu0 0.0
    %7573 = vmatpush1.msra.mxu0 %v7360
    %7574 = vmatprep.subr.mxu0 0.0
    %7575 = vmatpush1.msra.mxu0 %v7361
    %7576 = vmatprep.subr.mxu0 0.0
    %7577 = vmatpush1.msra.mxu0 %v7362
    %7578 = vmatprep.mubr.f32.mxu0 %v6621
    %7579 = vmatmul.mubr.f32.gmra.mrb[0].mxu0 %v6619
    %v7580 = vpop.f32.mrb[0].mxu0
    %v7581 = vadd.f32 %v7512, %v7580
    %v7582 = vpop.f32.mrb[0].mxu0
    %7583 = vdwg.mxu0
    %7584 = vmatprep.subr.mxu0 0.0
    %7585 = vmatpush1.msra.mxu0 %v7363
    %7586 = vmatprep.subr.mxu0 0.0
    %7587 = vmatpush1.msra.mxu0 %v7364
    %7588 = vmatprep.subr.mxu0 0.0
    %7589 = vmatpush1.msra.mxu0 %v7365
    %7590 = vmatprep.subr.mxu0 0.0
    %7591 = vmatpush1.msra.mxu0 %v7366
    %7592 = vmatprep.subr.mxu0 0.0
    %7593 = vmatpush1.msra.mxu0 %v7367
    %7594 = vmatprep.subr.mxu0 0.0
    %7595 = vmatpush1.msra.mxu0 %v7368
    %7596 = vmatprep.subr.mxu0 0.0
    %7597 = vmatpush1.msra.mxu0 %v7369
    %7598 = vmatprep.subr.mxu0 0.0
    %7599 = vmatpush1.msra.mxu0 %v7370
    %7600 = vmatprep.subr.mxu0 0.0
    %7601 = vmatpush1.msra.mxu0 %v7371
    %7602 = vmatprep.subr.mxu0 0.0
    %7603 = vmatpush1.msra.mxu0 %v7372
    %7604 = vmatprep.subr.mxu0 0.0
    %7605 = vmatpush1.msra.mxu0 %v7373
    %7606 = vmatprep.subr.mxu0 0.0
    %7607 = vmatpush1.msra.mxu0 %v7374
    %7608 = vmatprep.subr.mxu0 0.0
    %7609 = vmatpush1.msra.mxu0 %v7375
    %7610 = vmatprep.subr.mxu0 0.0
    %7611 = vmatpush1.msra.mxu0 %v7376
    %7612 = vmatprep.subr.mxu0 0.0
    %7613 = vmatpush1.msra.mxu0 %v7377
    %7614 = vmatprep.subr.mxu0 0.0
    %7615 = vmatpush1.msra.mxu0 %v7378
    %7616 = vmatprep.subr.mxu0 0.0
    %7617 = vmatpush1.msra.mxu0 %v7379
    %7618 = vmatprep.subr.mxu0 0.0
    %7619 = vmatpush1.msra.mxu0 %v7380
    %7620 = vmatprep.subr.mxu0 0.0
    %7621 = vmatpush1.msra.mxu0 %v7381
    %7622 = vmatprep.subr.mxu0 0.0
    %7623 = vmatpush1.msra.mxu0 %v7382
    %7624 = vmatprep.subr.mxu0 0.0
    %7625 = vmatpush1.msra.mxu0 %v7383
    %7626 = vmatprep.subr.mxu0 0.0
    %7627 = vmatpush1.msra.mxu0 %v7384
    %7628 = vmatprep.subr.mxu0 0.0
    %7629 = vmatpush1.msra.mxu0 %v7385
    %7630 = vmatprep.subr.mxu0 0.0
    %7631 = vmatpush1.msra.mxu0 %v7386
    %7632 = vmatprep.subr.mxu0 0.0
    %7633 = vmatpush1.msra.mxu0 %v7387
    %7634 = vmatprep.subr.mxu0 0.0
    %7635 = vmatpush1.msra.mxu0 %v7388
    %7636 = vmatprep.subr.mxu0 0.0
    %7637 = vmatpush1.msra.mxu0 %v7389
    %7638 = vmatprep.subr.mxu0 0.0
    %7639 = vmatpush1.msra.mxu0 %v7390
    %7640 = vmatprep.subr.mxu0 0.0
    %7641 = vmatpush1.msra.mxu0 %v7391
    %7642 = vmatprep.subr.mxu0 0.0
    %7643 = vmatpush1.msra.mxu0 %v7392
    %7644 = vmatprep.subr.mxu0 0.0
    %7645 = vmatpush1.msra.mxu0 %v7393
    %7646 = vmatprep.subr.mxu0 0.0
    %7647 = vmatpush1.msra.mxu0 %v7394
    %7648 = vmatprep.mubr.f32.mxu0 %v6763
    %7649 = vmatmul.mubr.f32.gmra.mrb[0].mxu0 %v6761
    %v7650 = vpop.f32.mrb[0].mxu0
    %v7651 = vadd.f32 %v7581, %v7650
    %v7652 = vpop.f32.mrb[0].mxu0
    %7653 = vdwg.mxu0
    %7654 = vmatprep.subr.mxu0 0.0
    %7655 = vmatpush1.msra.mxu0 %v7395
    %7656 = vmatprep.subr.mxu0 0.0
    %7657 = vmatpush1.msra.mxu0 %v7396
    %7658 = vmatprep.subr.mxu0 0.0
    %7659 = vmatpush1.msra.mxu0 %v7397
    %7660 = vmatprep.subr.mxu0 0.0
    %7661 = vmatpush1.msra.mxu0 %v7398
    %7662 = vmatprep.subr.mxu0 0.0
    %7663 = vmatpush1.msra.mxu0 %v7399
    %7664 = vmatprep.subr.mxu0 0.0
    %7665 = vmatpush1.msra.mxu0 %v7400
    %7666 = vmatprep.subr.mxu0 0.0
    %7667 = vmatpush1.msra.mxu0 %v7401
    %7668 = vmatprep.subr.mxu0 0.0
    %7669 = vmatpush1.msra.mxu0 %v7402
    %7670 = vmatprep.subr.mxu0 0.0
    %7671 = vmatpush1.msra.mxu0 %v7403
    %7672 = vmatprep.subr.mxu0 0.0
    %7673 = vmatpush1.msra.mxu0 %v7404
    %7674 = vmatprep.subr.mxu0 0.0
    %7675 = vmatpush1.msra.mxu0 %v7405
    %7676 = vmatprep.subr.mxu0 0.0
    %7677 = vmatpush1.msra.mxu0 %v7406
    %7678 = vmatprep.subr.mxu0 0.0
    %7679 = vmatpush1.msra.mxu0 %v7407
    %7680 = vmatprep.subr.mxu0 0.0
    %7681 = vmatpush1.msra.mxu0 %v7408
    %7682 = vmatprep.subr.mxu0 0.0
    %7683 = vmatpush1.msra.mxu0 %v7409
    %7684 = vmatprep.subr.mxu0 0.0
    %7685 = vmatpush1.msra.mxu0 %v7410
    %7686 = vmatprep.subr.mxu0 0.0
    %7687 = vmatpush1.msra.mxu0 %v7411
    %7688 = vmatprep.subr.mxu0 0.0
    %7689 = vmatpush1.msra.mxu0 %v7412
    %7690 = vmatprep.subr.mxu0 0.0
    %7691 = vmatpush1.msra.mxu0 %v7413
    %7692 = vmatprep.subr.mxu0 0.0
    %7693 = vmatpush1.msra.mxu0 %v7414
    %7694 = vmatprep.subr.mxu0 0.0
    %7695 = vmatpush1.msra.mxu0 %v7415
    %7696 = vmatprep.subr.mxu0 0.0
    %7697 = vmatpush1.msra.mxu0 %v7416
    %7698 = vmatprep.subr.mxu0 0.0
    %7699 = vmatpush1.msra.mxu0 %v7417
    %7700 = vmatprep.subr.mxu0 0.0
    %7701 = vmatpush1.msra.mxu0 %v7418
    %7702 = vmatprep.subr.mxu0 0.0
    %7703 = vmatpush1.msra.mxu0 %v7419
    %7704 = vmatprep.subr.mxu0 0.0
    %7705 = vmatpush1.msra.mxu0 %v7420
    %7706 = vmatprep.subr.mxu0 0.0
    %7707 = vmatpush1.msra.mxu0 %v7421
    %7708 = vmatprep.subr.mxu0 0.0
    %7709 = vmatpush1.msra.mxu0 %v7422
    %7710 = vmatprep.subr.mxu0 0.0
    %7711 = vmatpush1.msra.mxu0 %v7423
    %7712 = vmatprep.subr.mxu0 0.0
    %7713 = vmatpush1.msra.mxu0 %v7424
    %7714 = vmatprep.subr.mxu0 0.0
    %7715 = vmatpush1.msra.mxu0 %v7425
    %7716 = vmatprep.subr.mxu0 0.0
    %7717 = vmatpush1.msra.mxu0 %v7426
    %7718 = vmatprep.mubr.f32.mxu0 %v6905
    %7719 = vmatmul.mubr.f32.gmra.mrb[0].mxu0 %v6903
    %v7720 = vpop.f32.mrb[0].mxu0
    %v7721 = vadd.f32 %v7651, %v7720
    %v7722 = vpop.f32.mrb[0].mxu0
    %7723 = vdwg.mxu0
    %7724 = vmatprep.subr.mxu0 0.0
    %7725 = vmatpush1.msra.mxu0 %v7427
    %7726 = vmatprep.subr.mxu0 0.0
    %7727 = vmatpush1.msra.mxu0 %v7428
    %7728 = vmatprep.subr.mxu0 0.0
    %7729 = vmatpush1.msra.mxu0 %v7429
    %7730 = vmatprep.subr.mxu0 0.0
    %7731 = vmatpush1.msra.mxu0 %v7430
    %7732 = vmatprep.subr.mxu0 0.0
    %7733 = vmatpush1.msra.mxu0 %v7431
    %7734 = vmatprep.subr.mxu0 0.0
    %7735 = vmatpush1.msra.mxu0 %v7432
    %7736 = vmatprep.subr.mxu0 0.0
    %7737 = vmatpush1.msra.mxu0 %v7433
    %7738 = vmatprep.subr.mxu0 0.0
    %7739 = vmatpush1.msra.mxu0 %v7434
    %7740 = vmatprep.subr.mxu0 0.0
    %7741 = vmatpush1.msra.mxu0 %v7435
    %7742 = vmatprep.subr.mxu0 0.0
    %7743 = vmatpush1.msra.mxu0 %v7436
    %7744 = vmatprep.subr.mxu0 0.0
    %7745 = vmatpush1.msra.mxu0 %v7437
    %7746 = vmatprep.subr.mxu0 0.0
    %7747 = vmatpush1.msra.mxu0 %v7438
    %7748 = vmatprep.subr.mxu0 0.0
    %7749 = vmatpush1.msra.mxu0 %v7439
    %7750 = vmatprep.subr.mxu0 0.0
    %7751 = vmatpush1.msra.mxu0 %v7440
    %7752 = vmatprep.subr.mxu0 0.0
    %7753 = vmatpush1.msra.mxu0 %v7441
    %7754 = vmatprep.subr.mxu0 0.0
    %7755 = vmatpush1.msra.mxu0 %v7442
    %7756 = vmatprep.subr.mxu0 0.0
    %7757 = vmatpush1.msra.mxu0 %v7443
    %7758 = vmatprep.subr.mxu0 0.0
    %7759 = vmatpush1.msra.mxu0 %v7444
    %7760 = vmatprep.subr.mxu0 0.0
    %7761 = vmatpush1.msra.mxu0 %v7445
    %7762 = vmatprep.subr.mxu0 0.0
    %7763 = vmatpush1.msra.mxu0 %v7446
    %7764 = vmatprep.subr.mxu0 0.0
    %7765 = vmatpush1.msra.mxu0 %v7447
    %7766 = vmatprep.subr.mxu0 0.0
    %7767 = vmatpush1.msra.mxu0 %v7448
    %7768 = vmatprep.subr.mxu0 0.0
    %7769 = vmatpush1.msra.mxu0 %v7449
    %7770 = vmatprep.subr.mxu0 0.0
    %7771 = vmatpush1.msra.mxu0 %v7450
    %7772 = vmatprep.subr.mxu0 0.0
    %7773 = vmatpush1.msra.mxu0 %v7451
    %7774 = vmatprep.subr.mxu0 0.0
    %7775 = vmatpush1.msra.mxu0 %v7452
    %7776 = vmatprep.subr.mxu0 0.0
    %7777 = vmatpush1.msra.mxu0 %v7453
    %7778 = vmatprep.subr.mxu0 0.0
    %7779 = vmatpush1.msra.mxu0 %v7454
    %7780 = vmatprep.subr.mxu0 0.0
    %7781 = vmatpush1.msra.mxu0 %v7455
    %7782 = vmatprep.subr.mxu0 0.0
    %7783 = vmatpush1.msra.mxu0 %v7456
    %7784 = vmatprep.subr.mxu0 0.0
    %7785 = vmatpush1.msra.mxu0 %v7457
    %7786 = vmatprep.subr.mxu0 0.0
    %7787 = vmatpush1.msra.mxu0 %v7458
    %7788 = vmatprep.mubr.f32.mxu0 %v7047
    %7789 = vmatmul.mubr.f32.gmra.mrb[0].mxu0 %v7045
    %v7790 = vpop.f32.mrb[0].mxu0
    %v7791 = vadd.f32 %v7721, %v7790
    %v7792 = vpop.f32.mrb[0].mxu0
    %7793 = vdwg.mxu0
    %7794 = vmatprep.subr.mxu0 0.0
    %7795 = vmatpush1.msra.mxu0 %v7459
    %7796 = vmatprep.subr.mxu0 0.0
    %7797 = vmatpush1.msra.mxu0 %v7460
    %7798 = vmatprep.subr.mxu0 0.0
    %7799 = vmatpush1.msra.mxu0 %v7461
    %7800 = vmatprep.subr.mxu0 0.0
    %7801 = vmatpush1.msra.mxu0 %v7462
    %7802 = vmatprep.subr.mxu0 0.0
    %7803 = vmatpush1.msra.mxu0 %v7463
    %7804 = vmatprep.subr.mxu0 0.0
    %7805 = vmatpush1.msra.mxu0 %v7464
    %7806 = vmatprep.subr.mxu0 0.0
    %7807 = vmatpush1.msra.mxu0 %v7465
    %7808 = vmatprep.subr.mxu0 0.0
    %7809 = vmatpush1.msra.mxu0 %v7466
    %7810 = vmatprep.subr.mxu0 0.0
    %7811 = vmatpush1.msra.mxu0 %v7467
    %7812 = vmatprep.subr.mxu0 0.0
    %7813 = vmatpush1.msra.mxu0 %v7468
    %7814 = vmatprep.subr.mxu0 0.0
    %7815 = vmatpush1.msra.mxu0 %v7469
    %7816 = vmatprep.subr.mxu0 0.0
    %7817 = vmatpush1.msra.mxu0 %v7470
    %7818 = vmatprep.subr.mxu0 0.0
    %7819 = vmatpush1.msra.mxu0 %v7471
    %7820 = vmatprep.subr.mxu0 0.0
    %7821 = vmatpush1.msra.mxu0 %v7472
    %7822 = vmatprep.subr.mxu0 0.0
    %7823 = vmatpush1.msra.mxu0 %v7473
    %7824 = vmatprep.subr.mxu0 0.0
    %7825 = vmatpush1.msra.mxu0 %v7474
    %7826 = vmatprep.subr.mxu0 0.0
    %7827 = vmatpush1.msra.mxu0 %v7475
    %7828 = vmatprep.subr.mxu0 0.0
    %7829 = vmatpush1.msra.mxu0 %v7476
    %7830 = vmatprep.subr.mxu0 0.0
    %7831 = vmatpush1.msra.mxu0 %v7477
    %7832 = vmatprep.subr.mxu0 0.0
    %7833 = vmatpush1.msra.mxu0 %v7478
    %7834 = vmatprep.subr.mxu0 0.0
    %7835 = vmatpush1.msra.mxu0 %v7479
    %7836 = vmatprep.subr.mxu0 0.0
    %7837 = vmatpush1.msra.mxu0 %v7480
    %7838 = vmatprep.subr.mxu0 0.0
    %7839 = vmatpush1.msra.mxu0 %v7481
    %7840 = vmatprep.subr.mxu0 0.0
    %7841 = vmatpush1.msra.mxu0 %v7482
    %7842 = vmatprep.subr.mxu0 0.0
    %7843 = vmatpush1.msra.mxu0 %v7483
    %7844 = vmatprep.subr.mxu0 0.0
    %7845 = vmatpush1.msra.mxu0 %v7484
    %7846 = vmatprep.subr.mxu0 0.0
    %7847 = vmatpush1.msra.mxu0 %v7485
    %7848 = vmatprep.subr.mxu0 0.0
    %7849 = vmatpush1.msra.mxu0 %v7486
    %7850 = vmatprep.subr.mxu0 0.0
    %7851 = vmatpush1.msra.mxu0 %v7487
    %7852 = vmatprep.subr.mxu0 0.0
    %7853 = vmatpush1.msra.mxu0 %v7488
    %7854 = vmatprep.subr.mxu0 0.0
    %7855 = vmatpush1.msra.mxu0 %v7489
    %7856 = vmatprep.subr.mxu0 0.0
    %7857 = vmatpush1.msra.mxu0 %v7490
    %7858 = vmatprep.mubr.f32.mxu0 %v7189
    %7859 = vmatmul.mubr.f32.gmra.mrb[0].mxu0 %v7187
    %v7860 = vpop.f32.mrb[0].mxu0
    %v7861 = vadd.f32 %v7791, %v7860
    %v7862 = vpop.f32.mrb[0].mxu0
    %7863 = vdwg.mxu0
    %7864 = vmatprep.subr.mxu0 0.0
    %7865 = vmatpush1.msra.mxu0 %v7491
    %7866 = vmatprep.subr.mxu0 0.0
    %7867 = vmatpush1.msra.mxu0 %v7492
    %7868 = vmatprep.subr.mxu0 0.0
    %7869 = vmatpush1.msra.mxu0 %v7493
    %7870 = vmatprep.subr.mxu0 0.0
    %7871 = vmatpush1.msra.mxu0 %v7494
    %7872 = vmatprep.subr.mxu0 0.0
    %7873 = vmatpush1.msra.mxu0 %v7495
    %7874 = vmatprep.subr.mxu0 0.0
    %7875 = vmatpush1.msra.mxu0 %v7496
    %7876 = vmatprep.subr.mxu0 0.0
    %7877 = vmatpush1.msra.mxu0 %v7497
    %7878 = vmatprep.subr.mxu0 0.0
    %7879 = vmatpush1.msra.mxu0 %v7498
    %7880 = vmatprep.subr.mxu0 0.0
    %7881 = vmatpush1.msra.mxu0 %v7499
    %7882 = vmatprep.subr.mxu0 0.0
    %7883 = vmatpush1.msra.mxu0 %v7500
    %7884 = vmatprep.subr.mxu0 0.0
    %7885 = vmatpush1.msra.mxu0 %v7501
    %7886 = vmatprep.subr.mxu0 0.0
    %7887 = vmatpush1.msra.mxu0 %v7502
    %7888 = vmatprep.subr.mxu0 0.0
    %7889 = vmatpush1.msra.mxu0 %v7503
    %7890 = vmatprep.subr.mxu0 0.0
    %7891 = vmatpush1.msra.mxu0 %v7504
    %7892 = vmatprep.subr.mxu0 0.0
    %7893 = vmatpush1.msra.mxu0 %v7505
    %7894 = vmatprep.subr.mxu0 0.0
    %7895 = vmatpush1.msra.mxu0 %v7506
    %7896 = vmatprep.subr.mxu0 0.0
    %7897 = vmatpush1.msra.mxu0 0.0
    %7898 = vmatprep.subr.mxu0 0.0
    %7899 = vmatpush1.msra.mxu0 0.0
    %7900 = vmatprep.subr.mxu0 0.0
    %7901 = vmatpush1.msra.mxu0 0.0
    %7902 = vmatprep.subr.mxu0 0.0
    %7903 = vmatpush1.msra.mxu0 0.0
    %7904 = vmatprep.subr.mxu0 0.0
    %7905 = vmatpush1.msra.mxu0 0.0
    %7906 = vmatprep.subr.mxu0 0.0
    %7907 = vmatpush1.msra.mxu0 0.0
    %7908 = vmatprep.subr.mxu0 0.0
    %7909 = vmatpush1.msra.mxu0 0.0
    %7910 = vmatprep.subr.mxu0 0.0
    %7911 = vmatpush1.msra.mxu0 0.0
    %7912 = vmatprep.subr.mxu0 0.0
    %7913 = vmatpush1.msra.mxu0 0.0
    %7914 = vmatprep.subr.mxu0 0.0
    %7915 = vmatpush1.msra.mxu0 0.0
    %7916 = vmatprep.subr.mxu0 0.0
    %7917 = vmatpush1.msra.mxu0 0.0
    %7918 = vmatprep.subr.mxu0 0.0
    %7919 = vmatpush1.msra.mxu0 0.0
    %7920 = vmatprep.subr.mxu0 0.0
    %7921 = vmatpush1.msra.mxu0 0.0
    %7922 = vmatprep.subr.mxu0 0.0
    %7923 = vmatpush1.msra.mxu0 0.0
    %7924 = vmatprep.subr.mxu0 0.0
    %7925 = vmatpush1.msra.mxu0 0.0
    %7926 = vmatprep.subr.mxu0 0.0
    %7927 = vmatpush1.msra.mxu0 0.0
    %7928 = vmatprep.mubr.f32.mxu0 0.0
    %7929 = vmatmul.mubr.f32.gmra.mrb[0].mxu0 %v7328
    %v7930 = vpop.f32.mrb[0].mxu0
    %v7931 = vadd.f32 %v7861, %v7930
    %v7932 = vpop.f32.mrb[0].mxu0
    %7933 = vdwg.mxu0
    %v7934 = vlaneseq
    %v7935 = vand.u32 %v7934, 127
    %vm7936 = vcmp.lt.s32.totalorder %v7935, 4
    %v7937 = vsel %vm7936, %v7931, -1e+30
    %vm7938 = vcmask 1041408
    %v7939 = vsel %vm7938, %v7937, -inf
    %7940 = vmax.xlane.f32.xlu0 %v7939
    %v7941 = vpop.xlane.xlu0 %7940
    %v7942 = vsub.f32 %v7937, %v7941
    %v7943 = vmul.f32 %v7942, 1.442695
    %v7944 = vpow.pop %v7943
    %v7945 = vsel %vm7938, %v7944, 0.0
    %7946 = vadd.xlane.f32.xlu0 %v7945
    %v7947 = vpop.xlane.xlu0 %7946
    %v7948 = vlog2.pop %v7947
    %v7949 = vmul.f32 %v7948, 0.6931472
    %v7950 = vsub.f32 %v7942, %v7949
    %7951 = vst [vmem:[#allocation2] sm:$0x3] %v7950
    // Predicated region
    $region26: #{end_to_end_net.1} parent=1 // pred_check
      _
    $region27: #{end_to_end_net.1} parent=1 // pred_check_branch
      %7953 = sbr.rel (0) target = $region29
    $region28: #{end_to_end_net.1} parent=1 // pred_region
      %s7955 = ssub.s32 32, 32
      %7956 = vsyncadd [#allocation3], %s7955
      %s7958 = sshll.u32 [#allocation2], 4
      %s7959 = int_to_ptr.vmem [resolvable:$true] %s7958
      %7961 = dma.vmem_to_hbm [thread:$0]  %s7959, 32, %s6, [#allocation3]
    $region29: #{end_to_end_net.1} parent=1 // pred_fallthru
      _
    // Predicated region
    $region30: #{end_to_end_net.1} parent=1 // pred_check
      _
    $region31: #{end_to_end_net.1} parent=1 // pred_check_branch
      %7963 = sbr.rel (0) target = $region33
    $region32: #{end_to_end_net.1} parent=1 // pred_region
      %7964 = dma.done [#allocation3], 32
    $region33: #{end_to_end_net.1} parent=1 // pred_fallthru
      _
    %7965 = vsyncpa [#allocation3], 1

</llo_original>
